<compile_context>
chip_gen: v6e
topology: v6e:2x2x1
jax: 0.10.0
libtpu: 0.0.40
codegen_flags: <defaults>
</compile_context>

<pallas_src>
import functools

import jax
import jax.numpy as jnp
from jax import lax
from jax.experimental import pallas as pl
from jax.experimental.pallas import tpu as pltpu

_VMEM_LIMIT = 64 * 1024 * 1024  # raise scoped VMEM limit (v5e default 16 MiB, v7x 32 MiB)


# ----------------------------- tiling helper -----------------------------

def _tile(dim, target, quantum):
    """Largest multiple of `quantum` (<= target) that divides `dim`; else full `dim`."""
    if dim <= target:
        return dim
    t = (target // quantum) * quantum
    while t >= quantum:
        if dim % t == 0:
            return t
        t -= quantum
    return dim


# ----------------------------- tiled linear (+bias, optional GELU) -----------------------------

def _linear_kernel(x_ref, w_ref, b_ref, o_ref, acc_ref, *, activation):
    @pl.when(pl.program_id(2) == 0)
    def _():
        acc_ref[...] = jnp.zeros_like(acc_ref)

    # bf16 MXU operands, f32 accumulation (weights are already stored bf16).
    acc_ref[...] += jnp.dot(x_ref[...].astype(jnp.bfloat16), w_ref[...],
                            preferred_element_type=jnp.float32)

    @pl.when(pl.program_id(2) == pl.num_programs(2) - 1)
    def _():
        y = acc_ref[...] + b_ref[...]
        if activation == "gelu":
            y = jax.nn.gelu(y, approximate=True)
        o_ref[...] = y.astype(o_ref.dtype)


def fused_linear(x, w, b, activation=None, out_dtype=None):
    """x: (M, K), w: (K, N) bf16, b: (N,) f32 -> (M, N). Tiled M/N/K, f32 accumulator."""
    M, K = x.shape
    N = w.shape[1]
    out_dtype = x.dtype if out_dtype is None else out_dtype
    tm = _tile(M, 256, 8)     # larger row tile -> better weight reuse / fewer grid steps
    tn = _tile(N, 256, 128)   # lane-dense output tile
    tk = _tile(K, 512, 128)
    grid = (M // tm, N // tn, K // tk)
    kern = functools.partial(_linear_kernel, activation=activation)
    # TODO(synk): sweep pipeline_mode=pl.Buffered(3) on the weight spec for thin-tile cases.
    return pl.pallas_call(
        kern,
        out_shape=jax.ShapeDtypeStruct((M, N), out_dtype),
        grid=grid,
        in_specs=[
            pl.BlockSpec((tm, tk), lambda i, j, k: (i, k)),
            pl.BlockSpec((tk, tn), lambda i, j, k: (k, j)),
            pl.BlockSpec((1, tn), lambda i, j, k: (0, j)),
        ],
        out_specs=pl.BlockSpec((tm, tn), lambda i, j, k: (i, j)),
        scratch_shapes=[pltpu.VMEM((tm, tn), jnp.float32)],
        compiler_params=pltpu.CompilerParams(
            dimension_semantics=("parallel", "parallel", "arbitrary"),
            vmem_limit_bytes=_VMEM_LIMIT),
    )(x, w, b.reshape(1, N))


# ----------------------------- tiled linear + residual + LayerNorm -----------------------------

def _linear_add_ln_kernel(x_ref, w_ref, b_ref, res_ref, g_ref, beta_ref, o_ref,
                          acc_ref, *, eps):
    @pl.when(pl.program_id(1) == 0)
    def _():
        acc_ref[...] = jnp.zeros_like(acc_ref)

    acc_ref[...] += jnp.dot(x_ref[...].astype(jnp.bfloat16), w_ref[...],
                            preferred_element_type=jnp.float32)

    @pl.when(pl.program_id(1) == pl.num_programs(1) - 1)
    def _():
        h = acc_ref[...] + b_ref[...] + res_ref[...].astype(jnp.float32)
        mu = jnp.mean(h, axis=-1, keepdims=True)
        diff = h - mu
        var = jnp.mean(diff * diff, axis=-1, keepdims=True)
        y = diff * lax.rsqrt(var + eps) * g_ref[...] + beta_ref[...]
        o_ref[...] = y.astype(o_ref.dtype)


def linear_add_layernorm(x, w, b, residual, gamma, beta, eps=1e-5):
    """LayerNorm((x @ w + b) + residual).  Full-N blocks (LN needs whole rows)."""
    M, K = x.shape
    N = w.shape[1]
    tm = _tile(M, 256, 8)
    tk = _tile(K, 256, 128)   # smaller K tile: full-N bf16 weight block stays VMEM-resident (v7x 64 MiB)
    grid = (M // tm, K // tk)
    kern = functools.partial(_linear_add_ln_kernel, eps=eps)
    return pl.pallas_call(
        kern,
        out_shape=jax.ShapeDtypeStruct((M, N), residual.dtype),
        grid=grid,
        in_specs=[
            pl.BlockSpec((tm, tk), lambda i, k: (i, k)),
            pl.BlockSpec((tk, N), lambda i, k: (k, 0)),
            pl.BlockSpec((1, N), lambda i, k: (0, 0)),
            pl.BlockSpec((tm, N), lambda i, k: (i, 0)),
            pl.BlockSpec((1, N), lambda i, k: (0, 0)),
            pl.BlockSpec((1, N), lambda i, k: (0, 0)),
        ],
        out_specs=pl.BlockSpec((tm, N), lambda i, k: (i, 0)),
        scratch_shapes=[pltpu.VMEM((tm, N), jnp.float32)],
        compiler_params=pltpu.CompilerParams(
            dimension_semantics=("parallel", "arbitrary"),
            vmem_limit_bytes=_VMEM_LIMIT),
    )(x, w, b.reshape(1, N), residual, gamma.reshape(1, N), beta.reshape(1, N))


# ------------------ fused relative attention + out-proj + residual + LayerNorm ------------------

def _attn_out_ln_kernel(q_ref, k_ref, v_ref, r_ref, rw_ref, rr_ref, mask_ref,
                        x_ref, wo_ref, bo_ref, g_ref, beta_ref, o_ref, *, eps):
    H, S, Dh = r_ref.shape
    D = H * Dh
    scale = 1.0 / (Dh ** 0.5)

    q = q_ref[0].astype(jnp.float32)             # (H, S, Dh)
    kb = k_ref[0].astype(jnp.bfloat16)
    vb = v_ref[0].astype(jnp.bfloat16)
    rb = r_ref[...].astype(jnp.bfloat16)

    # Fold 1/sqrt(Dh) into the small (H, S, Dh) query operands, not the (H, S, S) scores.
    qw = ((q + rw_ref[...]) * scale).astype(jnp.bfloat16)
    qr = ((q + rr_ref[...]) * scale).astype(jnp.bfloat16)

    # Content and position scores for all heads: batched MXU matmuls, contracting the
    # last dim of both operands (no explicit transposes, no lane slicing).
    ac = jnp.einsum('hqd,hkd->hqk', qw, kb, preferred_element_type=jnp.float32)  # (H,S,S)
    bd = jnp.einsum('hqd,hkd->hqk', qr, rb, preferred_element_type=jnp.float32)  # (H,S,S)

    # Transformer-XL rel_shift, O(S^2): row i is rotated by (i + 1) mod S via a strided
    # XLU lane rotate (per head), then relative offsets outside [0, S-1] are zeroed.
    bd = jnp.stack(
        [pltpu.roll(bd[h], shift=1, axis=1, stride=1, stride_axis=0) for h in range(H)],
        axis=0)
    ii = lax.broadcasted_iota(jnp.int32, (S, S), 0)
    jj = lax.broadcasted_iota(jnp.int32, (S, S), 1)
    tri = (jj <= ii)[None, :, :]                 # keys at/left of the query get a pos term
    bd = jnp.where(tri, bd, 0.0)

    score = ac + bd + mask_ref[...]              # (H,S,S) + (1,1,S) additive padding mask
    mx = jnp.max(score, axis=-1, keepdims=True)
    p = jnp.exp(score - mx)
    denom = jnp.sum(p, axis=-1, keepdims=True)
    attn = p * pl.reciprocal(denom, approx=True)

    ctx = jnp.einsum('hqk,hkd->hqd', attn.astype(jnp.bfloat16), vb,
                     preferred_element_type=jnp.float32)          # (H, S, Dh)

    # Fused output projection: accumulate per-head (S,Dh) @ (Dh,D) into a lane-dense (S,D).
    ctx_b = ctx.astype(jnp.bfloat16)
    attn_out = jnp.zeros((S, D), jnp.float32)
    for h in range(H):
        attn_out = attn_out + jnp.dot(ctx_b[h], wo_ref[h],
                                      preferred_element_type=jnp.float32)

    # Residual + LayerNorm (f32), then a single lane-dense (S, D) store.
    hres = attn_out + bo_ref[...] + x_ref[0].astype(jnp.float32)
    mu = jnp.mean(hres, axis=-1, keepdims=True)
    diff = hres - mu
    var = jnp.mean(diff * diff, axis=-1, keepdims=True)
    y = diff * lax.rsqrt(var + eps) * g_ref[...] + beta_ref[...]
    o_ref[0] = y.astype(o_ref.dtype)


def attention_out_ln(q, k, v, r, rw, rr, attn_add, x_res, wo_heads, bo, gamma, beta,
                     eps=1e-5):
    """q/k/v: (B,H,S,Dh); r: (H,S,Dh); rw/rr: (H,1,Dh); mask: (B,1,S); x_res: (B,S,D);
    wo_heads: (H,Dh,D).  Returns LayerNorm(attn_out @ Wo + bo + x_res): (B, S, D)."""
    B, H, S, Dh = q.shape
    D = H * Dh
    kern = functools.partial(_attn_out_ln_kernel, eps=eps)
    return pl.pallas_call(
        kern,
        out_shape=jax.ShapeDtypeStruct((B, S, D), x_res.dtype),
        grid=(B,),   # batch axis shards across TensorCores (megacore / v7x 2-TC)
        in_specs=[
            pl.BlockSpec((1, H, S, Dh), lambda b: (b, 0, 0, 0)),
            pl.BlockSpec((1, H, S, Dh), lambda b: (b, 0, 0, 0)),
            pl.BlockSpec((1, H, S, Dh), lambda b: (b, 0, 0, 0)),
            pl.BlockSpec((H, S, Dh), lambda b: (0, 0, 0)),
            pl.BlockSpec((H, 1, Dh), lambda b: (0, 0, 0)),
            pl.BlockSpec((H, 1, Dh), lambda b: (0, 0, 0)),
            pl.BlockSpec((1, 1, S), lambda b: (b, 0, 0)),
            pl.BlockSpec((1, S, D), lambda b: (b, 0, 0)),
            pl.BlockSpec((H, Dh, D), lambda b: (0, 0, 0)),
            pl.BlockSpec((1, D), lambda b: (0, 0)),
            pl.BlockSpec((1, D), lambda b: (0, 0)),
            pl.BlockSpec((1, D), lambda b: (0, 0)),
        ],
        out_specs=pl.BlockSpec((1, S, D), lambda b: (b, 0, 0)),  # lane-dense store
        compiler_params=pltpu.CompilerParams(
            dimension_semantics=("parallel",),
            vmem_limit_bytes=_VMEM_LIMIT),
    )(q, k, v, r, rw, rr, attn_add, x_res, wo_heads,
      bo.reshape(1, D), gamma.reshape(1, D), beta.reshape(1, D))


# ----------------------------- parameters -----------------------------

def init_params(key, n_layer, d_model, n_head, d_inter):
    d_head = d_model // n_head

    def dense(k, fan_in, fan_out):
        # Weights stored in bf16 (MXU-native, halves weight DMA bytes); biases/LN in f32.
        return (jax.random.normal(k, (fan_in, fan_out), jnp.float32) * 0.02
                ).astype(jnp.bfloat16)

    keys = jax.random.split(key, 2 + 5 * n_layer)
    params = {
        "inv_freq": 1.0 / (10000.0 ** (jnp.arange(0, d_model, 2, dtype=jnp.float32)
                                       / d_model)),
        "r_w_bias": jax.random.normal(keys[0], (n_head, d_head), jnp.float32) * 0.02,
        "r_r_bias": jax.random.normal(keys[1], (n_head, d_head), jnp.float32) * 0.02,
        "layers": [],
    }
    idx = 2
    for _ in range(n_layer):
        lk = keys[idx:idx + 5]
        idx += 5
        params["layers"].append(dict(
            wqkv=dense(lk[0], d_model, 3 * d_model),          # fused q|k|v projection
            bqkv=jnp.zeros((3 * d_model,), jnp.float32),
            wr=dense(lk[1], d_model, d_model),                # r_net (no bias)
            wo=dense(lk[2], d_model, d_model), bo=jnp.zeros((d_model,), jnp.float32),
            wi=dense(lk[3], d_model, d_inter), bi=jnp.zeros((d_inter,), jnp.float32),
            wf=dense(lk[4], d_inter, d_model), bf=jnp.zeros((d_model,), jnp.float32),
            g1=jnp.ones((d_model,), jnp.float32), be1=jnp.zeros((d_model,), jnp.float32),
            g2=jnp.ones((d_model,), jnp.float32), be2=jnp.zeros((d_model,), jnp.float32),
        ))
    return params


# ----------------------------- encoder forward -----------------------------

def rel0_encoder_forward(params, hidden_states, attention_mask=None,
                         output_hidden_states=False):
    """Mirrors Rel0Encoder.forward (eval mode; head_mask entries are None)."""
    B, S, D = hidden_states.shape
    H, Dh = params["r_w_bias"].shape
    L = len(params["layers"])

    if attention_mask is None:
        attn_add = jnp.zeros((B, 1, S), jnp.float32)
    else:
        attn_add = ((1.0 - attention_mask.astype(jnp.float32)) * -10000.0).reshape(B, 1, S)

    # pos_seq = arange(klen-1, -1, -1); identical every layer and eval-mode dropout is
    # identity, so the sinusoidal embedding is computed once, in plain JAX (tiny VPU work,
    # not worth a pallas_call launch).
    pos_seq = jnp.arange(S - 1, -1, -1, dtype=jnp.float32)
    sinus = pos_seq[:, None] * params["inv_freq"][None, :]
    pos_emb = jnp.concatenate([jnp.sin(sinus), jnp.cos(sinus)], axis=-1)       # (S, D)

    # r_net projection batched across ALL layers: one matmul instead of L launches.
    wr_all = jnp.concatenate([lp["wr"] for lp in params["layers"]], axis=1)    # (D, L*D)
    r_all = fused_linear(pos_emb, wr_all, jnp.zeros((L * D,), jnp.float32),
                         out_dtype=jnp.bfloat16)                               # (S, L*D)

    rw = params["r_w_bias"].reshape(H, 1, Dh)
    rr = params["r_r_bias"].reshape(H, 1, Dh)

    all_hidden = ()
    h = hidden_states
    for li, lp in enumerate(params["layers"]):
        if output_hidden_states:
            all_hidden = all_hidden + (h,)

        x2 = h.reshape(B * S, D)
        # Fused Q|K|V projection: one bf16 matmul, one HBM read of x2.
        qkv = fused_linear(x2, lp["wqkv"], lp["bqkv"], out_dtype=jnp.bfloat16)
        qkv = qkv.reshape(B, S, 3, H, Dh)
        # Wrapper-side layout plumbing: per-head (B, H, S, Dh) views for batched matmuls.
        q = jnp.transpose(qkv[:, :, 0], (0, 2, 1, 3))
        k = jnp.transpose(qkv[:, :, 1], (0, 2, 1, 3))
        v = jnp.transpose(qkv[:, :, 2], (0, 2, 1, 3))
        r_l = jnp.transpose(r_all[:, li * D:(li + 1) * D].reshape(S, H, Dh), (1, 0, 2))
        wo_h = lp["wo"].reshape(H, Dh, D)

        # Fused: relative attention + output projection + residual + LayerNorm.
        h1 = attention_out_ln(q, k, v, r_l, rw, rr, attn_add, h,
                              wo_h, lp["bo"], lp["g1"], lp["be1"])             # (B, S, D)
        h1_2 = h1.reshape(B * S, D)

        # FFN: GELU up-projection, then down-proj + residual + LayerNorm.
        inter = fused_linear(h1_2, lp["wi"], lp["bi"], activation="gelu",
                             out_dtype=jnp.bfloat16)
        h2 = linear_add_layernorm(inter, lp["wf"], lp["bf"], h1_2, lp["g2"], lp["be2"])

        h = h2.reshape(B, S, D)

    if output_hidden_states:
        all_hidden = all_hidden + (h,)
        return (h, all_hidden)
    return (h,)


# ----------------------------- main -----------------------------

if __name__ == "__main__":
    # Small, lane-friendly config: hidden=64, heads=4 (d_head=16), layers=2, seq=128, batch=2.
    B, S, D, H, L, DI = 2, 128, 64, 4, 2, 128
    key = jax.random.PRNGKey(0)
    pkey, xkey = jax.random.split(key)
    params = init_params(pkey, n_layer=L, d_model=D, n_head=H, d_inter=DI)
    x = jax.random.normal(xkey, (B, S, D), jnp.float32)

    fwd = jax.jit(rel0_encoder_forward)
    outputs = fwd(params, x)
    out = jax.block_until_ready(outputs[0])
    assert out.shape == (B, S, D) and out.dtype == jnp.float32
    assert bool(jnp.all(jnp.isfinite(out)))
    print("KERNEL_OK")
</pallas_src>

<mosaic_0001>
module attributes {stable_mosaic.version = 11 : i64} {
  func.func @_linear_kernel(%arg0: i32, %arg1: i32, %arg2: i32, %arg3: memref<256x64xf32, #tpu.memory_space<vmem>>, %arg4: memref<64x192xbf16, #tpu.memory_space<vmem>>, %arg5: memref<1x192xf32, #tpu.memory_space<vmem>>, %arg6: memref<256x192xbf16, #tpu.memory_space<vmem>>, %arg7: memref<256x192xf32, #tpu.memory_space<vmem>>) attributes {dimension_semantics = [#tpu.dimension_semantics<parallel>, #tpu.dimension_semantics<parallel>, #tpu.dimension_semantics<arbitrary>], iteration_bounds = array<i64: 1, 1, 1>, scalar_prefetch = 0 : i64, scratch_operands = 1 : i64, tpu.core_type = #tpu.core_type<tc>, window_params = [{transform_indices = @transform_0, window_bounds = array<i64: 256, 64>}, {transform_indices = @transform_1, window_bounds = array<i64: 64, 192>}, {transform_indices = @transform_2, window_bounds = array<i64: 1, 192>}, {transform_indices = @transform_3, window_bounds = array<i64: 256, 192>}]} {
    %c0_i32 = arith.constant 0 : i32
    %0 = arith.cmpi eq, %arg2, %c0_i32 : i32
    %1 = arith.extui %0 : i1 to i32
    %c0_i32_0 = arith.constant 0 : i32
    %2 = arith.cmpi ne, %1, %c0_i32_0 : i32
    scf.if %2 {
      %cst_10 = arith.constant 0.000000e+00 : f32
      %13 = vector.broadcast %cst_10 : f32 to vector<256x192xf32>
      %c0_11 = arith.constant 0 : index
      %c0_12 = arith.constant 0 : index
      %14 = vector.load %arg7[%c0_11, %c0_12] : memref<256x192xf32, #tpu.memory_space<vmem>>, vector<256x192xf32>
      tpu.vector_store %arg7[%c0_11, %c0_12], %13 {strides = array<i32>} : memref<256x192xf32, #tpu.memory_space<vmem>>, vector<256x192xf32>,
    } else {
    }
    %c0 = arith.constant 0 : index
    %c0_1 = arith.constant 0 : index
    %3 = vector.load %arg7[%c0, %c0_1] : memref<256x192xf32, #tpu.memory_space<vmem>>, vector<256x192xf32>
    %c0_2 = arith.constant 0 : index
    %c0_3 = arith.constant 0 : index
    %4 = vector.load %arg3[%c0_2, %c0_3] : memref<256x64xf32, #tpu.memory_space<vmem>>, vector<256x64xf32>
    %5 = arith.truncf %4 : vector<256x64xf32> to vector<256x64xbf16>
    %c0_4 = arith.constant 0 : index
    %c0_5 = arith.constant 0 : index
    %6 = vector.load %arg4[%c0_4, %c0_5] : memref<64x192xbf16, #tpu.memory_space<vmem>>, vector<64x192xbf16>
    %cst = arith.constant dense<0.000000e+00> : vector<256x192xf32>
    %7 = tpu.matmul %5, %6, %cst {dimension_numbers = #tpu.dot_dimension_numbers<[1], [0], [0], [1], [0, 0, 1, 1], [], []>} : vector<256x64xbf16>, vector<64x192xbf16>, vector<256x192xf32> -> vector<256x192xf32>
    %8 = arith.addf %3, %7 : vector<256x192xf32>
    %c0_6 = arith.constant 0 : index
    %c0_7 = arith.constant 0 : index
    %9 = vector.load %arg7[%c0_6, %c0_7] : memref<256x192xf32, #tpu.memory_space<vmem>>, vector<256x192xf32>
    tpu.vector_store %arg7[%c0_6, %c0_7], %8 {strides = array<i32>} : memref<256x192xf32, #tpu.memory_space<vmem>>, vector<256x192xf32>,
    %c0_i32_8 = arith.constant 0 : i32
    %10 = arith.cmpi eq, %arg2, %c0_i32_8 : i32
    %11 = arith.extui %10 : i1 to i32
    %c0_i32_9 = arith.constant 0 : i32
    %12 = arith.cmpi ne, %11, %c0_i32_9 : i32
    scf.if %12 {
      %c0_10 = arith.constant 0 : index
      %c0_11 = arith.constant 0 : index
      %13 = vector.load %arg7[%c0_10, %c0_11] : memref<256x192xf32, #tpu.memory_space<vmem>>, vector<256x192xf32>
      %c0_12 = arith.constant 0 : index
      %c0_13 = arith.constant 0 : index
      %14 = vector.load %arg5[%c0_12, %c0_13] : memref<1x192xf32, #tpu.memory_space<vmem>>, vector<1x192xf32>
      %15 = vector.broadcast %14 : vector<1x192xf32> to vector<256x192xf32>
      %16 = arith.addf %13, %15 : vector<256x192xf32>
      %17 = arith.truncf %16 : vector<256x192xf32> to vector<256x192xbf16>
      %c0_14 = arith.constant 0 : index
      %c0_15 = arith.constant 0 : index
      %18 = vector.load %arg6[%c0_14, %c0_15] : memref<256x192xbf16, #tpu.memory_space<vmem>>, vector<256x192xbf16>
      tpu.vector_store %arg6[%c0_14, %c0_15], %17 {strides = array<i32>} : memref<256x192xbf16, #tpu.memory_space<vmem>>, vector<256x192xbf16>,
    } else {
    }
    return
  }
  func.func @transform_0(%arg0: i32, %arg1: i32, %arg2: i32) -> (i32, i32) {
    %c0_i32 = arith.constant 0 : i32
    return %arg0, %arg2 : i32, i32
  }
  func.func @transform_1(%arg0: i32, %arg1: i32, %arg2: i32) -> (i32, i32) {
    %c0_i32 = arith.constant 0 : i32
    return %arg2, %arg1 : i32, i32
  }
  func.func @transform_2(%arg0: i32, %arg1: i32, %arg2: i32) -> (i32, i32) {
    %c0_i32 = arith.constant 0 : i32
    %c0_i32_0 = arith.constant 0 : i32
    return %c0_i32, %arg1 : i32, i32
  }
  func.func @transform_3(%arg0: i32, %arg1: i32, %arg2: i32) -> (i32, i32) {
    %c0_i32 = arith.constant 0 : i32
    return %arg0, %arg1 : i32, i32
  }
}

module attributes {stable_mosaic.version = 11 : i64} {
  func.func @_linear_kernel(%arg0: i32, %arg1: i32, %arg2: i32, %arg3: memref<128x64xf32, #tpu.memory_space<vmem>>, %arg4: memref<64x128xbf16, #tpu.memory_space<vmem>>, %arg5: memref<1x128xf32, #tpu.memory_space<vmem>>, %arg6: memref<128x128xbf16, #tpu.memory_space<vmem>>, %arg7: memref<128x128xf32, #tpu.memory_space<vmem>>) attributes {dimension_semantics = [#tpu.dimension_semantics<parallel>, #tpu.dimension_semantics<parallel>, #tpu.dimension_semantics<arbitrary>], iteration_bounds = array<i64: 1, 1, 1>, scalar_prefetch = 0 : i64, scratch_operands = 1 : i64, tpu.core_type = #tpu.core_type<tc>, window_params = [{transform_indices = @transform_0, window_bounds = array<i64: 128, 64>}, {transform_indices = @transform_1, window_bounds = array<i64: 64, 128>}, {transform_indices = @transform_2, window_bounds = array<i64: 1, 128>}, {transform_indices = @transform_3, window_bounds = array<i64: 128, 128>}]} {
    %c0_i32 = arith.constant 0 : i32
    %0 = arith.cmpi eq, %arg2, %c0_i32 : i32
    %1 = arith.extui %0 : i1 to i32
    %c0_i32_0 = arith.constant 0 : i32
    %2 = arith.cmpi ne, %1, %c0_i32_0 : i32
    scf.if %2 {
      %cst_10 = arith.constant 0.000000e+00 : f32
      %13 = vector.broadcast %cst_10 : f32 to vector<128x128xf32>
      %c0_11 = arith.constant 0 : index
      %c0_12 = arith.constant 0 : index
      %14 = vector.load %arg7[%c0_11, %c0_12] : memref<128x128xf32, #tpu.memory_space<vmem>>, vector<128x128xf32>
      tpu.vector_store %arg7[%c0_11, %c0_12], %13 {strides = array<i32>} : memref<128x128xf32, #tpu.memory_space<vmem>>, vector<128x128xf32>,
    } else {
    }
    %c0 = arith.constant 0 : index
    %c0_1 = arith.constant 0 : index
    %3 = vector.load %arg7[%c0, %c0_1] : memref<128x128xf32, #tpu.memory_space<vmem>>, vector<128x128xf32>
    %c0_2 = arith.constant 0 : index
    %c0_3 = arith.constant 0 : index
    %4 = vector.load %arg3[%c0_2, %c0_3] : memref<128x64xf32, #tpu.memory_space<vmem>>, vector<128x64xf32>
    %5 = arith.truncf %4 : vector<128x64xf32> to vector<128x64xbf16>
    %c0_4 = arith.constant 0 : index
    %c0_5 = arith.constant 0 : index
    %6 = vector.load %arg4[%c0_4, %c0_5] : memref<64x128xbf16, #tpu.memory_space<vmem>>, vector<64x128xbf16>
    %cst = arith.constant dense<0.000000e+00> : vector<128x128xf32>
    %7 = tpu.matmul %5, %6, %cst {dimension_numbers = #tpu.dot_dimension_numbers<[1], [0], [0], [1], [0, 0, 1, 1], [], []>} : vector<128x64xbf16>, vector<64x128xbf16>, vector<128x128xf32> -> vector<128x128xf32>
    %8 = arith.addf %3, %7 : vector<128x128xf32>
    %c0_6 = arith.constant 0 : index
    %c0_7 = arith.constant 0 : index
    %9 = vector.load %arg7[%c0_6, %c0_7] : memref<128x128xf32, #tpu.memory_space<vmem>>, vector<128x128xf32>
    tpu.vector_store %arg7[%c0_6, %c0_7], %8 {strides = array<i32>} : memref<128x128xf32, #tpu.memory_space<vmem>>, vector<128x128xf32>,
    %c0_i32_8 = arith.constant 0 : i32
    %10 = arith.cmpi eq, %arg2, %c0_i32_8 : i32
    %11 = arith.extui %10 : i1 to i32
    %c0_i32_9 = arith.constant 0 : i32
    %12 = arith.cmpi ne, %11, %c0_i32_9 : i32
    scf.if %12 {
      %c0_10 = arith.constant 0 : index
      %c0_11 = arith.constant 0 : index
      %13 = vector.load %arg7[%c0_10, %c0_11] : memref<128x128xf32, #tpu.memory_space<vmem>>, vector<128x128xf32>
      %c0_12 = arith.constant 0 : index
      %c0_13 = arith.constant 0 : index
      %14 = vector.load %arg5[%c0_12, %c0_13] : memref<1x128xf32, #tpu.memory_space<vmem>>, vector<1x128xf32>
      %15 = vector.broadcast %14 : vector<1x128xf32> to vector<128x128xf32>
      %16 = arith.addf %13, %15 : vector<128x128xf32>
      %17 = arith.truncf %16 : vector<128x128xf32> to vector<128x128xbf16>
      %c0_14 = arith.constant 0 : index
      %c0_15 = arith.constant 0 : index
      %18 = vector.load %arg6[%c0_14, %c0_15] : memref<128x128xbf16, #tpu.memory_space<vmem>>, vector<128x128xbf16>
      tpu.vector_store %arg6[%c0_14, %c0_15], %17 {strides = array<i32>} : memref<128x128xbf16, #tpu.memory_space<vmem>>, vector<128x128xbf16>,
    } else {
    }
    return
  }
  func.func @transform_0(%arg0: i32, %arg1: i32, %arg2: i32) -> (i32, i32) {
    %c0_i32 = arith.constant 0 : i32
    return %arg0, %arg2 : i32, i32
  }
  func.func @transform_1(%arg0: i32, %arg1: i32, %arg2: i32) -> (i32, i32) {
    %c0_i32 = arith.constant 0 : i32
    return %arg2, %arg1 : i32, i32
  }
  func.func @transform_2(%arg0: i32, %arg1: i32, %arg2: i32) -> (i32, i32) {
    %c0_i32 = arith.constant 0 : i32
    %c0_i32_0 = arith.constant 0 : i32
    return %c0_i32, %arg1 : i32, i32
  }
  func.func @transform_3(%arg0: i32, %arg1: i32, %arg2: i32) -> (i32, i32) {
    %c0_i32 = arith.constant 0 : i32
    return %arg0, %arg1 : i32, i32
  }
}

module attributes {stable_mosaic.version = 11 : i64} {
  func.func @_linear_kernel(%arg0: i32, %arg1: i32, %arg2: i32, %arg3: memref<256x64xf32, #tpu.memory_space<vmem>>, %arg4: memref<64x128xbf16, #tpu.memory_space<vmem>>, %arg5: memref<1x128xf32, #tpu.memory_space<vmem>>, %arg6: memref<256x128xbf16, #tpu.memory_space<vmem>>, %arg7: memref<256x128xf32, #tpu.memory_space<vmem>>) attributes {dimension_semantics = [#tpu.dimension_semantics<parallel>, #tpu.dimension_semantics<parallel>, #tpu.dimension_semantics<arbitrary>], iteration_bounds = array<i64: 1, 1, 1>, scalar_prefetch = 0 : i64, scratch_operands = 1 : i64, tpu.core_type = #tpu.core_type<tc>, window_params = [{transform_indices = @transform_0, window_bounds = array<i64: 256, 64>}, {transform_indices = @transform_1, window_bounds = array<i64: 64, 128>}, {transform_indices = @transform_2, window_bounds = array<i64: 1, 128>}, {transform_indices = @transform_3, window_bounds = array<i64: 256, 128>}]} {
    %c0_i32 = arith.constant 0 : i32
    %0 = arith.cmpi eq, %arg2, %c0_i32 : i32
    %1 = arith.extui %0 : i1 to i32
    %c0_i32_0 = arith.constant 0 : i32
    %2 = arith.cmpi ne, %1, %c0_i32_0 : i32
    scf.if %2 {
      %cst_10 = arith.constant 0.000000e+00 : f32
      %13 = vector.broadcast %cst_10 : f32 to vector<256x128xf32>
      %c0_11 = arith.constant 0 : index
      %c0_12 = arith.constant 0 : index
      %14 = vector.load %arg7[%c0_11, %c0_12] : memref<256x128xf32, #tpu.memory_space<vmem>>, vector<256x128xf32>
      tpu.vector_store %arg7[%c0_11, %c0_12], %13 {strides = array<i32>} : memref<256x128xf32, #tpu.memory_space<vmem>>, vector<256x128xf32>,
    } else {
    }
    %c0 = arith.constant 0 : index
    %c0_1 = arith.constant 0 : index
    %3 = vector.load %arg7[%c0, %c0_1] : memref<256x128xf32, #tpu.memory_space<vmem>>, vector<256x128xf32>
    %c0_2 = arith.constant 0 : index
    %c0_3 = arith.constant 0 : index
    %4 = vector.load %arg3[%c0_2, %c0_3] : memref<256x64xf32, #tpu.memory_space<vmem>>, vector<256x64xf32>
    %5 = arith.truncf %4 : vector<256x64xf32> to vector<256x64xbf16>
    %c0_4 = arith.constant 0 : index
    %c0_5 = arith.constant 0 : index
    %6 = vector.load %arg4[%c0_4, %c0_5] : memref<64x128xbf16, #tpu.memory_space<vmem>>, vector<64x128xbf16>
    %cst = arith.constant dense<0.000000e+00> : vector<256x128xf32>
    %7 = tpu.matmul %5, %6, %cst {dimension_numbers = #tpu.dot_dimension_numbers<[1], [0], [0], [1], [0, 0, 1, 1], [], []>} : vector<256x64xbf16>, vector<64x128xbf16>, vector<256x128xf32> -> vector<256x128xf32>
    %8 = arith.addf %3, %7 : vector<256x128xf32>
    %c0_6 = arith.constant 0 : index
    %c0_7 = arith.constant 0 : index
    %9 = vector.load %arg7[%c0_6, %c0_7] : memref<256x128xf32, #tpu.memory_space<vmem>>, vector<256x128xf32>
    tpu.vector_store %arg7[%c0_6, %c0_7], %8 {strides = array<i32>} : memref<256x128xf32, #tpu.memory_space<vmem>>, vector<256x128xf32>,
    %c0_i32_8 = arith.constant 0 : i32
    %10 = arith.cmpi eq, %arg2, %c0_i32_8 : i32
    %11 = arith.extui %10 : i1 to i32
    %c0_i32_9 = arith.constant 0 : i32
    %12 = arith.cmpi ne, %11, %c0_i32_9 : i32
    scf.if %12 {
      %c0_10 = arith.constant 0 : index
      %c0_11 = arith.constant 0 : index
      %13 = vector.load %arg7[%c0_10, %c0_11] : memref<256x128xf32, #tpu.memory_space<vmem>>, vector<256x128xf32>
      %c0_12 = arith.constant 0 : index
      %c0_13 = arith.constant 0 : index
      %14 = vector.load %arg5[%c0_12, %c0_13] : memref<1x128xf32, #tpu.memory_space<vmem>>, vector<1x128xf32>
      %15 = vector.broadcast %14 : vector<1x128xf32> to vector<256x128xf32>
      %16 = arith.addf %13, %15 : vector<256x128xf32>
      %17 = arith.mulf %16, %16 : vector<256x128xf32>
      %18 = arith.mulf %16, %17 : vector<256x128xf32>
      %cst_14 = arith.constant 4.471500e-02 : f32
      %19 = vector.broadcast %cst_14 : f32 to vector<256x128xf32>
      %20 = arith.mulf %19, %18 : vector<256x128xf32>
      %21 = arith.addf %16, %20 : vector<256x128xf32>
      %cst_15 = arith.constant 0.797884583 : f32
      %22 = vector.broadcast %cst_15 : f32 to vector<256x128xf32>
      %23 = arith.mulf %22, %21 : vector<256x128xf32>
      %24 = math.tanh %23 : vector<256x128xf32>
      %cst_16 = arith.constant 1.000000e+00 : f32
      %25 = vector.broadcast %cst_16 : f32 to vector<256x128xf32>
      %26 = arith.addf %25, %24 : vector<256x128xf32>
      %cst_17 = arith.constant 5.000000e-01 : f32
      %27 = vector.broadcast %cst_17 : f32 to vector<256x128xf32>
      %28 = arith.mulf %27, %26 : vector<256x128xf32>
      %29 = arith.mulf %16, %28 : vector<256x128xf32>
      %30 = arith.truncf %29 : vector<256x128xf32> to vector<256x128xbf16>
      %c0_18 = arith.constant 0 : index
      %c0_19 = arith.constant 0 : index
      %31 = vector.load %arg6[%c0_18, %c0_19] : memref<256x128xbf16, #tpu.memory_space<vmem>>, vector<256x128xbf16>
      tpu.vector_store %arg6[%c0_18, %c0_19], %30 {strides = array<i32>} : memref<256x128xbf16, #tpu.memory_space<vmem>>, vector<256x128xbf16>,
    } else {
    }
    return
  }
  func.func @transform_0(%arg0: i32, %arg1: i32, %arg2: i32) -> (i32, i32) {
    %c0_i32 = arith.constant 0 : i32
    return %arg0, %arg2 : i32, i32
  }
  func.func @transform_1(%arg0: i32, %arg1: i32, %arg2: i32) -> (i32, i32) {
    %c0_i32 = arith.constant 0 : i32
    return %arg2, %arg1 : i32, i32
  }
  func.func @transform_2(%arg0: i32, %arg1: i32, %arg2: i32) -> (i32, i32) {
    %c0_i32 = arith.constant 0 : i32
    %c0_i32_0 = arith.constant 0 : i32
    return %c0_i32, %arg1 : i32, i32
  }
  func.func @transform_3(%arg0: i32, %arg1: i32, %arg2: i32) -> (i32, i32) {
    %c0_i32 = arith.constant 0 : i32
    return %arg0, %arg1 : i32, i32
  }
}

module attributes {stable_mosaic.version = 11 : i64} {
  func.func @_attn_out_ln_kernel(%arg0: i32, %arg1: memref<1x4x128x16xbf16, #tpu.memory_space<vmem>>, %arg2: memref<1x4x128x16xbf16, #tpu.memory_space<vmem>>, %arg3: memref<1x4x128x16xbf16, #tpu.memory_space<vmem>>, %arg4: memref<4x128x16xbf16, #tpu.memory_space<vmem>>, %arg5: memref<4x1x16xf32, #tpu.memory_space<vmem>>, %arg6: memref<4x1x16xf32, #tpu.memory_space<vmem>>, %arg7: memref<1x1x128xf32, #tpu.memory_space<vmem>>, %arg8: memref<1x128x64xf32, #tpu.memory_space<vmem>>, %arg9: memref<4x16x64xbf16, #tpu.memory_space<vmem>>, %arg10: memref<1x64xf32, #tpu.memory_space<vmem>>, %arg11: memref<1x64xf32, #tpu.memory_space<vmem>>, %arg12: memref<1x64xf32, #tpu.memory_space<vmem>>, %arg13: memref<1x128x64xf32, #tpu.memory_space<vmem>>) attributes {dimension_semantics = [#tpu.dimension_semantics<parallel>], iteration_bounds = array<i64: 2>, scalar_prefetch = 0 : i64, scratch_operands = 0 : i64, tpu.core_type = #tpu.core_type<tc>, window_params = [{transform_indices = @transform_0, window_bounds = array<i64: 1, 4, 128, 16>}, {transform_indices = @transform_1, window_bounds = array<i64: 1, 4, 128, 16>}, {transform_indices = @transform_2, window_bounds = array<i64: 1, 4, 128, 16>}, {pipeline_mode = #tpu.pipeline_mode<synchronous>, transform_indices = @transform_3, window_bounds = array<i64: 4, 128, 16>}, {pipeline_mode = #tpu.pipeline_mode<synchronous>, transform_indices = @transform_4, window_bounds = array<i64: 4, 1, 16>}, {pipeline_mode = #tpu.pipeline_mode<synchronous>, transform_indices = @transform_5, window_bounds = array<i64: 4, 1, 16>}, {transform_indices = @transform_6, window_bounds = array<i64: 1, 1, 128>}, {transform_indices = @transform_7, window_bounds = array<i64: 1, 128, 64>}, {pipeline_mode = #tpu.pipeline_mode<synchronous>, transform_indices = @transform_8, window_bounds = array<i64: 4, 16, 64>}, {pipeline_mode = #tpu.pipeline_mode<synchronous>, transform_indices = @transform_9, window_bounds = array<i64: 1, 64>}, {pipeline_mode = #tpu.pipeline_mode<synchronous>, transform_indices = @transform_10, window_bounds = array<i64: 1, 64>}, {pipeline_mode = #tpu.pipeline_mode<synchronous>, transform_indices = @transform_11, window_bounds = array<i64: 1, 64>}, {transform_indices = @transform_12, window_bounds = array<i64: 1, 128, 64>}]} {
    %c0 = arith.constant 0 : index
    %c0_0 = arith.constant 0 : index
    %c0_1 = arith.constant 0 : index
    %c0_2 = arith.constant 0 : index
    %0 = vector.load %arg1[%c0, %c0_0, %c0_1, %c0_2] : memref<1x4x128x16xbf16, #tpu.memory_space<vmem>>, vector<1x4x128x16xbf16>
    %1 = vector.shape_cast %0 : vector<1x4x128x16xbf16> to vector<4x128x16xbf16>
    %2 = arith.extf %1 : vector<4x128x16xbf16> to vector<4x128x16xf32>
    %c0_3 = arith.constant 0 : index
    %c0_4 = arith.constant 0 : index
    %c0_5 = arith.constant 0 : index
    %c0_6 = arith.constant 0 : index
    %3 = vector.load %arg2[%c0_3, %c0_4, %c0_5, %c0_6] : memref<1x4x128x16xbf16, #tpu.memory_space<vmem>>, vector<1x4x128x16xbf16>
    %4 = vector.shape_cast %3 : vector<1x4x128x16xbf16> to vector<4x128x16xbf16>
    %c0_7 = arith.constant 0 : index
    %c0_8 = arith.constant 0 : index
    %c0_9 = arith.constant 0 : index
    %c0_10 = arith.constant 0 : index
    %5 = vector.load %arg3[%c0_7, %c0_8, %c0_9, %c0_10] : memref<1x4x128x16xbf16, #tpu.memory_space<vmem>>, vector<1x4x128x16xbf16>
    %6 = vector.shape_cast %5 : vector<1x4x128x16xbf16> to vector<4x128x16xbf16>
    %c0_11 = arith.constant 0 : index
    %c0_12 = arith.constant 0 : index
    %c0_13 = arith.constant 0 : index
    %7 = vector.load %arg4[%c0_11, %c0_12, %c0_13] : memref<4x128x16xbf16, #tpu.memory_space<vmem>>, vector<4x128x16xbf16>
    %c0_14 = arith.constant 0 : index
    %c0_15 = arith.constant 0 : index
    %c0_16 = arith.constant 0 : index
    %8 = vector.load %arg5[%c0_14, %c0_15, %c0_16] : memref<4x1x16xf32, #tpu.memory_space<vmem>>, vector<4x1x16xf32>
    %9 = vector.broadcast %8 : vector<4x1x16xf32> to vector<4x128x16xf32>
    %10 = arith.addf %2, %9 : vector<4x128x16xf32>
    %cst = arith.constant 2.500000e-01 : f32
    %11 = vector.broadcast %cst : f32 to vector<4x128x16xf32>
    %12 = arith.mulf %10, %11 : vector<4x128x16xf32>
    %13 = arith.truncf %12 : vector<4x128x16xf32> to vector<4x128x16xbf16>
    %c0_17 = arith.constant 0 : index
    %c0_18 = arith.constant 0 : index
    %c0_19 = arith.constant 0 : index
    %14 = vector.load %arg6[%c0_17, %c0_18, %c0_19] : memref<4x1x16xf32, #tpu.memory_space<vmem>>, vector<4x1x16xf32>
    %15 = vector.broadcast %14 : vector<4x1x16xf32> to vector<4x128x16xf32>
    %16 = arith.addf %2, %15 : vector<4x128x16xf32>
    %cst_20 = arith.constant 2.500000e-01 : f32
    %17 = vector.broadcast %cst_20 : f32 to vector<4x128x16xf32>
    %18 = arith.mulf %16, %17 : vector<4x128x16xf32>
    %19 = arith.truncf %18 : vector<4x128x16xf32> to vector<4x128x16xbf16>
    "tpu.trace_start"() <{level = 10 : i32, message = "hqd,hkd->hqk"}> : () -> ()
    %cst_21 = arith.constant dense<0.000000e+00> : vector<4x128x128xf32>
    %20 = tpu.matmul %13, %4, %cst_21 {dimension_numbers = #tpu.dot_dimension_numbers<[2], [2], [1], [1], [0, 0, 0, 1, 1, 1], [0], [0]>} : vector<4x128x16xbf16>, vector<4x128x16xbf16>, vector<4x128x128xf32> -> vector<4x128x128xf32>
    %cst_22 = arith.constant dense<0.000000e+00> : vector<4x128x128xf32>
    %21 = tpu.matmul %19, %7, %cst_22 {dimension_numbers = #tpu.dot_dimension_numbers<[2], [2], [1], [1], [0, 0, 0, 1, 1, 1], [0], [0]>} : vector<4x128x16xbf16>, vector<4x128x16xbf16>, vector<4x128x128xf32> -> vector<4x128x128xf32>
    "tpu.trace_stop"() : () -> ()
    %22 = vector.extract_strided_slice %21 {offsets = [0, 0, 0], sizes = [1, 128, 128], strides = [1, 1, 1]} : vector<4x128x128xf32> to vector<1x128x128xf32>
    %23 = vector.shape_cast %22 : vector<1x128x128xf32> to vector<128x128xf32>
    %c1_i32 = arith.constant 1 : i32
    %24 = tpu.dynamic_rotate %23 by %c1_i32 dim 1 {stride = 1 : si32, stride_dimension = 0 : si32} : vector<128x128xf32>, i32 -> vector<128x128xf32>
    %25 = vector.extract_strided_slice %21 {offsets = [1, 0, 0], sizes = [1, 128, 128], strides = [1, 1, 1]} : vector<4x128x128xf32> to vector<1x128x128xf32>
    %26 = vector.shape_cast %25 : vector<1x128x128xf32> to vector<128x128xf32>
    %c1_i32_23 = arith.constant 1 : i32
    %27 = tpu.dynamic_rotate %26 by %c1_i32_23 dim 1 {stride = 1 : si32, stride_dimension = 0 : si32} : vector<128x128xf32>, i32 -> vector<128x128xf32>
    %28 = vector.extract_strided_slice %21 {offsets = [2, 0, 0], sizes = [1, 128, 128], strides = [1, 1, 1]} : vector<4x128x128xf32> to vector<1x128x128xf32>
    %29 = vector.shape_cast %28 : vector<1x128x128xf32> to vector<128x128xf32>
    %c1_i32_24 = arith.constant 1 : i32
    %30 = tpu.dynamic_rotate %29 by %c1_i32_24 dim 1 {stride = 1 : si32, stride_dimension = 0 : si32} : vector<128x128xf32>, i32 -> vector<128x128xf32>
    %31 = vector.extract_strided_slice %21 {offsets = [3, 0, 0], sizes = [1, 128, 128], strides = [1, 1, 1]} : vector<4x128x128xf32> to vector<1x128x128xf32>
    %32 = vector.shape_cast %31 : vector<1x128x128xf32> to vector<128x128xf32>
    %c1_i32_25 = arith.constant 1 : i32
    %33 = tpu.dynamic_rotate %32 by %c1_i32_25 dim 1 {stride = 1 : si32, stride_dimension = 0 : si32} : vector<128x128xf32>, i32 -> vector<128x128xf32>
    %34 = vector.shape_cast %24 : vector<128x128xf32> to vector<1x128x128xf32>
    %35 = vector.shape_cast %27 : vector<128x128xf32> to vector<1x128x128xf32>
    %36 = vector.shape_cast %30 : vector<128x128xf32> to vector<1x128x128xf32>
    %37 = vector.shape_cast %33 : vector<128x128xf32> to vector<1x128x128xf32>
    %38 = tpu.concatenate %34, %35, %36, %37 in 0 : vector<1x128x128xf32>, vector<1x128x128xf32>, vector<1x128x128xf32>, vector<1x128x128xf32> -> vector<4x128x128xf32>
    %39 = tpu.iota {dimensions = array<i32: 0>} : vector<128x128xi32>
    %40 = tpu.iota {dimensions = array<i32: 1>} : vector<128x128xi32>
    %41 = arith.cmpi sle, %40, %39 : vector<128x128xi32>
    %42 = vector.shape_cast %41 : vector<128x128xi1> to vector<1x128x128xi1>
    %cst_26 = arith.constant 0.000000e+00 : f32
    %43 = vector.shape_cast %42 : vector<1x128x128xi1> to vector<1x128x128xi1>
    %44 = vector.broadcast %43 : vector<1x128x128xi1> to vector<4x128x128xi1>
    %45 = vector.broadcast %cst_26 : f32 to vector<4x128x128xf32>
    %46 = arith.select %44, %38, %45 : vector<4x128x128xi1>, vector<4x128x128xf32>
    %47 = arith.addf %20, %46 : vector<4x128x128xf32>
    %c0_27 = arith.constant 0 : index
    %c0_28 = arith.constant 0 : index
    %c0_29 = arith.constant 0 : index
    %48 = vector.load %arg7[%c0_27, %c0_28, %c0_29] : memref<1x1x128xf32, #tpu.memory_space<vmem>>, vector<1x1x128xf32>
    %49 = vector.broadcast %48 : vector<1x1x128xf32> to vector<4x128x128xf32>
    %50 = arith.addf %47, %49 : vector<4x128x128xf32>
    %cst_30 = arith.constant dense<0xFF800000> : vector<4x128xf32>
    %51 = vector.multi_reduction <maximumf>, %50, %cst_30 [2] : vector<4x128x128xf32> to vector<4x128xf32>
    %52 = vector.shape_cast %51 : vector<4x128xf32> to vector<4x128x1xf32>
    %53 = vector.broadcast %52 : vector<4x128x1xf32> to vector<4x128x128xf32>
    %54 = arith.subf %50, %53 : vector<4x128x128xf32>
    %55 = math.exp %54 : vector<4x128x128xf32>
    %cst_31 = arith.constant dense<0.000000e+00> : vector<4x128xf32>
    %56 = vector.multi_reduction <add>, %55, %cst_31 [2] : vector<4x128x128xf32> to vector<4x128xf32>
    %57 = vector.shape_cast %56 : vector<4x128xf32> to vector<4x128x1xf32>
    %58 = tpu.reciprocal %57 {approx = true} : vector<4x128x1xf32> -> vector<4x128x1xf32>
    %59 = vector.broadcast %58 : vector<4x128x1xf32> to vector<4x128x128xf32>
    %60 = arith.mulf %55, %59 : vector<4x128x128xf32>
    %61 = arith.truncf %60 : vector<4x128x128xf32> to vector<4x128x128xbf16>
    "tpu.trace_start"() <{level = 10 : i32, message = "hqk,hkd->hqd"}> : () -> ()
    %cst_32 = arith.constant dense<0.000000e+00> : vector<4x128x16xf32>
    %62 = tpu.matmul %61, %6, %cst_32 {dimension_numbers = #tpu.dot_dimension_numbers<[2], [1], [1], [2], [0, 0, 0, 1, 1, 2], [0], [0]>} : vector<4x128x128xbf16>, vector<4x128x16xbf16>, vector<4x128x16xf32> -> vector<4x128x16xf32>
    "tpu.trace_stop"() : () -> ()
    %63 = arith.truncf %62 : vector<4x128x16xf32> to vector<4x128x16xbf16>
    %cst_33 = arith.constant 0.000000e+00 : f32
    %64 = vector.broadcast %cst_33 : f32 to vector<128x64xf32>
    %65 = vector.extract_strided_slice %63 {offsets = [0, 0, 0], sizes = [1, 128, 16], strides = [1, 1, 1]} : vector<4x128x16xbf16> to vector<1x128x16xbf16>
    %66 = vector.shape_cast %65 : vector<1x128x16xbf16> to vector<128x16xbf16>
    %c0_34 = arith.constant 0 : index
    %c0_35 = arith.constant 0 : index
    %c0_36 = arith.constant 0 : index
    %67 = vector.load %arg9[%c0_34, %c0_35, %c0_36] : memref<4x16x64xbf16, #tpu.memory_space<vmem>>, vector<1x16x64xbf16>
    %68 = vector.shape_cast %67 : vector<1x16x64xbf16> to vector<16x64xbf16>
    %cst_37 = arith.constant dense<0.000000e+00> : vector<128x64xf32>
    %69 = tpu.matmul %66, %68, %cst_37 {dimension_numbers = #tpu.dot_dimension_numbers<[1], [0], [0], [1], [0, 0, 1, 1], [], []>} : vector<128x16xbf16>, vector<16x64xbf16>, vector<128x64xf32> -> vector<128x64xf32>
    %70 = arith.addf %64, %69 : vector<128x64xf32>
    %71 = vector.extract_strided_slice %63 {offsets = [1, 0, 0], sizes = [1, 128, 16], strides = [1, 1, 1]} : vector<4x128x16xbf16> to vector<1x128x16xbf16>
    %72 = vector.shape_cast %71 : vector<1x128x16xbf16> to vector<128x16xbf16>
    %c1 = arith.constant 1 : index
    %c0_38 = arith.constant 0 : index
    %c0_39 = arith.constant 0 : index
    %73 = vector.load %arg9[%c1, %c0_38, %c0_39] : memref<4x16x64xbf16, #tpu.memory_space<vmem>>, vector<1x16x64xbf16>
    %74 = vector.shape_cast %73 : vector<1x16x64xbf16> to vector<16x64xbf16>
    %cst_40 = arith.constant dense<0.000000e+00> : vector<128x64xf32>
    %75 = tpu.matmul %72, %74, %cst_40 {dimension_numbers = #tpu.dot_dimension_numbers<[1], [0], [0], [1], [0, 0, 1, 1], [], []>} : vector<128x16xbf16>, vector<16x64xbf16>, vector<128x64xf32> -> vector<128x64xf32>
    %76 = arith.addf %70, %75 : vector<128x64xf32>
    %77 = vector.extract_strided_slice %63 {offsets = [2, 0, 0], sizes = [1, 128, 16], strides = [1, 1, 1]} : vector<4x128x16xbf16> to vector<1x128x16xbf16>
    %78 = vector.shape_cast %77 : vector<1x128x16xbf16> to vector<128x16xbf16>
    %c2 = arith.constant 2 : index
    %c0_41 = arith.constant 0 : index
    %c0_42 = arith.constant 0 : index
    %79 = vector.load %arg9[%c2, %c0_41, %c0_42] : memref<4x16x64xbf16, #tpu.memory_space<vmem>>, vector<1x16x64xbf16>
    %80 = vector.shape_cast %79 : vector<1x16x64xbf16> to vector<16x64xbf16>
    %cst_43 = arith.constant dense<0.000000e+00> : vector<128x64xf32>
    %81 = tpu.matmul %78, %80, %cst_43 {dimension_numbers = #tpu.dot_dimension_numbers<[1], [0], [0], [1], [0, 0, 1, 1], [], []>} : vector<128x16xbf16>, vector<16x64xbf16>, vector<128x64xf32> -> vector<128x64xf32>
    %82 = arith.addf %76, %81 : vector<128x64xf32>
    %83 = vector.extract_strided_slice %63 {offsets = [3, 0, 0], sizes = [1, 128, 16], strides = [1, 1, 1]} : vector<4x128x16xbf16> to vector<1x128x16xbf16>
    %84 = vector.shape_cast %83 : vector<1x128x16xbf16> to vector<128x16xbf16>
    %c3 = arith.constant 3 : index
    %c0_44 = arith.constant 0 : index
    %c0_45 = arith.constant 0 : index
    %85 = vector.load %arg9[%c3, %c0_44, %c0_45] : memref<4x16x64xbf16, #tpu.memory_space<vmem>>, vector<1x16x64xbf16>
    %86 = vector.shape_cast %85 : vector<1x16x64xbf16> to vector<16x64xbf16>
    %cst_46 = arith.constant dense<0.000000e+00> : vector<128x64xf32>
    %87 = tpu.matmul %84, %86, %cst_46 {dimension_numbers = #tpu.dot_dimension_numbers<[1], [0], [0], [1], [0, 0, 1, 1], [], []>} : vector<128x16xbf16>, vector<16x64xbf16>, vector<128x64xf32> -> vector<128x64xf32>
    %88 = arith.addf %82, %87 : vector<128x64xf32>
    %c0_47 = arith.constant 0 : index
    %c0_48 = arith.constant 0 : index
    %89 = vector.load %arg10[%c0_47, %c0_48] : memref<1x64xf32, #tpu.memory_space<vmem>>, vector<1x64xf32>
    %90 = vector.broadcast %89 : vector<1x64xf32> to vector<128x64xf32>
    %91 = arith.addf %88, %90 : vector<128x64xf32>
    %c0_49 = arith.constant 0 : index
    %c0_50 = arith.constant 0 : index
    %c0_51 = arith.constant 0 : index
    %92 = vector.load %arg8[%c0_49, %c0_50, %c0_51] : memref<1x128x64xf32, #tpu.memory_space<vmem>>, vector<1x128x64xf32>
    %93 = vector.shape_cast %92 : vector<1x128x64xf32> to vector<128x64xf32>
    %94 = arith.addf %91, %93 : vector<128x64xf32>
    %cst_52 = arith.constant dense<0.000000e+00> : vector<128xf32>
    %95 = vector.multi_reduction <add>, %94, %cst_52 [1] : vector<128x64xf32> to vector<128xf32>
    %96 = vector.shape_cast %95 : vector<128xf32> to vector<128x1xf32>
    %cst_53 = arith.constant 6.400000e+01 : f32
    %97 = vector.broadcast %cst_53 : f32 to vector<128x1xf32>
    %98 = arith.divf %96, %97 : vector<128x1xf32>
    %99 = vector.broadcast %98 : vector<128x1xf32> to vector<128x64xf32>
    %100 = arith.subf %94, %99 : vector<128x64xf32>
    %101 = arith.mulf %100, %100 : vector<128x64xf32>
    %cst_54 = arith.constant dense<0.000000e+00> : vector<128xf32>
    %102 = vector.multi_reduction <add>, %101, %cst_54 [1] : vector<128x64xf32> to vector<128xf32>
    %103 = vector.shape_cast %102 : vector<128xf32> to vector<128x1xf32>
    %cst_55 = arith.constant 6.400000e+01 : f32
    %104 = vector.broadcast %cst_55 : f32 to vector<128x1xf32>
    %105 = arith.divf %103, %104 : vector<128x1xf32>
    %cst_56 = arith.constant 9.99999974E-6 : f32
    %106 = vector.broadcast %cst_56 : f32 to vector<128x1xf32>
    %107 = arith.addf %105, %106 : vector<128x1xf32>
    %108 = math.rsqrt %107 : vector<128x1xf32>
    %109 = vector.broadcast %108 : vector<128x1xf32> to vector<128x64xf32>
    %110 = arith.mulf %100, %109 : vector<128x64xf32>
    %c0_57 = arith.constant 0 : index
    %c0_58 = arith.constant 0 : index
    %111 = vector.load %arg11[%c0_57, %c0_58] : memref<1x64xf32, #tpu.memory_space<vmem>>, vector<1x64xf32>
    %112 = vector.broadcast %111 : vector<1x64xf32> to vector<128x64xf32>
    %113 = arith.mulf %110, %112 : vector<128x64xf32>
    %c0_59 = arith.constant 0 : index
    %c0_60 = arith.constant 0 : index
    %114 = vector.load %arg12[%c0_59, %c0_60] : memref<1x64xf32, #tpu.memory_space<vmem>>, vector<1x64xf32>
    %115 = vector.broadcast %114 : vector<1x64xf32> to vector<128x64xf32>
    %116 = arith.addf %113, %115 : vector<128x64xf32>
    %c0_61 = arith.constant 0 : index
    %c0_62 = arith.constant 0 : index
    %c0_63 = arith.constant 0 : index
    %117 = vector.load %arg13[%c0_61, %c0_62, %c0_63] : memref<1x128x64xf32, #tpu.memory_space<vmem>>, vector<1x128x64xf32>
    %118 = vector.shape_cast %117 : vector<1x128x64xf32> to vector<128x64xf32>
    %119 = vector.shape_cast %116 : vector<128x64xf32> to vector<1x128x64xf32>
    tpu.vector_store %arg13[%c0_61, %c0_62, %c0_63], %119 {strides = array<i32>} : memref<1x128x64xf32, #tpu.memory_space<vmem>>, vector<1x128x64xf32>,
    return
  }
  func.func @transform_0(%arg0: i32) -> (i32, i32, i32, i32) {
    %c0_i32 = arith.constant 0 : i32
    %c0_i32_0 = arith.constant 0 : i32
    %c0_i32_1 = arith.constant 0 : i32
    %c0_i32_2 = arith.constant 0 : i32
    return %arg0, %c0_i32, %c0_i32_0, %c0_i32_1 : i32, i32, i32, i32
  }
  func.func @transform_1(%arg0: i32) -> (i32, i32, i32, i32) {
    %c0_i32 = arith.constant 0 : i32
    %c0_i32_0 = arith.constant 0 : i32
    %c0_i32_1 = arith.constant 0 : i32
    %c0_i32_2 = arith.constant 0 : i32
    return %arg0, %c0_i32, %c0_i32_0, %c0_i32_1 : i32, i32, i32, i32
  }
  func.func @transform_2(%arg0: i32) -> (i32, i32, i32, i32) {
    %c0_i32 = arith.constant 0 : i32
    %c0_i32_0 = arith.constant 0 : i32
    %c0_i32_1 = arith.constant 0 : i32
    %c0_i32_2 = arith.constant 0 : i32
    return %arg0, %c0_i32, %c0_i32_0, %c0_i32_1 : i32, i32, i32, i32
  }
  func.func @transform_3(%arg0: i32) -> (i32, i32, i32) {
    %c0_i32 = arith.constant 0 : i32
    %c0_i32_0 = arith.constant 0 : i32
    %c0_i32_1 = arith.constant 0 : i32
    %c0_i32_2 = arith.constant 0 : i32
    return %c0_i32, %c0_i32_0, %c0_i32_1 : i32, i32, i32
  }
  func.func @transform_4(%arg0: i32) -> (i32, i32, i32) {
    %c0_i32 = arith.constant 0 : i32
    %c0_i32_0 = arith.constant 0 : i32
    %c0_i32_1 = arith.constant 0 : i32
    %c0_i32_2 = arith.constant 0 : i32
    return %c0_i32, %c0_i32_0, %c0_i32_1 : i32, i32, i32
  }
  func.func @transform_5(%arg0: i32) -> (i32, i32, i32) {
    %c0_i32 = arith.constant 0 : i32
    %c0_i32_0 = arith.constant 0 : i32
    %c0_i32_1 = arith.constant 0 : i32
    %c0_i32_2 = arith.constant 0 : i32
    return %c0_i32, %c0_i32_0, %c0_i32_1 : i32, i32, i32
  }
  func.func @transform_6(%arg0: i32) -> (i32, i32, i32) {
    %c0_i32 = arith.constant 0 : i32
    %c0_i32_0 = arith.constant 0 : i32
    %c0_i32_1 = arith.constant 0 : i32
    return %arg0, %c0_i32, %c0_i32_0 : i32, i32, i32
  }
  func.func @transform_7(%arg0: i32) -> (i32, i32, i32) {
    %c0_i32 = arith.constant 0 : i32
    %c0_i32_0 = arith.constant 0 : i32
    %c0_i32_1 = arith.constant 0 : i32
    return %arg0, %c0_i32, %c0_i32_0 : i32, i32, i32
  }
  func.func @transform_8(%arg0: i32) -> (i32, i32, i32) {
    %c0_i32 = arith.constant 0 : i32
    %c0_i32_0 = arith.constant 0 : i32
    %c0_i32_1 = arith.constant 0 : i32
    %c0_i32_2 = arith.constant 0 : i32
    return %c0_i32, %c0_i32_0, %c0_i32_1 : i32, i32, i32
  }
  func.func @transform_9(%arg0: i32) -> (i32, i32) {
    %c0_i32 = arith.constant 0 : i32
    %c0_i32_0 = arith.constant 0 : i32
    %c0_i32_1 = arith.constant 0 : i32
    return %c0_i32, %c0_i32_0 : i32, i32
  }
  func.func @transform_10(%arg0: i32) -> (i32, i32) {
    %c0_i32 = arith.constant 0 : i32
    %c0_i32_0 = arith.constant 0 : i32
    %c0_i32_1 = arith.constant 0 : i32
    return %c0_i32, %c0_i32_0 : i32, i32
  }
  func.func @transform_11(%arg0: i32) -> (i32, i32) {
    %c0_i32 = arith.constant 0 : i32
    %c0_i32_0 = arith.constant 0 : i32
    %c0_i32_1 = arith.constant 0 : i32
    return %c0_i32, %c0_i32_0 : i32, i32
  }
  func.func @transform_12(%arg0: i32) -> (i32, i32, i32) {
    %c0_i32 = arith.constant 0 : i32
    %c0_i32_0 = arith.constant 0 : i32
    %c0_i32_1 = arith.constant 0 : i32
    return %arg0, %c0_i32, %c0_i32_0 : i32, i32, i32
  }
}

module attributes {stable_mosaic.version = 11 : i64} {
  func.func @_linear_add_ln_kernel(%arg0: i32, %arg1: i32, %arg2: memref<256x128xbf16, #tpu.memory_space<vmem>>, %arg3: memref<128x64xbf16, #tpu.memory_space<vmem>>, %arg4: memref<1x64xf32, #tpu.memory_space<vmem>>, %arg5: memref<256x64xf32, #tpu.memory_space<vmem>>, %arg6: memref<1x64xf32, #tpu.memory_space<vmem>>, %arg7: memref<1x64xf32, #tpu.memory_space<vmem>>, %arg8: memref<256x64xf32, #tpu.memory_space<vmem>>, %arg9: memref<256x64xf32, #tpu.memory_space<vmem>>) attributes {dimension_semantics = [#tpu.dimension_semantics<parallel>, #tpu.dimension_semantics<arbitrary>], iteration_bounds = array<i64: 1, 1>, scalar_prefetch = 0 : i64, scratch_operands = 1 : i64, tpu.core_type = #tpu.core_type<tc>, window_params = [{transform_indices = @transform_0, window_bounds = array<i64: 256, 128>}, {transform_indices = @transform_1, window_bounds = array<i64: 128, 64>}, {pipeline_mode = #tpu.pipeline_mode<synchronous>, transform_indices = @transform_2, window_bounds = array<i64: 1, 64>}, {transform_indices = @transform_3, window_bounds = array<i64: 256, 64>}, {pipeline_mode = #tpu.pipeline_mode<synchronous>, transform_indices = @transform_4, window_bounds = array<i64: 1, 64>}, {pipeline_mode = #tpu.pipeline_mode<synchronous>, transform_indices = @transform_5, window_bounds = array<i64: 1, 64>}, {transform_indices = @transform_6, window_bounds = array<i64: 256, 64>}]} {
    %c0_i32 = arith.constant 0 : i32
    %0 = arith.cmpi eq, %arg1, %c0_i32 : i32
    %1 = arith.extui %0 : i1 to i32
    %c0_i32_0 = arith.constant 0 : i32
    %2 = arith.cmpi ne, %1, %c0_i32_0 : i32
    scf.if %2 {
      %cst_10 = arith.constant 0.000000e+00 : f32
      %12 = vector.broadcast %cst_10 : f32 to vector<256x64xf32>
      %c0_11 = arith.constant 0 : index
      %c0_12 = arith.constant 0 : index
      %13 = vector.load %arg9[%c0_11, %c0_12] : memref<256x64xf32, #tpu.memory_space<vmem>>, vector<256x64xf32>
      tpu.vector_store %arg9[%c0_11, %c0_12], %12 {strides = array<i32>} : memref<256x64xf32, #tpu.memory_space<vmem>>, vector<256x64xf32>,
    } else {
    }
    %c0 = arith.constant 0 : index
    %c0_1 = arith.constant 0 : index
    %3 = vector.load %arg9[%c0, %c0_1] : memref<256x64xf32, #tpu.memory_space<vmem>>, vector<256x64xf32>
    %c0_2 = arith.constant 0 : index
    %c0_3 = arith.constant 0 : index
    %4 = vector.load %arg2[%c0_2, %c0_3] : memref<256x128xbf16, #tpu.memory_space<vmem>>, vector<256x128xbf16>
    %c0_4 = arith.constant 0 : index
    %c0_5 = arith.constant 0 : index
    %5 = vector.load %arg3[%c0_4, %c0_5] : memref<128x64xbf16, #tpu.memory_space<vmem>>, vector<128x64xbf16>
    %cst = arith.constant dense<0.000000e+00> : vector<256x64xf32>
    %6 = tpu.matmul %4, %5, %cst {dimension_numbers = #tpu.dot_dimension_numbers<[1], [0], [0], [1], [0, 0, 1, 1], [], []>} : vector<256x128xbf16>, vector<128x64xbf16>, vector<256x64xf32> -> vector<256x64xf32>
    %7 = arith.addf %3, %6 : vector<256x64xf32>
    %c0_6 = arith.constant 0 : index
    %c0_7 = arith.constant 0 : index
    %8 = vector.load %arg9[%c0_6, %c0_7] : memref<256x64xf32, #tpu.memory_space<vmem>>, vector<256x64xf32>
    tpu.vector_store %arg9[%c0_6, %c0_7], %7 {strides = array<i32>} : memref<256x64xf32, #tpu.memory_space<vmem>>, vector<256x64xf32>,
    %c0_i32_8 = arith.constant 0 : i32
    %9 = arith.cmpi eq, %arg1, %c0_i32_8 : i32
    %10 = arith.extui %9 : i1 to i32
    %c0_i32_9 = arith.constant 0 : i32
    %11 = arith.cmpi ne, %10, %c0_i32_9 : i32
    scf.if %11 {
      %c0_10 = arith.constant 0 : index
      %c0_11 = arith.constant 0 : index
      %12 = vector.load %arg9[%c0_10, %c0_11] : memref<256x64xf32, #tpu.memory_space<vmem>>, vector<256x64xf32>
      %c0_12 = arith.constant 0 : index
      %c0_13 = arith.constant 0 : index
      %13 = vector.load %arg4[%c0_12, %c0_13] : memref<1x64xf32, #tpu.memory_space<vmem>>, vector<1x64xf32>
      %14 = vector.broadcast %13 : vector<1x64xf32> to vector<256x64xf32>
      %15 = arith.addf %12, %14 : vector<256x64xf32>
      %c0_14 = arith.constant 0 : index
      %c0_15 = arith.constant 0 : index
      %16 = vector.load %arg5[%c0_14, %c0_15] : memref<256x64xf32, #tpu.memory_space<vmem>>, vector<256x64xf32>
      %17 = arith.addf %15, %16 : vector<256x64xf32>
      %cst_16 = arith.constant dense<0.000000e+00> : vector<256xf32>
      %18 = vector.multi_reduction <add>, %17, %cst_16 [1] : vector<256x64xf32> to vector<256xf32>
      %19 = vector.shape_cast %18 : vector<256xf32> to vector<256x1xf32>
      %cst_17 = arith.constant 6.400000e+01 : f32
      %20 = vector.broadcast %cst_17 : f32 to vector<256x1xf32>
      %21 = arith.divf %19, %20 : vector<256x1xf32>
      %22 = vector.broadcast %21 : vector<256x1xf32> to vector<256x64xf32>
      %23 = arith.subf %17, %22 : vector<256x64xf32>
      %24 = arith.mulf %23, %23 : vector<256x64xf32>
      %cst_18 = arith.constant dense<0.000000e+00> : vector<256xf32>
      %25 = vector.multi_reduction <add>, %24, %cst_18 [1] : vector<256x64xf32> to vector<256xf32>
      %26 = vector.shape_cast %25 : vector<256xf32> to vector<256x1xf32>
      %cst_19 = arith.constant 6.400000e+01 : f32
      %27 = vector.broadcast %cst_19 : f32 to vector<256x1xf32>
      %28 = arith.divf %26, %27 : vector<256x1xf32>
      %cst_20 = arith.constant 9.99999974E-6 : f32
      %29 = vector.broadcast %cst_20 : f32 to vector<256x1xf32>
      %30 = arith.addf %28, %29 : vector<256x1xf32>
      %31 = math.rsqrt %30 : vector<256x1xf32>
      %32 = vector.broadcast %31 : vector<256x1xf32> to vector<256x64xf32>
      %33 = arith.mulf %23, %32 : vector<256x64xf32>
      %c0_21 = arith.constant 0 : index
      %c0_22 = arith.constant 0 : index
      %34 = vector.load %arg6[%c0_21, %c0_22] : memref<1x64xf32, #tpu.memory_space<vmem>>, vector<1x64xf32>
      %35 = vector.broadcast %34 : vector<1x64xf32> to vector<256x64xf32>
      %36 = arith.mulf %33, %35 : vector<256x64xf32>
      %c0_23 = arith.constant 0 : index
      %c0_24 = arith.constant 0 : index
      %37 = vector.load %arg7[%c0_23, %c0_24] : memref<1x64xf32, #tpu.memory_space<vmem>>, vector<1x64xf32>
      %38 = vector.broadcast %37 : vector<1x64xf32> to vector<256x64xf32>
      %39 = arith.addf %36, %38 : vector<256x64xf32>
      %c0_25 = arith.constant 0 : index
      %c0_26 = arith.constant 0 : index
      %40 = vector.load %arg8[%c0_25, %c0_26] : memref<256x64xf32, #tpu.memory_space<vmem>>, vector<256x64xf32>
      tpu.vector_store %arg8[%c0_25, %c0_26], %39 {strides = array<i32>} : memref<256x64xf32, #tpu.memory_space<vmem>>, vector<256x64xf32>,
    } else {
    }
    return
  }
  func.func @transform_0(%arg0: i32, %arg1: i32) -> (i32, i32) {
    %c0_i32 = arith.constant 0 : i32
    return %arg0, %arg1 : i32, i32
  }
  func.func @transform_1(%arg0: i32, %arg1: i32) -> (i32, i32) {
    %c0_i32 = arith.constant 0 : i32
    %c0_i32_0 = arith.constant 0 : i32
    return %arg1, %c0_i32 : i32, i32
  }
  func.func @transform_2(%arg0: i32, %arg1: i32) -> (i32, i32) {
    %c0_i32 = arith.constant 0 : i32
    %c0_i32_0 = arith.constant 0 : i32
    %c0_i32_1 = arith.constant 0 : i32
    return %c0_i32, %c0_i32_0 : i32, i32
  }
  func.func @transform_3(%arg0: i32, %arg1: i32) -> (i32, i32) {
    %c0_i32 = arith.constant 0 : i32
    %c0_i32_0 = arith.constant 0 : i32
    return %arg0, %c0_i32 : i32, i32
  }
  func.func @transform_4(%arg0: i32, %arg1: i32) -> (i32, i32) {
    %c0_i32 = arith.constant 0 : i32
    %c0_i32_0 = arith.constant 0 : i32
    %c0_i32_1 = arith.constant 0 : i32
    return %c0_i32, %c0_i32_0 : i32, i32
  }
  func.func @transform_5(%arg0: i32, %arg1: i32) -> (i32, i32) {
    %c0_i32 = arith.constant 0 : i32
    %c0_i32_0 = arith.constant 0 : i32
    %c0_i32_1 = arith.constant 0 : i32
    return %c0_i32, %c0_i32_0 : i32, i32
  }
  func.func @transform_6(%arg0: i32, %arg1: i32) -> (i32, i32) {
    %c0_i32 = arith.constant 0 : i32
    %c0_i32_0 = arith.constant 0 : i32
    return %arg0, %c0_i32 : i32, i32
  }
}

</mosaic_0001>

<llo_original>
// kernel: rel0_encoder_forward.10
$region0: #{rel0_encoder_forward.10}
  #allocation0 [shape = 'u32[]', space=smem, size = 0x4, offset = 0x4, fixed_abs, tag = 'smem constant byte address 0x4 - core index']
  #allocation1 [shape = 'u32[144,128]{1,0:T(1,128)}', space=vmem, size = 0x12000, scoped, tag = 'internal scratch']
  #allocation2 [shape = 'f32[256,192]{1,0:T(8,128)}', space=vmem, size = 0x40000, scoped, tag = 'scratch operand']
  %s0 = inlined_call_operand.vmem [shape: f32[256,64], index: 0, kind: input, shape index: {}]
  %s1 = inlined_call_operand.vmem [shape: bf16[64,192], index: 1, kind: input, shape index: {}]
  %s2 = inlined_call_operand.vmem [shape: f32[1,192], index: 2, kind: input, shape index: {}]
  %s3 = inlined_call_operand.vmem [shape: bf16[256,192], index: 3, kind: output, shape index: {}]
  %s4 = sld [smem:[#allocation0]]
  $region30: #{rel0_encoder_forward.10} parent=0
    _
  %s6 = ssub.s32 1, %s4
  %s7 = scalar_select 0, %s6, %s4
  // Predicated region
  $region2: #{rel0_encoder_forward.10} parent=0 // pred_check
    _
  $region3: #{rel0_encoder_forward.10} parent=0 // pred_check_branch
    %9 = sbr.rel (0) target = $region5
  $region4: #{rel0_encoder_forward.10} parent=0 // pred_region
    _
  $region5: #{rel0_encoder_forward.10} parent=0 // pred_fallthru
    _
  // Predicated region
  $region6: #{rel0_encoder_forward.10} parent=0 // pred_check
    _
  $region7: #{rel0_encoder_forward.10} parent=0 // pred_check_branch
    %11 = sbr.rel (0) target = $region9
  $region8: #{rel0_encoder_forward.10} parent=0 // pred_region
    _
  $region9: #{rel0_encoder_forward.10} parent=0 // pred_fallthru
    _
  // Predicated region
  $region10: #{rel0_encoder_forward.10} parent=0 // pred_check
    _
  $region11: #{rel0_encoder_forward.10} parent=0 // pred_check_branch
    %13 = sbr.rel (0) target = $region13
  $region12: #{rel0_encoder_forward.10} parent=0 // pred_region
    _
  $region13: #{rel0_encoder_forward.10} parent=0 // pred_fallthru
    _
  %p15 = scmp.eq.s32.totalorder 0, 0
  // Predicated region
  $region14: #{rel0_encoder_forward.10} parent=0 // pred_check
    %p16 = pneg %p15
  $region15: #{rel0_encoder_forward.10} parent=0 // pred_check_branch
    %18 = sbr.rel (%p16) target = $region17
  $region16: #{rel0_encoder_forward.10} parent=0 // pred_region
    %19 = vst [vmem:[#allocation2] sm:$0xff] 0.0
    %vm20 = vcmask 523264
    %21 = vst.msk [vmem:[#allocation2 + $0x8] sm:$0xff] %vm20, 0.0
    %22 = vst [vmem:[#allocation2 + $0x10] sm:$0xff] 0.0
    %23 = vst.msk [vmem:[#allocation2 + $0x18] sm:$0xff] %vm20, 0.0
    %24 = vst [vmem:[#allocation2 + $0x20] sm:$0xff] 0.0
    %25 = vst.msk [vmem:[#allocation2 + $0x28] sm:$0xff] %vm20, 0.0
    %26 = vst [vmem:[#allocation2 + $0x30] sm:$0xff] 0.0
    %27 = vst.msk [vmem:[#allocation2 + $0x38] sm:$0xff] %vm20, 0.0
    %28 = vst [vmem:[#allocation2 + $0x40] sm:$0xff] 0.0
    %29 = vst.msk [vmem:[#allocation2 + $0x48] sm:$0xff] %vm20, 0.0
    %30 = vst [vmem:[#allocation2 + $0x50] sm:$0xff] 0.0
    %31 = vst.msk [vmem:[#allocation2 + $0x58] sm:$0xff] %vm20, 0.0
    %32 = vst [vmem:[#allocation2 + $0x60] sm:$0xff] 0.0
    %33 = vst.msk [vmem:[#allocation2 + $0x68] sm:$0xff] %vm20, 0.0
    %34 = vst [vmem:[#allocation2 + $0x70] sm:$0xff] 0.0
    %35 = vst.msk [vmem:[#allocation2 + $0x78] sm:$0xff] %vm20, 0.0
    %36 = vst [vmem:[#allocation2 + $0x80] sm:$0xff] 0.0
    %37 = vst.msk [vmem:[#allocation2 + $0x88] sm:$0xff] %vm20, 0.0
    %38 = vst [vmem:[#allocation2 + $0x90] sm:$0xff] 0.0
    %39 = vst.msk [vmem:[#allocation2 + $0x98] sm:$0xff] %vm20, 0.0
    %40 = vst [vmem:[#allocation2 + $0xa0] sm:$0xff] 0.0
    %41 = vst.msk [vmem:[#allocation2 + $0xa8] sm:$0xff] %vm20, 0.0
    %42 = vst [vmem:[#allocation2 + $0xb0] sm:$0xff] 0.0
    %43 = vst.msk [vmem:[#allocation2 + $0xb8] sm:$0xff] %vm20, 0.0
    %44 = vst [vmem:[#allocation2 + $0xc0] sm:$0xff] 0.0
    %45 = vst.msk [vmem:[#allocation2 + $0xc8] sm:$0xff] %vm20, 0.0
    %46 = vst [vmem:[#allocation2 + $0xd0] sm:$0xff] 0.0
    %47 = vst.msk [vmem:[#allocation2 + $0xd8] sm:$0xff] %vm20, 0.0
    %48 = vst [vmem:[#allocation2 + $0xe0] sm:$0xff] 0.0
    %49 = vst.msk [vmem:[#allocation2 + $0xe8] sm:$0xff] %vm20, 0.0
    %50 = vst [vmem:[#allocation2 + $0xf0] sm:$0xff] 0.0
    %51 = vst.msk [vmem:[#allocation2 + $0xf8] sm:$0xff] %vm20, 0.0
    %52 = vst [vmem:[#allocation2 + $0x100] sm:$0xff] 0.0
    %53 = vst.msk [vmem:[#allocation2 + $0x108] sm:$0xff] %vm20, 0.0
    %54 = vst [vmem:[#allocation2 + $0x110] sm:$0xff] 0.0
    %55 = vst.msk [vmem:[#allocation2 + $0x118] sm:$0xff] %vm20, 0.0
    %56 = vst [vmem:[#allocation2 + $0x120] sm:$0xff] 0.0
    %57 = vst.msk [vmem:[#allocation2 + $0x128] sm:$0xff] %vm20, 0.0
    %58 = vst [vmem:[#allocation2 + $0x130] sm:$0xff] 0.0
    %59 = vst.msk [vmem:[#allocation2 + $0x138] sm:$0xff] %vm20, 0.0
    %60 = vst [vmem:[#allocation2 + $0x140] sm:$0xff] 0.0
    %61 = vst.msk [vmem:[#allocation2 + $0x148] sm:$0xff] %vm20, 0.0
    %62 = vst [vmem:[#allocation2 + $0x150] sm:$0xff] 0.0
    %63 = vst.msk [vmem:[#allocation2 + $0x158] sm:$0xff] %vm20, 0.0
    %64 = vst [vmem:[#allocation2 + $0x160] sm:$0xff] 0.0
    %65 = vst.msk [vmem:[#allocation2 + $0x168] sm:$0xff] %vm20, 0.0
    %66 = vst [vmem:[#allocation2 + $0x170] sm:$0xff] 0.0
    %67 = vst.msk [vmem:[#allocation2 + $0x178] sm:$0xff] %vm20, 0.0
    %68 = vst [vmem:[#allocation2 + $0x180] sm:$0xff] 0.0
    %69 = vst.msk [vmem:[#allocation2 + $0x188] sm:$0xff] %vm20, 0.0
    %70 = vst [vmem:[#allocation2 + $0x190] sm:$0xff] 0.0
    %71 = vst.msk [vmem:[#allocation2 + $0x198] sm:$0xff] %vm20, 0.0
    %72 = vst [vmem:[#allocation2 + $0x1a0] sm:$0xff] 0.0
    %73 = vst.msk [vmem:[#allocation2 + $0x1a8] sm:$0xff] %vm20, 0.0
    %74 = vst [vmem:[#allocation2 + $0x1b0] sm:$0xff] 0.0
    %75 = vst.msk [vmem:[#allocation2 + $0x1b8] sm:$0xff] %vm20, 0.0
    %76 = vst [vmem:[#allocation2 + $0x1c0] sm:$0xff] 0.0
    %77 = vst.msk [vmem:[#allocation2 + $0x1c8] sm:$0xff] %vm20, 0.0
    %78 = vst [vmem:[#allocation2 + $0x1d0] sm:$0xff] 0.0
    %79 = vst.msk [vmem:[#allocation2 + $0x1d8] sm:$0xff] %vm20, 0.0
    %80 = vst [vmem:[#allocation2 + $0x1e0] sm:$0xff] 0.0
    %81 = vst.msk [vmem:[#allocation2 + $0x1e8] sm:$0xff] %vm20, 0.0
    %82 = vst [vmem:[#allocation2 + $0x1f0] sm:$0xff] 0.0
    %83 = vst.msk [vmem:[#allocation2 + $0x1f8] sm:$0xff] %vm20, 0.0
  $region17: #{rel0_encoder_forward.10} parent=0 // pred_fallthru
    _
  %v84 = vld [vmem:[#allocation2] sm:$0xff]
  %v85 = vld [vmem:[#allocation2 + $0x8] sm:$0xff]
  %v86 = vld [vmem:[#allocation2 + $0x10] sm:$0xff]
  %v87 = vld [vmem:[#allocation2 + $0x18] sm:$0xff]
  %v88 = vld [vmem:[#allocation2 + $0x20] sm:$0xff]
  %v89 = vld [vmem:[#allocation2 + $0x28] sm:$0xff]
  %v90 = vld [vmem:[#allocation2 + $0x30] sm:$0xff]
  %v91 = vld [vmem:[#allocation2 + $0x38] sm:$0xff]
  %v92 = vld [vmem:[#allocation2 + $0x40] sm:$0xff]
  %v93 = vld [vmem:[#allocation2 + $0x48] sm:$0xff]
  %v94 = vld [vmem:[#allocation2 + $0x50] sm:$0xff]
  %v95 = vld [vmem:[#allocation2 + $0x58] sm:$0xff]
  %v96 = vld [vmem:[#allocation2 + $0x60] sm:$0xff]
  %v97 = vld [vmem:[#allocation2 + $0x68] sm:$0xff]
  %v98 = vld [vmem:[#allocation2 + $0x70] sm:$0xff]
  %v99 = vld [vmem:[#allocation2 + $0x78] sm:$0xff]
  %v100 = vld [vmem:[#allocation2 + $0x80] sm:$0xff]
  %v101 = vld [vmem:[#allocation2 + $0x88] sm:$0xff]
  %v102 = vld [vmem:[#allocation2 + $0x90] sm:$0xff]
  %v103 = vld [vmem:[#allocation2 + $0x98] sm:$0xff]
  %v104 = vld [vmem:[#allocation2 + $0xa0] sm:$0xff]
  %v105 = vld [vmem:[#allocation2 + $0xa8] sm:$0xff]
  %v106 = vld [vmem:[#allocation2 + $0xb0] sm:$0xff]
  %v107 = vld [vmem:[#allocation2 + $0xb8] sm:$0xff]
  %v108 = vld [vmem:[#allocation2 + $0xc0] sm:$0xff]
  %v109 = vld [vmem:[#allocation2 + $0xc8] sm:$0xff]
  %v110 = vld [vmem:[#allocation2 + $0xd0] sm:$0xff]
  %v111 = vld [vmem:[#allocation2 + $0xd8] sm:$0xff]
  %v112 = vld [vmem:[#allocation2 + $0xe0] sm:$0xff]
  %v113 = vld [vmem:[#allocation2 + $0xe8] sm:$0xff]
  %v114 = vld [vmem:[#allocation2 + $0xf0] sm:$0xff]
  %v115 = vld [vmem:[#allocation2 + $0xf8] sm:$0xff]
  %v116 = vld [vmem:[#allocation2 + $0x100] sm:$0xff]
  %v117 = vld [vmem:[#allocation2 + $0x108] sm:$0xff]
  %v118 = vld [vmem:[#allocation2 + $0x110] sm:$0xff]
  %v119 = vld [vmem:[#allocation2 + $0x118] sm:$0xff]
  %v120 = vld [vmem:[#allocation2 + $0x120] sm:$0xff]
  %v121 = vld [vmem:[#allocation2 + $0x128] sm:$0xff]
  %v122 = vld [vmem:[#allocation2 + $0x130] sm:$0xff]
  %v123 = vld [vmem:[#allocation2 + $0x138] sm:$0xff]
  %v124 = vld [vmem:[#allocation2 + $0x140] sm:$0xff]
  %v125 = vld [vmem:[#allocation2 + $0x148] sm:$0xff]
  %v126 = vld [vmem:[#allocation2 + $0x150] sm:$0xff]
  %v127 = vld [vmem:[#allocation2 + $0x158] sm:$0xff]
  %v128 = vld [vmem:[#allocation2 + $0x160] sm:$0xff]
  %v129 = vld [vmem:[#allocation2 + $0x168] sm:$0xff]
  %v130 = vld [vmem:[#allocation2 + $0x170] sm:$0xff]
  %v131 = vld [vmem:[#allocation2 + $0x178] sm:$0xff]
  %v132 = vld [vmem:[#allocation2 + $0x180] sm:$0xff]
  %v133 = vld [vmem:[#allocation2 + $0x188] sm:$0xff]
  %v134 = vld [vmem:[#allocation2 + $0x190] sm:$0xff]
  %v135 = vld [vmem:[#allocation2 + $0x198] sm:$0xff]
  %v136 = vld [vmem:[#allocation2 + $0x1a0] sm:$0xff]
  %v137 = vld [vmem:[#allocation2 + $0x1a8] sm:$0xff]
  %v138 = vld [vmem:[#allocation2 + $0x1b0] sm:$0xff]
  %v139 = vld [vmem:[#allocation2 + $0x1b8] sm:$0xff]
  %v140 = vld [vmem:[#allocation2 + $0x1c0] sm:$0xff]
  %v141 = vld [vmem:[#allocation2 + $0x1c8] sm:$0xff]
  %v142 = vld [vmem:[#allocation2 + $0x1d0] sm:$0xff]
  %v143 = vld [vmem:[#allocation2 + $0x1d8] sm:$0xff]
  %v144 = vld [vmem:[#allocation2 + $0x1e0] sm:$0xff]
  %v145 = vld [vmem:[#allocation2 + $0x1e8] sm:$0xff]
  %v146 = vld [vmem:[#allocation2 + $0x1f0] sm:$0xff]
  %v147 = vld [vmem:[#allocation2 + $0x1f8] sm:$0xff]
  %v148 = vld [vmem:[%s0] sm:$0xff]
  %v149 = vld [vmem:[%s0 + $0x8] sm:$0xff]
  %v150 = vld [vmem:[%s0 + $0x10] sm:$0xff]
  %v151 = vld [vmem:[%s0 + $0x18] sm:$0xff]
  %v152 = vld [vmem:[%s0 + $0x20] sm:$0xff]
  %v153 = vld [vmem:[%s0 + $0x28] sm:$0xff]
  %v154 = vld [vmem:[%s0 + $0x30] sm:$0xff]
  %v155 = vld [vmem:[%s0 + $0x38] sm:$0xff]
  %v156 = vld [vmem:[%s0 + $0x40] sm:$0xff]
  %v157 = vld [vmem:[%s0 + $0x48] sm:$0xff]
  %v158 = vld [vmem:[%s0 + $0x50] sm:$0xff]
  %v159 = vld [vmem:[%s0 + $0x58] sm:$0xff]
  %v160 = vld [vmem:[%s0 + $0x60] sm:$0xff]
  %v161 = vld [vmem:[%s0 + $0x68] sm:$0xff]
  %v162 = vld [vmem:[%s0 + $0x70] sm:$0xff]
  %v163 = vld [vmem:[%s0 + $0x78] sm:$0xff]
  %v164 = vld [vmem:[%s0 + $0x80] sm:$0xff]
  %v165 = vld [vmem:[%s0 + $0x88] sm:$0xff]
  %v166 = vld [vmem:[%s0 + $0x90] sm:$0xff]
  %v167 = vld [vmem:[%s0 + $0x98] sm:$0xff]
  %v168 = vld [vmem:[%s0 + $0xa0] sm:$0xff]
  %v169 = vld [vmem:[%s0 + $0xa8] sm:$0xff]
  %v170 = vld [vmem:[%s0 + $0xb0] sm:$0xff]
  %v171 = vld [vmem:[%s0 + $0xb8] sm:$0xff]
  %v172 = vld [vmem:[%s0 + $0xc0] sm:$0xff]
  %v173 = vld [vmem:[%s0 + $0xc8] sm:$0xff]
  %v174 = vld [vmem:[%s0 + $0xd0] sm:$0xff]
  %v175 = vld [vmem:[%s0 + $0xd8] sm:$0xff]
  %v176 = vld [vmem:[%s0 + $0xe0] sm:$0xff]
  %v177 = vld [vmem:[%s0 + $0xe8] sm:$0xff]
  %v178 = vld [vmem:[%s0 + $0xf0] sm:$0xff]
  %v179 = vld [vmem:[%s0 + $0xf8] sm:$0xff]
  %v180 = vpack.c.bf16 %v149, %v148
  %v181 = vpack.c.bf16 %v151, %v150
  %v182 = vpack.c.bf16 %v153, %v152
  %v183 = vpack.c.bf16 %v155, %v154
  %v184 = vpack.c.bf16 %v157, %v156
  %v185 = vpack.c.bf16 %v159, %v158
  %v186 = vpack.c.bf16 %v161, %v160
  %v187 = vpack.c.bf16 %v163, %v162
  %v188 = vpack.c.bf16 %v165, %v164
  %v189 = vpack.c.bf16 %v167, %v166
  %v190 = vpack.c.bf16 %v169, %v168
  %v191 = vpack.c.bf16 %v171, %v170
  %v192 = vpack.c.bf16 %v173, %v172
  %v193 = vpack.c.bf16 %v175, %v174
  %v194 = vpack.c.bf16 %v177, %v176
  %v195 = vpack.c.bf16 %v179, %v178
  %v196 = vld [vmem:[%s1] sm:$0xff]
  %v197 = vld [vmem:[%s1 + $0x8] sm:$0xff]
  %v198 = vld [vmem:[%s1 + $0x10] sm:$0xff]
  %v199 = vld [vmem:[%s1 + $0x18] sm:$0xff]
  %v200 = vld [vmem:[%s1 + $0x20] sm:$0xff]
  %v201 = vld [vmem:[%s1 + $0x28] sm:$0xff]
  %v202 = vld [vmem:[%s1 + $0x30] sm:$0xff]
  %v203 = vld [vmem:[%s1 + $0x38] sm:$0xff]
  %v212 = vunpack.c.l.b16 %v196
  %v213 = vunpack.c.h.b16 %v196
  %v214 = vunpack.c.l.b16 %v197
  %v215 = vunpack.c.h.b16 %v197
  %v216 = vunpack.c.l.b16 %v198
  %v217 = vunpack.c.h.b16 %v198
  %v218 = vunpack.c.l.b16 %v199
  %v219 = vunpack.c.h.b16 %v199
  %v220 = vunpack.c.l.b16 %v200
  %v221 = vunpack.c.h.b16 %v200
  %v222 = vunpack.c.l.b16 %v201
  %v223 = vunpack.c.h.b16 %v201
  %v224 = vunpack.c.l.b16 %v202
  %v225 = vunpack.c.h.b16 %v202
  %v226 = vunpack.c.l.b16 %v203
  %v227 = vunpack.c.h.b16 %v203
  %v228 = vpack.c.b16 %v214, %v212
  %v229 = vpack.c.b16 %v215, %v213
  %v230 = vpack.c.b16 %v218, %v216
  %v231 = vpack.c.b16 %v219, %v217
  %v232 = vpack.c.b16 %v222, %v220
  %v233 = vpack.c.b16 %v223, %v221
  %v234 = vpack.c.b16 %v226, %v224
  %v235 = vpack.c.b16 %v227, %v225
  %vm244 = vcmask 523264
  %v246 = vsel %vm244, %v180, 0
  %v249 = vsel %vm244, %v181, 0
  %v252 = vsel %vm244, %v182, 0
  %v255 = vsel %vm244, %v183, 0
  %v258 = vsel %vm244, %v184, 0
  %v261 = vsel %vm244, %v185, 0
  %v264 = vsel %vm244, %v186, 0
  %v267 = vsel %vm244, %v187, 0
  %v270 = vsel %vm244, %v188, 0
  %v273 = vsel %vm244, %v189, 0
  %v276 = vsel %vm244, %v190, 0
  %v279 = vsel %vm244, %v191, 0
  %v282 = vsel %vm244, %v192, 0
  %v285 = vsel %vm244, %v193, 0
  %v288 = vsel %vm244, %v194, 0
  %v291 = vsel %vm244, %v195, 0
  %293 = vmatprep.subr.bf16.mxu0 0
  %294 = vmatpush1.bf16.msra.mxu0 0
  %295 = vmatprep.subr.bf16.mxu0 0
  %296 = vmatpush1.bf16.msra.mxu0 0
  %297 = vmatprep.subr.bf16.mxu0 0
  %298 = vmatpush1.bf16.msra.mxu0 0
  %299 = vmatprep.subr.bf16.mxu0 0
  %300 = vmatpush1.bf16.msra.mxu0 0
  %301 = vmatprep.subr.bf16.mxu0 %v235
  %302 = vmatpush1.bf16.msra.mxu0 %v234
  %303 = vmatprep.subr.bf16.mxu0 %v233
  %304 = vmatpush1.bf16.msra.mxu0 %v232
  %305 = vmatprep.subr.bf16.mxu0 %v231
  %306 = vmatpush1.bf16.msra.mxu0 %v230
  %307 = vmatprep.subr.bf16.mxu0 %v229
  %308 = vmatpush1.bf16.msra.mxu0 %v228
  %309 = vmatprep.subr.bf16.mxu0 0
  %310 = vmatpush2.bf16.msra.mxu0 0
  %311 = vmatprep.subr.bf16.mxu0 0
  %312 = vmatpush2.bf16.msra.mxu0 0
  %313 = vmatprep.subr.bf16.mxu0 0
  %314 = vmatpush2.bf16.msra.mxu0 0
  %315 = vmatprep.subr.bf16.mxu0 0
  %316 = vmatpush2.bf16.msra.mxu0 0
  %317 = vmatprep.subr.bf16.mxu0 0
  %318 = vmatpush2.bf16.msra.mxu0 0
  %319 = vmatprep.subr.bf16.mxu0 0
  %320 = vmatpush2.bf16.msra.mxu0 0
  %321 = vmatprep.subr.bf16.mxu0 0
  %322 = vmatpush2.bf16.msra.mxu0 0
  %323 = vmatprep.subr.bf16.mxu0 0
  %324 = vmatpush2.bf16.msra.mxu0 0
  %325 = vmatprep.mubr.bf16.mxu0 0
  %326 = vmatmul.mubr.bf16.gmra.mxu0 %v246
  %v327 = vpop.f32.mrf.mxu0
  %v328 = vadd.f32 0.0, %v327
  %v329 = vpop.f32.mrf.mxu0
  %v330 = vadd.f32 0.0, %v329
  %v331 = vpop.f32.mrf.mxu0
  %v332 = vadd.f32 0.0, %v331
  %v333 = vpop.f32.mrf.mxu0
  %v334 = vadd.f32 0.0, %v333
  %335 = vmatprep.mubr.bf16.mxu0 0
  %336 = vmatmul.mubr.bf16.gmra.mxu0 %v249
  %v337 = vpop.f32.mrf.mxu0
  %v338 = vadd.f32 0.0, %v337
  %v339 = vpop.f32.mrf.mxu0
  %v340 = vadd.f32 0.0, %v339
  %v341 = vpop.f32.mrf.mxu0
  %v342 = vadd.f32 0.0, %v341
  %v343 = vpop.f32.mrf.mxu0
  %v344 = vadd.f32 0.0, %v343
  %345 = vmatprep.mubr.bf16.mxu0 0
  %346 = vmatmul.mubr.bf16.gmra.mxu0 %v252
  %v347 = vpop.f32.mrf.mxu0
  %v348 = vadd.f32 0.0, %v347
  %v349 = vpop.f32.mrf.mxu0
  %v350 = vadd.f32 0.0, %v349
  %v351 = vpop.f32.mrf.mxu0
  %v352 = vadd.f32 0.0, %v351
  %v353 = vpop.f32.mrf.mxu0
  %v354 = vadd.f32 0.0, %v353
  %355 = vmatprep.mubr.bf16.mxu0 0
  %356 = vmatmul.mubr.bf16.gmra.mxu0 %v255
  %v357 = vpop.f32.mrf.mxu0
  %v358 = vadd.f32 0.0, %v357
  %v359 = vpop.f32.mrf.mxu0
  %v360 = vadd.f32 0.0, %v359
  %v361 = vpop.f32.mrf.mxu0
  %v362 = vadd.f32 0.0, %v361
  %v363 = vpop.f32.mrf.mxu0
  %v364 = vadd.f32 0.0, %v363
  %365 = vmatprep.mubr.bf16.mxu0 0
  %366 = vmatmul.mubr.bf16.gmra.mxu0 %v258
  %v367 = vpop.f32.mrf.mxu0
  %v368 = vadd.f32 0.0, %v367
  %v369 = vpop.f32.mrf.mxu0
  %v370 = vadd.f32 0.0, %v369
  %v371 = vpop.f32.mrf.mxu0
  %v372 = vadd.f32 0.0, %v371
  %v373 = vpop.f32.mrf.mxu0
  %v374 = vadd.f32 0.0, %v373
  %375 = vmatprep.mubr.bf16.mxu0 0
  %376 = vmatmul.mubr.bf16.gmra.mxu0 %v261
  %v377 = vpop.f32.mrf.mxu0
  %v378 = vadd.f32 0.0, %v377
  %v379 = vpop.f32.mrf.mxu0
  %v380 = vadd.f32 0.0, %v379
  %v381 = vpop.f32.mrf.mxu0
  %v382 = vadd.f32 0.0, %v381
  %v383 = vpop.f32.mrf.mxu0
  %v384 = vadd.f32 0.0, %v383
  %385 = vmatprep.mubr.bf16.mxu0 0
  %386 = vmatmul.mubr.bf16.gmra.mxu0 %v264
  %v387 = vpop.f32.mrf.mxu0
  %v388 = vadd.f32 0.0, %v387
  %v389 = vpop.f32.mrf.mxu0
  %v390 = vadd.f32 0.0, %v389
  %v391 = vpop.f32.mrf.mxu0
  %v392 = vadd.f32 0.0, %v391
  %v393 = vpop.f32.mrf.mxu0
  %v394 = vadd.f32 0.0, %v393
  %395 = vmatprep.mubr.bf16.mxu0 0
  %396 = vmatmul.mubr.bf16.gmra.mxu0 %v267
  %v397 = vpop.f32.mrf.mxu0
  %v398 = vadd.f32 0.0, %v397
  %v399 = vpop.f32.mrf.mxu0
  %v400 = vadd.f32 0.0, %v399
  %v401 = vpop.f32.mrf.mxu0
  %v402 = vadd.f32 0.0, %v401
  %v403 = vpop.f32.mrf.mxu0
  %v404 = vadd.f32 0.0, %v403
  %405 = vmatprep.mubr.bf16.mxu0 0
  %406 = vmatmul.mubr.bf16.gmra.mxu0 %v270
  %v407 = vpop.f32.mrf.mxu0
  %v408 = vadd.f32 0.0, %v407
  %v409 = vpop.f32.mrf.mxu0
  %v410 = vadd.f32 0.0, %v409
  %v411 = vpop.f32.mrf.mxu0
  %v412 = vadd.f32 0.0, %v411
  %v413 = vpop.f32.mrf.mxu0
  %v414 = vadd.f32 0.0, %v413
  %415 = vmatprep.mubr.bf16.mxu0 0
  %416 = vmatmul.mubr.bf16.gmra.mxu0 %v273
  %v417 = vpop.f32.mrf.mxu0
  %v418 = vadd.f32 0.0, %v417
  %v419 = vpop.f32.mrf.mxu0
  %v420 = vadd.f32 0.0, %v419
  %v421 = vpop.f32.mrf.mxu0
  %v422 = vadd.f32 0.0, %v421
  %v423 = vpop.f32.mrf.mxu0
  %v424 = vadd.f32 0.0, %v423
  %425 = vmatprep.mubr.bf16.mxu0 0
  %426 = vmatmul.mubr.bf16.gmra.mxu0 %v276
  %v427 = vpop.f32.mrf.mxu0
  %v428 = vadd.f32 0.0, %v427
  %v429 = vpop.f32.mrf.mxu0
  %v430 = vadd.f32 0.0, %v429
  %v431 = vpop.f32.mrf.mxu0
  %v432 = vadd.f32 0.0, %v431
  %v433 = vpop.f32.mrf.mxu0
  %v434 = vadd.f32 0.0, %v433
  %435 = vmatprep.mubr.bf16.mxu0 0
  %436 = vmatmul.mubr.bf16.gmra.mxu0 %v279
  %v437 = vpop.f32.mrf.mxu0
  %v438 = vadd.f32 0.0, %v437
  %v439 = vpop.f32.mrf.mxu0
  %v440 = vadd.f32 0.0, %v439
  %v441 = vpop.f32.mrf.mxu0
  %v442 = vadd.f32 0.0, %v441
  %v443 = vpop.f32.mrf.mxu0
  %v444 = vadd.f32 0.0, %v443
  %445 = vmatprep.mubr.bf16.mxu0 0
  %446 = vmatmul.mubr.bf16.gmra.mxu0 %v282
  %v447 = vpop.f32.mrf.mxu0
  %v448 = vadd.f32 0.0, %v447
  %v449 = vpop.f32.mrf.mxu0
  %v450 = vadd.f32 0.0, %v449
  %v451 = vpop.f32.mrf.mxu0
  %v452 = vadd.f32 0.0, %v451
  %v453 = vpop.f32.mrf.mxu0
  %v454 = vadd.f32 0.0, %v453
  %455 = vmatprep.mubr.bf16.mxu0 0
  %456 = vmatmul.mubr.bf16.gmra.mxu0 %v285
  %v457 = vpop.f32.mrf.mxu0
  %v458 = vadd.f32 0.0, %v457
  %v459 = vpop.f32.mrf.mxu0
  %v460 = vadd.f32 0.0, %v459
  %v461 = vpop.f32.mrf.mxu0
  %v462 = vadd.f32 0.0, %v461
  %v463 = vpop.f32.mrf.mxu0
  %v464 = vadd.f32 0.0, %v463
  %465 = vmatprep.mubr.bf16.mxu0 0
  %466 = vmatmul.mubr.bf16.gmra.mxu0 %v288
  %v467 = vpop.f32.mrf.mxu0
  %v468 = vadd.f32 0.0, %v467
  %v469 = vpop.f32.mrf.mxu0
  %v470 = vadd.f32 0.0, %v469
  %v471 = vpop.f32.mrf.mxu0
  %v472 = vadd.f32 0.0, %v471
  %v473 = vpop.f32.mrf.mxu0
  %v474 = vadd.f32 0.0, %v473
  %475 = vmatprep.mubr.bf16.mxu0 0
  %476 = vmatmul.mubr.bf16.gmra.mxu0 %v291
  %v477 = vpop.f32.mrf.mxu0
  %v478 = vadd.f32 0.0, %v477
  %v479 = vpop.f32.mrf.mxu0
  %v480 = vadd.f32 0.0, %v479
  %v481 = vpop.f32.mrf.mxu0
  %v482 = vadd.f32 0.0, %v481
  %v483 = vpop.f32.mrf.mxu0
  %v484 = vadd.f32 0.0, %v483
  %485 = vdwg.mxu0
  %v486 = vadd.f32 %v84, %v328
  %v487 = vadd.f32 %v85, %v330
  %v488 = vadd.f32 %v86, %v332
  %v489 = vadd.f32 %v87, %v334
  %v490 = vadd.f32 %v88, %v338
  %v491 = vadd.f32 %v89, %v340
  %v492 = vadd.f32 %v90, %v342
  %v493 = vadd.f32 %v91, %v344
  %v494 = vadd.f32 %v92, %v348
  %v495 = vadd.f32 %v93, %v350
  %v496 = vadd.f32 %v94, %v352
  %v497 = vadd.f32 %v95, %v354
  %v498 = vadd.f32 %v96, %v358
  %v499 = vadd.f32 %v97, %v360
  %v500 = vadd.f32 %v98, %v362
  %v501 = vadd.f32 %v99, %v364
  %v502 = vadd.f32 %v100, %v368
  %v503 = vadd.f32 %v101, %v370
  %v504 = vadd.f32 %v102, %v372
  %v505 = vadd.f32 %v103, %v374
  %v506 = vadd.f32 %v104, %v378
  %v507 = vadd.f32 %v105, %v380
  %v508 = vadd.f32 %v106, %v382
  %v509 = vadd.f32 %v107, %v384
  %v510 = vadd.f32 %v108, %v388
  %v511 = vadd.f32 %v109, %v390
  %v512 = vadd.f32 %v110, %v392
  %v513 = vadd.f32 %v111, %v394
  %v514 = vadd.f32 %v112, %v398
  %v515 = vadd.f32 %v113, %v400
  %v516 = vadd.f32 %v114, %v402
  %v517 = vadd.f32 %v115, %v404
  %v518 = vadd.f32 %v116, %v408
  %v519 = vadd.f32 %v117, %v410
  %v520 = vadd.f32 %v118, %v412
  %v521 = vadd.f32 %v119, %v414
  %v522 = vadd.f32 %v120, %v418
  %v523 = vadd.f32 %v121, %v420
  %v524 = vadd.f32 %v122, %v422
  %v525 = vadd.f32 %v123, %v424
  %v526 = vadd.f32 %v124, %v428
  %v527 = vadd.f32 %v125, %v430
  %v528 = vadd.f32 %v126, %v432
  %v529 = vadd.f32 %v127, %v434
  %v530 = vadd.f32 %v128, %v438
  %v531 = vadd.f32 %v129, %v440
  %v532 = vadd.f32 %v130, %v442
  %v533 = vadd.f32 %v131, %v444
  %v534 = vadd.f32 %v132, %v448
  %v535 = vadd.f32 %v133, %v450
  %v536 = vadd.f32 %v134, %v452
  %v537 = vadd.f32 %v135, %v454
  %v538 = vadd.f32 %v136, %v458
  %v539 = vadd.f32 %v137, %v460
  %v540 = vadd.f32 %v138, %v462
  %v541 = vadd.f32 %v139, %v464
  %v542 = vadd.f32 %v140, %v468
  %v543 = vadd.f32 %v141, %v470
  %v544 = vadd.f32 %v142, %v472
  %v545 = vadd.f32 %v143, %v474
  %v546 = vadd.f32 %v144, %v478
  %v547 = vadd.f32 %v145, %v480
  %v548 = vadd.f32 %v146, %v482
  %v549 = vadd.f32 %v147, %v484
  %550 = vst [vmem:[#allocation2] sm:$0xff] %v486
  %551 = vst.msk [vmem:[#allocation2 + $0x8] sm:$0xff] %vm244, %v487
  %552 = vst [vmem:[#allocation2 + $0x10] sm:$0xff] %v488
  %553 = vst.msk [vmem:[#allocation2 + $0x18] sm:$0xff] %vm244, %v489
  %554 = vst [vmem:[#allocation2 + $0x20] sm:$0xff] %v490
  %555 = vst.msk [vmem:[#allocation2 + $0x28] sm:$0xff] %vm244, %v491
  %556 = vst [vmem:[#allocation2 + $0x30] sm:$0xff] %v492
  %557 = vst.msk [vmem:[#allocation2 + $0x38] sm:$0xff] %vm244, %v493
  %558 = vst [vmem:[#allocation2 + $0x40] sm:$0xff] %v494
  %559 = vst.msk [vmem:[#allocation2 + $0x48] sm:$0xff] %vm244, %v495
  %560 = vst [vmem:[#allocation2 + $0x50] sm:$0xff] %v496
  %561 = vst.msk [vmem:[#allocation2 + $0x58] sm:$0xff] %vm244, %v497
  %562 = vst [vmem:[#allocation2 + $0x60] sm:$0xff] %v498
  %563 = vst.msk [vmem:[#allocation2 + $0x68] sm:$0xff] %vm244, %v499
  %564 = vst [vmem:[#allocation2 + $0x70] sm:$0xff] %v500
  %565 = vst.msk [vmem:[#allocation2 + $0x78] sm:$0xff] %vm244, %v501
  %566 = vst [vmem:[#allocation2 + $0x80] sm:$0xff] %v502
  %567 = vst.msk [vmem:[#allocation2 + $0x88] sm:$0xff] %vm244, %v503
  %568 = vst [vmem:[#allocation2 + $0x90] sm:$0xff] %v504
  %569 = vst.msk [vmem:[#allocation2 + $0x98] sm:$0xff] %vm244, %v505
  %570 = vst [vmem:[#allocation2 + $0xa0] sm:$0xff] %v506
  %571 = vst.msk [vmem:[#allocation2 + $0xa8] sm:$0xff] %vm244, %v507
  %572 = vst [vmem:[#allocation2 + $0xb0] sm:$0xff] %v508
  %573 = vst.msk [vmem:[#allocation2 + $0xb8] sm:$0xff] %vm244, %v509
  %574 = vst [vmem:[#allocation2 + $0xc0] sm:$0xff] %v510
  %575 = vst.msk [vmem:[#allocation2 + $0xc8] sm:$0xff] %vm244, %v511
  %576 = vst [vmem:[#allocation2 + $0xd0] sm:$0xff] %v512
  %577 = vst.msk [vmem:[#allocation2 + $0xd8] sm:$0xff] %vm244, %v513
  %578 = vst [vmem:[#allocation2 + $0xe0] sm:$0xff] %v514
  %579 = vst.msk [vmem:[#allocation2 + $0xe8] sm:$0xff] %vm244, %v515
  %580 = vst [vmem:[#allocation2 + $0xf0] sm:$0xff] %v516
  %581 = vst.msk [vmem:[#allocation2 + $0xf8] sm:$0xff] %vm244, %v517
  %582 = vst [vmem:[#allocation2 + $0x100] sm:$0xff] %v518
  %583 = vst.msk [vmem:[#allocation2 + $0x108] sm:$0xff] %vm244, %v519
  %584 = vst [vmem:[#allocation2 + $0x110] sm:$0xff] %v520
  %585 = vst.msk [vmem:[#allocation2 + $0x118] sm:$0xff] %vm244, %v521
  %586 = vst [vmem:[#allocation2 + $0x120] sm:$0xff] %v522
  %587 = vst.msk [vmem:[#allocation2 + $0x128] sm:$0xff] %vm244, %v523
  %588 = vst [vmem:[#allocation2 + $0x130] sm:$0xff] %v524
  %589 = vst.msk [vmem:[#allocation2 + $0x138] sm:$0xff] %vm244, %v525
  %590 = vst [vmem:[#allocation2 + $0x140] sm:$0xff] %v526
  %591 = vst.msk [vmem:[#allocation2 + $0x148] sm:$0xff] %vm244, %v527
  %592 = vst [vmem:[#allocation2 + $0x150] sm:$0xff] %v528
  %593 = vst.msk [vmem:[#allocation2 + $0x158] sm:$0xff] %vm244, %v529
  %594 = vst [vmem:[#allocation2 + $0x160] sm:$0xff] %v530
  %595 = vst.msk [vmem:[#allocation2 + $0x168] sm:$0xff] %vm244, %v531
  %596 = vst [vmem:[#allocation2 + $0x170] sm:$0xff] %v532
  %597 = vst.msk [vmem:[#allocation2 + $0x178] sm:$0xff] %vm244, %v533
  %598 = vst [vmem:[#allocation2 + $0x180] sm:$0xff] %v534
  %599 = vst.msk [vmem:[#allocation2 + $0x188] sm:$0xff] %vm244, %v535
  %600 = vst [vmem:[#allocation2 + $0x190] sm:$0xff] %v536
  %601 = vst.msk [vmem:[#allocation2 + $0x198] sm:$0xff] %vm244, %v537
  %602 = vst [vmem:[#allocation2 + $0x1a0] sm:$0xff] %v538
  %603 = vst.msk [vmem:[#allocation2 + $0x1a8] sm:$0xff] %vm244, %v539
  %604 = vst [vmem:[#allocation2 + $0x1b0] sm:$0xff] %v540
  %605 = vst.msk [vmem:[#allocation2 + $0x1b8] sm:$0xff] %vm244, %v541
  %606 = vst [vmem:[#allocation2 + $0x1c0] sm:$0xff] %v542
  %607 = vst.msk [vmem:[#allocation2 + $0x1c8] sm:$0xff] %vm244, %v543
  %608 = vst [vmem:[#allocation2 + $0x1d0] sm:$0xff] %v544
  %609 = vst.msk [vmem:[#allocation2 + $0x1d8] sm:$0xff] %vm244, %v545
  %610 = vst [vmem:[#allocation2 + $0x1e0] sm:$0xff] %v546
  %611 = vst.msk [vmem:[#allocation2 + $0x1e8] sm:$0xff] %vm244, %v547
  %612 = vst [vmem:[#allocation2 + $0x1f0] sm:$0xff] %v548
  %613 = vst.msk [vmem:[#allocation2 + $0x1f8] sm:$0xff] %vm244, %v549
  // Predicated region
  $region18: #{rel0_encoder_forward.10} parent=0 // pred_check
    %p614 = pneg %p15
  $region19: #{rel0_encoder_forward.10} parent=0 // pred_check_branch
    %616 = sbr.rel (%p614) target = $region21
  $region20: #{rel0_encoder_forward.10} parent=0 // pred_region
    %v617 = vld [vmem:[#allocation2] sm:$0xff]
    %v618 = vld [vmem:[#allocation2 + $0x8] sm:$0xff]
    %v619 = vld [vmem:[#allocation2 + $0x10] sm:$0xff]
    %v620 = vld [vmem:[#allocation2 + $0x18] sm:$0xff]
    %v621 = vld [vmem:[#allocation2 + $0x20] sm:$0xff]
    %v622 = vld [vmem:[#allocation2 + $0x28] sm:$0xff]
    %v623 = vld [vmem:[#allocation2 + $0x30] sm:$0xff]
    %v624 = vld [vmem:[#allocation2 + $0x38] sm:$0xff]
    %v625 = vld [vmem:[#allocation2 + $0x40] sm:$0xff]
    %v626 = vld [vmem:[#allocation2 + $0x48] sm:$0xff]
    %v627 = vld [vmem:[#allocation2 + $0x50] sm:$0xff]
    %v628 = vld [vmem:[#allocation2 + $0x58] sm:$0xff]
    %v629 = vld [vmem:[#allocation2 + $0x60] sm:$0xff]
    %v630 = vld [vmem:[#allocation2 + $0x68] sm:$0xff]
    %v631 = vld [vmem:[#allocation2 + $0x70] sm:$0xff]
    %v632 = vld [vmem:[#allocation2 + $0x78] sm:$0xff]
    %v633 = vld [vmem:[#allocation2 + $0x80] sm:$0xff]
    %v634 = vld [vmem:[#allocation2 + $0x88] sm:$0xff]
    %v635 = vld [vmem:[#allocation2 + $0x90] sm:$0xff]
    %v636 = vld [vmem:[#allocation2 + $0x98] sm:$0xff]
    %v637 = vld [vmem:[#allocation2 + $0xa0] sm:$0xff]
    %v638 = vld [vmem:[#allocation2 + $0xa8] sm:$0xff]
    %v639 = vld [vmem:[#allocation2 + $0xb0] sm:$0xff]
    %v640 = vld [vmem:[#allocation2 + $0xb8] sm:$0xff]
    %v641 = vld [vmem:[#allocation2 + $0xc0] sm:$0xff]
    %v642 = vld [vmem:[#allocation2 + $0xc8] sm:$0xff]
    %v643 = vld [vmem:[#allocation2 + $0xd0] sm:$0xff]
    %v644 = vld [vmem:[#allocation2 + $0xd8] sm:$0xff]
    %v645 = vld [vmem:[#allocation2 + $0xe0] sm:$0xff]
    %v646 = vld [vmem:[#allocation2 + $0xe8] sm:$0xff]
    %v647 = vld [vmem:[#allocation2 + $0xf0] sm:$0xff]
    %v648 = vld [vmem:[#allocation2 + $0xf8] sm:$0xff]
    %v649 = vld [vmem:[#allocation2 + $0x100] sm:$0xff]
    %v650 = vld [vmem:[#allocation2 + $0x108] sm:$0xff]
    %v651 = vld [vmem:[#allocation2 + $0x110] sm:$0xff]
    %v652 = vld [vmem:[#allocation2 + $0x118] sm:$0xff]
    %v653 = vld [vmem:[#allocation2 + $0x120] sm:$0xff]
    %v654 = vld [vmem:[#allocation2 + $0x128] sm:$0xff]
    %v655 = vld [vmem:[#allocation2 + $0x130] sm:$0xff]
    %v656 = vld [vmem:[#allocation2 + $0x138] sm:$0xff]
    %v657 = vld [vmem:[#allocation2 + $0x140] sm:$0xff]
    %v658 = vld [vmem:[#allocation2 + $0x148] sm:$0xff]
    %v659 = vld [vmem:[#allocation2 + $0x150] sm:$0xff]
    %v660 = vld [vmem:[#allocation2 + $0x158] sm:$0xff]
    %v661 = vld [vmem:[#allocation2 + $0x160] sm:$0xff]
    %v662 = vld [vmem:[#allocation2 + $0x168] sm:$0xff]
    %v663 = vld [vmem:[#allocation2 + $0x170] sm:$0xff]
    %v664 = vld [vmem:[#allocation2 + $0x178] sm:$0xff]
    %v665 = vld [vmem:[#allocation2 + $0x180] sm:$0xff]
    %v666 = vld [vmem:[#allocation2 + $0x188] sm:$0xff]
    %v667 = vld [vmem:[#allocation2 + $0x190] sm:$0xff]
    %v668 = vld [vmem:[#allocation2 + $0x198] sm:$0xff]
    %v669 = vld [vmem:[#allocation2 + $0x1a0] sm:$0xff]
    %v670 = vld [vmem:[#allocation2 + $0x1a8] sm:$0xff]
    %v671 = vld [vmem:[#allocation2 + $0x1b0] sm:$0xff]
    %v672 = vld [vmem:[#allocation2 + $0x1b8] sm:$0xff]
    %v673 = vld [vmem:[#allocation2 + $0x1c0] sm:$0xff]
    %v674 = vld [vmem:[#allocation2 + $0x1c8] sm:$0xff]
    %v675 = vld [vmem:[#allocation2 + $0x1d0] sm:$0xff]
    %v676 = vld [vmem:[#allocation2 + $0x1d8] sm:$0xff]
    %v677 = vld [vmem:[#allocation2 + $0x1e0] sm:$0xff]
    %v678 = vld [vmem:[#allocation2 + $0x1e8] sm:$0xff]
    %v679 = vld [vmem:[#allocation2 + $0x1f0] sm:$0xff]
    %v680 = vld [vmem:[#allocation2 + $0x1f8] sm:$0xff]
    %v681 = vld [vmem:[%s2] sm:$0x3]
    %v683 = vlaneseq
    %v684 = vshrl.u32 %v683, 7
    %v685 = vsub.s32 0, %v684
    %v686 = vrot.slane %v681, %v685
    %v687 = vlaneseq
    %v688 = vshrl.u32 %v687, 7
    %v689 = vsub.s32 1, %v688
    %v690 = vrot.slane %v681, %v689
    %v693 = vadd.f32 %v617, %v686
    %v694 = vadd.f32 %v618, %v690
    %v695 = vadd.f32 %v619, %v686
    %v696 = vadd.f32 %v620, %v690
    %v697 = vadd.f32 %v621, %v686
    %v698 = vadd.f32 %v622, %v690
    %v699 = vadd.f32 %v623, %v686
    %v700 = vadd.f32 %v624, %v690
    %v701 = vadd.f32 %v625, %v686
    %v702 = vadd.f32 %v626, %v690
    %v703 = vadd.f32 %v627, %v686
    %v704 = vadd.f32 %v628, %v690
    %v705 = vadd.f32 %v629, %v686
    %v706 = vadd.f32 %v630, %v690
    %v707 = vadd.f32 %v631, %v686
    %v708 = vadd.f32 %v632, %v690
    %v709 = vadd.f32 %v633, %v686
    %v710 = vadd.f32 %v634, %v690
    %v711 = vadd.f32 %v635, %v686
    %v712 = vadd.f32 %v636, %v690
    %v713 = vadd.f32 %v637, %v686
    %v714 = vadd.f32 %v638, %v690
    %v715 = vadd.f32 %v639, %v686
    %v716 = vadd.f32 %v640, %v690
    %v717 = vadd.f32 %v641, %v686
    %v718 = vadd.f32 %v642, %v690
    %v719 = vadd.f32 %v643, %v686
    %v720 = vadd.f32 %v644, %v690
    %v721 = vadd.f32 %v645, %v686
    %v722 = vadd.f32 %v646, %v690
    %v723 = vadd.f32 %v647, %v686
    %v724 = vadd.f32 %v648, %v690
    %v725 = vadd.f32 %v649, %v686
    %v726 = vadd.f32 %v650, %v690
    %v727 = vadd.f32 %v651, %v686
    %v728 = vadd.f32 %v652, %v690
    %v729 = vadd.f32 %v653, %v686
    %v730 = vadd.f32 %v654, %v690
    %v731 = vadd.f32 %v655, %v686
    %v732 = vadd.f32 %v656, %v690
    %v733 = vadd.f32 %v657, %v686
    %v734 = vadd.f32 %v658, %v690
    %v735 = vadd.f32 %v659, %v686
    %v736 = vadd.f32 %v660, %v690
    %v737 = vadd.f32 %v661, %v686
    %v738 = vadd.f32 %v662, %v690
    %v739 = vadd.f32 %v663, %v686
    %v740 = vadd.f32 %v664, %v690
    %v741 = vadd.f32 %v665, %v686
    %v742 = vadd.f32 %v666, %v690
    %v743 = vadd.f32 %v667, %v686
    %v744 = vadd.f32 %v668, %v690
    %v745 = vadd.f32 %v669, %v686
    %v746 = vadd.f32 %v670, %v690
    %v747 = vadd.f32 %v671, %v686
    %v748 = vadd.f32 %v672, %v690
    %v749 = vadd.f32 %v673, %v686
    %v750 = vadd.f32 %v674, %v690
    %v751 = vadd.f32 %v675, %v686
    %v752 = vadd.f32 %v676, %v690
    %v753 = vadd.f32 %v677, %v686
    %v754 = vadd.f32 %v678, %v690
    %v755 = vadd.f32 %v679, %v686
    %v756 = vadd.f32 %v680, %v690
    %v757 = vpack.c.bf16 %v695, %v693
    %v758 = vpack.c.bf16 %v696, %v694
    %v759 = vpack.c.bf16 %v699, %v697
    %v760 = vpack.c.bf16 %v700, %v698
    %v761 = vpack.c.bf16 %v703, %v701
    %v762 = vpack.c.bf16 %v704, %v702
    %v763 = vpack.c.bf16 %v707, %v705
    %v764 = vpack.c.bf16 %v708, %v706
    %v765 = vpack.c.bf16 %v711, %v709
    %v766 = vpack.c.bf16 %v712, %v710
    %v767 = vpack.c.bf16 %v715, %v713
    %v768 = vpack.c.bf16 %v716, %v714
    %v769 = vpack.c.bf16 %v719, %v717
    %v770 = vpack.c.bf16 %v720, %v718
    %v771 = vpack.c.bf16 %v723, %v721
    %v772 = vpack.c.bf16 %v724, %v722
    %v773 = vpack.c.bf16 %v727, %v725
    %v774 = vpack.c.bf16 %v728, %v726
    %v775 = vpack.c.bf16 %v731, %v729
    %v776 = vpack.c.bf16 %v732, %v730
    %v777 = vpack.c.bf16 %v735, %v733
    %v778 = vpack.c.bf16 %v736, %v734
    %v779 = vpack.c.bf16 %v739, %v737
    %v780 = vpack.c.bf16 %v740, %v738
    %v781 = vpack.c.bf16 %v743, %v741
    %v782 = vpack.c.bf16 %v744, %v742
    %v783 = vpack.c.bf16 %v747, %v745
    %v784 = vpack.c.bf16 %v748, %v746
    %v785 = vpack.c.bf16 %v751, %v749
    %v786 = vpack.c.bf16 %v752, %v750
    %v787 = vpack.c.bf16 %v755, %v753
    %v788 = vpack.c.bf16 %v756, %v754
    %v821 = vunpack.c.l.b16 %v757
    %v822 = vunpack.c.l.b16 %v758
    %v823 = vunpack.c.h.b16 %v757
    %v824 = vunpack.c.h.b16 %v758
    %v825 = vunpack.c.l.b16 %v759
    %v826 = vunpack.c.l.b16 %v760
    %v827 = vunpack.c.h.b16 %v759
    %v828 = vunpack.c.h.b16 %v760
    %v829 = vunpack.c.l.b16 %v761
    %v830 = vunpack.c.l.b16 %v762
    %v831 = vunpack.c.h.b16 %v761
    %v832 = vunpack.c.h.b16 %v762
    %v833 = vunpack.c.l.b16 %v763
    %v834 = vunpack.c.l.b16 %v764
    %v835 = vunpack.c.h.b16 %v763
    %v836 = vunpack.c.h.b16 %v764
    %v837 = vunpack.c.l.b16 %v765
    %v838 = vunpack.c.l.b16 %v766
    %v839 = vunpack.c.h.b16 %v765
    %v840 = vunpack.c.h.b16 %v766
    %v841 = vunpack.c.l.b16 %v767
    %v842 = vunpack.c.l.b16 %v768
    %v843 = vunpack.c.h.b16 %v767
    %v844 = vunpack.c.h.b16 %v768
    %v845 = vunpack.c.l.b16 %v769
    %v846 = vunpack.c.l.b16 %v770
    %v847 = vunpack.c.h.b16 %v769
    %v848 = vunpack.c.h.b16 %v770
    %v849 = vunpack.c.l.b16 %v771
    %v850 = vunpack.c.l.b16 %v772
    %v851 = vunpack.c.h.b16 %v771
    %v852 = vunpack.c.h.b16 %v772
    %v853 = vunpack.c.l.b16 %v773
    %v854 = vunpack.c.l.b16 %v774
    %v855 = vunpack.c.h.b16 %v773
    %v856 = vunpack.c.h.b16 %v774
    %v857 = vunpack.c.l.b16 %v775
    %v858 = vunpack.c.l.b16 %v776
    %v859 = vunpack.c.h.b16 %v775
    %v860 = vunpack.c.h.b16 %v776
    %v861 = vunpack.c.l.b16 %v777
    %v862 = vunpack.c.l.b16 %v778
    %v863 = vunpack.c.h.b16 %v777
    %v864 = vunpack.c.h.b16 %v778
    %v865 = vunpack.c.l.b16 %v779
    %v866 = vunpack.c.l.b16 %v780
    %v867 = vunpack.c.h.b16 %v779
    %v868 = vunpack.c.h.b16 %v780
    %v869 = vunpack.c.l.b16 %v781
    %v870 = vunpack.c.l.b16 %v782
    %v871 = vunpack.c.h.b16 %v781
    %v872 = vunpack.c.h.b16 %v782
    %v873 = vunpack.c.l.b16 %v783
    %v874 = vunpack.c.l.b16 %v784
    %v875 = vunpack.c.h.b16 %v783
    %v876 = vunpack.c.h.b16 %v784
    %v877 = vunpack.c.l.b16 %v785
    %v878 = vunpack.c.l.b16 %v786
    %v879 = vunpack.c.h.b16 %v785
    %v880 = vunpack.c.h.b16 %v786
    %v881 = vunpack.c.l.b16 %v787
    %v882 = vunpack.c.l.b16 %v788
    %v883 = vunpack.c.h.b16 %v787
    %v884 = vunpack.c.h.b16 %v788
    %v885 = vpack.c.b16 %v822, %v821
    %v886 = vpack.c.b16 %v824, %v823
    %v887 = vpack.c.b16 %v826, %v825
    %v888 = vpack.c.b16 %v828, %v827
    %v889 = vpack.c.b16 %v830, %v829
    %v890 = vpack.c.b16 %v832, %v831
    %v891 = vpack.c.b16 %v834, %v833
    %v892 = vpack.c.b16 %v836, %v835
    %v893 = vpack.c.b16 %v838, %v837
    %v894 = vpack.c.b16 %v840, %v839
    %v895 = vpack.c.b16 %v842, %v841
    %v896 = vpack.c.b16 %v844, %v843
    %v897 = vpack.c.b16 %v846, %v845
    %v898 = vpack.c.b16 %v848, %v847
    %v899 = vpack.c.b16 %v850, %v849
    %v900 = vpack.c.b16 %v852, %v851
    %v901 = vpack.c.b16 %v854, %v853
    %v902 = vpack.c.b16 %v856, %v855
    %v903 = vpack.c.b16 %v858, %v857
    %v904 = vpack.c.b16 %v860, %v859
    %v905 = vpack.c.b16 %v862, %v861
    %v906 = vpack.c.b16 %v864, %v863
    %v907 = vpack.c.b16 %v866, %v865
    %v908 = vpack.c.b16 %v868, %v867
    %v909 = vpack.c.b16 %v870, %v869
    %v910 = vpack.c.b16 %v872, %v871
    %v911 = vpack.c.b16 %v874, %v873
    %v912 = vpack.c.b16 %v876, %v875
    %v913 = vpack.c.b16 %v878, %v877
    %v914 = vpack.c.b16 %v880, %v879
    %v915 = vpack.c.b16 %v882, %v881
    %v916 = vpack.c.b16 %v884, %v883
    %vm949 = vcmask 1043456
    %vm950 = vcmask 523268
    %vm951 = vmor %vm950, %vm949
    %952 = vst.msk [vmem:[%s3] sm:$0xff] %vm951, %v885
    %953 = vst.msk [vmem:[%s3 + $0x8] sm:$0xff] %vm951, %v886
    %954 = vst.msk [vmem:[%s3 + $0x10] sm:$0xff] %vm951, %v887
    %955 = vst.msk [vmem:[%s3 + $0x18] sm:$0xff] %vm951, %v888
    %956 = vst.msk [vmem:[%s3 + $0x20] sm:$0xff] %vm951, %v889
    %957 = vst.msk [vmem:[%s3 + $0x28] sm:$0xff] %vm951, %v890
    %958 = vst.msk [vmem:[%s3 + $0x30] sm:$0xff] %vm951, %v891
    %959 = vst.msk [vmem:[%s3 + $0x38] sm:$0xff] %vm951, %v892
    %960 = vst.msk [vmem:[%s3 + $0x40] sm:$0xff] %vm951, %v893
    %961 = vst.msk [vmem:[%s3 + $0x48] sm:$0xff] %vm951, %v894
    %962 = vst.msk [vmem:[%s3 + $0x50] sm:$0xff] %vm951, %v895
    %963 = vst.msk [vmem:[%s3 + $0x58] sm:$0xff] %vm951, %v896
    %964 = vst.msk [vmem:[%s3 + $0x60] sm:$0xff] %vm951, %v897
    %965 = vst.msk [vmem:[%s3 + $0x68] sm:$0xff] %vm951, %v898
    %966 = vst.msk [vmem:[%s3 + $0x70] sm:$0xff] %vm951, %v899
    %967 = vst.msk [vmem:[%s3 + $0x78] sm:$0xff] %vm951, %v900
    %968 = vst.msk [vmem:[%s3 + $0x80] sm:$0xff] %vm951, %v901
    %969 = vst.msk [vmem:[%s3 + $0x88] sm:$0xff] %vm951, %v902
    %970 = vst.msk [vmem:[%s3 + $0x90] sm:$0xff] %vm951, %v903
    %971 = vst.msk [vmem:[%s3 + $0x98] sm:$0xff] %vm951, %v904
    %972 = vst.msk [vmem:[%s3 + $0xa0] sm:$0xff] %vm951, %v905
    %973 = vst.msk [vmem:[%s3 + $0xa8] sm:$0xff] %vm951, %v906
    %974 = vst.msk [vmem:[%s3 + $0xb0] sm:$0xff] %vm951, %v907
    %975 = vst.msk [vmem:[%s3 + $0xb8] sm:$0xff] %vm951, %v908
    %976 = vst.msk [vmem:[%s3 + $0xc0] sm:$0xff] %vm951, %v909
    %977 = vst.msk [vmem:[%s3 + $0xc8] sm:$0xff] %vm951, %v910
    %978 = vst.msk [vmem:[%s3 + $0xd0] sm:$0xff] %vm951, %v911
    %979 = vst.msk [vmem:[%s3 + $0xd8] sm:$0xff] %vm951, %v912
    %980 = vst.msk [vmem:[%s3 + $0xe0] sm:$0xff] %vm951, %v913
    %981 = vst.msk [vmem:[%s3 + $0xe8] sm:$0xff] %vm951, %v914
    %982 = vst.msk [vmem:[%s3 + $0xf0] sm:$0xff] %vm951, %v915
    %983 = vst.msk [vmem:[%s3 + $0xf8] sm:$0xff] %vm951, %v916
  $region21: #{rel0_encoder_forward.10} parent=0 // pred_fallthru
    _
  // Predicated region
  $region22: #{rel0_encoder_forward.10} parent=0 // pred_check
    _
  $region23: #{rel0_encoder_forward.10} parent=0 // pred_check_branch
    %985 = sbr.rel (0) target = $region25
  $region24: #{rel0_encoder_forward.10} parent=0 // pred_region
    _
  $region25: #{rel0_encoder_forward.10} parent=0 // pred_fallthru
    _
  // Predicated region
  $region26: #{rel0_encoder_forward.10} parent=0 // pred_check
    _
  $region27: #{rel0_encoder_forward.10} parent=0 // pred_check_branch
    %987 = sbr.rel (0) target = $region29
  $region28: #{rel0_encoder_forward.10} parent=0 // pred_region
    _
  $region29: #{rel0_encoder_forward.10} parent=0 // pred_fallthru
    _

// kernel: rel0_encoder_forward.9
$region0: #{rel0_encoder_forward.9}
  #allocation0 [shape = 'u32[]', space=smem, size = 0x4, offset = 0x4, fixed_abs, tag = 'smem constant byte address 0x4 - core index']
  #allocation1 [shape = 'u32[144,128]{1,0:T(1,128)}', space=vmem, size = 0x12000, scoped, tag = 'internal scratch']
  #allocation2 [shape = 'f32[128,128]{1,0:T(8,128)}', space=vmem, size = 0x10000, scoped, tag = 'scratch operand']
  %s0 = inlined_call_operand.vmem [shape: f32[128,64], index: 0, kind: input, shape index: {}]
  %s1 = inlined_call_operand.vmem [shape: bf16[64,128], index: 1, kind: input, shape index: {}]
  %s2 = inlined_call_operand.vmem [shape: f32[1,128], index: 2, kind: input, shape index: {}]
  %s3 = inlined_call_operand.vmem [shape: bf16[128,128], index: 3, kind: output, shape index: {}]
  %s4 = sld [smem:[#allocation0]]
  $region30: #{rel0_encoder_forward.9} parent=0
    _
  %s6 = ssub.s32 1, %s4
  %s7 = scalar_select 0, %s6, %s4
  // Predicated region
  $region2: #{rel0_encoder_forward.9} parent=0 // pred_check
    _
  $region3: #{rel0_encoder_forward.9} parent=0 // pred_check_branch
    %9 = sbr.rel (0) target = $region5
  $region4: #{rel0_encoder_forward.9} parent=0 // pred_region
    _
  $region5: #{rel0_encoder_forward.9} parent=0 // pred_fallthru
    _
  // Predicated region
  $region6: #{rel0_encoder_forward.9} parent=0 // pred_check
    _
  $region7: #{rel0_encoder_forward.9} parent=0 // pred_check_branch
    %11 = sbr.rel (0) target = $region9
  $region8: #{rel0_encoder_forward.9} parent=0 // pred_region
    _
  $region9: #{rel0_encoder_forward.9} parent=0 // pred_fallthru
    _
  // Predicated region
  $region10: #{rel0_encoder_forward.9} parent=0 // pred_check
    _
  $region11: #{rel0_encoder_forward.9} parent=0 // pred_check_branch
    %13 = sbr.rel (0) target = $region13
  $region12: #{rel0_encoder_forward.9} parent=0 // pred_region
    _
  $region13: #{rel0_encoder_forward.9} parent=0 // pred_fallthru
    _
  %p15 = scmp.eq.s32.totalorder 0, 0
  // Predicated region
  $region14: #{rel0_encoder_forward.9} parent=0 // pred_check
    %p16 = pneg %p15
  $region15: #{rel0_encoder_forward.9} parent=0 // pred_check_branch
    %18 = sbr.rel (%p16) target = $region17
  $region16: #{rel0_encoder_forward.9} parent=0 // pred_region
    %19 = vst [vmem:[#allocation2] sm:$0xff] 0.0
    %20 = vst [vmem:[#allocation2 + $0x8] sm:$0xff] 0.0
    %21 = vst [vmem:[#allocation2 + $0x10] sm:$0xff] 0.0
    %22 = vst [vmem:[#allocation2 + $0x18] sm:$0xff] 0.0
    %23 = vst [vmem:[#allocation2 + $0x20] sm:$0xff] 0.0
    %24 = vst [vmem:[#allocation2 + $0x28] sm:$0xff] 0.0
    %25 = vst [vmem:[#allocation2 + $0x30] sm:$0xff] 0.0
    %26 = vst [vmem:[#allocation2 + $0x38] sm:$0xff] 0.0
    %27 = vst [vmem:[#allocation2 + $0x40] sm:$0xff] 0.0
    %28 = vst [vmem:[#allocation2 + $0x48] sm:$0xff] 0.0
    %29 = vst [vmem:[#allocation2 + $0x50] sm:$0xff] 0.0
    %30 = vst [vmem:[#allocation2 + $0x58] sm:$0xff] 0.0
    %31 = vst [vmem:[#allocation2 + $0x60] sm:$0xff] 0.0
    %32 = vst [vmem:[#allocation2 + $0x68] sm:$0xff] 0.0
    %33 = vst [vmem:[#allocation2 + $0x70] sm:$0xff] 0.0
    %34 = vst [vmem:[#allocation2 + $0x78] sm:$0xff] 0.0
  $region17: #{rel0_encoder_forward.9} parent=0 // pred_fallthru
    _
  %v35 = vld [vmem:[#allocation2] sm:$0xff]
  %v36 = vld [vmem:[#allocation2 + $0x8] sm:$0xff]
  %v37 = vld [vmem:[#allocation2 + $0x10] sm:$0xff]
  %v38 = vld [vmem:[#allocation2 + $0x18] sm:$0xff]
  %v39 = vld [vmem:[#allocation2 + $0x20] sm:$0xff]
  %v40 = vld [vmem:[#allocation2 + $0x28] sm:$0xff]
  %v41 = vld [vmem:[#allocation2 + $0x30] sm:$0xff]
  %v42 = vld [vmem:[#allocation2 + $0x38] sm:$0xff]
  %v43 = vld [vmem:[#allocation2 + $0x40] sm:$0xff]
  %v44 = vld [vmem:[#allocation2 + $0x48] sm:$0xff]
  %v45 = vld [vmem:[#allocation2 + $0x50] sm:$0xff]
  %v46 = vld [vmem:[#allocation2 + $0x58] sm:$0xff]
  %v47 = vld [vmem:[#allocation2 + $0x60] sm:$0xff]
  %v48 = vld [vmem:[#allocation2 + $0x68] sm:$0xff]
  %v49 = vld [vmem:[#allocation2 + $0x70] sm:$0xff]
  %v50 = vld [vmem:[#allocation2 + $0x78] sm:$0xff]
  %v51 = vld [vmem:[%s0] sm:$0xff]
  %v52 = vld [vmem:[%s0 + $0x8] sm:$0xff]
  %v53 = vld [vmem:[%s0 + $0x10] sm:$0xff]
  %v54 = vld [vmem:[%s0 + $0x18] sm:$0xff]
  %v55 = vld [vmem:[%s0 + $0x20] sm:$0xff]
  %v56 = vld [vmem:[%s0 + $0x28] sm:$0xff]
  %v57 = vld [vmem:[%s0 + $0x30] sm:$0xff]
  %v58 = vld [vmem:[%s0 + $0x38] sm:$0xff]
  %v59 = vld [vmem:[%s0 + $0x40] sm:$0xff]
  %v60 = vld [vmem:[%s0 + $0x48] sm:$0xff]
  %v61 = vld [vmem:[%s0 + $0x50] sm:$0xff]
  %v62 = vld [vmem:[%s0 + $0x58] sm:$0xff]
  %v63 = vld [vmem:[%s0 + $0x60] sm:$0xff]
  %v64 = vld [vmem:[%s0 + $0x68] sm:$0xff]
  %v65 = vld [vmem:[%s0 + $0x70] sm:$0xff]
  %v66 = vld [vmem:[%s0 + $0x78] sm:$0xff]
  %v67 = vpack.c.bf16 %v52, %v51
  %v68 = vpack.c.bf16 %v54, %v53
  %v69 = vpack.c.bf16 %v56, %v55
  %v70 = vpack.c.bf16 %v58, %v57
  %v71 = vpack.c.bf16 %v60, %v59
  %v72 = vpack.c.bf16 %v62, %v61
  %v73 = vpack.c.bf16 %v64, %v63
  %v74 = vpack.c.bf16 %v66, %v65
  %v75 = vld [vmem:[%s1] sm:$0xf]
  %v76 = vld [vmem:[%s1 + $0x4] sm:$0xf]
  %v77 = vld [vmem:[%s1 + $0x8] sm:$0xf]
  %v78 = vld [vmem:[%s1 + $0xc] sm:$0xf]
  %v79 = vld [vmem:[%s1 + $0x10] sm:$0xf]
  %v80 = vld [vmem:[%s1 + $0x14] sm:$0xf]
  %v81 = vld [vmem:[%s1 + $0x18] sm:$0xf]
  %v82 = vld [vmem:[%s1 + $0x1c] sm:$0xf]
  %v91 = vunpack.c.l.b16 %v75
  %v92 = vunpack.c.l.b16 %v76
  %v93 = vunpack.c.l.b16 %v77
  %v94 = vunpack.c.l.b16 %v78
  %v95 = vunpack.c.l.b16 %v79
  %v96 = vunpack.c.l.b16 %v80
  %v97 = vunpack.c.l.b16 %v81
  %v98 = vunpack.c.l.b16 %v82
  %v99 = vpack.c.b16 %v92, %v91
  %v100 = vpack.c.b16 %v94, %v93
  %v101 = vpack.c.b16 %v96, %v95
  %v102 = vpack.c.b16 %v98, %v97
  %vm107 = vcmask 523264
  %v109 = vsel %vm107, %v67, 0
  %v112 = vsel %vm107, %v68, 0
  %v115 = vsel %vm107, %v69, 0
  %v118 = vsel %vm107, %v70, 0
  %v121 = vsel %vm107, %v71, 0
  %v124 = vsel %vm107, %v72, 0
  %v127 = vsel %vm107, %v73, 0
  %v130 = vsel %vm107, %v74, 0
  %132 = vmatprep.subr.bf16.mxu0 0
  %133 = vmatpush1.bf16.msra.mxu0 0
  %134 = vmatprep.subr.bf16.mxu0 0
  %135 = vmatpush1.bf16.msra.mxu0 0
  %136 = vmatprep.subr.bf16.mxu0 0
  %137 = vmatpush1.bf16.msra.mxu0 0
  %138 = vmatprep.subr.bf16.mxu0 0
  %139 = vmatpush1.bf16.msra.mxu0 0
  %140 = vmatprep.subr.bf16.mxu0 0
  %141 = vmatpush1.bf16.msra.mxu0 %v102
  %142 = vmatprep.subr.bf16.mxu0 0
  %143 = vmatpush1.bf16.msra.mxu0 %v101
  %144 = vmatprep.subr.bf16.mxu0 0
  %145 = vmatpush1.bf16.msra.mxu0 %v100
  %146 = vmatprep.subr.bf16.mxu0 0
  %147 = vmatpush1.bf16.msra.mxu0 %v99
  %148 = vmatprep.subr.bf16.mxu0 0
  %149 = vmatpush2.bf16.msra.mxu0 0
  %150 = vmatprep.subr.bf16.mxu0 0
  %151 = vmatpush2.bf16.msra.mxu0 0
  %152 = vmatprep.subr.bf16.mxu0 0
  %153 = vmatpush2.bf16.msra.mxu0 0
  %154 = vmatprep.subr.bf16.mxu0 0
  %155 = vmatpush2.bf16.msra.mxu0 0
  %156 = vmatprep.subr.bf16.mxu0 0
  %157 = vmatpush2.bf16.msra.mxu0 0
  %158 = vmatprep.subr.bf16.mxu0 0
  %159 = vmatpush2.bf16.msra.mxu0 0
  %160 = vmatprep.subr.bf16.mxu0 0
  %161 = vmatpush2.bf16.msra.mxu0 0
  %162 = vmatprep.subr.bf16.mxu0 0
  %163 = vmatpush2.bf16.msra.mxu0 0
  %164 = vmatprep.mubr.bf16.mxu0 0
  %165 = vmatmul.mubr.bf16.gmra.mxu0 %v109
  %v166 = vpop.f32.mrf.mxu0
  %v167 = vadd.f32 0.0, %v166
  %v168 = vpop.f32.mrf.mxu0
  %v169 = vpop.f32.mrf.mxu0
  %v170 = vadd.f32 0.0, %v169
  %v171 = vpop.f32.mrf.mxu0
  %172 = vmatprep.mubr.bf16.mxu0 0
  %173 = vmatmul.mubr.bf16.gmra.mxu0 %v112
  %v174 = vpop.f32.mrf.mxu0
  %v175 = vadd.f32 0.0, %v174
  %v176 = vpop.f32.mrf.mxu0
  %v177 = vpop.f32.mrf.mxu0
  %v178 = vadd.f32 0.0, %v177
  %v179 = vpop.f32.mrf.mxu0
  %180 = vmatprep.mubr.bf16.mxu0 0
  %181 = vmatmul.mubr.bf16.gmra.mxu0 %v115
  %v182 = vpop.f32.mrf.mxu0
  %v183 = vadd.f32 0.0, %v182
  %v184 = vpop.f32.mrf.mxu0
  %v185 = vpop.f32.mrf.mxu0
  %v186 = vadd.f32 0.0, %v185
  %v187 = vpop.f32.mrf.mxu0
  %188 = vmatprep.mubr.bf16.mxu0 0
  %189 = vmatmul.mubr.bf16.gmra.mxu0 %v118
  %v190 = vpop.f32.mrf.mxu0
  %v191 = vadd.f32 0.0, %v190
  %v192 = vpop.f32.mrf.mxu0
  %v193 = vpop.f32.mrf.mxu0
  %v194 = vadd.f32 0.0, %v193
  %v195 = vpop.f32.mrf.mxu0
  %196 = vmatprep.mubr.bf16.mxu0 0
  %197 = vmatmul.mubr.bf16.gmra.mxu0 %v121
  %v198 = vpop.f32.mrf.mxu0
  %v199 = vadd.f32 0.0, %v198
  %v200 = vpop.f32.mrf.mxu0
  %v201 = vpop.f32.mrf.mxu0
  %v202 = vadd.f32 0.0, %v201
  %v203 = vpop.f32.mrf.mxu0
  %204 = vmatprep.mubr.bf16.mxu0 0
  %205 = vmatmul.mubr.bf16.gmra.mxu0 %v124
  %v206 = vpop.f32.mrf.mxu0
  %v207 = vadd.f32 0.0, %v206
  %v208 = vpop.f32.mrf.mxu0
  %v209 = vpop.f32.mrf.mxu0
  %v210 = vadd.f32 0.0, %v209
  %v211 = vpop.f32.mrf.mxu0
  %212 = vmatprep.mubr.bf16.mxu0 0
  %213 = vmatmul.mubr.bf16.gmra.mxu0 %v127
  %v214 = vpop.f32.mrf.mxu0
  %v215 = vadd.f32 0.0, %v214
  %v216 = vpop.f32.mrf.mxu0
  %v217 = vpop.f32.mrf.mxu0
  %v218 = vadd.f32 0.0, %v217
  %v219 = vpop.f32.mrf.mxu0
  %220 = vmatprep.mubr.bf16.mxu0 0
  %221 = vmatmul.mubr.bf16.gmra.mxu0 %v130
  %v222 = vpop.f32.mrf.mxu0
  %v223 = vadd.f32 0.0, %v222
  %v224 = vpop.f32.mrf.mxu0
  %v225 = vpop.f32.mrf.mxu0
  %v226 = vadd.f32 0.0, %v225
  %v227 = vpop.f32.mrf.mxu0
  %228 = vdwg.mxu0
  %v229 = vadd.f32 %v35, %v167
  %v230 = vadd.f32 %v36, %v170
  %v231 = vadd.f32 %v37, %v175
  %v232 = vadd.f32 %v38, %v178
  %v233 = vadd.f32 %v39, %v183
  %v234 = vadd.f32 %v40, %v186
  %v235 = vadd.f32 %v41, %v191
  %v236 = vadd.f32 %v42, %v194
  %v237 = vadd.f32 %v43, %v199
  %v238 = vadd.f32 %v44, %v202
  %v239 = vadd.f32 %v45, %v207
  %v240 = vadd.f32 %v46, %v210
  %v241 = vadd.f32 %v47, %v215
  %v242 = vadd.f32 %v48, %v218
  %v243 = vadd.f32 %v49, %v223
  %v244 = vadd.f32 %v50, %v226
  %245 = vst [vmem:[#allocation2] sm:$0xff] %v229
  %246 = vst [vmem:[#allocation2 + $0x8] sm:$0xff] %v230
  %247 = vst [vmem:[#allocation2 + $0x10] sm:$0xff] %v231
  %248 = vst [vmem:[#allocation2 + $0x18] sm:$0xff] %v232
  %249 = vst [vmem:[#allocation2 + $0x20] sm:$0xff] %v233
  %250 = vst [vmem:[#allocation2 + $0x28] sm:$0xff] %v234
  %251 = vst [vmem:[#allocation2 + $0x30] sm:$0xff] %v235
  %252 = vst [vmem:[#allocation2 + $0x38] sm:$0xff] %v236
  %253 = vst [vmem:[#allocation2 + $0x40] sm:$0xff] %v237
  %254 = vst [vmem:[#allocation2 + $0x48] sm:$0xff] %v238
  %255 = vst [vmem:[#allocation2 + $0x50] sm:$0xff] %v239
  %256 = vst [vmem:[#allocation2 + $0x58] sm:$0xff] %v240
  %257 = vst [vmem:[#allocation2 + $0x60] sm:$0xff] %v241
  %258 = vst [vmem:[#allocation2 + $0x68] sm:$0xff] %v242
  %259 = vst [vmem:[#allocation2 + $0x70] sm:$0xff] %v243
  %260 = vst [vmem:[#allocation2 + $0x78] sm:$0xff] %v244
  // Predicated region
  $region18: #{rel0_encoder_forward.9} parent=0 // pred_check
    %p261 = pneg %p15
  $region19: #{rel0_encoder_forward.9} parent=0 // pred_check_branch
    %263 = sbr.rel (%p261) target = $region21
  $region20: #{rel0_encoder_forward.9} parent=0 // pred_region
    %v264 = vld [vmem:[#allocation2] sm:$0xff]
    %v265 = vld [vmem:[#allocation2 + $0x8] sm:$0xff]
    %v266 = vld [vmem:[#allocation2 + $0x10] sm:$0xff]
    %v267 = vld [vmem:[#allocation2 + $0x18] sm:$0xff]
    %v268 = vld [vmem:[#allocation2 + $0x20] sm:$0xff]
    %v269 = vld [vmem:[#allocation2 + $0x28] sm:$0xff]
    %v270 = vld [vmem:[#allocation2 + $0x30] sm:$0xff]
    %v271 = vld [vmem:[#allocation2 + $0x38] sm:$0xff]
    %v272 = vld [vmem:[#allocation2 + $0x40] sm:$0xff]
    %v273 = vld [vmem:[#allocation2 + $0x48] sm:$0xff]
    %v274 = vld [vmem:[#allocation2 + $0x50] sm:$0xff]
    %v275 = vld [vmem:[#allocation2 + $0x58] sm:$0xff]
    %v276 = vld [vmem:[#allocation2 + $0x60] sm:$0xff]
    %v277 = vld [vmem:[#allocation2 + $0x68] sm:$0xff]
    %v278 = vld [vmem:[#allocation2 + $0x70] sm:$0xff]
    %v279 = vld [vmem:[#allocation2 + $0x78] sm:$0xff]
    %v280 = vld [vmem:[%s2] sm:$0x1]
    %v282 = vlaneseq
    %v283 = vshrl.u32 %v282, 7
    %v284 = vsub.s32 0, %v283
    %v285 = vrot.slane %v280, %v284
    %v287 = vadd.f32 %v264, %v285
    %v288 = vadd.f32 %v265, %v285
    %v289 = vadd.f32 %v266, %v285
    %v290 = vadd.f32 %v267, %v285
    %v291 = vadd.f32 %v268, %v285
    %v292 = vadd.f32 %v269, %v285
    %v293 = vadd.f32 %v270, %v285
    %v294 = vadd.f32 %v271, %v285
    %v295 = vadd.f32 %v272, %v285
    %v296 = vadd.f32 %v273, %v285
    %v297 = vadd.f32 %v274, %v285
    %v298 = vadd.f32 %v275, %v285
    %v299 = vadd.f32 %v276, %v285
    %v300 = vadd.f32 %v277, %v285
    %v301 = vadd.f32 %v278, %v285
    %v302 = vadd.f32 %v279, %v285
    %v303 = vpack.c.bf16 %v288, %v287
    %v304 = vpack.c.bf16 %v290, %v289
    %v305 = vpack.c.bf16 %v292, %v291
    %v306 = vpack.c.bf16 %v294, %v293
    %v307 = vpack.c.bf16 %v296, %v295
    %v308 = vpack.c.bf16 %v298, %v297
    %v309 = vpack.c.bf16 %v300, %v299
    %v310 = vpack.c.bf16 %v302, %v301
    %v319 = vunpack.c.l.b16 %v303
    %v320 = vunpack.c.h.b16 %v303
    %v321 = vunpack.c.l.b16 %v304
    %v322 = vunpack.c.h.b16 %v304
    %v323 = vunpack.c.l.b16 %v305
    %v324 = vunpack.c.h.b16 %v305
    %v325 = vunpack.c.l.b16 %v306
    %v326 = vunpack.c.h.b16 %v306
    %v327 = vunpack.c.l.b16 %v307
    %v328 = vunpack.c.h.b16 %v307
    %v329 = vunpack.c.l.b16 %v308
    %v330 = vunpack.c.h.b16 %v308
    %v331 = vunpack.c.l.b16 %v309
    %v332 = vunpack.c.h.b16 %v309
    %v333 = vunpack.c.l.b16 %v310
    %v334 = vunpack.c.h.b16 %v310
    %v335 = vpack.c.b16 %v319, %v319
    %v336 = vpack.c.b16 %v320, %v320
    %v337 = vpack.c.b16 %v321, %v321
    %v338 = vpack.c.b16 %v322, %v322
    %v339 = vpack.c.b16 %v323, %v323
    %v340 = vpack.c.b16 %v324, %v324
    %v341 = vpack.c.b16 %v325, %v325
    %v342 = vpack.c.b16 %v326, %v326
    %v343 = vpack.c.b16 %v327, %v327
    %v344 = vpack.c.b16 %v328, %v328
    %v345 = vpack.c.b16 %v329, %v329
    %v346 = vpack.c.b16 %v330, %v330
    %v347 = vpack.c.b16 %v331, %v331
    %v348 = vpack.c.b16 %v332, %v332
    %v349 = vpack.c.b16 %v333, %v333
    %v350 = vpack.c.b16 %v334, %v334
    %367 = vst [vmem:[%s3] sm:$0xf] %v335
    %368 = vst [vmem:[%s3 + $0x4] sm:$0xf] %v336
    %369 = vst [vmem:[%s3 + $0x8] sm:$0xf] %v337
    %370 = vst [vmem:[%s3 + $0xc] sm:$0xf] %v338
    %371 = vst [vmem:[%s3 + $0x10] sm:$0xf] %v339
    %372 = vst [vmem:[%s3 + $0x14] sm:$0xf] %v340
    %373 = vst [vmem:[%s3 + $0x18] sm:$0xf] %v341
    %374 = vst [vmem:[%s3 + $0x1c] sm:$0xf] %v342
    %375 = vst [vmem:[%s3 + $0x20] sm:$0xf] %v343
    %376 = vst [vmem:[%s3 + $0x24] sm:$0xf] %v344
    %377 = vst [vmem:[%s3 + $0x28] sm:$0xf] %v345
    %378 = vst [vmem:[%s3 + $0x2c] sm:$0xf] %v346
    %379 = vst [vmem:[%s3 + $0x30] sm:$0xf] %v347
    %380 = vst [vmem:[%s3 + $0x34] sm:$0xf] %v348
    %381 = vst [vmem:[%s3 + $0x38] sm:$0xf] %v349
    %382 = vst [vmem:[%s3 + $0x3c] sm:$0xf] %v350
  $region21: #{rel0_encoder_forward.9} parent=0 // pred_fallthru
    _
  // Predicated region
  $region22: #{rel0_encoder_forward.9} parent=0 // pred_check
    _
  $region23: #{rel0_encoder_forward.9} parent=0 // pred_check_branch
    %384 = sbr.rel (0) target = $region25
  $region24: #{rel0_encoder_forward.9} parent=0 // pred_region
    _
  $region25: #{rel0_encoder_forward.9} parent=0 // pred_fallthru
    _
  // Predicated region
  $region26: #{rel0_encoder_forward.9} parent=0 // pred_check
    _
  $region27: #{rel0_encoder_forward.9} parent=0 // pred_check_branch
    %386 = sbr.rel (0) target = $region29
  $region28: #{rel0_encoder_forward.9} parent=0 // pred_region
    _
  $region29: #{rel0_encoder_forward.9} parent=0 // pred_fallthru
    _

// kernel: rel0_encoder_forward.12
$region0: #{rel0_encoder_forward.12}
  #allocation0 [shape = 'u32[]', space=smem, size = 0x4, offset = 0x4, fixed_abs, tag = 'smem constant byte address 0x4 - core index']
  #allocation1 [shape = 'u32[144,128]{1,0:T(1,128)}', space=vmem, size = 0x12000, scoped, tag = 'internal scratch']
  #allocation2 [shape = 'f32[256,128]{1,0:T(8,128)}', space=vmem, size = 0x20000, scoped, tag = 'scratch operand']
  %s0 = inlined_call_operand.vmem [shape: f32[256,64], index: 0, kind: input, shape index: {}]
  %s1 = inlined_call_operand.vmem [shape: bf16[64,128], index: 1, kind: input, shape index: {}]
  %s2 = inlined_call_operand.vmem [shape: f32[1,128], index: 2, kind: input, shape index: {}]
  %s3 = inlined_call_operand.vmem [shape: bf16[256,128], index: 3, kind: output, shape index: {}]
  %s4 = sld [smem:[#allocation0]]
  $region30: #{rel0_encoder_forward.12} parent=0
    _
  %s6 = ssub.s32 1, %s4
  %s7 = scalar_select 0, %s6, %s4
  // Predicated region
  $region2: #{rel0_encoder_forward.12} parent=0 // pred_check
    _
  $region3: #{rel0_encoder_forward.12} parent=0 // pred_check_branch
    %9 = sbr.rel (0) target = $region5
  $region4: #{rel0_encoder_forward.12} parent=0 // pred_region
    _
  $region5: #{rel0_encoder_forward.12} parent=0 // pred_fallthru
    _
  // Predicated region
  $region6: #{rel0_encoder_forward.12} parent=0 // pred_check
    _
  $region7: #{rel0_encoder_forward.12} parent=0 // pred_check_branch
    %11 = sbr.rel (0) target = $region9
  $region8: #{rel0_encoder_forward.12} parent=0 // pred_region
    _
  $region9: #{rel0_encoder_forward.12} parent=0 // pred_fallthru
    _
  // Predicated region
  $region10: #{rel0_encoder_forward.12} parent=0 // pred_check
    _
  $region11: #{rel0_encoder_forward.12} parent=0 // pred_check_branch
    %13 = sbr.rel (0) target = $region13
  $region12: #{rel0_encoder_forward.12} parent=0 // pred_region
    _
  $region13: #{rel0_encoder_forward.12} parent=0 // pred_fallthru
    _
  %p15 = scmp.eq.s32.totalorder 0, 0
  // Predicated region
  $region14: #{rel0_encoder_forward.12} parent=0 // pred_check
    %p16 = pneg %p15
  $region15: #{rel0_encoder_forward.12} parent=0 // pred_check_branch
    %18 = sbr.rel (%p16) target = $region17
  $region16: #{rel0_encoder_forward.12} parent=0 // pred_region
    %19 = vst [vmem:[#allocation2] sm:$0xff] 0.0
    %20 = vst [vmem:[#allocation2 + $0x8] sm:$0xff] 0.0
    %21 = vst [vmem:[#allocation2 + $0x10] sm:$0xff] 0.0
    %22 = vst [vmem:[#allocation2 + $0x18] sm:$0xff] 0.0
    %23 = vst [vmem:[#allocation2 + $0x20] sm:$0xff] 0.0
    %24 = vst [vmem:[#allocation2 + $0x28] sm:$0xff] 0.0
    %25 = vst [vmem:[#allocation2 + $0x30] sm:$0xff] 0.0
    %26 = vst [vmem:[#allocation2 + $0x38] sm:$0xff] 0.0
    %27 = vst [vmem:[#allocation2 + $0x40] sm:$0xff] 0.0
    %28 = vst [vmem:[#allocation2 + $0x48] sm:$0xff] 0.0
    %29 = vst [vmem:[#allocation2 + $0x50] sm:$0xff] 0.0
    %30 = vst [vmem:[#allocation2 + $0x58] sm:$0xff] 0.0
    %31 = vst [vmem:[#allocation2 + $0x60] sm:$0xff] 0.0
    %32 = vst [vmem:[#allocation2 + $0x68] sm:$0xff] 0.0
    %33 = vst [vmem:[#allocation2 + $0x70] sm:$0xff] 0.0
    %34 = vst [vmem:[#allocation2 + $0x78] sm:$0xff] 0.0
    %35 = vst [vmem:[#allocation2 + $0x80] sm:$0xff] 0.0
    %36 = vst [vmem:[#allocation2 + $0x88] sm:$0xff] 0.0
    %37 = vst [vmem:[#allocation2 + $0x90] sm:$0xff] 0.0
    %38 = vst [vmem:[#allocation2 + $0x98] sm:$0xff] 0.0
    %39 = vst [vmem:[#allocation2 + $0xa0] sm:$0xff] 0.0
    %40 = vst [vmem:[#allocation2 + $0xa8] sm:$0xff] 0.0
    %41 = vst [vmem:[#allocation2 + $0xb0] sm:$0xff] 0.0
    %42 = vst [vmem:[#allocation2 + $0xb8] sm:$0xff] 0.0
    %43 = vst [vmem:[#allocation2 + $0xc0] sm:$0xff] 0.0
    %44 = vst [vmem:[#allocation2 + $0xc8] sm:$0xff] 0.0
    %45 = vst [vmem:[#allocation2 + $0xd0] sm:$0xff] 0.0
    %46 = vst [vmem:[#allocation2 + $0xd8] sm:$0xff] 0.0
    %47 = vst [vmem:[#allocation2 + $0xe0] sm:$0xff] 0.0
    %48 = vst [vmem:[#allocation2 + $0xe8] sm:$0xff] 0.0
    %49 = vst [vmem:[#allocation2 + $0xf0] sm:$0xff] 0.0
    %50 = vst [vmem:[#allocation2 + $0xf8] sm:$0xff] 0.0
  $region17: #{rel0_encoder_forward.12} parent=0 // pred_fallthru
    _
  %v51 = vld [vmem:[#allocation2] sm:$0xff]
  %v52 = vld [vmem:[#allocation2 + $0x8] sm:$0xff]
  %v53 = vld [vmem:[#allocation2 + $0x10] sm:$0xff]
  %v54 = vld [vmem:[#allocation2 + $0x18] sm:$0xff]
  %v55 = vld [vmem:[#allocation2 + $0x20] sm:$0xff]
  %v56 = vld [vmem:[#allocation2 + $0x28] sm:$0xff]
  %v57 = vld [vmem:[#allocation2 + $0x30] sm:$0xff]
  %v58 = vld [vmem:[#allocation2 + $0x38] sm:$0xff]
  %v59 = vld [vmem:[#allocation2 + $0x40] sm:$0xff]
  %v60 = vld [vmem:[#allocation2 + $0x48] sm:$0xff]
  %v61 = vld [vmem:[#allocation2 + $0x50] sm:$0xff]
  %v62 = vld [vmem:[#allocation2 + $0x58] sm:$0xff]
  %v63 = vld [vmem:[#allocation2 + $0x60] sm:$0xff]
  %v64 = vld [vmem:[#allocation2 + $0x68] sm:$0xff]
  %v65 = vld [vmem:[#allocation2 + $0x70] sm:$0xff]
  %v66 = vld [vmem:[#allocation2 + $0x78] sm:$0xff]
  %v67 = vld [vmem:[#allocation2 + $0x80] sm:$0xff]
  %v68 = vld [vmem:[#allocation2 + $0x88] sm:$0xff]
  %v69 = vld [vmem:[#allocation2 + $0x90] sm:$0xff]
  %v70 = vld [vmem:[#allocation2 + $0x98] sm:$0xff]
  %v71 = vld [vmem:[#allocation2 + $0xa0] sm:$0xff]
  %v72 = vld [vmem:[#allocation2 + $0xa8] sm:$0xff]
  %v73 = vld [vmem:[#allocation2 + $0xb0] sm:$0xff]
  %v74 = vld [vmem:[#allocation2 + $0xb8] sm:$0xff]
  %v75 = vld [vmem:[#allocation2 + $0xc0] sm:$0xff]
  %v76 = vld [vmem:[#allocation2 + $0xc8] sm:$0xff]
  %v77 = vld [vmem:[#allocation2 + $0xd0] sm:$0xff]
  %v78 = vld [vmem:[#allocation2 + $0xd8] sm:$0xff]
  %v79 = vld [vmem:[#allocation2 + $0xe0] sm:$0xff]
  %v80 = vld [vmem:[#allocation2 + $0xe8] sm:$0xff]
  %v81 = vld [vmem:[#allocation2 + $0xf0] sm:$0xff]
  %v82 = vld [vmem:[#allocation2 + $0xf8] sm:$0xff]
  %v83 = vld [vmem:[%s0] sm:$0xff]
  %v84 = vld [vmem:[%s0 + $0x8] sm:$0xff]
  %v85 = vld [vmem:[%s0 + $0x10] sm:$0xff]
  %v86 = vld [vmem:[%s0 + $0x18] sm:$0xff]
  %v87 = vld [vmem:[%s0 + $0x20] sm:$0xff]
  %v88 = vld [vmem:[%s0 + $0x28] sm:$0xff]
  %v89 = vld [vmem:[%s0 + $0x30] sm:$0xff]
  %v90 = vld [vmem:[%s0 + $0x38] sm:$0xff]
  %v91 = vld [vmem:[%s0 + $0x40] sm:$0xff]
  %v92 = vld [vmem:[%s0 + $0x48] sm:$0xff]
  %v93 = vld [vmem:[%s0 + $0x50] sm:$0xff]
  %v94 = vld [vmem:[%s0 + $0x58] sm:$0xff]
  %v95 = vld [vmem:[%s0 + $0x60] sm:$0xff]
  %v96 = vld [vmem:[%s0 + $0x68] sm:$0xff]
  %v97 = vld [vmem:[%s0 + $0x70] sm:$0xff]
  %v98 = vld [vmem:[%s0 + $0x78] sm:$0xff]
  %v99 = vld [vmem:[%s0 + $0x80] sm:$0xff]
  %v100 = vld [vmem:[%s0 + $0x88] sm:$0xff]
  %v101 = vld [vmem:[%s0 + $0x90] sm:$0xff]
  %v102 = vld [vmem:[%s0 + $0x98] sm:$0xff]
  %v103 = vld [vmem:[%s0 + $0xa0] sm:$0xff]
  %v104 = vld [vmem:[%s0 + $0xa8] sm:$0xff]
  %v105 = vld [vmem:[%s0 + $0xb0] sm:$0xff]
  %v106 = vld [vmem:[%s0 + $0xb8] sm:$0xff]
  %v107 = vld [vmem:[%s0 + $0xc0] sm:$0xff]
  %v108 = vld [vmem:[%s0 + $0xc8] sm:$0xff]
  %v109 = vld [vmem:[%s0 + $0xd0] sm:$0xff]
  %v110 = vld [vmem:[%s0 + $0xd8] sm:$0xff]
  %v111 = vld [vmem:[%s0 + $0xe0] sm:$0xff]
  %v112 = vld [vmem:[%s0 + $0xe8] sm:$0xff]
  %v113 = vld [vmem:[%s0 + $0xf0] sm:$0xff]
  %v114 = vld [vmem:[%s0 + $0xf8] sm:$0xff]
  %v115 = vpack.c.bf16 %v84, %v83
  %v116 = vpack.c.bf16 %v86, %v85
  %v117 = vpack.c.bf16 %v88, %v87
  %v118 = vpack.c.bf16 %v90, %v89
  %v119 = vpack.c.bf16 %v92, %v91
  %v120 = vpack.c.bf16 %v94, %v93
  %v121 = vpack.c.bf16 %v96, %v95
  %v122 = vpack.c.bf16 %v98, %v97
  %v123 = vpack.c.bf16 %v100, %v99
  %v124 = vpack.c.bf16 %v102, %v101
  %v125 = vpack.c.bf16 %v104, %v103
  %v126 = vpack.c.bf16 %v106, %v105
  %v127 = vpack.c.bf16 %v108, %v107
  %v128 = vpack.c.bf16 %v110, %v109
  %v129 = vpack.c.bf16 %v112, %v111
  %v130 = vpack.c.bf16 %v114, %v113
  %v131 = vld [vmem:[%s1] sm:$0xf]
  %v132 = vld [vmem:[%s1 + $0x4] sm:$0xf]
  %v133 = vld [vmem:[%s1 + $0x8] sm:$0xf]
  %v134 = vld [vmem:[%s1 + $0xc] sm:$0xf]
  %v135 = vld [vmem:[%s1 + $0x10] sm:$0xf]
  %v136 = vld [vmem:[%s1 + $0x14] sm:$0xf]
  %v137 = vld [vmem:[%s1 + $0x18] sm:$0xf]
  %v138 = vld [vmem:[%s1 + $0x1c] sm:$0xf]
  %v147 = vunpack.c.l.b16 %v131
  %v148 = vunpack.c.l.b16 %v132
  %v149 = vunpack.c.l.b16 %v133
  %v150 = vunpack.c.l.b16 %v134
  %v151 = vunpack.c.l.b16 %v135
  %v152 = vunpack.c.l.b16 %v136
  %v153 = vunpack.c.l.b16 %v137
  %v154 = vunpack.c.l.b16 %v138
  %v155 = vpack.c.b16 %v148, %v147
  %v156 = vpack.c.b16 %v150, %v149
  %v157 = vpack.c.b16 %v152, %v151
  %v158 = vpack.c.b16 %v154, %v153
  %vm163 = vcmask 523264
  %v165 = vsel %vm163, %v115, 0
  %v168 = vsel %vm163, %v116, 0
  %v171 = vsel %vm163, %v117, 0
  %v174 = vsel %vm163, %v118, 0
  %v177 = vsel %vm163, %v119, 0
  %v180 = vsel %vm163, %v120, 0
  %v183 = vsel %vm163, %v121, 0
  %v186 = vsel %vm163, %v122, 0
  %v189 = vsel %vm163, %v123, 0
  %v192 = vsel %vm163, %v124, 0
  %v195 = vsel %vm163, %v125, 0
  %v198 = vsel %vm163, %v126, 0
  %v201 = vsel %vm163, %v127, 0
  %v204 = vsel %vm163, %v128, 0
  %v207 = vsel %vm163, %v129, 0
  %v210 = vsel %vm163, %v130, 0
  %212 = vmatprep.subr.bf16.mxu0 0
  %213 = vmatpush1.bf16.msra.mxu0 0
  %214 = vmatprep.subr.bf16.mxu0 0
  %215 = vmatpush1.bf16.msra.mxu0 0
  %216 = vmatprep.subr.bf16.mxu0 0
  %217 = vmatpush1.bf16.msra.mxu0 0
  %218 = vmatprep.subr.bf16.mxu0 0
  %219 = vmatpush1.bf16.msra.mxu0 0
  %220 = vmatprep.subr.bf16.mxu0 0
  %221 = vmatpush1.bf16.msra.mxu0 %v158
  %222 = vmatprep.subr.bf16.mxu0 0
  %223 = vmatpush1.bf16.msra.mxu0 %v157
  %224 = vmatprep.subr.bf16.mxu0 0
  %225 = vmatpush1.bf16.msra.mxu0 %v156
  %226 = vmatprep.subr.bf16.mxu0 0
  %227 = vmatpush1.bf16.msra.mxu0 %v155
  %228 = vmatprep.subr.bf16.mxu0 0
  %229 = vmatpush2.bf16.msra.mxu0 0
  %230 = vmatprep.subr.bf16.mxu0 0
  %231 = vmatpush2.bf16.msra.mxu0 0
  %232 = vmatprep.subr.bf16.mxu0 0
  %233 = vmatpush2.bf16.msra.mxu0 0
  %234 = vmatprep.subr.bf16.mxu0 0
  %235 = vmatpush2.bf16.msra.mxu0 0
  %236 = vmatprep.subr.bf16.mxu0 0
  %237 = vmatpush2.bf16.msra.mxu0 0
  %238 = vmatprep.subr.bf16.mxu0 0
  %239 = vmatpush2.bf16.msra.mxu0 0
  %240 = vmatprep.subr.bf16.mxu0 0
  %241 = vmatpush2.bf16.msra.mxu0 0
  %242 = vmatprep.subr.bf16.mxu0 0
  %243 = vmatpush2.bf16.msra.mxu0 0
  %244 = vmatprep.mubr.bf16.mxu0 0
  %245 = vmatmul.mubr.bf16.gmra.mxu0 %v165
  %v246 = vpop.f32.mrf.mxu0
  %v247 = vadd.f32 0.0, %v246
  %v248 = vpop.f32.mrf.mxu0
  %v249 = vpop.f32.mrf.mxu0
  %v250 = vadd.f32 0.0, %v249
  %v251 = vpop.f32.mrf.mxu0
  %252 = vmatprep.mubr.bf16.mxu0 0
  %253 = vmatmul.mubr.bf16.gmra.mxu0 %v168
  %v254 = vpop.f32.mrf.mxu0
  %v255 = vadd.f32 0.0, %v254
  %v256 = vpop.f32.mrf.mxu0
  %v257 = vpop.f32.mrf.mxu0
  %v258 = vadd.f32 0.0, %v257
  %v259 = vpop.f32.mrf.mxu0
  %260 = vmatprep.mubr.bf16.mxu0 0
  %261 = vmatmul.mubr.bf16.gmra.mxu0 %v171
  %v262 = vpop.f32.mrf.mxu0
  %v263 = vadd.f32 0.0, %v262
  %v264 = vpop.f32.mrf.mxu0
  %v265 = vpop.f32.mrf.mxu0
  %v266 = vadd.f32 0.0, %v265
  %v267 = vpop.f32.mrf.mxu0
  %268 = vmatprep.mubr.bf16.mxu0 0
  %269 = vmatmul.mubr.bf16.gmra.mxu0 %v174
  %v270 = vpop.f32.mrf.mxu0
  %v271 = vadd.f32 0.0, %v270
  %v272 = vpop.f32.mrf.mxu0
  %v273 = vpop.f32.mrf.mxu0
  %v274 = vadd.f32 0.0, %v273
  %v275 = vpop.f32.mrf.mxu0
  %276 = vmatprep.mubr.bf16.mxu0 0
  %277 = vmatmul.mubr.bf16.gmra.mxu0 %v177
  %v278 = vpop.f32.mrf.mxu0
  %v279 = vadd.f32 0.0, %v278
  %v280 = vpop.f32.mrf.mxu0
  %v281 = vpop.f32.mrf.mxu0
  %v282 = vadd.f32 0.0, %v281
  %v283 = vpop.f32.mrf.mxu0
  %284 = vmatprep.mubr.bf16.mxu0 0
  %285 = vmatmul.mubr.bf16.gmra.mxu0 %v180
  %v286 = vpop.f32.mrf.mxu0
  %v287 = vadd.f32 0.0, %v286
  %v288 = vpop.f32.mrf.mxu0
  %v289 = vpop.f32.mrf.mxu0
  %v290 = vadd.f32 0.0, %v289
  %v291 = vpop.f32.mrf.mxu0
  %292 = vmatprep.mubr.bf16.mxu0 0
  %293 = vmatmul.mubr.bf16.gmra.mxu0 %v183
  %v294 = vpop.f32.mrf.mxu0
  %v295 = vadd.f32 0.0, %v294
  %v296 = vpop.f32.mrf.mxu0
  %v297 = vpop.f32.mrf.mxu0
  %v298 = vadd.f32 0.0, %v297
  %v299 = vpop.f32.mrf.mxu0
  %300 = vmatprep.mubr.bf16.mxu0 0
  %301 = vmatmul.mubr.bf16.gmra.mxu0 %v186
  %v302 = vpop.f32.mrf.mxu0
  %v303 = vadd.f32 0.0, %v302
  %v304 = vpop.f32.mrf.mxu0
  %v305 = vpop.f32.mrf.mxu0
  %v306 = vadd.f32 0.0, %v305
  %v307 = vpop.f32.mrf.mxu0
  %308 = vmatprep.mubr.bf16.mxu0 0
  %309 = vmatmul.mubr.bf16.gmra.mxu0 %v189
  %v310 = vpop.f32.mrf.mxu0
  %v311 = vadd.f32 0.0, %v310
  %v312 = vpop.f32.mrf.mxu0
  %v313 = vpop.f32.mrf.mxu0
  %v314 = vadd.f32 0.0, %v313
  %v315 = vpop.f32.mrf.mxu0
  %316 = vmatprep.mubr.bf16.mxu0 0
  %317 = vmatmul.mubr.bf16.gmra.mxu0 %v192
  %v318 = vpop.f32.mrf.mxu0
  %v319 = vadd.f32 0.0, %v318
  %v320 = vpop.f32.mrf.mxu0
  %v321 = vpop.f32.mrf.mxu0
  %v322 = vadd.f32 0.0, %v321
  %v323 = vpop.f32.mrf.mxu0
  %324 = vmatprep.mubr.bf16.mxu0 0
  %325 = vmatmul.mubr.bf16.gmra.mxu0 %v195
  %v326 = vpop.f32.mrf.mxu0
  %v327 = vadd.f32 0.0, %v326
  %v328 = vpop.f32.mrf.mxu0
  %v329 = vpop.f32.mrf.mxu0
  %v330 = vadd.f32 0.0, %v329
  %v331 = vpop.f32.mrf.mxu0
  %332 = vmatprep.mubr.bf16.mxu0 0
  %333 = vmatmul.mubr.bf16.gmra.mxu0 %v198
  %v334 = vpop.f32.mrf.mxu0
  %v335 = vadd.f32 0.0, %v334
  %v336 = vpop.f32.mrf.mxu0
  %v337 = vpop.f32.mrf.mxu0
  %v338 = vadd.f32 0.0, %v337
  %v339 = vpop.f32.mrf.mxu0
  %340 = vmatprep.mubr.bf16.mxu0 0
  %341 = vmatmul.mubr.bf16.gmra.mxu0 %v201
  %v342 = vpop.f32.mrf.mxu0
  %v343 = vadd.f32 0.0, %v342
  %v344 = vpop.f32.mrf.mxu0
  %v345 = vpop.f32.mrf.mxu0
  %v346 = vadd.f32 0.0, %v345
  %v347 = vpop.f32.mrf.mxu0
  %348 = vmatprep.mubr.bf16.mxu0 0
  %349 = vmatmul.mubr.bf16.gmra.mxu0 %v204
  %v350 = vpop.f32.mrf.mxu0
  %v351 = vadd.f32 0.0, %v350
  %v352 = vpop.f32.mrf.mxu0
  %v353 = vpop.f32.mrf.mxu0
  %v354 = vadd.f32 0.0, %v353
  %v355 = vpop.f32.mrf.mxu0
  %356 = vmatprep.mubr.bf16.mxu0 0
  %357 = vmatmul.mubr.bf16.gmra.mxu0 %v207
  %v358 = vpop.f32.mrf.mxu0
  %v359 = vadd.f32 0.0, %v358
  %v360 = vpop.f32.mrf.mxu0
  %v361 = vpop.f32.mrf.mxu0
  %v362 = vadd.f32 0.0, %v361
  %v363 = vpop.f32.mrf.mxu0
  %364 = vmatprep.mubr.bf16.mxu0 0
  %365 = vmatmul.mubr.bf16.gmra.mxu0 %v210
  %v366 = vpop.f32.mrf.mxu0
  %v367 = vadd.f32 0.0, %v366
  %v368 = vpop.f32.mrf.mxu0
  %v369 = vpop.f32.mrf.mxu0
  %v370 = vadd.f32 0.0, %v369
  %v371 = vpop.f32.mrf.mxu0
  %372 = vdwg.mxu0
  %v373 = vadd.f32 %v51, %v247
  %v374 = vadd.f32 %v52, %v250
  %v375 = vadd.f32 %v53, %v255
  %v376 = vadd.f32 %v54, %v258
  %v377 = vadd.f32 %v55, %v263
  %v378 = vadd.f32 %v56, %v266
  %v379 = vadd.f32 %v57, %v271
  %v380 = vadd.f32 %v58, %v274
  %v381 = vadd.f32 %v59, %v279
  %v382 = vadd.f32 %v60, %v282
  %v383 = vadd.f32 %v61, %v287
  %v384 = vadd.f32 %v62, %v290
  %v385 = vadd.f32 %v63, %v295
  %v386 = vadd.f32 %v64, %v298
  %v387 = vadd.f32 %v65, %v303
  %v388 = vadd.f32 %v66, %v306
  %v389 = vadd.f32 %v67, %v311
  %v390 = vadd.f32 %v68, %v314
  %v391 = vadd.f32 %v69, %v319
  %v392 = vadd.f32 %v70, %v322
  %v393 = vadd.f32 %v71, %v327
  %v394 = vadd.f32 %v72, %v330
  %v395 = vadd.f32 %v73, %v335
  %v396 = vadd.f32 %v74, %v338
  %v397 = vadd.f32 %v75, %v343
  %v398 = vadd.f32 %v76, %v346
  %v399 = vadd.f32 %v77, %v351
  %v400 = vadd.f32 %v78, %v354
  %v401 = vadd.f32 %v79, %v359
  %v402 = vadd.f32 %v80, %v362
  %v403 = vadd.f32 %v81, %v367
  %v404 = vadd.f32 %v82, %v370
  %405 = vst [vmem:[#allocation2] sm:$0xff] %v373
  %406 = vst [vmem:[#allocation2 + $0x8] sm:$0xff] %v374
  %407 = vst [vmem:[#allocation2 + $0x10] sm:$0xff] %v375
  %408 = vst [vmem:[#allocation2 + $0x18] sm:$0xff] %v376
  %409 = vst [vmem:[#allocation2 + $0x20] sm:$0xff] %v377
  %410 = vst [vmem:[#allocation2 + $0x28] sm:$0xff] %v378
  %411 = vst [vmem:[#allocation2 + $0x30] sm:$0xff] %v379
  %412 = vst [vmem:[#allocation2 + $0x38] sm:$0xff] %v380
  %413 = vst [vmem:[#allocation2 + $0x40] sm:$0xff] %v381
  %414 = vst [vmem:[#allocation2 + $0x48] sm:$0xff] %v382
  %415 = vst [vmem:[#allocation2 + $0x50] sm:$0xff] %v383
  %416 = vst [vmem:[#allocation2 + $0x58] sm:$0xff] %v384
  %417 = vst [vmem:[#allocation2 + $0x60] sm:$0xff] %v385
  %418 = vst [vmem:[#allocation2 + $0x68] sm:$0xff] %v386
  %419 = vst [vmem:[#allocation2 + $0x70] sm:$0xff] %v387
  %420 = vst [vmem:[#allocation2 + $0x78] sm:$0xff] %v388
  %421 = vst [vmem:[#allocation2 + $0x80] sm:$0xff] %v389
  %422 = vst [vmem:[#allocation2 + $0x88] sm:$0xff] %v390
  %423 = vst [vmem:[#allocation2 + $0x90] sm:$0xff] %v391
  %424 = vst [vmem:[#allocation2 + $0x98] sm:$0xff] %v392
  %425 = vst [vmem:[#allocation2 + $0xa0] sm:$0xff] %v393
  %426 = vst [vmem:[#allocation2 + $0xa8] sm:$0xff] %v394
  %427 = vst [vmem:[#allocation2 + $0xb0] sm:$0xff] %v395
  %428 = vst [vmem:[#allocation2 + $0xb8] sm:$0xff] %v396
  %429 = vst [vmem:[#allocation2 + $0xc0] sm:$0xff] %v397
  %430 = vst [vmem:[#allocation2 + $0xc8] sm:$0xff] %v398
  %431 = vst [vmem:[#allocation2 + $0xd0] sm:$0xff] %v399
  %432 = vst [vmem:[#allocation2 + $0xd8] sm:$0xff] %v400
  %433 = vst [vmem:[#allocation2 + $0xe0] sm:$0xff] %v401
  %434 = vst [vmem:[#allocation2 + $0xe8] sm:$0xff] %v402
  %435 = vst [vmem:[#allocation2 + $0xf0] sm:$0xff] %v403
  %436 = vst [vmem:[#allocation2 + $0xf8] sm:$0xff] %v404
  // Predicated region
  $region18: #{rel0_encoder_forward.12} parent=0 // pred_check
    %p437 = pneg %p15
  $region19: #{rel0_encoder_forward.12} parent=0 // pred_check_branch
    %439 = sbr.rel (%p437) target = $region21
  $region20: #{rel0_encoder_forward.12} parent=0 // pred_region
    %v440 = vld [vmem:[#allocation2] sm:$0xff]
    %v441 = vld [vmem:[#allocation2 + $0x8] sm:$0xff]
    %v442 = vld [vmem:[#allocation2 + $0x10] sm:$0xff]
    %v443 = vld [vmem:[#allocation2 + $0x18] sm:$0xff]
    %v444 = vld [vmem:[#allocation2 + $0x20] sm:$0xff]
    %v445 = vld [vmem:[#allocation2 + $0x28] sm:$0xff]
    %v446 = vld [vmem:[#allocation2 + $0x30] sm:$0xff]
    %v447 = vld [vmem:[#allocation2 + $0x38] sm:$0xff]
    %v448 = vld [vmem:[#allocation2 + $0x40] sm:$0xff]
    %v449 = vld [vmem:[#allocation2 + $0x48] sm:$0xff]
    %v450 = vld [vmem:[#allocation2 + $0x50] sm:$0xff]
    %v451 = vld [vmem:[#allocation2 + $0x58] sm:$0xff]
    %v452 = vld [vmem:[#allocation2 + $0x60] sm:$0xff]
    %v453 = vld [vmem:[#allocation2 + $0x68] sm:$0xff]
    %v454 = vld [vmem:[#allocation2 + $0x70] sm:$0xff]
    %v455 = vld [vmem:[#allocation2 + $0x78] sm:$0xff]
    %v456 = vld [vmem:[#allocation2 + $0x80] sm:$0xff]
    %v457 = vld [vmem:[#allocation2 + $0x88] sm:$0xff]
    %v458 = vld [vmem:[#allocation2 + $0x90] sm:$0xff]
    %v459 = vld [vmem:[#allocation2 + $0x98] sm:$0xff]
    %v460 = vld [vmem:[#allocation2 + $0xa0] sm:$0xff]
    %v461 = vld [vmem:[#allocation2 + $0xa8] sm:$0xff]
    %v462 = vld [vmem:[#allocation2 + $0xb0] sm:$0xff]
    %v463 = vld [vmem:[#allocation2 + $0xb8] sm:$0xff]
    %v464 = vld [vmem:[#allocation2 + $0xc0] sm:$0xff]
    %v465 = vld [vmem:[#allocation2 + $0xc8] sm:$0xff]
    %v466 = vld [vmem:[#allocation2 + $0xd0] sm:$0xff]
    %v467 = vld [vmem:[#allocation2 + $0xd8] sm:$0xff]
    %v468 = vld [vmem:[#allocation2 + $0xe0] sm:$0xff]
    %v469 = vld [vmem:[#allocation2 + $0xe8] sm:$0xff]
    %v470 = vld [vmem:[#allocation2 + $0xf0] sm:$0xff]
    %v471 = vld [vmem:[#allocation2 + $0xf8] sm:$0xff]
    %v472 = vld [vmem:[%s2] sm:$0x1]
    %v474 = vlaneseq
    %v475 = vshrl.u32 %v474, 7
    %v476 = vsub.s32 0, %v475
    %v477 = vrot.slane %v472, %v476
    %v479 = vadd.f32 %v440, %v477
    %v480 = vadd.f32 %v441, %v477
    %v481 = vadd.f32 %v442, %v477
    %v482 = vadd.f32 %v443, %v477
    %v483 = vadd.f32 %v444, %v477
    %v484 = vadd.f32 %v445, %v477
    %v485 = vadd.f32 %v446, %v477
    %v486 = vadd.f32 %v447, %v477
    %v487 = vadd.f32 %v448, %v477
    %v488 = vadd.f32 %v449, %v477
    %v489 = vadd.f32 %v450, %v477
    %v490 = vadd.f32 %v451, %v477
    %v491 = vadd.f32 %v452, %v477
    %v492 = vadd.f32 %v453, %v477
    %v493 = vadd.f32 %v454, %v477
    %v494 = vadd.f32 %v455, %v477
    %v495 = vadd.f32 %v456, %v477
    %v496 = vadd.f32 %v457, %v477
    %v497 = vadd.f32 %v458, %v477
    %v498 = vadd.f32 %v459, %v477
    %v499 = vadd.f32 %v460, %v477
    %v500 = vadd.f32 %v461, %v477
    %v501 = vadd.f32 %v462, %v477
    %v502 = vadd.f32 %v463, %v477
    %v503 = vadd.f32 %v464, %v477
    %v504 = vadd.f32 %v465, %v477
    %v505 = vadd.f32 %v466, %v477
    %v506 = vadd.f32 %v467, %v477
    %v507 = vadd.f32 %v468, %v477
    %v508 = vadd.f32 %v469, %v477
    %v509 = vadd.f32 %v470, %v477
    %v510 = vadd.f32 %v471, %v477
    %v511 = vmul.f32 %v479, %v479
    %v512 = vmul.f32 %v480, %v480
    %v513 = vmul.f32 %v481, %v481
    %v514 = vmul.f32 %v482, %v482
    %v515 = vmul.f32 %v483, %v483
    %v516 = vmul.f32 %v484, %v484
    %v517 = vmul.f32 %v485, %v485
    %v518 = vmul.f32 %v486, %v486
    %v519 = vmul.f32 %v487, %v487
    %v520 = vmul.f32 %v488, %v488
    %v521 = vmul.f32 %v489, %v489
    %v522 = vmul.f32 %v490, %v490
    %v523 = vmul.f32 %v491, %v491
    %v524 = vmul.f32 %v492, %v492
    %v525 = vmul.f32 %v493, %v493
    %v526 = vmul.f32 %v494, %v494
    %v527 = vmul.f32 %v495, %v495
    %v528 = vmul.f32 %v496, %v496
    %v529 = vmul.f32 %v497, %v497
    %v530 = vmul.f32 %v498, %v498
    %v531 = vmul.f32 %v499, %v499
    %v532 = vmul.f32 %v500, %v500
    %v533 = vmul.f32 %v501, %v501
    %v534 = vmul.f32 %v502, %v502
    %v535 = vmul.f32 %v503, %v503
    %v536 = vmul.f32 %v504, %v504
    %v537 = vmul.f32 %v505, %v505
    %v538 = vmul.f32 %v506, %v506
    %v539 = vmul.f32 %v507, %v507
    %v540 = vmul.f32 %v508, %v508
    %v541 = vmul.f32 %v509, %v509
    %v542 = vmul.f32 %v510, %v510
    %v543 = vmul.f32 %v479, %v511
    %v544 = vmul.f32 %v480, %v512
    %v545 = vmul.f32 %v481, %v513
    %v546 = vmul.f32 %v482, %v514
    %v547 = vmul.f32 %v483, %v515
    %v548 = vmul.f32 %v484, %v516
    %v549 = vmul.f32 %v485, %v517
    %v550 = vmul.f32 %v486, %v518
    %v551 = vmul.f32 %v487, %v519
    %v552 = vmul.f32 %v488, %v520
    %v553 = vmul.f32 %v489, %v521
    %v554 = vmul.f32 %v490, %v522
    %v555 = vmul.f32 %v491, %v523
    %v556 = vmul.f32 %v492, %v524
    %v557 = vmul.f32 %v493, %v525
    %v558 = vmul.f32 %v494, %v526
    %v559 = vmul.f32 %v495, %v527
    %v560 = vmul.f32 %v496, %v528
    %v561 = vmul.f32 %v497, %v529
    %v562 = vmul.f32 %v498, %v530
    %v563 = vmul.f32 %v499, %v531
    %v564 = vmul.f32 %v500, %v532
    %v565 = vmul.f32 %v501, %v533
    %v566 = vmul.f32 %v502, %v534
    %v567 = vmul.f32 %v503, %v535
    %v568 = vmul.f32 %v504, %v536
    %v569 = vmul.f32 %v505, %v537
    %v570 = vmul.f32 %v506, %v538
    %v571 = vmul.f32 %v507, %v539
    %v572 = vmul.f32 %v508, %v540
    %v573 = vmul.f32 %v509, %v541
    %v574 = vmul.f32 %v510, %v542
    %v575 = vmul.f32 %v543, 0.044715
    %v576 = vmul.f32 %v544, 0.044715
    %v577 = vmul.f32 %v545, 0.044715
    %v578 = vmul.f32 %v546, 0.044715
    %v579 = vmul.f32 %v547, 0.044715
    %v580 = vmul.f32 %v548, 0.044715
    %v581 = vmul.f32 %v549, 0.044715
    %v582 = vmul.f32 %v550, 0.044715
    %v583 = vmul.f32 %v551, 0.044715
    %v584 = vmul.f32 %v552, 0.044715
    %v585 = vmul.f32 %v553, 0.044715
    %v586 = vmul.f32 %v554, 0.044715
    %v587 = vmul.f32 %v555, 0.044715
    %v588 = vmul.f32 %v556, 0.044715
    %v589 = vmul.f32 %v557, 0.044715
    %v590 = vmul.f32 %v558, 0.044715
    %v591 = vmul.f32 %v559, 0.044715
    %v592 = vmul.f32 %v560, 0.044715
    %v593 = vmul.f32 %v561, 0.044715
    %v594 = vmul.f32 %v562, 0.044715
    %v595 = vmul.f32 %v563, 0.044715
    %v596 = vmul.f32 %v564, 0.044715
    %v597 = vmul.f32 %v565, 0.044715
    %v598 = vmul.f32 %v566, 0.044715
    %v599 = vmul.f32 %v567, 0.044715
    %v600 = vmul.f32 %v568, 0.044715
    %v601 = vmul.f32 %v569, 0.044715
    %v602 = vmul.f32 %v570, 0.044715
    %v603 = vmul.f32 %v571, 0.044715
    %v604 = vmul.f32 %v572, 0.044715
    %v605 = vmul.f32 %v573, 0.044715
    %v606 = vmul.f32 %v574, 0.044715
    %v607 = vadd.f32 %v479, %v575
    %v608 = vadd.f32 %v480, %v576
    %v609 = vadd.f32 %v481, %v577
    %v610 = vadd.f32 %v482, %v578
    %v611 = vadd.f32 %v483, %v579
    %v612 = vadd.f32 %v484, %v580
    %v613 = vadd.f32 %v485, %v581
    %v614 = vadd.f32 %v486, %v582
    %v615 = vadd.f32 %v487, %v583
    %v616 = vadd.f32 %v488, %v584
    %v617 = vadd.f32 %v489, %v585
    %v618 = vadd.f32 %v490, %v586
    %v619 = vadd.f32 %v491, %v587
    %v620 = vadd.f32 %v492, %v588
    %v621 = vadd.f32 %v493, %v589
    %v622 = vadd.f32 %v494, %v590
    %v623 = vadd.f32 %v495, %v591
    %v624 = vadd.f32 %v496, %v592
    %v625 = vadd.f32 %v497, %v593
    %v626 = vadd.f32 %v498, %v594
    %v627 = vadd.f32 %v499, %v595
    %v628 = vadd.f32 %v500, %v596
    %v629 = vadd.f32 %v501, %v597
    %v630 = vadd.f32 %v502, %v598
    %v631 = vadd.f32 %v503, %v599
    %v632 = vadd.f32 %v504, %v600
    %v633 = vadd.f32 %v505, %v601
    %v634 = vadd.f32 %v506, %v602
    %v635 = vadd.f32 %v507, %v603
    %v636 = vadd.f32 %v508, %v604
    %v637 = vadd.f32 %v509, %v605
    %v638 = vadd.f32 %v510, %v606
    %v639 = vmul.f32 %v607, 0.7978846
    %v640 = vmul.f32 %v608, 0.7978846
    %v641 = vmul.f32 %v609, 0.7978846
    %v642 = vmul.f32 %v610, 0.7978846
    %v643 = vmul.f32 %v611, 0.7978846
    %v644 = vmul.f32 %v612, 0.7978846
    %v645 = vmul.f32 %v613, 0.7978846
    %v646 = vmul.f32 %v614, 0.7978846
    %v647 = vmul.f32 %v615, 0.7978846
    %v648 = vmul.f32 %v616, 0.7978846
    %v649 = vmul.f32 %v617, 0.7978846
    %v650 = vmul.f32 %v618, 0.7978846
    %v651 = vmul.f32 %v619, 0.7978846
    %v652 = vmul.f32 %v620, 0.7978846
    %v653 = vmul.f32 %v621, 0.7978846
    %v654 = vmul.f32 %v622, 0.7978846
    %v655 = vmul.f32 %v623, 0.7978846
    %v656 = vmul.f32 %v624, 0.7978846
    %v657 = vmul.f32 %v625, 0.7978846
    %v658 = vmul.f32 %v626, 0.7978846
    %v659 = vmul.f32 %v627, 0.7978846
    %v660 = vmul.f32 %v628, 0.7978846
    %v661 = vmul.f32 %v629, 0.7978846
    %v662 = vmul.f32 %v630, 0.7978846
    %v663 = vmul.f32 %v631, 0.7978846
    %v664 = vmul.f32 %v632, 0.7978846
    %v665 = vmul.f32 %v633, 0.7978846
    %v666 = vmul.f32 %v634, 0.7978846
    %v667 = vmul.f32 %v635, 0.7978846
    %v668 = vmul.f32 %v636, 0.7978846
    %v669 = vmul.f32 %v637, 0.7978846
    %v670 = vmul.f32 %v638, 0.7978846
    %v671 = vtanh.pop %v639
    %v672 = vtanh.pop %v640
    %v673 = vtanh.pop %v641
    %v674 = vtanh.pop %v642
    %v675 = vtanh.pop %v643
    %v676 = vtanh.pop %v644
    %v677 = vtanh.pop %v645
    %v678 = vtanh.pop %v646
    %v679 = vtanh.pop %v647
    %v680 = vtanh.pop %v648
    %v681 = vtanh.pop %v649
    %v682 = vtanh.pop %v650
    %v683 = vtanh.pop %v651
    %v684 = vtanh.pop %v652
    %v685 = vtanh.pop %v653
    %v686 = vtanh.pop %v654
    %v687 = vtanh.pop %v655
    %v688 = vtanh.pop %v656
    %v689 = vtanh.pop %v657
    %v690 = vtanh.pop %v658
    %v691 = vtanh.pop %v659
    %v692 = vtanh.pop %v660
    %v693 = vtanh.pop %v661
    %v694 = vtanh.pop %v662
    %v695 = vtanh.pop %v663
    %v696 = vtanh.pop %v664
    %v697 = vtanh.pop %v665
    %v698 = vtanh.pop %v666
    %v699 = vtanh.pop %v667
    %v700 = vtanh.pop %v668
    %v701 = vtanh.pop %v669
    %v702 = vtanh.pop %v670
    %v703 = vadd.f32 %v671, 1.0
    %v704 = vadd.f32 %v672, 1.0
    %v705 = vadd.f32 %v673, 1.0
    %v706 = vadd.f32 %v674, 1.0
    %v707 = vadd.f32 %v675, 1.0
    %v708 = vadd.f32 %v676, 1.0
    %v709 = vadd.f32 %v677, 1.0
    %v710 = vadd.f32 %v678, 1.0
    %v711 = vadd.f32 %v679, 1.0
    %v712 = vadd.f32 %v680, 1.0
    %v713 = vadd.f32 %v681, 1.0
    %v714 = vadd.f32 %v682, 1.0
    %v715 = vadd.f32 %v683, 1.0
    %v716 = vadd.f32 %v684, 1.0
    %v717 = vadd.f32 %v685, 1.0
    %v718 = vadd.f32 %v686, 1.0
    %v719 = vadd.f32 %v687, 1.0
    %v720 = vadd.f32 %v688, 1.0
    %v721 = vadd.f32 %v689, 1.0
    %v722 = vadd.f32 %v690, 1.0
    %v723 = vadd.f32 %v691, 1.0
    %v724 = vadd.f32 %v692, 1.0
    %v725 = vadd.f32 %v693, 1.0
    %v726 = vadd.f32 %v694, 1.0
    %v727 = vadd.f32 %v695, 1.0
    %v728 = vadd.f32 %v696, 1.0
    %v729 = vadd.f32 %v697, 1.0
    %v730 = vadd.f32 %v698, 1.0
    %v731 = vadd.f32 %v699, 1.0
    %v732 = vadd.f32 %v700, 1.0
    %v733 = vadd.f32 %v701, 1.0
    %v734 = vadd.f32 %v702, 1.0
    %v735 = vmul.f32 %v703, 0.5
    %v736 = vmul.f32 %v704, 0.5
    %v737 = vmul.f32 %v705, 0.5
    %v738 = vmul.f32 %v706, 0.5
    %v739 = vmul.f32 %v707, 0.5
    %v740 = vmul.f32 %v708, 0.5
    %v741 = vmul.f32 %v709, 0.5
    %v742 = vmul.f32 %v710, 0.5
    %v743 = vmul.f32 %v711, 0.5
    %v744 = vmul.f32 %v712, 0.5
    %v745 = vmul.f32 %v713, 0.5
    %v746 = vmul.f32 %v714, 0.5
    %v747 = vmul.f32 %v715, 0.5
    %v748 = vmul.f32 %v716, 0.5
    %v749 = vmul.f32 %v717, 0.5
    %v750 = vmul.f32 %v718, 0.5
    %v751 = vmul.f32 %v719, 0.5
    %v752 = vmul.f32 %v720, 0.5
    %v753 = vmul.f32 %v721, 0.5
    %v754 = vmul.f32 %v722, 0.5
    %v755 = vmul.f32 %v723, 0.5
    %v756 = vmul.f32 %v724, 0.5
    %v757 = vmul.f32 %v725, 0.5
    %v758 = vmul.f32 %v726, 0.5
    %v759 = vmul.f32 %v727, 0.5
    %v760 = vmul.f32 %v728, 0.5
    %v761 = vmul.f32 %v729, 0.5
    %v762 = vmul.f32 %v730, 0.5
    %v763 = vmul.f32 %v731, 0.5
    %v764 = vmul.f32 %v732, 0.5
    %v765 = vmul.f32 %v733, 0.5
    %v766 = vmul.f32 %v734, 0.5
    %v767 = vmul.f32 %v479, %v735
    %v768 = vmul.f32 %v480, %v736
    %v769 = vmul.f32 %v481, %v737
    %v770 = vmul.f32 %v482, %v738
    %v771 = vmul.f32 %v483, %v739
    %v772 = vmul.f32 %v484, %v740
    %v773 = vmul.f32 %v485, %v741
    %v774 = vmul.f32 %v486, %v742
    %v775 = vmul.f32 %v487, %v743
    %v776 = vmul.f32 %v488, %v744
    %v777 = vmul.f32 %v489, %v745
    %v778 = vmul.f32 %v490, %v746
    %v779 = vmul.f32 %v491, %v747
    %v780 = vmul.f32 %v492, %v748
    %v781 = vmul.f32 %v493, %v749
    %v782 = vmul.f32 %v494, %v750
    %v783 = vmul.f32 %v495, %v751
    %v784 = vmul.f32 %v496, %v752
    %v785 = vmul.f32 %v497, %v753
    %v786 = vmul.f32 %v498, %v754
    %v787 = vmul.f32 %v499, %v755
    %v788 = vmul.f32 %v500, %v756
    %v789 = vmul.f32 %v501, %v757
    %v790 = vmul.f32 %v502, %v758
    %v791 = vmul.f32 %v503, %v759
    %v792 = vmul.f32 %v504, %v760
    %v793 = vmul.f32 %v505, %v761
    %v794 = vmul.f32 %v506, %v762
    %v795 = vmul.f32 %v507, %v763
    %v796 = vmul.f32 %v508, %v764
    %v797 = vmul.f32 %v509, %v765
    %v798 = vmul.f32 %v510, %v766
    %v799 = vpack.c.bf16 %v768, %v767
    %v800 = vpack.c.bf16 %v770, %v769
    %v801 = vpack.c.bf16 %v772, %v771
    %v802 = vpack.c.bf16 %v774, %v773
    %v803 = vpack.c.bf16 %v776, %v775
    %v804 = vpack.c.bf16 %v778, %v777
    %v805 = vpack.c.bf16 %v780, %v779
    %v806 = vpack.c.bf16 %v782, %v781
    %v807 = vpack.c.bf16 %v784, %v783
    %v808 = vpack.c.bf16 %v786, %v785
    %v809 = vpack.c.bf16 %v788, %v787
    %v810 = vpack.c.bf16 %v790, %v789
    %v811 = vpack.c.bf16 %v792, %v791
    %v812 = vpack.c.bf16 %v794, %v793
    %v813 = vpack.c.bf16 %v796, %v795
    %v814 = vpack.c.bf16 %v798, %v797
    %v831 = vunpack.c.l.b16 %v799
    %v832 = vunpack.c.h.b16 %v799
    %v833 = vunpack.c.l.b16 %v800
    %v834 = vunpack.c.h.b16 %v800
    %v835 = vunpack.c.l.b16 %v801
    %v836 = vunpack.c.h.b16 %v801
    %v837 = vunpack.c.l.b16 %v802
    %v838 = vunpack.c.h.b16 %v802
    %v839 = vunpack.c.l.b16 %v803
    %v840 = vunpack.c.h.b16 %v803
    %v841 = vunpack.c.l.b16 %v804
    %v842 = vunpack.c.h.b16 %v804
    %v843 = vunpack.c.l.b16 %v805
    %v844 = vunpack.c.h.b16 %v805
    %v845 = vunpack.c.l.b16 %v806
    %v846 = vunpack.c.h.b16 %v806
    %v847 = vunpack.c.l.b16 %v807
    %v848 = vunpack.c.h.b16 %v807
    %v849 = vunpack.c.l.b16 %v808
    %v850 = vunpack.c.h.b16 %v808
    %v851 = vunpack.c.l.b16 %v809
    %v852 = vunpack.c.h.b16 %v809
    %v853 = vunpack.c.l.b16 %v810
    %v854 = vunpack.c.h.b16 %v810
    %v855 = vunpack.c.l.b16 %v811
    %v856 = vunpack.c.h.b16 %v811
    %v857 = vunpack.c.l.b16 %v812
    %v858 = vunpack.c.h.b16 %v812
    %v859 = vunpack.c.l.b16 %v813
    %v860 = vunpack.c.h.b16 %v813
    %v861 = vunpack.c.l.b16 %v814
    %v862 = vunpack.c.h.b16 %v814
    %v863 = vpack.c.b16 %v831, %v831
    %v864 = vpack.c.b16 %v832, %v832
    %v865 = vpack.c.b16 %v833, %v833
    %v866 = vpack.c.b16 %v834, %v834
    %v867 = vpack.c.b16 %v835, %v835
    %v868 = vpack.c.b16 %v836, %v836
    %v869 = vpack.c.b16 %v837, %v837
    %v870 = vpack.c.b16 %v838, %v838
    %v871 = vpack.c.b16 %v839, %v839
    %v872 = vpack.c.b16 %v840, %v840
    %v873 = vpack.c.b16 %v841, %v841
    %v874 = vpack.c.b16 %v842, %v842
    %v875 = vpack.c.b16 %v843, %v843
    %v876 = vpack.c.b16 %v844, %v844
    %v877 = vpack.c.b16 %v845, %v845
    %v878 = vpack.c.b16 %v846, %v846
    %v879 = vpack.c.b16 %v847, %v847
    %v880 = vpack.c.b16 %v848, %v848
    %v881 = vpack.c.b16 %v849, %v849
    %v882 = vpack.c.b16 %v850, %v850
    %v883 = vpack.c.b16 %v851, %v851
    %v884 = vpack.c.b16 %v852, %v852
    %v885 = vpack.c.b16 %v853, %v853
    %v886 = vpack.c.b16 %v854, %v854
    %v887 = vpack.c.b16 %v855, %v855
    %v888 = vpack.c.b16 %v856, %v856
    %v889 = vpack.c.b16 %v857, %v857
    %v890 = vpack.c.b16 %v858, %v858
    %v891 = vpack.c.b16 %v859, %v859
    %v892 = vpack.c.b16 %v860, %v860
    %v893 = vpack.c.b16 %v861, %v861
    %v894 = vpack.c.b16 %v862, %v862
    %927 = vst [vmem:[%s3] sm:$0xf] %v863
    %928 = vst [vmem:[%s3 + $0x4] sm:$0xf] %v864
    %929 = vst [vmem:[%s3 + $0x8] sm:$0xf] %v865
    %930 = vst [vmem:[%s3 + $0xc] sm:$0xf] %v866
    %931 = vst [vmem:[%s3 + $0x10] sm:$0xf] %v867
    %932 = vst [vmem:[%s3 + $0x14] sm:$0xf] %v868
    %933 = vst [vmem:[%s3 + $0x18] sm:$0xf] %v869
    %934 = vst [vmem:[%s3 + $0x1c] sm:$0xf] %v870
    %935 = vst [vmem:[%s3 + $0x20] sm:$0xf] %v871
    %936 = vst [vmem:[%s3 + $0x24] sm:$0xf] %v872
    %937 = vst [vmem:[%s3 + $0x28] sm:$0xf] %v873
    %938 = vst [vmem:[%s3 + $0x2c] sm:$0xf] %v874
    %939 = vst [vmem:[%s3 + $0x30] sm:$0xf] %v875
    %940 = vst [vmem:[%s3 + $0x34] sm:$0xf] %v876
    %941 = vst [vmem:[%s3 + $0x38] sm:$0xf] %v877
    %942 = vst [vmem:[%s3 + $0x3c] sm:$0xf] %v878
    %943 = vst [vmem:[%s3 + $0x40] sm:$0xf] %v879
    %944 = vst [vmem:[%s3 + $0x44] sm:$0xf] %v880
    %945 = vst [vmem:[%s3 + $0x48] sm:$0xf] %v881
    %946 = vst [vmem:[%s3 + $0x4c] sm:$0xf] %v882
    %947 = vst [vmem:[%s3 + $0x50] sm:$0xf] %v883
    %948 = vst [vmem:[%s3 + $0x54] sm:$0xf] %v884
    %949 = vst [vmem:[%s3 + $0x58] sm:$0xf] %v885
    %950 = vst [vmem:[%s3 + $0x5c] sm:$0xf] %v886
    %951 = vst [vmem:[%s3 + $0x60] sm:$0xf] %v887
    %952 = vst [vmem:[%s3 + $0x64] sm:$0xf] %v888
    %953 = vst [vmem:[%s3 + $0x68] sm:$0xf] %v889
    %954 = vst [vmem:[%s3 + $0x6c] sm:$0xf] %v890
    %955 = vst [vmem:[%s3 + $0x70] sm:$0xf] %v891
    %956 = vst [vmem:[%s3 + $0x74] sm:$0xf] %v892
    %957 = vst [vmem:[%s3 + $0x78] sm:$0xf] %v893
    %958 = vst [vmem:[%s3 + $0x7c] sm:$0xf] %v894
  $region21: #{rel0_encoder_forward.12} parent=0 // pred_fallthru
    _
  // Predicated region
  $region22: #{rel0_encoder_forward.12} parent=0 // pred_check
    _
  $region23: #{rel0_encoder_forward.12} parent=0 // pred_check_branch
    %960 = sbr.rel (0) target = $region25
  $region24: #{rel0_encoder_forward.12} parent=0 // pred_region
    _
  $region25: #{rel0_encoder_forward.12} parent=0 // pred_fallthru
    _
  // Predicated region
  $region26: #{rel0_encoder_forward.12} parent=0 // pred_check
    _
  $region27: #{rel0_encoder_forward.12} parent=0 // pred_check_branch
    %962 = sbr.rel (0) target = $region29
  $region28: #{rel0_encoder_forward.12} parent=0 // pred_region
    _
  $region29: #{rel0_encoder_forward.12} parent=0 // pred_fallthru
    _

// kernel: rel0_encoder_forward.13
$region0: #{rel0_encoder_forward.13}
  #allocation0 [shape = 'u32[]', space=smem, size = 0x4, offset = 0x4, fixed_abs, tag = 'smem constant byte address 0x4 - core index']
  #allocation1 [shape = 'u32[144,128]{1,0:T(1,128)}', space=vmem, size = 0x12000, scoped, tag = 'internal scratch']
  #allocation2 [shape = 'f32[256,64]{1,0:T(8,128)}', space=vmem, size = 0x20000, scoped, tag = 'scratch operand']
  %s0 = inlined_call_operand.vmem [shape: bf16[256,128], index: 0, kind: input, shape index: {}]
  %s1 = inlined_call_operand.vmem [shape: bf16[128,64], index: 1, kind: input, shape index: {}]
  %s2 = inlined_call_operand.vmem [shape: f32[1,64], index: 2, kind: input, shape index: {}]
  %s3 = inlined_call_operand.vmem [shape: f32[256,64], index: 3, kind: input, shape index: {}]
  %s4 = inlined_call_operand.vmem [shape: f32[1,64], index: 4, kind: input, shape index: {}]
  %s5 = inlined_call_operand.vmem [shape: f32[1,64], index: 5, kind: input, shape index: {}]
  %s6 = inlined_call_operand.vmem [shape: f32[256,64], index: 6, kind: output, shape index: {}]
  %s7 = sld [smem:[#allocation0]]
  $region42: #{rel0_encoder_forward.13} parent=0
    _
  %s9 = ssub.s32 1, %s7
  %s10 = scalar_select 0, %s9, %s7
  // Predicated region
  $region2: #{rel0_encoder_forward.13} parent=0 // pred_check
    _
  $region3: #{rel0_encoder_forward.13} parent=0 // pred_check_branch
    %12 = sbr.rel (0) target = $region5
  $region4: #{rel0_encoder_forward.13} parent=0 // pred_region
    _
  $region5: #{rel0_encoder_forward.13} parent=0 // pred_fallthru
    _
  // Predicated region
  $region6: #{rel0_encoder_forward.13} parent=0 // pred_check
    _
  $region7: #{rel0_encoder_forward.13} parent=0 // pred_check_branch
    %14 = sbr.rel (0) target = $region9
  $region8: #{rel0_encoder_forward.13} parent=0 // pred_region
    _
  $region9: #{rel0_encoder_forward.13} parent=0 // pred_fallthru
    _
  // Predicated region
  $region10: #{rel0_encoder_forward.13} parent=0 // pred_check
    _
  $region11: #{rel0_encoder_forward.13} parent=0 // pred_check_branch
    %16 = sbr.rel (0) target = $region13
  $region12: #{rel0_encoder_forward.13} parent=0 // pred_region
    _
  $region13: #{rel0_encoder_forward.13} parent=0 // pred_fallthru
    _
  // Predicated region
  $region14: #{rel0_encoder_forward.13} parent=0 // pred_check
    _
  $region15: #{rel0_encoder_forward.13} parent=0 // pred_check_branch
    %18 = sbr.rel (0) target = $region17
  $region16: #{rel0_encoder_forward.13} parent=0 // pred_region
    _
  $region17: #{rel0_encoder_forward.13} parent=0 // pred_fallthru
    _
  // Predicated region
  $region18: #{rel0_encoder_forward.13} parent=0 // pred_check
    _
  $region19: #{rel0_encoder_forward.13} parent=0 // pred_check_branch
    %20 = sbr.rel (0) target = $region21
  $region20: #{rel0_encoder_forward.13} parent=0 // pred_region
    _
  $region21: #{rel0_encoder_forward.13} parent=0 // pred_fallthru
    _
  // Predicated region
  $region22: #{rel0_encoder_forward.13} parent=0 // pred_check
    _
  $region23: #{rel0_encoder_forward.13} parent=0 // pred_check_branch
    %22 = sbr.rel (0) target = $region25
  $region24: #{rel0_encoder_forward.13} parent=0 // pred_region
    _
  $region25: #{rel0_encoder_forward.13} parent=0 // pred_fallthru
    _
  %p24 = scmp.eq.s32.totalorder 0, 0
  // Predicated region
  $region26: #{rel0_encoder_forward.13} parent=0 // pred_check
    %p25 = pneg %p24
  $region27: #{rel0_encoder_forward.13} parent=0 // pred_check_branch
    %27 = sbr.rel (%p25) target = $region29
  $region28: #{rel0_encoder_forward.13} parent=0 // pred_region
    %vm28 = vcmask 523264
    %29 = vst.msk [vmem:[#allocation2] sm:$0xff] %vm28, 0.0
    %30 = vst.msk [vmem:[#allocation2 + $0x8] sm:$0xff] %vm28, 0.0
    %31 = vst.msk [vmem:[#allocation2 + $0x10] sm:$0xff] %vm28, 0.0
    %32 = vst.msk [vmem:[#allocation2 + $0x18] sm:$0xff] %vm28, 0.0
    %33 = vst.msk [vmem:[#allocation2 + $0x20] sm:$0xff] %vm28, 0.0
    %34 = vst.msk [vmem:[#allocation2 + $0x28] sm:$0xff] %vm28, 0.0
    %35 = vst.msk [vmem:[#allocation2 + $0x30] sm:$0xff] %vm28, 0.0
    %36 = vst.msk [vmem:[#allocation2 + $0x38] sm:$0xff] %vm28, 0.0
    %37 = vst.msk [vmem:[#allocation2 + $0x40] sm:$0xff] %vm28, 0.0
    %38 = vst.msk [vmem:[#allocation2 + $0x48] sm:$0xff] %vm28, 0.0
    %39 = vst.msk [vmem:[#allocation2 + $0x50] sm:$0xff] %vm28, 0.0
    %40 = vst.msk [vmem:[#allocation2 + $0x58] sm:$0xff] %vm28, 0.0
    %41 = vst.msk [vmem:[#allocation2 + $0x60] sm:$0xff] %vm28, 0.0
    %42 = vst.msk [vmem:[#allocation2 + $0x68] sm:$0xff] %vm28, 0.0
    %43 = vst.msk [vmem:[#allocation2 + $0x70] sm:$0xff] %vm28, 0.0
    %44 = vst.msk [vmem:[#allocation2 + $0x78] sm:$0xff] %vm28, 0.0
    %45 = vst.msk [vmem:[#allocation2 + $0x80] sm:$0xff] %vm28, 0.0
    %46 = vst.msk [vmem:[#allocation2 + $0x88] sm:$0xff] %vm28, 0.0
    %47 = vst.msk [vmem:[#allocation2 + $0x90] sm:$0xff] %vm28, 0.0
    %48 = vst.msk [vmem:[#allocation2 + $0x98] sm:$0xff] %vm28, 0.0
    %49 = vst.msk [vmem:[#allocation2 + $0xa0] sm:$0xff] %vm28, 0.0
    %50 = vst.msk [vmem:[#allocation2 + $0xa8] sm:$0xff] %vm28, 0.0
    %51 = vst.msk [vmem:[#allocation2 + $0xb0] sm:$0xff] %vm28, 0.0
    %52 = vst.msk [vmem:[#allocation2 + $0xb8] sm:$0xff] %vm28, 0.0
    %53 = vst.msk [vmem:[#allocation2 + $0xc0] sm:$0xff] %vm28, 0.0
    %54 = vst.msk [vmem:[#allocation2 + $0xc8] sm:$0xff] %vm28, 0.0
    %55 = vst.msk [vmem:[#allocation2 + $0xd0] sm:$0xff] %vm28, 0.0
    %56 = vst.msk [vmem:[#allocation2 + $0xd8] sm:$0xff] %vm28, 0.0
    %57 = vst.msk [vmem:[#allocation2 + $0xe0] sm:$0xff] %vm28, 0.0
    %58 = vst.msk [vmem:[#allocation2 + $0xe8] sm:$0xff] %vm28, 0.0
    %59 = vst.msk [vmem:[#allocation2 + $0xf0] sm:$0xff] %vm28, 0.0
    %60 = vst.msk [vmem:[#allocation2 + $0xf8] sm:$0xff] %vm28, 0.0
  $region29: #{rel0_encoder_forward.13} parent=0 // pred_fallthru
    _
  %v61 = vld [vmem:[#allocation2] sm:$0xff]
  %v62 = vld [vmem:[#allocation2 + $0x8] sm:$0xff]
  %v63 = vld [vmem:[#allocation2 + $0x10] sm:$0xff]
  %v64 = vld [vmem:[#allocation2 + $0x18] sm:$0xff]
  %v65 = vld [vmem:[#allocation2 + $0x20] sm:$0xff]
  %v66 = vld [vmem:[#allocation2 + $0x28] sm:$0xff]
  %v67 = vld [vmem:[#allocation2 + $0x30] sm:$0xff]
  %v68 = vld [vmem:[#allocation2 + $0x38] sm:$0xff]
  %v69 = vld [vmem:[#allocation2 + $0x40] sm:$0xff]
  %v70 = vld [vmem:[#allocation2 + $0x48] sm:$0xff]
  %v71 = vld [vmem:[#allocation2 + $0x50] sm:$0xff]
  %v72 = vld [vmem:[#allocation2 + $0x58] sm:$0xff]
  %v73 = vld [vmem:[#allocation2 + $0x60] sm:$0xff]
  %v74 = vld [vmem:[#allocation2 + $0x68] sm:$0xff]
  %v75 = vld [vmem:[#allocation2 + $0x70] sm:$0xff]
  %v76 = vld [vmem:[#allocation2 + $0x78] sm:$0xff]
  %v77 = vld [vmem:[#allocation2 + $0x80] sm:$0xff]
  %v78 = vld [vmem:[#allocation2 + $0x88] sm:$0xff]
  %v79 = vld [vmem:[#allocation2 + $0x90] sm:$0xff]
  %v80 = vld [vmem:[#allocation2 + $0x98] sm:$0xff]
  %v81 = vld [vmem:[#allocation2 + $0xa0] sm:$0xff]
  %v82 = vld [vmem:[#allocation2 + $0xa8] sm:$0xff]
  %v83 = vld [vmem:[#allocation2 + $0xb0] sm:$0xff]
  %v84 = vld [vmem:[#allocation2 + $0xb8] sm:$0xff]
  %v85 = vld [vmem:[#allocation2 + $0xc0] sm:$0xff]
  %v86 = vld [vmem:[#allocation2 + $0xc8] sm:$0xff]
  %v87 = vld [vmem:[#allocation2 + $0xd0] sm:$0xff]
  %v88 = vld [vmem:[#allocation2 + $0xd8] sm:$0xff]
  %v89 = vld [vmem:[#allocation2 + $0xe0] sm:$0xff]
  %v90 = vld [vmem:[#allocation2 + $0xe8] sm:$0xff]
  %v91 = vld [vmem:[#allocation2 + $0xf0] sm:$0xff]
  %v92 = vld [vmem:[#allocation2 + $0xf8] sm:$0xff]
  %v93 = vld [vmem:[%s0] sm:$0xf]
  %v94 = vld [vmem:[%s0 + $0x4] sm:$0xf]
  %v95 = vld [vmem:[%s0 + $0x8] sm:$0xf]
  %v96 = vld [vmem:[%s0 + $0xc] sm:$0xf]
  %v97 = vld [vmem:[%s0 + $0x10] sm:$0xf]
  %v98 = vld [vmem:[%s0 + $0x14] sm:$0xf]
  %v99 = vld [vmem:[%s0 + $0x18] sm:$0xf]
  %v100 = vld [vmem:[%s0 + $0x1c] sm:$0xf]
  %v101 = vld [vmem:[%s0 + $0x20] sm:$0xf]
  %v102 = vld [vmem:[%s0 + $0x24] sm:$0xf]
  %v103 = vld [vmem:[%s0 + $0x28] sm:$0xf]
  %v104 = vld [vmem:[%s0 + $0x2c] sm:$0xf]
  %v105 = vld [vmem:[%s0 + $0x30] sm:$0xf]
  %v106 = vld [vmem:[%s0 + $0x34] sm:$0xf]
  %v107 = vld [vmem:[%s0 + $0x38] sm:$0xf]
  %v108 = vld [vmem:[%s0 + $0x3c] sm:$0xf]
  %v109 = vld [vmem:[%s0 + $0x40] sm:$0xf]
  %v110 = vld [vmem:[%s0 + $0x44] sm:$0xf]
  %v111 = vld [vmem:[%s0 + $0x48] sm:$0xf]
  %v112 = vld [vmem:[%s0 + $0x4c] sm:$0xf]
  %v113 = vld [vmem:[%s0 + $0x50] sm:$0xf]
  %v114 = vld [vmem:[%s0 + $0x54] sm:$0xf]
  %v115 = vld [vmem:[%s0 + $0x58] sm:$0xf]
  %v116 = vld [vmem:[%s0 + $0x5c] sm:$0xf]
  %v117 = vld [vmem:[%s0 + $0x60] sm:$0xf]
  %v118 = vld [vmem:[%s0 + $0x64] sm:$0xf]
  %v119 = vld [vmem:[%s0 + $0x68] sm:$0xf]
  %v120 = vld [vmem:[%s0 + $0x6c] sm:$0xf]
  %v121 = vld [vmem:[%s0 + $0x70] sm:$0xf]
  %v122 = vld [vmem:[%s0 + $0x74] sm:$0xf]
  %v123 = vld [vmem:[%s0 + $0x78] sm:$0xf]
  %v124 = vld [vmem:[%s0 + $0x7c] sm:$0xf]
  %v125 = vld [vmem:[%s1] sm:$0xf]
  %v126 = vld [vmem:[%s1 + $0x4] sm:$0xf]
  %v127 = vld [vmem:[%s1 + $0x8] sm:$0xf]
  %v128 = vld [vmem:[%s1 + $0xc] sm:$0xf]
  %v129 = vld [vmem:[%s1 + $0x10] sm:$0xf]
  %v130 = vld [vmem:[%s1 + $0x14] sm:$0xf]
  %v131 = vld [vmem:[%s1 + $0x18] sm:$0xf]
  %v132 = vld [vmem:[%s1 + $0x1c] sm:$0xf]
  %v133 = vld [vmem:[%s1 + $0x20] sm:$0xf]
  %v134 = vld [vmem:[%s1 + $0x24] sm:$0xf]
  %v135 = vld [vmem:[%s1 + $0x28] sm:$0xf]
  %v136 = vld [vmem:[%s1 + $0x2c] sm:$0xf]
  %v137 = vld [vmem:[%s1 + $0x30] sm:$0xf]
  %v138 = vld [vmem:[%s1 + $0x34] sm:$0xf]
  %v139 = vld [vmem:[%s1 + $0x38] sm:$0xf]
  %v140 = vld [vmem:[%s1 + $0x3c] sm:$0xf]
  %v173 = vunpack.c.l.b16 %v93
  %v174 = vunpack.c.l.b16 %v94
  %v175 = vunpack.c.l.b16 %v95
  %v176 = vunpack.c.l.b16 %v96
  %v177 = vunpack.c.l.b16 %v97
  %v178 = vunpack.c.l.b16 %v98
  %v179 = vunpack.c.l.b16 %v99
  %v180 = vunpack.c.l.b16 %v100
  %v181 = vunpack.c.l.b16 %v101
  %v182 = vunpack.c.l.b16 %v102
  %v183 = vunpack.c.l.b16 %v103
  %v184 = vunpack.c.l.b16 %v104
  %v185 = vunpack.c.l.b16 %v105
  %v186 = vunpack.c.l.b16 %v106
  %v187 = vunpack.c.l.b16 %v107
  %v188 = vunpack.c.l.b16 %v108
  %v189 = vunpack.c.l.b16 %v109
  %v190 = vunpack.c.l.b16 %v110
  %v191 = vunpack.c.l.b16 %v111
  %v192 = vunpack.c.l.b16 %v112
  %v193 = vunpack.c.l.b16 %v113
  %v194 = vunpack.c.l.b16 %v114
  %v195 = vunpack.c.l.b16 %v115
  %v196 = vunpack.c.l.b16 %v116
  %v197 = vunpack.c.l.b16 %v117
  %v198 = vunpack.c.l.b16 %v118
  %v199 = vunpack.c.l.b16 %v119
  %v200 = vunpack.c.l.b16 %v120
  %v201 = vunpack.c.l.b16 %v121
  %v202 = vunpack.c.l.b16 %v122
  %v203 = vunpack.c.l.b16 %v123
  %v204 = vunpack.c.l.b16 %v124
  %v205 = vpack.c.b16 %v174, %v173
  %v206 = vpack.c.b16 %v176, %v175
  %v207 = vpack.c.b16 %v178, %v177
  %v208 = vpack.c.b16 %v180, %v179
  %v209 = vpack.c.b16 %v182, %v181
  %v210 = vpack.c.b16 %v184, %v183
  %v211 = vpack.c.b16 %v186, %v185
  %v212 = vpack.c.b16 %v188, %v187
  %v213 = vpack.c.b16 %v190, %v189
  %v214 = vpack.c.b16 %v192, %v191
  %v215 = vpack.c.b16 %v194, %v193
  %v216 = vpack.c.b16 %v196, %v195
  %v217 = vpack.c.b16 %v198, %v197
  %v218 = vpack.c.b16 %v200, %v199
  %v219 = vpack.c.b16 %v202, %v201
  %v220 = vpack.c.b16 %v204, %v203
  %v253 = vunpack.c.l.b16 %v125
  %v254 = vunpack.c.l.b16 %v126
  %v255 = vunpack.c.l.b16 %v127
  %v256 = vunpack.c.l.b16 %v128
  %v257 = vunpack.c.l.b16 %v129
  %v258 = vunpack.c.l.b16 %v130
  %v259 = vunpack.c.l.b16 %v131
  %v260 = vunpack.c.l.b16 %v132
  %v261 = vunpack.c.l.b16 %v133
  %v262 = vunpack.c.l.b16 %v134
  %v263 = vunpack.c.l.b16 %v135
  %v264 = vunpack.c.l.b16 %v136
  %v265 = vunpack.c.l.b16 %v137
  %v266 = vunpack.c.l.b16 %v138
  %v267 = vunpack.c.l.b16 %v139
  %v268 = vunpack.c.l.b16 %v140
  %v269 = vpack.c.b16 %v254, %v253
  %v270 = vpack.c.b16 %v256, %v255
  %v271 = vpack.c.b16 %v258, %v257
  %v272 = vpack.c.b16 %v260, %v259
  %v273 = vpack.c.b16 %v262, %v261
  %v274 = vpack.c.b16 %v264, %v263
  %v275 = vpack.c.b16 %v266, %v265
  %v276 = vpack.c.b16 %v268, %v267
  %285 = vmatprep.subr.bf16.mxu0 0
  %286 = vmatpush1.bf16.msra.mxu0 %v276
  %287 = vmatprep.subr.bf16.mxu0 0
  %288 = vmatpush1.bf16.msra.mxu0 %v275
  %289 = vmatprep.subr.bf16.mxu0 0
  %290 = vmatpush1.bf16.msra.mxu0 %v274
  %291 = vmatprep.subr.bf16.mxu0 0
  %292 = vmatpush1.bf16.msra.mxu0 %v273
  %293 = vmatprep.subr.bf16.mxu0 0
  %294 = vmatpush1.bf16.msra.mxu0 %v272
  %295 = vmatprep.subr.bf16.mxu0 0
  %296 = vmatpush1.bf16.msra.mxu0 %v271
  %297 = vmatprep.subr.bf16.mxu0 0
  %298 = vmatpush1.bf16.msra.mxu0 %v270
  %299 = vmatprep.subr.bf16.mxu0 0
  %300 = vmatpush1.bf16.msra.mxu0 %v269
  %301 = vmatprep.subr.bf16.mxu0 0
  %302 = vmatpush2.bf16.msra.mxu0 0
  %303 = vmatprep.subr.bf16.mxu0 0
  %304 = vmatpush2.bf16.msra.mxu0 0
  %305 = vmatprep.subr.bf16.mxu0 0
  %306 = vmatpush2.bf16.msra.mxu0 0
  %307 = vmatprep.subr.bf16.mxu0 0
  %308 = vmatpush2.bf16.msra.mxu0 0
  %309 = vmatprep.subr.bf16.mxu0 0
  %310 = vmatpush2.bf16.msra.mxu0 0
  %311 = vmatprep.subr.bf16.mxu0 0
  %312 = vmatpush2.bf16.msra.mxu0 0
  %313 = vmatprep.subr.bf16.mxu0 0
  %314 = vmatpush2.bf16.msra.mxu0 0
  %315 = vmatprep.subr.bf16.mxu0 0
  %316 = vmatpush2.bf16.msra.mxu0 0
  %317 = vmatprep.mubr.bf16.mxu0 0
  %318 = vmatmul.mubr.bf16.gmra.mxu0 %v205
  %v319 = vpop.f32.mrf.mxu0
  %v320 = vadd.f32 0.0, %v319
  %v321 = vpop.f32.mrf.mxu0
  %v322 = vpop.f32.mrf.mxu0
  %v323 = vadd.f32 0.0, %v322
  %v324 = vpop.f32.mrf.mxu0
  %325 = vmatprep.mubr.bf16.mxu0 0
  %326 = vmatmul.mubr.bf16.gmra.mxu0 %v206
  %v327 = vpop.f32.mrf.mxu0
  %v328 = vadd.f32 0.0, %v327
  %v329 = vpop.f32.mrf.mxu0
  %v330 = vpop.f32.mrf.mxu0
  %v331 = vadd.f32 0.0, %v330
  %v332 = vpop.f32.mrf.mxu0
  %333 = vmatprep.mubr.bf16.mxu0 0
  %334 = vmatmul.mubr.bf16.gmra.mxu0 %v207
  %v335 = vpop.f32.mrf.mxu0
  %v336 = vadd.f32 0.0, %v335
  %v337 = vpop.f32.mrf.mxu0
  %v338 = vpop.f32.mrf.mxu0
  %v339 = vadd.f32 0.0, %v338
  %v340 = vpop.f32.mrf.mxu0
  %341 = vmatprep.mubr.bf16.mxu0 0
  %342 = vmatmul.mubr.bf16.gmra.mxu0 %v208
  %v343 = vpop.f32.mrf.mxu0
  %v344 = vadd.f32 0.0, %v343
  %v345 = vpop.f32.mrf.mxu0
  %v346 = vpop.f32.mrf.mxu0
  %v347 = vadd.f32 0.0, %v346
  %v348 = vpop.f32.mrf.mxu0
  %349 = vmatprep.mubr.bf16.mxu0 0
  %350 = vmatmul.mubr.bf16.gmra.mxu0 %v209
  %v351 = vpop.f32.mrf.mxu0
  %v352 = vadd.f32 0.0, %v351
  %v353 = vpop.f32.mrf.mxu0
  %v354 = vpop.f32.mrf.mxu0
  %v355 = vadd.f32 0.0, %v354
  %v356 = vpop.f32.mrf.mxu0
  %357 = vmatprep.mubr.bf16.mxu0 0
  %358 = vmatmul.mubr.bf16.gmra.mxu0 %v210
  %v359 = vpop.f32.mrf.mxu0
  %v360 = vadd.f32 0.0, %v359
  %v361 = vpop.f32.mrf.mxu0
  %v362 = vpop.f32.mrf.mxu0
  %v363 = vadd.f32 0.0, %v362
  %v364 = vpop.f32.mrf.mxu0
  %365 = vmatprep.mubr.bf16.mxu0 0
  %366 = vmatmul.mubr.bf16.gmra.mxu0 %v211
  %v367 = vpop.f32.mrf.mxu0
  %v368 = vadd.f32 0.0, %v367
  %v369 = vpop.f32.mrf.mxu0
  %v370 = vpop.f32.mrf.mxu0
  %v371 = vadd.f32 0.0, %v370
  %v372 = vpop.f32.mrf.mxu0
  %373 = vmatprep.mubr.bf16.mxu0 0
  %374 = vmatmul.mubr.bf16.gmra.mxu0 %v212
  %v375 = vpop.f32.mrf.mxu0
  %v376 = vadd.f32 0.0, %v375
  %v377 = vpop.f32.mrf.mxu0
  %v378 = vpop.f32.mrf.mxu0
  %v379 = vadd.f32 0.0, %v378
  %v380 = vpop.f32.mrf.mxu0
  %381 = vmatprep.mubr.bf16.mxu0 0
  %382 = vmatmul.mubr.bf16.gmra.mxu0 %v213
  %v383 = vpop.f32.mrf.mxu0
  %v384 = vadd.f32 0.0, %v383
  %v385 = vpop.f32.mrf.mxu0
  %v386 = vpop.f32.mrf.mxu0
  %v387 = vadd.f32 0.0, %v386
  %v388 = vpop.f32.mrf.mxu0
  %389 = vmatprep.mubr.bf16.mxu0 0
  %390 = vmatmul.mubr.bf16.gmra.mxu0 %v214
  %v391 = vpop.f32.mrf.mxu0
  %v392 = vadd.f32 0.0, %v391
  %v393 = vpop.f32.mrf.mxu0
  %v394 = vpop.f32.mrf.mxu0
  %v395 = vadd.f32 0.0, %v394
  %v396 = vpop.f32.mrf.mxu0
  %397 = vmatprep.mubr.bf16.mxu0 0
  %398 = vmatmul.mubr.bf16.gmra.mxu0 %v215
  %v399 = vpop.f32.mrf.mxu0
  %v400 = vadd.f32 0.0, %v399
  %v401 = vpop.f32.mrf.mxu0
  %v402 = vpop.f32.mrf.mxu0
  %v403 = vadd.f32 0.0, %v402
  %v404 = vpop.f32.mrf.mxu0
  %405 = vmatprep.mubr.bf16.mxu0 0
  %406 = vmatmul.mubr.bf16.gmra.mxu0 %v216
  %v407 = vpop.f32.mrf.mxu0
  %v408 = vadd.f32 0.0, %v407
  %v409 = vpop.f32.mrf.mxu0
  %v410 = vpop.f32.mrf.mxu0
  %v411 = vadd.f32 0.0, %v410
  %v412 = vpop.f32.mrf.mxu0
  %413 = vmatprep.mubr.bf16.mxu0 0
  %414 = vmatmul.mubr.bf16.gmra.mxu0 %v217
  %v415 = vpop.f32.mrf.mxu0
  %v416 = vadd.f32 0.0, %v415
  %v417 = vpop.f32.mrf.mxu0
  %v418 = vpop.f32.mrf.mxu0
  %v419 = vadd.f32 0.0, %v418
  %v420 = vpop.f32.mrf.mxu0
  %421 = vmatprep.mubr.bf16.mxu0 0
  %422 = vmatmul.mubr.bf16.gmra.mxu0 %v218
  %v423 = vpop.f32.mrf.mxu0
  %v424 = vadd.f32 0.0, %v423
  %v425 = vpop.f32.mrf.mxu0
  %v426 = vpop.f32.mrf.mxu0
  %v427 = vadd.f32 0.0, %v426
  %v428 = vpop.f32.mrf.mxu0
  %429 = vmatprep.mubr.bf16.mxu0 0
  %430 = vmatmul.mubr.bf16.gmra.mxu0 %v219
  %v431 = vpop.f32.mrf.mxu0
  %v432 = vadd.f32 0.0, %v431
  %v433 = vpop.f32.mrf.mxu0
  %v434 = vpop.f32.mrf.mxu0
  %v435 = vadd.f32 0.0, %v434
  %v436 = vpop.f32.mrf.mxu0
  %437 = vmatprep.mubr.bf16.mxu0 0
  %438 = vmatmul.mubr.bf16.gmra.mxu0 %v220
  %v439 = vpop.f32.mrf.mxu0
  %v440 = vadd.f32 0.0, %v439
  %v441 = vpop.f32.mrf.mxu0
  %v442 = vpop.f32.mrf.mxu0
  %v443 = vadd.f32 0.0, %v442
  %v444 = vpop.f32.mrf.mxu0
  %445 = vdwg.mxu0
  %v446 = vadd.f32 %v61, %v320
  %v447 = vadd.f32 %v62, %v323
  %v448 = vadd.f32 %v63, %v328
  %v449 = vadd.f32 %v64, %v331
  %v450 = vadd.f32 %v65, %v336
  %v451 = vadd.f32 %v66, %v339
  %v452 = vadd.f32 %v67, %v344
  %v453 = vadd.f32 %v68, %v347
  %v454 = vadd.f32 %v69, %v352
  %v455 = vadd.f32 %v70, %v355
  %v456 = vadd.f32 %v71, %v360
  %v457 = vadd.f32 %v72, %v363
  %v458 = vadd.f32 %v73, %v368
  %v459 = vadd.f32 %v74, %v371
  %v460 = vadd.f32 %v75, %v376
  %v461 = vadd.f32 %v76, %v379
  %v462 = vadd.f32 %v77, %v384
  %v463 = vadd.f32 %v78, %v387
  %v464 = vadd.f32 %v79, %v392
  %v465 = vadd.f32 %v80, %v395
  %v466 = vadd.f32 %v81, %v400
  %v467 = vadd.f32 %v82, %v403
  %v468 = vadd.f32 %v83, %v408
  %v469 = vadd.f32 %v84, %v411
  %v470 = vadd.f32 %v85, %v416
  %v471 = vadd.f32 %v86, %v419
  %v472 = vadd.f32 %v87, %v424
  %v473 = vadd.f32 %v88, %v427
  %v474 = vadd.f32 %v89, %v432
  %v475 = vadd.f32 %v90, %v435
  %v476 = vadd.f32 %v91, %v440
  %v477 = vadd.f32 %v92, %v443
  %vm478 = vcmask 523264
  %479 = vst.msk [vmem:[#allocation2] sm:$0xff] %vm478, %v446
  %480 = vst.msk [vmem:[#allocation2 + $0x8] sm:$0xff] %vm478, %v447
  %481 = vst.msk [vmem:[#allocation2 + $0x10] sm:$0xff] %vm478, %v448
  %482 = vst.msk [vmem:[#allocation2 + $0x18] sm:$0xff] %vm478, %v449
  %483 = vst.msk [vmem:[#allocation2 + $0x20] sm:$0xff] %vm478, %v450
  %484 = vst.msk [vmem:[#allocation2 + $0x28] sm:$0xff] %vm478, %v451
  %485 = vst.msk [vmem:[#allocation2 + $0x30] sm:$0xff] %vm478, %v452
  %486 = vst.msk [vmem:[#allocation2 + $0x38] sm:$0xff] %vm478, %v453
  %487 = vst.msk [vmem:[#allocation2 + $0x40] sm:$0xff] %vm478, %v454
  %488 = vst.msk [vmem:[#allocation2 + $0x48] sm:$0xff] %vm478, %v455
  %489 = vst.msk [vmem:[#allocation2 + $0x50] sm:$0xff] %vm478, %v456
  %490 = vst.msk [vmem:[#allocation2 + $0x58] sm:$0xff] %vm478, %v457
  %491 = vst.msk [vmem:[#allocation2 + $0x60] sm:$0xff] %vm478, %v458
  %492 = vst.msk [vmem:[#allocation2 + $0x68] sm:$0xff] %vm478, %v459
  %493 = vst.msk [vmem:[#allocation2 + $0x70] sm:$0xff] %vm478, %v460
  %494 = vst.msk [vmem:[#allocation2 + $0x78] sm:$0xff] %vm478, %v461
  %495 = vst.msk [vmem:[#allocation2 + $0x80] sm:$0xff] %vm478, %v462
  %496 = vst.msk [vmem:[#allocation2 + $0x88] sm:$0xff] %vm478, %v463
  %497 = vst.msk [vmem:[#allocation2 + $0x90] sm:$0xff] %vm478, %v464
  %498 = vst.msk [vmem:[#allocation2 + $0x98] sm:$0xff] %vm478, %v465
  %499 = vst.msk [vmem:[#allocation2 + $0xa0] sm:$0xff] %vm478, %v466
  %500 = vst.msk [vmem:[#allocation2 + $0xa8] sm:$0xff] %vm478, %v467
  %501 = vst.msk [vmem:[#allocation2 + $0xb0] sm:$0xff] %vm478, %v468
  %502 = vst.msk [vmem:[#allocation2 + $0xb8] sm:$0xff] %vm478, %v469
  %503 = vst.msk [vmem:[#allocation2 + $0xc0] sm:$0xff] %vm478, %v470
  %504 = vst.msk [vmem:[#allocation2 + $0xc8] sm:$0xff] %vm478, %v471
  %505 = vst.msk [vmem:[#allocation2 + $0xd0] sm:$0xff] %vm478, %v472
  %506 = vst.msk [vmem:[#allocation2 + $0xd8] sm:$0xff] %vm478, %v473
  %507 = vst.msk [vmem:[#allocation2 + $0xe0] sm:$0xff] %vm478, %v474
  %508 = vst.msk [vmem:[#allocation2 + $0xe8] sm:$0xff] %vm478, %v475
  %509 = vst.msk [vmem:[#allocation2 + $0xf0] sm:$0xff] %vm478, %v476
  %510 = vst.msk [vmem:[#allocation2 + $0xf8] sm:$0xff] %vm478, %v477
  // Predicated region
  $region30: #{rel0_encoder_forward.13} parent=0 // pred_check
    %p511 = pneg %p24
  $region31: #{rel0_encoder_forward.13} parent=0 // pred_check_branch
    %513 = sbr.rel (%p511) target = $region33
  $region32: #{rel0_encoder_forward.13} parent=0 // pred_region
    %v514 = vld [vmem:[#allocation2] sm:$0xff]
    %v515 = vld [vmem:[#allocation2 + $0x8] sm:$0xff]
    %v516 = vld [vmem:[#allocation2 + $0x10] sm:$0xff]
    %v517 = vld [vmem:[#allocation2 + $0x18] sm:$0xff]
    %v518 = vld [vmem:[#allocation2 + $0x20] sm:$0xff]
    %v519 = vld [vmem:[#allocation2 + $0x28] sm:$0xff]
    %v520 = vld [vmem:[#allocation2 + $0x30] sm:$0xff]
    %v521 = vld [vmem:[#allocation2 + $0x38] sm:$0xff]
    %v522 = vld [vmem:[#allocation2 + $0x40] sm:$0xff]
    %v523 = vld [vmem:[#allocation2 + $0x48] sm:$0xff]
    %v524 = vld [vmem:[#allocation2 + $0x50] sm:$0xff]
    %v525 = vld [vmem:[#allocation2 + $0x58] sm:$0xff]
    %v526 = vld [vmem:[#allocation2 + $0x60] sm:$0xff]
    %v527 = vld [vmem:[#allocation2 + $0x68] sm:$0xff]
    %v528 = vld [vmem:[#allocation2 + $0x70] sm:$0xff]
    %v529 = vld [vmem:[#allocation2 + $0x78] sm:$0xff]
    %v530 = vld [vmem:[#allocation2 + $0x80] sm:$0xff]
    %v531 = vld [vmem:[#allocation2 + $0x88] sm:$0xff]
    %v532 = vld [vmem:[#allocation2 + $0x90] sm:$0xff]
    %v533 = vld [vmem:[#allocation2 + $0x98] sm:$0xff]
    %v534 = vld [vmem:[#allocation2 + $0xa0] sm:$0xff]
    %v535 = vld [vmem:[#allocation2 + $0xa8] sm:$0xff]
    %v536 = vld [vmem:[#allocation2 + $0xb0] sm:$0xff]
    %v537 = vld [vmem:[#allocation2 + $0xb8] sm:$0xff]
    %v538 = vld [vmem:[#allocation2 + $0xc0] sm:$0xff]
    %v539 = vld [vmem:[#allocation2 + $0xc8] sm:$0xff]
    %v540 = vld [vmem:[#allocation2 + $0xd0] sm:$0xff]
    %v541 = vld [vmem:[#allocation2 + $0xd8] sm:$0xff]
    %v542 = vld [vmem:[#allocation2 + $0xe0] sm:$0xff]
    %v543 = vld [vmem:[#allocation2 + $0xe8] sm:$0xff]
    %v544 = vld [vmem:[#allocation2 + $0xf0] sm:$0xff]
    %v545 = vld [vmem:[#allocation2 + $0xf8] sm:$0xff]
    %v546 = vld [vmem:[%s2] sm:$0x1]
    %v548 = vlaneseq
    %v549 = vshrl.u32 %v548, 7
    %v550 = vsub.s32 0, %v549
    %v551 = vrot.slane %v546, %v550
    %v553 = vadd.f32 %v514, %v551
    %v554 = vadd.f32 %v515, %v551
    %v555 = vadd.f32 %v516, %v551
    %v556 = vadd.f32 %v517, %v551
    %v557 = vadd.f32 %v518, %v551
    %v558 = vadd.f32 %v519, %v551
    %v559 = vadd.f32 %v520, %v551
    %v560 = vadd.f32 %v521, %v551
    %v561 = vadd.f32 %v522, %v551
    %v562 = vadd.f32 %v523, %v551
    %v563 = vadd.f32 %v524, %v551
    %v564 = vadd.f32 %v525, %v551
    %v565 = vadd.f32 %v526, %v551
    %v566 = vadd.f32 %v527, %v551
    %v567 = vadd.f32 %v528, %v551
    %v568 = vadd.f32 %v529, %v551
    %v569 = vadd.f32 %v530, %v551
    %v570 = vadd.f32 %v531, %v551
    %v571 = vadd.f32 %v532, %v551
    %v572 = vadd.f32 %v533, %v551
    %v573 = vadd.f32 %v534, %v551
    %v574 = vadd.f32 %v535, %v551
    %v575 = vadd.f32 %v536, %v551
    %v576 = vadd.f32 %v537, %v551
    %v577 = vadd.f32 %v538, %v551
    %v578 = vadd.f32 %v539, %v551
    %v579 = vadd.f32 %v540, %v551
    %v580 = vadd.f32 %v541, %v551
    %v581 = vadd.f32 %v542, %v551
    %v582 = vadd.f32 %v543, %v551
    %v583 = vadd.f32 %v544, %v551
    %v584 = vadd.f32 %v545, %v551
    %v585 = vld [vmem:[%s3] sm:$0xff]
    %v586 = vld [vmem:[%s3 + $0x8] sm:$0xff]
    %v587 = vld [vmem:[%s3 + $0x10] sm:$0xff]
    %v588 = vld [vmem:[%s3 + $0x18] sm:$0xff]
    %v589 = vld [vmem:[%s3 + $0x20] sm:$0xff]
    %v590 = vld [vmem:[%s3 + $0x28] sm:$0xff]
    %v591 = vld [vmem:[%s3 + $0x30] sm:$0xff]
    %v592 = vld [vmem:[%s3 + $0x38] sm:$0xff]
    %v593 = vld [vmem:[%s3 + $0x40] sm:$0xff]
    %v594 = vld [vmem:[%s3 + $0x48] sm:$0xff]
    %v595 = vld [vmem:[%s3 + $0x50] sm:$0xff]
    %v596 = vld [vmem:[%s3 + $0x58] sm:$0xff]
    %v597 = vld [vmem:[%s3 + $0x60] sm:$0xff]
    %v598 = vld [vmem:[%s3 + $0x68] sm:$0xff]
    %v599 = vld [vmem:[%s3 + $0x70] sm:$0xff]
    %v600 = vld [vmem:[%s3 + $0x78] sm:$0xff]
    %v601 = vld [vmem:[%s3 + $0x80] sm:$0xff]
    %v602 = vld [vmem:[%s3 + $0x88] sm:$0xff]
    %v603 = vld [vmem:[%s3 + $0x90] sm:$0xff]
    %v604 = vld [vmem:[%s3 + $0x98] sm:$0xff]
    %v605 = vld [vmem:[%s3 + $0xa0] sm:$0xff]
    %v606 = vld [vmem:[%s3 + $0xa8] sm:$0xff]
    %v607 = vld [vmem:[%s3 + $0xb0] sm:$0xff]
    %v608 = vld [vmem:[%s3 + $0xb8] sm:$0xff]
    %v609 = vld [vmem:[%s3 + $0xc0] sm:$0xff]
    %v610 = vld [vmem:[%s3 + $0xc8] sm:$0xff]
    %v611 = vld [vmem:[%s3 + $0xd0] sm:$0xff]
    %v612 = vld [vmem:[%s3 + $0xd8] sm:$0xff]
    %v613 = vld [vmem:[%s3 + $0xe0] sm:$0xff]
    %v614 = vld [vmem:[%s3 + $0xe8] sm:$0xff]
    %v615 = vld [vmem:[%s3 + $0xf0] sm:$0xff]
    %v616 = vld [vmem:[%s3 + $0xf8] sm:$0xff]
    %v617 = vadd.f32 %v553, %v585
    %v618 = vadd.f32 %v554, %v586
    %v619 = vadd.f32 %v555, %v587
    %v620 = vadd.f32 %v556, %v588
    %v621 = vadd.f32 %v557, %v589
    %v622 = vadd.f32 %v558, %v590
    %v623 = vadd.f32 %v559, %v591
    %v624 = vadd.f32 %v560, %v592
    %v625 = vadd.f32 %v561, %v593
    %v626 = vadd.f32 %v562, %v594
    %v627 = vadd.f32 %v563, %v595
    %v628 = vadd.f32 %v564, %v596
    %v629 = vadd.f32 %v565, %v597
    %v630 = vadd.f32 %v566, %v598
    %v631 = vadd.f32 %v567, %v599
    %v632 = vadd.f32 %v568, %v600
    %v633 = vadd.f32 %v569, %v601
    %v634 = vadd.f32 %v570, %v602
    %v635 = vadd.f32 %v571, %v603
    %v636 = vadd.f32 %v572, %v604
    %v637 = vadd.f32 %v573, %v605
    %v638 = vadd.f32 %v574, %v606
    %v639 = vadd.f32 %v575, %v607
    %v640 = vadd.f32 %v576, %v608
    %v641 = vadd.f32 %v577, %v609
    %v642 = vadd.f32 %v578, %v610
    %v643 = vadd.f32 %v579, %v611
    %v644 = vadd.f32 %v580, %v612
    %v645 = vadd.f32 %v581, %v613
    %v646 = vadd.f32 %v582, %v614
    %v647 = vadd.f32 %v583, %v615
    %v648 = vadd.f32 %v584, %v616
    %v649 = vsel %vm478, %v617, 0.0
    %650 = vadd.xlane.f32.xlu0 %v649
    %v651 = vpop.xlane.xlu0 %650
    %v652 = vsel %vm478, %v618, 0.0
    %653 = vadd.xlane.f32.xlu0 %v652
    %v654 = vpop.xlane.xlu0 %653
    %v655 = vsel %vm478, %v619, 0.0
    %656 = vadd.xlane.f32.xlu0 %v655
    %v657 = vpop.xlane.xlu0 %656
    %v658 = vsel %vm478, %v620, 0.0
    %659 = vadd.xlane.f32.xlu0 %v658
    %v660 = vpop.xlane.xlu0 %659
    %v661 = vsel %vm478, %v621, 0.0
    %662 = vadd.xlane.f32.xlu0 %v661
    %v663 = vpop.xlane.xlu0 %662
    %v664 = vsel %vm478, %v622, 0.0
    %665 = vadd.xlane.f32.xlu0 %v664
    %v666 = vpop.xlane.xlu0 %665
    %v667 = vsel %vm478, %v623, 0.0
    %668 = vadd.xlane.f32.xlu0 %v667
    %v669 = vpop.xlane.xlu0 %668
    %v670 = vsel %vm478, %v624, 0.0
    %671 = vadd.xlane.f32.xlu0 %v670
    %v672 = vpop.xlane.xlu0 %671
    %v673 = vsel %vm478, %v625, 0.0
    %674 = vadd.xlane.f32.xlu0 %v673
    %v675 = vpop.xlane.xlu0 %674
    %v676 = vsel %vm478, %v626, 0.0
    %677 = vadd.xlane.f32.xlu0 %v676
    %v678 = vpop.xlane.xlu0 %677
    %v679 = vsel %vm478, %v627, 0.0
    %680 = vadd.xlane.f32.xlu0 %v679
    %v681 = vpop.xlane.xlu0 %680
    %v682 = vsel %vm478, %v628, 0.0
    %683 = vadd.xlane.f32.xlu0 %v682
    %v684 = vpop.xlane.xlu0 %683
    %v685 = vsel %vm478, %v629, 0.0
    %686 = vadd.xlane.f32.xlu0 %v685
    %v687 = vpop.xlane.xlu0 %686
    %v688 = vsel %vm478, %v630, 0.0
    %689 = vadd.xlane.f32.xlu0 %v688
    %v690 = vpop.xlane.xlu0 %689
    %v691 = vsel %vm478, %v631, 0.0
    %692 = vadd.xlane.f32.xlu0 %v691
    %v693 = vpop.xlane.xlu0 %692
    %v694 = vsel %vm478, %v632, 0.0
    %695 = vadd.xlane.f32.xlu0 %v694
    %v696 = vpop.xlane.xlu0 %695
    %v697 = vsel %vm478, %v633, 0.0
    %698 = vadd.xlane.f32.xlu0 %v697
    %v699 = vpop.xlane.xlu0 %698
    %v700 = vsel %vm478, %v634, 0.0
    %701 = vadd.xlane.f32.xlu0 %v700
    %v702 = vpop.xlane.xlu0 %701
    %v703 = vsel %vm478, %v635, 0.0
    %704 = vadd.xlane.f32.xlu0 %v703
    %v705 = vpop.xlane.xlu0 %704
    %v706 = vsel %vm478, %v636, 0.0
    %707 = vadd.xlane.f32.xlu0 %v706
    %v708 = vpop.xlane.xlu0 %707
    %v709 = vsel %vm478, %v637, 0.0
    %710 = vadd.xlane.f32.xlu0 %v709
    %v711 = vpop.xlane.xlu0 %710
    %v712 = vsel %vm478, %v638, 0.0
    %713 = vadd.xlane.f32.xlu0 %v712
    %v714 = vpop.xlane.xlu0 %713
    %v715 = vsel %vm478, %v639, 0.0
    %716 = vadd.xlane.f32.xlu0 %v715
    %v717 = vpop.xlane.xlu0 %716
    %v718 = vsel %vm478, %v640, 0.0
    %719 = vadd.xlane.f32.xlu0 %v718
    %v720 = vpop.xlane.xlu0 %719
    %v721 = vsel %vm478, %v641, 0.0
    %722 = vadd.xlane.f32.xlu0 %v721
    %v723 = vpop.xlane.xlu0 %722
    %v724 = vsel %vm478, %v642, 0.0
    %725 = vadd.xlane.f32.xlu0 %v724
    %v726 = vpop.xlane.xlu0 %725
    %v727 = vsel %vm478, %v643, 0.0
    %728 = vadd.xlane.f32.xlu0 %v727
    %v729 = vpop.xlane.xlu0 %728
    %v730 = vsel %vm478, %v644, 0.0
    %731 = vadd.xlane.f32.xlu0 %v730
    %v732 = vpop.xlane.xlu0 %731
    %v733 = vsel %vm478, %v645, 0.0
    %734 = vadd.xlane.f32.xlu0 %v733
    %v735 = vpop.xlane.xlu0 %734
    %v736 = vsel %vm478, %v646, 0.0
    %737 = vadd.xlane.f32.xlu0 %v736
    %v738 = vpop.xlane.xlu0 %737
    %v739 = vsel %vm478, %v647, 0.0
    %740 = vadd.xlane.f32.xlu0 %v739
    %v741 = vpop.xlane.xlu0 %740
    %v742 = vsel %vm478, %v648, 0.0
    %743 = vadd.xlane.f32.xlu0 %v742
    %v744 = vpop.xlane.xlu0 %743
    %v745 = vrcp.pop 64.0
    %v746 = vmul.f32 %v651, %v745
    %v747 = vmul.f32 %v654, %v745
    %v748 = vmul.f32 %v657, %v745
    %v749 = vmul.f32 %v660, %v745
    %v750 = vmul.f32 %v663, %v745
    %v751 = vmul.f32 %v666, %v745
    %v752 = vmul.f32 %v669, %v745
    %v753 = vmul.f32 %v672, %v745
    %v754 = vmul.f32 %v675, %v745
    %v755 = vmul.f32 %v678, %v745
    %v756 = vmul.f32 %v681, %v745
    %v757 = vmul.f32 %v684, %v745
    %v758 = vmul.f32 %v687, %v745
    %v759 = vmul.f32 %v690, %v745
    %v760 = vmul.f32 %v693, %v745
    %v761 = vmul.f32 %v696, %v745
    %v762 = vmul.f32 %v699, %v745
    %v763 = vmul.f32 %v702, %v745
    %v764 = vmul.f32 %v705, %v745
    %v765 = vmul.f32 %v708, %v745
    %v766 = vmul.f32 %v711, %v745
    %v767 = vmul.f32 %v714, %v745
    %v768 = vmul.f32 %v717, %v745
    %v769 = vmul.f32 %v720, %v745
    %v770 = vmul.f32 %v723, %v745
    %v771 = vmul.f32 %v726, %v745
    %v772 = vmul.f32 %v729, %v745
    %v773 = vmul.f32 %v732, %v745
    %v774 = vmul.f32 %v735, %v745
    %v775 = vmul.f32 %v738, %v745
    %v776 = vmul.f32 %v741, %v745
    %v777 = vmul.f32 %v744, %v745
    %v778 = vsub.f32 %v617, %v746
    %v779 = vsub.f32 %v618, %v747
    %v780 = vsub.f32 %v619, %v748
    %v781 = vsub.f32 %v620, %v749
    %v782 = vsub.f32 %v621, %v750
    %v783 = vsub.f32 %v622, %v751
    %v784 = vsub.f32 %v623, %v752
    %v785 = vsub.f32 %v624, %v753
    %v786 = vsub.f32 %v625, %v754
    %v787 = vsub.f32 %v626, %v755
    %v788 = vsub.f32 %v627, %v756
    %v789 = vsub.f32 %v628, %v757
    %v790 = vsub.f32 %v629, %v758
    %v791 = vsub.f32 %v630, %v759
    %v792 = vsub.f32 %v631, %v760
    %v793 = vsub.f32 %v632, %v761
    %v794 = vsub.f32 %v633, %v762
    %v795 = vsub.f32 %v634, %v763
    %v796 = vsub.f32 %v635, %v764
    %v797 = vsub.f32 %v636, %v765
    %v798 = vsub.f32 %v637, %v766
    %v799 = vsub.f32 %v638, %v767
    %v800 = vsub.f32 %v639, %v768
    %v801 = vsub.f32 %v640, %v769
    %v802 = vsub.f32 %v641, %v770
    %v803 = vsub.f32 %v642, %v771
    %v804 = vsub.f32 %v643, %v772
    %v805 = vsub.f32 %v644, %v773
    %v806 = vsub.f32 %v645, %v774
    %v807 = vsub.f32 %v646, %v775
    %v808 = vsub.f32 %v647, %v776
    %v809 = vsub.f32 %v648, %v777
    %v810 = vmul.f32 %v778, %v778
    %v811 = vmul.f32 %v779, %v779
    %v812 = vmul.f32 %v780, %v780
    %v813 = vmul.f32 %v781, %v781
    %v814 = vmul.f32 %v782, %v782
    %v815 = vmul.f32 %v783, %v783
    %v816 = vmul.f32 %v784, %v784
    %v817 = vmul.f32 %v785, %v785
    %v818 = vmul.f32 %v786, %v786
    %v819 = vmul.f32 %v787, %v787
    %v820 = vmul.f32 %v788, %v788
    %v821 = vmul.f32 %v789, %v789
    %v822 = vmul.f32 %v790, %v790
    %v823 = vmul.f32 %v791, %v791
    %v824 = vmul.f32 %v792, %v792
    %v825 = vmul.f32 %v793, %v793
    %v826 = vmul.f32 %v794, %v794
    %v827 = vmul.f32 %v795, %v795
    %v828 = vmul.f32 %v796, %v796
    %v829 = vmul.f32 %v797, %v797
    %v830 = vmul.f32 %v798, %v798
    %v831 = vmul.f32 %v799, %v799
    %v832 = vmul.f32 %v800, %v800
    %v833 = vmul.f32 %v801, %v801
    %v834 = vmul.f32 %v802, %v802
    %v835 = vmul.f32 %v803, %v803
    %v836 = vmul.f32 %v804, %v804
    %v837 = vmul.f32 %v805, %v805
    %v838 = vmul.f32 %v806, %v806
    %v839 = vmul.f32 %v807, %v807
    %v840 = vmul.f32 %v808, %v808
    %v841 = vmul.f32 %v809, %v809
    %v842 = vsel %vm478, %v810, 0.0
    %843 = vadd.xlane.f32.xlu0 %v842
    %v844 = vpop.xlane.xlu0 %843
    %v845 = vsel %vm478, %v811, 0.0
    %846 = vadd.xlane.f32.xlu0 %v845
    %v847 = vpop.xlane.xlu0 %846
    %v848 = vsel %vm478, %v812, 0.0
    %849 = vadd.xlane.f32.xlu0 %v848
    %v850 = vpop.xlane.xlu0 %849
    %v851 = vsel %vm478, %v813, 0.0
    %852 = vadd.xlane.f32.xlu0 %v851
    %v853 = vpop.xlane.xlu0 %852
    %v854 = vsel %vm478, %v814, 0.0
    %855 = vadd.xlane.f32.xlu0 %v854
    %v856 = vpop.xlane.xlu0 %855
    %v857 = vsel %vm478, %v815, 0.0
    %858 = vadd.xlane.f32.xlu0 %v857
    %v859 = vpop.xlane.xlu0 %858
    %v860 = vsel %vm478, %v816, 0.0
    %861 = vadd.xlane.f32.xlu0 %v860
    %v862 = vpop.xlane.xlu0 %861
    %v863 = vsel %vm478, %v817, 0.0
    %864 = vadd.xlane.f32.xlu0 %v863
    %v865 = vpop.xlane.xlu0 %864
    %v866 = vsel %vm478, %v818, 0.0
    %867 = vadd.xlane.f32.xlu0 %v866
    %v868 = vpop.xlane.xlu0 %867
    %v869 = vsel %vm478, %v819, 0.0
    %870 = vadd.xlane.f32.xlu0 %v869
    %v871 = vpop.xlane.xlu0 %870
    %v872 = vsel %vm478, %v820, 0.0
    %873 = vadd.xlane.f32.xlu0 %v872
    %v874 = vpop.xlane.xlu0 %873
    %v875 = vsel %vm478, %v821, 0.0
    %876 = vadd.xlane.f32.xlu0 %v875
    %v877 = vpop.xlane.xlu0 %876
    %v878 = vsel %vm478, %v822, 0.0
    %879 = vadd.xlane.f32.xlu0 %v878
    %v880 = vpop.xlane.xlu0 %879
    %v881 = vsel %vm478, %v823, 0.0
    %882 = vadd.xlane.f32.xlu0 %v881
    %v883 = vpop.xlane.xlu0 %882
    %v884 = vsel %vm478, %v824, 0.0
    %885 = vadd.xlane.f32.xlu0 %v884
    %v886 = vpop.xlane.xlu0 %885
    %v887 = vsel %vm478, %v825, 0.0
    %888 = vadd.xlane.f32.xlu0 %v887
    %v889 = vpop.xlane.xlu0 %888
    %v890 = vsel %vm478, %v826, 0.0
    %891 = vadd.xlane.f32.xlu0 %v890
    %v892 = vpop.xlane.xlu0 %891
    %v893 = vsel %vm478, %v827, 0.0
    %894 = vadd.xlane.f32.xlu0 %v893
    %v895 = vpop.xlane.xlu0 %894
    %v896 = vsel %vm478, %v828, 0.0
    %897 = vadd.xlane.f32.xlu0 %v896
    %v898 = vpop.xlane.xlu0 %897
    %v899 = vsel %vm478, %v829, 0.0
    %900 = vadd.xlane.f32.xlu0 %v899
    %v901 = vpop.xlane.xlu0 %900
    %v902 = vsel %vm478, %v830, 0.0
    %903 = vadd.xlane.f32.xlu0 %v902
    %v904 = vpop.xlane.xlu0 %903
    %v905 = vsel %vm478, %v831, 0.0
    %906 = vadd.xlane.f32.xlu0 %v905
    %v907 = vpop.xlane.xlu0 %906
    %v908 = vsel %vm478, %v832, 0.0
    %909 = vadd.xlane.f32.xlu0 %v908
    %v910 = vpop.xlane.xlu0 %909
    %v911 = vsel %vm478, %v833, 0.0
    %912 = vadd.xlane.f32.xlu0 %v911
    %v913 = vpop.xlane.xlu0 %912
    %v914 = vsel %vm478, %v834, 0.0
    %915 = vadd.xlane.f32.xlu0 %v914
    %v916 = vpop.xlane.xlu0 %915
    %v917 = vsel %vm478, %v835, 0.0
    %918 = vadd.xlane.f32.xlu0 %v917
    %v919 = vpop.xlane.xlu0 %918
    %v920 = vsel %vm478, %v836, 0.0
    %921 = vadd.xlane.f32.xlu0 %v920
    %v922 = vpop.xlane.xlu0 %921
    %v923 = vsel %vm478, %v837, 0.0
    %924 = vadd.xlane.f32.xlu0 %v923
    %v925 = vpop.xlane.xlu0 %924
    %v926 = vsel %vm478, %v838, 0.0
    %927 = vadd.xlane.f32.xlu0 %v926
    %v928 = vpop.xlane.xlu0 %927
    %v929 = vsel %vm478, %v839, 0.0
    %930 = vadd.xlane.f32.xlu0 %v929
    %v931 = vpop.xlane.xlu0 %930
    %v932 = vsel %vm478, %v840, 0.0
    %933 = vadd.xlane.f32.xlu0 %v932
    %v934 = vpop.xlane.xlu0 %933
    %v935 = vsel %vm478, %v841, 0.0
    %936 = vadd.xlane.f32.xlu0 %v935
    %v937 = vpop.xlane.xlu0 %936
    %v938 = vmul.f32 %v844, %v745
    %v939 = vmul.f32 %v847, %v745
    %v940 = vmul.f32 %v850, %v745
    %v941 = vmul.f32 %v853, %v745
    %v942 = vmul.f32 %v856, %v745
    %v943 = vmul.f32 %v859, %v745
    %v944 = vmul.f32 %v862, %v745
    %v945 = vmul.f32 %v865, %v745
    %v946 = vmul.f32 %v868, %v745
    %v947 = vmul.f32 %v871, %v745
    %v948 = vmul.f32 %v874, %v745
    %v949 = vmul.f32 %v877, %v745
    %v950 = vmul.f32 %v880, %v745
    %v951 = vmul.f32 %v883, %v745
    %v952 = vmul.f32 %v886, %v745
    %v953 = vmul.f32 %v889, %v745
    %v954 = vmul.f32 %v892, %v745
    %v955 = vmul.f32 %v895, %v745
    %v956 = vmul.f32 %v898, %v745
    %v957 = vmul.f32 %v901, %v745
    %v958 = vmul.f32 %v904, %v745
    %v959 = vmul.f32 %v907, %v745
    %v960 = vmul.f32 %v910, %v745
    %v961 = vmul.f32 %v913, %v745
    %v962 = vmul.f32 %v916, %v745
    %v963 = vmul.f32 %v919, %v745
    %v964 = vmul.f32 %v922, %v745
    %v965 = vmul.f32 %v925, %v745
    %v966 = vmul.f32 %v928, %v745
    %v967 = vmul.f32 %v931, %v745
    %v968 = vmul.f32 %v934, %v745
    %v969 = vmul.f32 %v937, %v745
    %v970 = vadd.f32 %v938, 1e-05
    %v971 = vadd.f32 %v939, 1e-05
    %v972 = vadd.f32 %v940, 1e-05
    %v973 = vadd.f32 %v941, 1e-05
    %v974 = vadd.f32 %v942, 1e-05
    %v975 = vadd.f32 %v943, 1e-05
    %v976 = vadd.f32 %v944, 1e-05
    %v977 = vadd.f32 %v945, 1e-05
    %v978 = vadd.f32 %v946, 1e-05
    %v979 = vadd.f32 %v947, 1e-05
    %v980 = vadd.f32 %v948, 1e-05
    %v981 = vadd.f32 %v949, 1e-05
    %v982 = vadd.f32 %v950, 1e-05
    %v983 = vadd.f32 %v951, 1e-05
    %v984 = vadd.f32 %v952, 1e-05
    %v985 = vadd.f32 %v953, 1e-05
    %v986 = vadd.f32 %v954, 1e-05
    %v987 = vadd.f32 %v955, 1e-05
    %v988 = vadd.f32 %v956, 1e-05
    %v989 = vadd.f32 %v957, 1e-05
    %v990 = vadd.f32 %v958, 1e-05
    %v991 = vadd.f32 %v959, 1e-05
    %v992 = vadd.f32 %v960, 1e-05
    %v993 = vadd.f32 %v961, 1e-05
    %v994 = vadd.f32 %v962, 1e-05
    %v995 = vadd.f32 %v963, 1e-05
    %v996 = vadd.f32 %v964, 1e-05
    %v997 = vadd.f32 %v965, 1e-05
    %v998 = vadd.f32 %v966, 1e-05
    %v999 = vadd.f32 %v967, 1e-05
    %v1000 = vadd.f32 %v968, 1e-05
    %v1001 = vadd.f32 %v969, 1e-05
    %v1002 = vrsqrt.pop %v970
    %v1003 = vrsqrt.pop %v971
    %v1004 = vrsqrt.pop %v972
    %v1005 = vrsqrt.pop %v973
    %v1006 = vrsqrt.pop %v974
    %v1007 = vrsqrt.pop %v975
    %v1008 = vrsqrt.pop %v976
    %v1009 = vrsqrt.pop %v977
    %v1010 = vrsqrt.pop %v978
    %v1011 = vrsqrt.pop %v979
    %v1012 = vrsqrt.pop %v980
    %v1013 = vrsqrt.pop %v981
    %v1014 = vrsqrt.pop %v982
    %v1015 = vrsqrt.pop %v983
    %v1016 = vrsqrt.pop %v984
    %v1017 = vrsqrt.pop %v985
    %v1018 = vrsqrt.pop %v986
    %v1019 = vrsqrt.pop %v987
    %v1020 = vrsqrt.pop %v988
    %v1021 = vrsqrt.pop %v989
    %v1022 = vrsqrt.pop %v990
    %v1023 = vrsqrt.pop %v991
    %v1024 = vrsqrt.pop %v992
    %v1025 = vrsqrt.pop %v993
    %v1026 = vrsqrt.pop %v994
    %v1027 = vrsqrt.pop %v995
    %v1028 = vrsqrt.pop %v996
    %v1029 = vrsqrt.pop %v997
    %v1030 = vrsqrt.pop %v998
    %v1031 = vrsqrt.pop %v999
    %v1032 = vrsqrt.pop %v1000
    %v1033 = vrsqrt.pop %v1001
    %v1034 = vmul.f32 %v778, %v1002
    %v1035 = vmul.f32 %v779, %v1003
    %v1036 = vmul.f32 %v780, %v1004
    %v1037 = vmul.f32 %v781, %v1005
    %v1038 = vmul.f32 %v782, %v1006
    %v1039 = vmul.f32 %v783, %v1007
    %v1040 = vmul.f32 %v784, %v1008
    %v1041 = vmul.f32 %v785, %v1009
    %v1042 = vmul.f32 %v786, %v1010
    %v1043 = vmul.f32 %v787, %v1011
    %v1044 = vmul.f32 %v788, %v1012
    %v1045 = vmul.f32 %v789, %v1013
    %v1046 = vmul.f32 %v790, %v1014
    %v1047 = vmul.f32 %v791, %v1015
    %v1048 = vmul.f32 %v792, %v1016
    %v1049 = vmul.f32 %v793, %v1017
    %v1050 = vmul.f32 %v794, %v1018
    %v1051 = vmul.f32 %v795, %v1019
    %v1052 = vmul.f32 %v796, %v1020
    %v1053 = vmul.f32 %v797, %v1021
    %v1054 = vmul.f32 %v798, %v1022
    %v1055 = vmul.f32 %v799, %v1023
    %v1056 = vmul.f32 %v800, %v1024
    %v1057 = vmul.f32 %v801, %v1025
    %v1058 = vmul.f32 %v802, %v1026
    %v1059 = vmul.f32 %v803, %v1027
    %v1060 = vmul.f32 %v804, %v1028
    %v1061 = vmul.f32 %v805, %v1029
    %v1062 = vmul.f32 %v806, %v1030
    %v1063 = vmul.f32 %v807, %v1031
    %v1064 = vmul.f32 %v808, %v1032
    %v1065 = vmul.f32 %v809, %v1033
    %v1066 = vld [vmem:[%s4] sm:$0x1]
    %v1068 = vlaneseq
    %v1069 = vshrl.u32 %v1068, 7
    %v1070 = vsub.s32 0, %v1069
    %v1071 = vrot.slane %v1066, %v1070
    %v1073 = vmul.f32 %v1034, %v1071
    %v1074 = vmul.f32 %v1035, %v1071
    %v1075 = vmul.f32 %v1036, %v1071
    %v1076 = vmul.f32 %v1037, %v1071
    %v1077 = vmul.f32 %v1038, %v1071
    %v1078 = vmul.f32 %v1039, %v1071
    %v1079 = vmul.f32 %v1040, %v1071
    %v1080 = vmul.f32 %v1041, %v1071
    %v1081 = vmul.f32 %v1042, %v1071
    %v1082 = vmul.f32 %v1043, %v1071
    %v1083 = vmul.f32 %v1044, %v1071
    %v1084 = vmul.f32 %v1045, %v1071
    %v1085 = vmul.f32 %v1046, %v1071
    %v1086 = vmul.f32 %v1047, %v1071
    %v1087 = vmul.f32 %v1048, %v1071
    %v1088 = vmul.f32 %v1049, %v1071
    %v1089 = vmul.f32 %v1050, %v1071
    %v1090 = vmul.f32 %v1051, %v1071
    %v1091 = vmul.f32 %v1052, %v1071
    %v1092 = vmul.f32 %v1053, %v1071
    %v1093 = vmul.f32 %v1054, %v1071
    %v1094 = vmul.f32 %v1055, %v1071
    %v1095 = vmul.f32 %v1056, %v1071
    %v1096 = vmul.f32 %v1057, %v1071
    %v1097 = vmul.f32 %v1058, %v1071
    %v1098 = vmul.f32 %v1059, %v1071
    %v1099 = vmul.f32 %v1060, %v1071
    %v1100 = vmul.f32 %v1061, %v1071
    %v1101 = vmul.f32 %v1062, %v1071
    %v1102 = vmul.f32 %v1063, %v1071
    %v1103 = vmul.f32 %v1064, %v1071
    %v1104 = vmul.f32 %v1065, %v1071
    %v1105 = vld [vmem:[%s5] sm:$0x1]
    %v1107 = vlaneseq
    %v1108 = vshrl.u32 %v1107, 7
    %v1109 = vsub.s32 0, %v1108
    %v1110 = vrot.slane %v1105, %v1109
    %v1112 = vadd.f32 %v1073, %v1110
    %v1113 = vadd.f32 %v1074, %v1110
    %v1114 = vadd.f32 %v1075, %v1110
    %v1115 = vadd.f32 %v1076, %v1110
    %v1116 = vadd.f32 %v1077, %v1110
    %v1117 = vadd.f32 %v1078, %v1110
    %v1118 = vadd.f32 %v1079, %v1110
    %v1119 = vadd.f32 %v1080, %v1110
    %v1120 = vadd.f32 %v1081, %v1110
    %v1121 = vadd.f32 %v1082, %v1110
    %v1122 = vadd.f32 %v1083, %v1110
    %v1123 = vadd.f32 %v1084, %v1110
    %v1124 = vadd.f32 %v1085, %v1110
    %v1125 = vadd.f32 %v1086, %v1110
    %v1126 = vadd.f32 %v1087, %v1110
    %v1127 = vadd.f32 %v1088, %v1110
    %v1128 = vadd.f32 %v1089, %v1110
    %v1129 = vadd.f32 %v1090, %v1110
    %v1130 = vadd.f32 %v1091, %v1110
    %v1131 = vadd.f32 %v1092, %v1110
    %v1132 = vadd.f32 %v1093, %v1110
    %v1133 = vadd.f32 %v1094, %v1110
    %v1134 = vadd.f32 %v1095, %v1110
    %v1135 = vadd.f32 %v1096, %v1110
    %v1136 = vadd.f32 %v1097, %v1110
    %v1137 = vadd.f32 %v1098, %v1110
    %v1138 = vadd.f32 %v1099, %v1110
    %v1139 = vadd.f32 %v1100, %v1110
    %v1140 = vadd.f32 %v1101, %v1110
    %v1141 = vadd.f32 %v1102, %v1110
    %v1142 = vadd.f32 %v1103, %v1110
    %v1143 = vadd.f32 %v1104, %v1110
    %1144 = vst.msk [vmem:[%s6] sm:$0xff] %vm478, %v1112
    %1145 = vst.msk [vmem:[%s6 + $0x8] sm:$0xff] %vm478, %v1113
    %1146 = vst.msk [vmem:[%s6 + $0x10] sm:$0xff] %vm478, %v1114
    %1147 = vst.msk [vmem:[%s6 + $0x18] sm:$0xff] %vm478, %v1115
    %1148 = vst.msk [vmem:[%s6 + $0x20] sm:$0xff] %vm478, %v1116
    %1149 = vst.msk [vmem:[%s6 + $0x28] sm:$0xff] %vm478, %v1117
    %1150 = vst.msk [vmem:[%s6 + $0x30] sm:$0xff] %vm478, %v1118
    %1151 = vst.msk [vmem:[%s6 + $0x38] sm:$0xff] %vm478, %v1119
    %1152 = vst.msk [vmem:[%s6 + $0x40] sm:$0xff] %vm478, %v1120
    %1153 = vst.msk [vmem:[%s6 + $0x48] sm:$0xff] %vm478, %v1121
    %1154 = vst.msk [vmem:[%s6 + $0x50] sm:$0xff] %vm478, %v1122
    %1155 = vst.msk [vmem:[%s6 + $0x58] sm:$0xff] %vm478, %v1123
    %1156 = vst.msk [vmem:[%s6 + $0x60] sm:$0xff] %vm478, %v1124
    %1157 = vst.msk [vmem:[%s6 + $0x68] sm:$0xff] %vm478, %v1125
    %1158 = vst.msk [vmem:[%s6 + $0x70] sm:$0xff] %vm478, %v1126
    %1159 = vst.msk [vmem:[%s6 + $0x78] sm:$0xff] %vm478, %v1127
    %1160 = vst.msk [vmem:[%s6 + $0x80] sm:$0xff] %vm478, %v1128
    %1161 = vst.msk [vmem:[%s6 + $0x88] sm:$0xff] %vm478, %v1129
    %1162 = vst.msk [vmem:[%s6 + $0x90] sm:$0xff] %vm478, %v1130
    %1163 = vst.msk [vmem:[%s6 + $0x98] sm:$0xff] %vm478, %v1131
    %1164 = vst.msk [vmem:[%s6 + $0xa0] sm:$0xff] %vm478, %v1132
    %1165 = vst.msk [vmem:[%s6 + $0xa8] sm:$0xff] %vm478, %v1133
    %1166 = vst.msk [vmem:[%s6 + $0xb0] sm:$0xff] %vm478, %v1134
    %1167 = vst.msk [vmem:[%s6 + $0xb8] sm:$0xff] %vm478, %v1135
    %1168 = vst.msk [vmem:[%s6 + $0xc0] sm:$0xff] %vm478, %v1136
    %1169 = vst.msk [vmem:[%s6 + $0xc8] sm:$0xff] %vm478, %v1137
    %1170 = vst.msk [vmem:[%s6 + $0xd0] sm:$0xff] %vm478, %v1138
    %1171 = vst.msk [vmem:[%s6 + $0xd8] sm:$0xff] %vm478, %v1139
    %1172 = vst.msk [vmem:[%s6 + $0xe0] sm:$0xff] %vm478, %v1140
    %1173 = vst.msk [vmem:[%s6 + $0xe8] sm:$0xff] %vm478, %v1141
    %1174 = vst.msk [vmem:[%s6 + $0xf0] sm:$0xff] %vm478, %v1142
    %1175 = vst.msk [vmem:[%s6 + $0xf8] sm:$0xff] %vm478, %v1143
  $region33: #{rel0_encoder_forward.13} parent=0 // pred_fallthru
    _
  // Predicated region
  $region34: #{rel0_encoder_forward.13} parent=0 // pred_check
    _
  $region35: #{rel0_encoder_forward.13} parent=0 // pred_check_branch
    %1177 = sbr.rel (0) target = $region37
  $region36: #{rel0_encoder_forward.13} parent=0 // pred_region
    _
  $region37: #{rel0_encoder_forward.13} parent=0 // pred_fallthru
    _
  // Predicated region
  $region38: #{rel0_encoder_forward.13} parent=0 // pred_check
    _
  $region39: #{rel0_encoder_forward.13} parent=0 // pred_check_branch
    %1179 = sbr.rel (0) target = $region41
  $region40: #{rel0_encoder_forward.13} parent=0 // pred_region
    _
  $region41: #{rel0_encoder_forward.13} parent=0 // pred_fallthru
    _

// kernel: rel0_encoder_forward.11
$region0: #{rel0_encoder_forward.11}
  #allocation0 [shape = 'u32[]', space=smem, size = 0x4, offset = 0x4, fixed_abs, tag = 'smem constant byte address 0x4 - core index']
  #allocation1 [shape = 'u32[144,128]{1,0:T(1,128)}', space=vmem, size = 0x12000, scoped, tag = 'internal scratch']
  %s0 = inlined_call_operand.vmem [shape: bf16[2,4,128,16], index: 0, kind: input, shape index: {}]
  %s1 = inlined_call_operand.vmem [shape: bf16[2,4,128,16], index: 1, kind: input, shape index: {}]
  %s2 = inlined_call_operand.vmem [shape: bf16[2,4,128,16], index: 2, kind: input, shape index: {}]
  %s3 = inlined_call_operand.vmem [shape: bf16[4,128,16], index: 3, kind: input, shape index: {}]
  %s4 = inlined_call_operand.vmem [shape: f32[4,1,16], index: 4, kind: input, shape index: {}]
  %s5 = inlined_call_operand.vmem [shape: f32[4,1,16], index: 5, kind: input, shape index: {}]
  %s6 = inlined_call_operand.vmem [shape: f32[2,1,128], index: 6, kind: input, shape index: {}]
  %s7 = inlined_call_operand.vmem [shape: f32[2,128,64], index: 7, kind: input, shape index: {}]
  %s8 = inlined_call_operand.vmem [shape: bf16[4,16,64], index: 8, kind: input, shape index: {}]
  %s9 = inlined_call_operand.vmem [shape: f32[1,64], index: 9, kind: input, shape index: {}]
  %s10 = inlined_call_operand.vmem [shape: f32[1,64], index: 10, kind: input, shape index: {}]
  %s11 = inlined_call_operand.vmem [shape: f32[1,64], index: 11, kind: input, shape index: {}]
  %s12 = inlined_call_operand.vmem [shape: f32[2,128,64], index: 12, kind: output, shape index: {}]
  %s13 = sld [smem:[#allocation0]]
  $region81: #{rel0_encoder_forward.11} parent=0
    _
  %s15 = ssub.s32 1, %s13
  %s16 = scalar_select 0, %s15, %s13
  loop: start=0, step=1, limit=4
  $region2: #{rel0_encoder_forward.11} parent=0 // loop_pre_header
    _
  $region3: #{rel0_encoder_forward.11} parent=0 // loop_header
    %s18 = sphi 0, %s22
    %p19 = scmp.ge.s32.totalorder %s18, 4
    %s28 = sphi 0, %s30
    %s31 = sphi 0, %s28
    %s32 = sphi 0, %s31
    %s48 = sphi 0, %s32
    %s54 = sphi 0, %s56
    %s57 = sphi 0, %s54
    %s58 = sphi 0, %s57
    %s74 = sphi 0, %s58
    %s80 = sphi 0, %s82
    %s83 = sphi 0, %s80
    %s84 = sphi 0, %s83
    %s100 = sphi 0, %s84
    %s104 = sphi 0, %s104
    %s106 = sphi 0, %s104
    %s107 = sphi 0, %s106
    %s121 = sphi 0, %s107
    %s125 = sphi 0, %s125
    %s127 = sphi 0, %s125
    %s128 = sphi 0, %s127
    %s142 = sphi 0, %s128
    %s146 = sphi 0, %s146
    %s148 = sphi 0, %s146
    %s149 = sphi 0, %s148
    %s163 = sphi 0, %s149
    %s169 = sphi 0, %s171
    %s172 = sphi 0, %s169
    %s173 = sphi 0, %s172
    %s189 = sphi 0, %s173
    %s195 = sphi 0, %s197
    %s198 = sphi 0, %s195
    %s199 = sphi 0, %s198
    %s215 = sphi 0, %s199
    %s219 = sphi 0, %s219
    %s221 = sphi 0, %s219
    %s222 = sphi 0, %s221
    %s236 = sphi 0, %s222
    %s240 = sphi 0, %s240
    %s242 = sphi 0, %s240
    %s243 = sphi 0, %s242
    %s257 = sphi 0, %s243
    %s261 = sphi 0, %s261
    %s263 = sphi 0, %s261
    %s264 = sphi 0, %s263
    %s278 = sphi 0, %s264
    %s282 = sphi 0, %s282
    %s284 = sphi 0, %s282
    %s285 = sphi 0, %s284
    %s299 = sphi 0, %s285
    %s305 = sphi 0, %s307
    %s308 = sphi 0, %s305
    %s309 = sphi 0, %s308
    %s325 = sphi 0, %s309
  $region4: #{rel0_encoder_forward.11} parent=0 // loop_header_branch
    %21 = sbr.rel (%p19) target = $region8
  $region5: #{rel0_encoder_forward.11} parent=0 // loop_body
    %s23 = ssub.s32 %s18, 1
    %s24 = ssub.s32 %s18, 2
    %s25 = sadd.s32 %s18, 1
    %s26 = ssub.s32 %s18, %s25
    %p27 = scmp.eq.s32.totalorder %s26, 0
    %s29 = sadd.s32 %s28, 1
    %s30 = scalar_select %p27, %s28, %s29
    %p33 = pneg %p27
    %p34 = scmp.eq.s32.totalorder %s18, 1
    %p35 = por %p33, %p34
    %p36 = scmp.ne.s32.totalorder %s28, %s31
    %p37 = scmp.eq.s32.totalorder %s18, 0
    %p38 = por %p36, %p37
    %p39 = scmp.ne.s32.totalorder %s28, %s31
    %p40 = scmp.eq.s32.totalorder %s23, 1
    %p41 = por %p39, %p40
    %p42 = scmp.ne.s32.totalorder %s31, %s32
    %p43 = scmp.eq.s32.totalorder %s23, 0
    %p44 = por %p42, %p43
    %p45 = scmp.ne.s32.totalorder %s31, %s32
    %p46 = scmp.eq.s32.totalorder %s24, 1
    %p47 = por %p45, %p46
    %p49 = scmp.ne.s32.totalorder %s32, %s48
    %p50 = scmp.eq.s32.totalorder %s24, 0
    %p51 = por %p49, %p50
    %s52 = ssub.s32 %s18, %s25
    %p53 = scmp.eq.s32.totalorder %s52, 0
    %s55 = sadd.s32 %s54, 1
    %s56 = scalar_select %p53, %s54, %s55
    %p59 = pneg %p53
    %p60 = scmp.eq.s32.totalorder %s18, 1
    %p61 = por %p59, %p60
    %p62 = scmp.ne.s32.totalorder %s54, %s57
    %p63 = scmp.eq.s32.totalorder %s18, 0
    %p64 = por %p62, %p63
    %p65 = scmp.ne.s32.totalorder %s54, %s57
    %p66 = scmp.eq.s32.totalorder %s23, 1
    %p67 = por %p65, %p66
    %p68 = scmp.ne.s32.totalorder %s57, %s58
    %p69 = scmp.eq.s32.totalorder %s23, 0
    %p70 = por %p68, %p69
    %p71 = scmp.ne.s32.totalorder %s57, %s58
    %p72 = scmp.eq.s32.totalorder %s24, 1
    %p73 = por %p71, %p72
    %p75 = scmp.ne.s32.totalorder %s58, %s74
    %p76 = scmp.eq.s32.totalorder %s24, 0
    %p77 = por %p75, %p76
    %s78 = ssub.s32 %s18, %s25
    %p79 = scmp.eq.s32.totalorder %s78, 0
    %s81 = sadd.s32 %s80, 1
    %s82 = scalar_select %p79, %s80, %s81
    %p85 = pneg %p79
    %p86 = scmp.eq.s32.totalorder %s18, 1
    %p87 = por %p85, %p86
    %p88 = scmp.ne.s32.totalorder %s80, %s83
    %p89 = scmp.eq.s32.totalorder %s18, 0
    %p90 = por %p88, %p89
    %p91 = scmp.ne.s32.totalorder %s80, %s83
    %p92 = scmp.eq.s32.totalorder %s23, 1
    %p93 = por %p91, %p92
    %p94 = scmp.ne.s32.totalorder %s83, %s84
    %p95 = scmp.eq.s32.totalorder %s23, 0
    %p96 = por %p94, %p95
    %p97 = scmp.ne.s32.totalorder %s83, %s84
    %p98 = scmp.eq.s32.totalorder %s24, 1
    %p99 = por %p97, %p98
    %p101 = scmp.ne.s32.totalorder %s84, %s100
    %p102 = scmp.eq.s32.totalorder %s24, 0
    %p103 = por %p101, %p102
    %s105 = sadd.s32 %s104, 1
    %p108 = scmp.eq.s32.totalorder %s18, 1
    %p109 = scmp.ne.s32.totalorder %s104, %s106
    %p110 = scmp.eq.s32.totalorder %s18, 0
    %p111 = por %p109, %p110
    %p112 = scmp.ne.s32.totalorder %s104, %s106
    %p113 = scmp.eq.s32.totalorder %s23, 1
    %p114 = por %p112, %p113
    %p115 = scmp.ne.s32.totalorder %s106, %s107
    %p116 = scmp.eq.s32.totalorder %s23, 0
    %p117 = por %p115, %p116
    %p118 = scmp.ne.s32.totalorder %s106, %s107
    %p119 = scmp.eq.s32.totalorder %s24, 1
    %p120 = por %p118, %p119
    %p122 = scmp.ne.s32.totalorder %s107, %s121
    %p123 = scmp.eq.s32.totalorder %s24, 0
    %p124 = por %p122, %p123
    %s126 = sadd.s32 %s125, 1
    %p129 = scmp.eq.s32.totalorder %s18, 1
    %p130 = scmp.ne.s32.totalorder %s125, %s127
    %p131 = scmp.eq.s32.totalorder %s18, 0
    %p132 = por %p130, %p131
    %p133 = scmp.ne.s32.totalorder %s125, %s127
    %p134 = scmp.eq.s32.totalorder %s23, 1
    %p135 = por %p133, %p134
    %p136 = scmp.ne.s32.totalorder %s127, %s128
    %p137 = scmp.eq.s32.totalorder %s23, 0
    %p138 = por %p136, %p137
    %p139 = scmp.ne.s32.totalorder %s127, %s128
    %p140 = scmp.eq.s32.totalorder %s24, 1
    %p141 = por %p139, %p140
    %p143 = scmp.ne.s32.totalorder %s128, %s142
    %p144 = scmp.eq.s32.totalorder %s24, 0
    %p145 = por %p143, %p144
    %s147 = sadd.s32 %s146, 1
    %p150 = scmp.eq.s32.totalorder %s18, 1
    %p151 = scmp.ne.s32.totalorder %s146, %s148
    %p152 = scmp.eq.s32.totalorder %s18, 0
    %p153 = por %p151, %p152
    %p154 = scmp.ne.s32.totalorder %s146, %s148
    %p155 = scmp.eq.s32.totalorder %s23, 1
    %p156 = por %p154, %p155
    %p157 = scmp.ne.s32.totalorder %s148, %s149
    %p158 = scmp.eq.s32.totalorder %s23, 0
    %p159 = por %p157, %p158
    %p160 = scmp.ne.s32.totalorder %s148, %s149
    %p161 = scmp.eq.s32.totalorder %s24, 1
    %p162 = por %p160, %p161
    %p164 = scmp.ne.s32.totalorder %s149, %s163
    %p165 = scmp.eq.s32.totalorder %s24, 0
    %p166 = por %p164, %p165
    %s167 = ssub.s32 %s18, %s25
    %p168 = scmp.eq.s32.totalorder %s167, 0
    %s170 = sadd.s32 %s169, 1
    %s171 = scalar_select %p168, %s169, %s170
    %p174 = pneg %p168
    %p175 = scmp.eq.s32.totalorder %s18, 1
    %p176 = por %p174, %p175
    %p177 = scmp.ne.s32.totalorder %s169, %s172
    %p178 = scmp.eq.s32.totalorder %s18, 0
    %p179 = por %p177, %p178
    %p180 = scmp.ne.s32.totalorder %s169, %s172
    %p181 = scmp.eq.s32.totalorder %s23, 1
    %p182 = por %p180, %p181
    %p183 = scmp.ne.s32.totalorder %s172, %s173
    %p184 = scmp.eq.s32.totalorder %s23, 0
    %p185 = por %p183, %p184
    %p186 = scmp.ne.s32.totalorder %s172, %s173
    %p187 = scmp.eq.s32.totalorder %s24, 1
    %p188 = por %p186, %p187
    %p190 = scmp.ne.s32.totalorder %s173, %s189
    %p191 = scmp.eq.s32.totalorder %s24, 0
    %p192 = por %p190, %p191
    %s193 = ssub.s32 %s18, %s25
    %p194 = scmp.eq.s32.totalorder %s193, 0
    %s196 = sadd.s32 %s195, 1
    %s197 = scalar_select %p194, %s195, %s196
    %p200 = pneg %p194
    %p201 = scmp.eq.s32.totalorder %s18, 1
    %p202 = por %p200, %p201
    %p203 = scmp.ne.s32.totalorder %s195, %s198
    %p204 = scmp.eq.s32.totalorder %s18, 0
    %p205 = por %p203, %p204
    %p206 = scmp.ne.s32.totalorder %s195, %s198
    %p207 = scmp.eq.s32.totalorder %s23, 1
    %p208 = por %p206, %p207
    %p209 = scmp.ne.s32.totalorder %s198, %s199
    %p210 = scmp.eq.s32.totalorder %s23, 0
    %p211 = por %p209, %p210
    %p212 = scmp.ne.s32.totalorder %s198, %s199
    %p213 = scmp.eq.s32.totalorder %s24, 1
    %p214 = por %p212, %p213
    %p216 = scmp.ne.s32.totalorder %s199, %s215
    %p217 = scmp.eq.s32.totalorder %s24, 0
    %p218 = por %p216, %p217
    %s220 = sadd.s32 %s219, 1
    %p223 = scmp.eq.s32.totalorder %s18, 1
    %p224 = scmp.ne.s32.totalorder %s219, %s221
    %p225 = scmp.eq.s32.totalorder %s18, 0
    %p226 = por %p224, %p225
    %p227 = scmp.ne.s32.totalorder %s219, %s221
    %p228 = scmp.eq.s32.totalorder %s23, 1
    %p229 = por %p227, %p228
    %p230 = scmp.ne.s32.totalorder %s221, %s222
    %p231 = scmp.eq.s32.totalorder %s23, 0
    %p232 = por %p230, %p231
    %p233 = scmp.ne.s32.totalorder %s221, %s222
    %p234 = scmp.eq.s32.totalorder %s24, 1
    %p235 = por %p233, %p234
    %p237 = scmp.ne.s32.totalorder %s222, %s236
    %p238 = scmp.eq.s32.totalorder %s24, 0
    %p239 = por %p237, %p238
    %s241 = sadd.s32 %s240, 1
    %p244 = scmp.eq.s32.totalorder %s18, 1
    %p245 = scmp.ne.s32.totalorder %s240, %s242
    %p246 = scmp.eq.s32.totalorder %s18, 0
    %p247 = por %p245, %p246
    %p248 = scmp.ne.s32.totalorder %s240, %s242
    %p249 = scmp.eq.s32.totalorder %s23, 1
    %p250 = por %p248, %p249
    %p251 = scmp.ne.s32.totalorder %s242, %s243
    %p252 = scmp.eq.s32.totalorder %s23, 0
    %p253 = por %p251, %p252
    %p254 = scmp.ne.s32.totalorder %s242, %s243
    %p255 = scmp.eq.s32.totalorder %s24, 1
    %p256 = por %p254, %p255
    %p258 = scmp.ne.s32.totalorder %s243, %s257
    %p259 = scmp.eq.s32.totalorder %s24, 0
    %p260 = por %p258, %p259
    %s262 = sadd.s32 %s261, 1
    %p265 = scmp.eq.s32.totalorder %s18, 1
    %p266 = scmp.ne.s32.totalorder %s261, %s263
    %p267 = scmp.eq.s32.totalorder %s18, 0
    %p268 = por %p266, %p267
    %p269 = scmp.ne.s32.totalorder %s261, %s263
    %p270 = scmp.eq.s32.totalorder %s23, 1
    %p271 = por %p269, %p270
    %p272 = scmp.ne.s32.totalorder %s263, %s264
    %p273 = scmp.eq.s32.totalorder %s23, 0
    %p274 = por %p272, %p273
    %p275 = scmp.ne.s32.totalorder %s263, %s264
    %p276 = scmp.eq.s32.totalorder %s24, 1
    %p277 = por %p275, %p276
    %p279 = scmp.ne.s32.totalorder %s264, %s278
    %p280 = scmp.eq.s32.totalorder %s24, 0
    %p281 = por %p279, %p280
    %s283 = sadd.s32 %s282, 1
    %p286 = scmp.eq.s32.totalorder %s18, 1
    %p287 = scmp.ne.s32.totalorder %s282, %s284
    %p288 = scmp.eq.s32.totalorder %s18, 0
    %p289 = por %p287, %p288
    %p290 = scmp.ne.s32.totalorder %s282, %s284
    %p291 = scmp.eq.s32.totalorder %s23, 1
    %p292 = por %p290, %p291
    %p293 = scmp.ne.s32.totalorder %s284, %s285
    %p294 = scmp.eq.s32.totalorder %s23, 0
    %p295 = por %p293, %p294
    %p296 = scmp.ne.s32.totalorder %s284, %s285
    %p297 = scmp.eq.s32.totalorder %s24, 1
    %p298 = por %p296, %p297
    %p300 = scmp.ne.s32.totalorder %s285, %s299
    %p301 = scmp.eq.s32.totalorder %s24, 0
    %p302 = por %p300, %p301
    %s303 = ssub.s32 %s18, %s25
    %p304 = scmp.eq.s32.totalorder %s303, 0
    %s306 = sadd.s32 %s305, 1
    %s307 = scalar_select %p304, %s305, %s306
    %p310 = pneg %p304
    %p311 = scmp.eq.s32.totalorder %s18, 1
    %p312 = por %p310, %p311
    %p313 = scmp.ne.s32.totalorder %s305, %s308
    %p314 = scmp.eq.s32.totalorder %s18, 0
    %p315 = por %p313, %p314
    %p316 = scmp.ne.s32.totalorder %s305, %s308
    %p317 = scmp.eq.s32.totalorder %s23, 1
    %p318 = por %p316, %p317
    %p319 = scmp.ne.s32.totalorder %s308, %s309
    %p320 = scmp.eq.s32.totalorder %s23, 0
    %p321 = por %p319, %p320
    %p322 = scmp.ne.s32.totalorder %s308, %s309
    %p323 = scmp.eq.s32.totalorder %s24, 1
    %p324 = por %p322, %p323
    %p326 = scmp.ne.s32.totalorder %s309, %s325
    %p327 = scmp.eq.s32.totalorder %s24, 0
    %p328 = por %p326, %p327
    %p329 = scmp.le.s32.totalorder 1, %s18
    %p330 = scmp.lt.s32.totalorder %s18, 3
    %p331 = pnand %p329, %p330
    %p332 = pneg %p331
    // Predicated region
    $region9: #{rel0_encoder_forward.11} parent=5 // pred_check
      _
    $region10: #{rel0_encoder_forward.11} parent=5 // pred_check_branch
      %334 = sbr.rel (%p331) target = $region12
    $region11: #{rel0_encoder_forward.11} parent=5 // pred_region
      %s335 = ssub.s32 %s18, 1
      // Predicated region
      $region13: #{rel0_encoder_forward.11} parent=11 // pred_check
        %p336 = pneg %p117
      $region14: #{rel0_encoder_forward.11} parent=11 // pred_check_branch
        %338 = sbr.rel (%p336) target = $region16
      $region15: #{rel0_encoder_forward.11} parent=11 // pred_region
        _
      $region16: #{rel0_encoder_forward.11} parent=11 // pred_fallthru
        _
      // Predicated region
      $region17: #{rel0_encoder_forward.11} parent=11 // pred_check
        %p339 = pneg %p138
      $region18: #{rel0_encoder_forward.11} parent=11 // pred_check_branch
        %341 = sbr.rel (%p339) target = $region20
      $region19: #{rel0_encoder_forward.11} parent=11 // pred_region
        _
      $region20: #{rel0_encoder_forward.11} parent=11 // pred_fallthru
        _
      // Predicated region
      $region21: #{rel0_encoder_forward.11} parent=11 // pred_check
        %p342 = pneg %p159
      $region22: #{rel0_encoder_forward.11} parent=11 // pred_check_branch
        %344 = sbr.rel (%p342) target = $region24
      $region23: #{rel0_encoder_forward.11} parent=11 // pred_region
        _
      $region24: #{rel0_encoder_forward.11} parent=11 // pred_fallthru
        _
      // Predicated region
      $region25: #{rel0_encoder_forward.11} parent=11 // pred_check
        %p345 = pneg %p232
      $region26: #{rel0_encoder_forward.11} parent=11 // pred_check_branch
        %347 = sbr.rel (%p345) target = $region28
      $region27: #{rel0_encoder_forward.11} parent=11 // pred_region
        _
      $region28: #{rel0_encoder_forward.11} parent=11 // pred_fallthru
        _
      // Predicated region
      $region29: #{rel0_encoder_forward.11} parent=11 // pred_check
        %p348 = pneg %p253
      $region30: #{rel0_encoder_forward.11} parent=11 // pred_check_branch
        %350 = sbr.rel (%p348) target = $region32
      $region31: #{rel0_encoder_forward.11} parent=11 // pred_region
        _
      $region32: #{rel0_encoder_forward.11} parent=11 // pred_fallthru
        _
      // Predicated region
      $region33: #{rel0_encoder_forward.11} parent=11 // pred_check
        %p351 = pneg %p274
      $region34: #{rel0_encoder_forward.11} parent=11 // pred_check_branch
        %353 = sbr.rel (%p351) target = $region36
      $region35: #{rel0_encoder_forward.11} parent=11 // pred_region
        _
      $region36: #{rel0_encoder_forward.11} parent=11 // pred_fallthru
        _
      // Predicated region
      $region37: #{rel0_encoder_forward.11} parent=11 // pred_check
        %p354 = pneg %p295
      $region38: #{rel0_encoder_forward.11} parent=11 // pred_check_branch
        %356 = sbr.rel (%p354) target = $region40
      $region39: #{rel0_encoder_forward.11} parent=11 // pred_region
        _
      $region40: #{rel0_encoder_forward.11} parent=11 // pred_fallthru
        _
    $region12: #{rel0_encoder_forward.11} parent=5 // pred_fallthru
      _
    %p357 = scmp.lt.s32.totalorder %s18, 2
    // Predicated region
    $region41: #{rel0_encoder_forward.11} parent=5 // pred_check
      %p358 = pneg %p357
    $region42: #{rel0_encoder_forward.11} parent=5 // pred_check_branch
      %360 = sbr.rel (%p358) target = $region44
    $region43: #{rel0_encoder_forward.11} parent=5 // pred_region
      // Predicated region
      $region45: #{rel0_encoder_forward.11} parent=43 // pred_check
        %p361 = pneg %p38
      $region46: #{rel0_encoder_forward.11} parent=43 // pred_check_branch
        %363 = sbr.rel (%p361) target = $region48
      $region47: #{rel0_encoder_forward.11} parent=43 // pred_region
        %p364 = scmp.lt.s32.totalorder %s18, 1
        %s365 = scalar_select %p364, %s18, 1
        %s366 = smul.addr %s365, 64
        %s367 = smul.addr %s366, 4
        %s368 = scalar_lea.vmem %s0, %s367
      $region48: #{rel0_encoder_forward.11} parent=43 // pred_fallthru
        _
      // Predicated region
      $region49: #{rel0_encoder_forward.11} parent=43 // pred_check
        %p369 = pneg %p64
      $region50: #{rel0_encoder_forward.11} parent=43 // pred_check_branch
        %371 = sbr.rel (%p369) target = $region52
      $region51: #{rel0_encoder_forward.11} parent=43 // pred_region
        %p372 = scmp.lt.s32.totalorder %s18, 1
        %s373 = scalar_select %p372, %s18, 1
        %s374 = smul.addr %s373, 64
        %s375 = smul.addr %s374, 4
        %s376 = scalar_lea.vmem %s1, %s375
      $region52: #{rel0_encoder_forward.11} parent=43 // pred_fallthru
        _
      // Predicated region
      $region53: #{rel0_encoder_forward.11} parent=43 // pred_check
        %p377 = pneg %p90
      $region54: #{rel0_encoder_forward.11} parent=43 // pred_check_branch
        %379 = sbr.rel (%p377) target = $region56
      $region55: #{rel0_encoder_forward.11} parent=43 // pred_region
        %p380 = scmp.lt.s32.totalorder %s18, 1
        %s381 = scalar_select %p380, %s18, 1
        %s382 = smul.addr %s381, 64
        %s383 = smul.addr %s382, 4
        %s384 = scalar_lea.vmem %s2, %s383
      $region56: #{rel0_encoder_forward.11} parent=43 // pred_fallthru
        _
      // Predicated region
      $region57: #{rel0_encoder_forward.11} parent=43 // pred_check
        %p385 = pneg %p179
      $region58: #{rel0_encoder_forward.11} parent=43 // pred_check_branch
        %387 = sbr.rel (%p385) target = $region60
      $region59: #{rel0_encoder_forward.11} parent=43 // pred_region
        %p388 = scmp.lt.s32.totalorder %s18, 1
        %s389 = scalar_select %p388, %s18, 1
        %s390 = scalar_lea.vmem %s6, %s389
      $region60: #{rel0_encoder_forward.11} parent=43 // pred_fallthru
        _
      // Predicated region
      $region61: #{rel0_encoder_forward.11} parent=43 // pred_check
        %p391 = pneg %p205
      $region62: #{rel0_encoder_forward.11} parent=43 // pred_check_branch
        %393 = sbr.rel (%p391) target = $region64
      $region63: #{rel0_encoder_forward.11} parent=43 // pred_region
        %p394 = scmp.lt.s32.totalorder %s18, 1
        %s395 = scalar_select %p394, %s18, 1
        %s396 = smul.addr %s395, 16
        %s397 = smul.addr %s396, 8
        %s398 = scalar_lea.vmem %s7, %s397
      $region64: #{rel0_encoder_forward.11} parent=43 // pred_fallthru
        _
    $region44: #{rel0_encoder_forward.11} parent=5 // pred_fallthru
      _
    %p399 = scmp.le.s32.totalorder 1, %s18
    %p400 = scmp.lt.s32.totalorder %s18, 3
    %p401 = pnand %p399, %p400
    %p402 = pneg %p401
    // Predicated region
    $region65: #{rel0_encoder_forward.11} parent=5 // pred_check
      _
    $region66: #{rel0_encoder_forward.11} parent=5 // pred_check_branch
      %404 = sbr.rel (%p401) target = $region68
    $region67: #{rel0_encoder_forward.11} parent=5 // pred_region
      %s405 = ssub.s32 %s18, 1
      %p406 = scmp.lt.s32.totalorder %s23, 1
      %s407 = scalar_select %p406, %s23, 1
      %s408 = smul.addr %s407, 64
      %s409 = smul.addr %s408, 4
      %s410 = scalar_lea.vmem %s0, %s409
      %p411 = pneg %p44
      %p412 = pneg %p41
      %p413 = scmp.lt.s32.totalorder %s23, 1
      %s414 = scalar_select %p413, %s23, 1
      %s415 = smul.addr %s414, 64
      %s416 = smul.addr %s415, 4
      %s417 = scalar_lea.vmem %s1, %s416
      %p418 = pneg %p70
      %p419 = pneg %p67
      %p420 = scmp.lt.s32.totalorder %s23, 1
      %s421 = scalar_select %p420, %s23, 1
      %s422 = smul.addr %s421, 64
      %s423 = smul.addr %s422, 4
      %s424 = scalar_lea.vmem %s2, %s423
      %p425 = pneg %p96
      %p426 = pneg %p93
      %p427 = pneg %p117
      %p428 = pneg %p114
      %p429 = pneg %p138
      %p430 = pneg %p135
      %p431 = pneg %p159
      %p432 = pneg %p156
      %p433 = scmp.lt.s32.totalorder %s23, 1
      %s434 = scalar_select %p433, %s23, 1
      %s435 = scalar_lea.vmem %s6, %s434
      %p436 = pneg %p185
      %p437 = pneg %p182
      %p438 = scmp.lt.s32.totalorder %s23, 1
      %s439 = scalar_select %p438, %s23, 1
      %s440 = smul.addr %s439, 16
      %s441 = smul.addr %s440, 8
      %s442 = scalar_lea.vmem %s7, %s441
      %p443 = pneg %p211
      %p444 = pneg %p208
      %p445 = pneg %p232
      %p446 = pneg %p229
      %p447 = pneg %p253
      %p448 = pneg %p250
      %p449 = pneg %p274
      %p450 = pneg %p271
      %p451 = pneg %p295
      %p452 = pneg %p292
      %p453 = pneg %p321
      %p454 = pneg %p318
      %p455 = scmp.lt.s32.totalorder %s23, 1
      %s456 = scalar_select %p455, %s23, 1
      %s457 = smul.addr %s456, 16
      %s458 = smul.addr %s457, 8
      %s459 = scalar_lea.vmem %s12, %s458
      %p460 = scmp.lt.s32.totalorder %s23, 1
      %s461 = scalar_select %p460, %s23, 1
      %s462 = smul.addr %s461, 64
      %s463 = smul.addr %s462, 4
      %s464 = scalar_lea.vmem %s0, %s463
      %p465 = scmp.lt.s32.totalorder %s23, 1
      %s466 = scalar_select %p465, %s23, 1
      %s467 = smul.addr %s466, 64
      %s468 = smul.addr %s467, 4
      %s469 = scalar_lea.vmem %s1, %s468
      %p470 = scmp.lt.s32.totalorder %s23, 1
      %s471 = scalar_select %p470, %s23, 1
      %s472 = smul.addr %s471, 64
      %s473 = smul.addr %s472, 4
      %s474 = scalar_lea.vmem %s2, %s473
      %p475 = scmp.lt.s32.totalorder %s23, 1
      %s476 = scalar_select %p475, %s23, 1
      %s477 = scalar_lea.vmem %s6, %s476
      %p478 = scmp.lt.s32.totalorder %s23, 1
      %s479 = scalar_select %p478, %s23, 1
      %s480 = smul.addr %s479, 16
      %s481 = smul.addr %s480, 8
      %s482 = scalar_lea.vmem %s7, %s481
      %p483 = scmp.lt.s32.totalorder %s23, 1
      %s484 = scalar_select %p483, %s23, 1
      %s485 = smul.addr %s484, 16
      %s486 = smul.addr %s485, 8
      %s487 = scalar_lea.vmem %s12, %s486
      %v489 = vld [vmem:[%s464] sm:$0xf]
      %v490 = vld [vmem:[%s464 + $0x4] sm:$0xf]
      %v491 = vld [vmem:[%s464 + $0x8] sm:$0xf]
      %v492 = vld [vmem:[%s464 + $0xc] sm:$0xf]
      %v493 = vld [vmem:[%s464 + $0x10] sm:$0xf]
      %v494 = vld [vmem:[%s464 + $0x14] sm:$0xf]
      %v495 = vld [vmem:[%s464 + $0x18] sm:$0xf]
      %v496 = vld [vmem:[%s464 + $0x1c] sm:$0xf]
      %v497 = vld [vmem:[%s464 + $0x20] sm:$0xf]
      %v498 = vld [vmem:[%s464 + $0x24] sm:$0xf]
      %v499 = vld [vmem:[%s464 + $0x28] sm:$0xf]
      %v500 = vld [vmem:[%s464 + $0x2c] sm:$0xf]
      %v501 = vld [vmem:[%s464 + $0x30] sm:$0xf]
      %v502 = vld [vmem:[%s464 + $0x34] sm:$0xf]
      %v503 = vld [vmem:[%s464 + $0x38] sm:$0xf]
      %v504 = vld [vmem:[%s464 + $0x3c] sm:$0xf]
      %v505 = vld [vmem:[%s464 + $0x40] sm:$0xf]
      %v506 = vld [vmem:[%s464 + $0x44] sm:$0xf]
      %v507 = vld [vmem:[%s464 + $0x48] sm:$0xf]
      %v508 = vld [vmem:[%s464 + $0x4c] sm:$0xf]
      %v509 = vld [vmem:[%s464 + $0x50] sm:$0xf]
      %v510 = vld [vmem:[%s464 + $0x54] sm:$0xf]
      %v511 = vld [vmem:[%s464 + $0x58] sm:$0xf]
      %v512 = vld [vmem:[%s464 + $0x5c] sm:$0xf]
      %v513 = vld [vmem:[%s464 + $0x60] sm:$0xf]
      %v514 = vld [vmem:[%s464 + $0x64] sm:$0xf]
      %v515 = vld [vmem:[%s464 + $0x68] sm:$0xf]
      %v516 = vld [vmem:[%s464 + $0x6c] sm:$0xf]
      %v517 = vld [vmem:[%s464 + $0x70] sm:$0xf]
      %v518 = vld [vmem:[%s464 + $0x74] sm:$0xf]
      %v519 = vld [vmem:[%s464 + $0x78] sm:$0xf]
      %v520 = vld [vmem:[%s464 + $0x7c] sm:$0xf]
      %v521 = vld [vmem:[%s464 + $0x80] sm:$0xf]
      %v522 = vld [vmem:[%s464 + $0x84] sm:$0xf]
      %v523 = vld [vmem:[%s464 + $0x88] sm:$0xf]
      %v524 = vld [vmem:[%s464 + $0x8c] sm:$0xf]
      %v525 = vld [vmem:[%s464 + $0x90] sm:$0xf]
      %v526 = vld [vmem:[%s464 + $0x94] sm:$0xf]
      %v527 = vld [vmem:[%s464 + $0x98] sm:$0xf]
      %v528 = vld [vmem:[%s464 + $0x9c] sm:$0xf]
      %v529 = vld [vmem:[%s464 + $0xa0] sm:$0xf]
      %v530 = vld [vmem:[%s464 + $0xa4] sm:$0xf]
      %v531 = vld [vmem:[%s464 + $0xa8] sm:$0xf]
      %v532 = vld [vmem:[%s464 + $0xac] sm:$0xf]
      %v533 = vld [vmem:[%s464 + $0xb0] sm:$0xf]
      %v534 = vld [vmem:[%s464 + $0xb4] sm:$0xf]
      %v535 = vld [vmem:[%s464 + $0xb8] sm:$0xf]
      %v536 = vld [vmem:[%s464 + $0xbc] sm:$0xf]
      %v537 = vld [vmem:[%s464 + $0xc0] sm:$0xf]
      %v538 = vld [vmem:[%s464 + $0xc4] sm:$0xf]
      %v539 = vld [vmem:[%s464 + $0xc8] sm:$0xf]
      %v540 = vld [vmem:[%s464 + $0xcc] sm:$0xf]
      %v541 = vld [vmem:[%s464 + $0xd0] sm:$0xf]
      %v542 = vld [vmem:[%s464 + $0xd4] sm:$0xf]
      %v543 = vld [vmem:[%s464 + $0xd8] sm:$0xf]
      %v544 = vld [vmem:[%s464 + $0xdc] sm:$0xf]
      %v545 = vld [vmem:[%s464 + $0xe0] sm:$0xf]
      %v546 = vld [vmem:[%s464 + $0xe4] sm:$0xf]
      %v547 = vld [vmem:[%s464 + $0xe8] sm:$0xf]
      %v548 = vld [vmem:[%s464 + $0xec] sm:$0xf]
      %v549 = vld [vmem:[%s464 + $0xf0] sm:$0xf]
      %v550 = vld [vmem:[%s464 + $0xf4] sm:$0xf]
      %v551 = vld [vmem:[%s464 + $0xf8] sm:$0xf]
      %v552 = vld [vmem:[%s464 + $0xfc] sm:$0xf]
      %v553 = vunpack.c.l.bf16 %v489
      %v554 = vunpack.c.l.bf16 %v490
      %v555 = vunpack.c.l.bf16 %v491
      %v556 = vunpack.c.l.bf16 %v492
      %v557 = vunpack.c.l.bf16 %v493
      %v558 = vunpack.c.l.bf16 %v494
      %v559 = vunpack.c.l.bf16 %v495
      %v560 = vunpack.c.l.bf16 %v496
      %v561 = vunpack.c.l.bf16 %v497
      %v562 = vunpack.c.l.bf16 %v498
      %v563 = vunpack.c.l.bf16 %v499
      %v564 = vunpack.c.l.bf16 %v500
      %v565 = vunpack.c.l.bf16 %v501
      %v566 = vunpack.c.l.bf16 %v502
      %v567 = vunpack.c.l.bf16 %v503
      %v568 = vunpack.c.l.bf16 %v504
      %v569 = vunpack.c.l.bf16 %v505
      %v570 = vunpack.c.l.bf16 %v506
      %v571 = vunpack.c.l.bf16 %v507
      %v572 = vunpack.c.l.bf16 %v508
      %v573 = vunpack.c.l.bf16 %v509
      %v574 = vunpack.c.l.bf16 %v510
      %v575 = vunpack.c.l.bf16 %v511
      %v576 = vunpack.c.l.bf16 %v512
      %v577 = vunpack.c.l.bf16 %v513
      %v578 = vunpack.c.l.bf16 %v514
      %v579 = vunpack.c.l.bf16 %v515
      %v580 = vunpack.c.l.bf16 %v516
      %v581 = vunpack.c.l.bf16 %v517
      %v582 = vunpack.c.l.bf16 %v518
      %v583 = vunpack.c.l.bf16 %v519
      %v584 = vunpack.c.l.bf16 %v520
      %v585 = vunpack.c.l.bf16 %v521
      %v586 = vunpack.c.l.bf16 %v522
      %v587 = vunpack.c.l.bf16 %v523
      %v588 = vunpack.c.l.bf16 %v524
      %v589 = vunpack.c.l.bf16 %v525
      %v590 = vunpack.c.l.bf16 %v526
      %v591 = vunpack.c.l.bf16 %v527
      %v592 = vunpack.c.l.bf16 %v528
      %v593 = vunpack.c.l.bf16 %v529
      %v594 = vunpack.c.l.bf16 %v530
      %v595 = vunpack.c.l.bf16 %v531
      %v596 = vunpack.c.l.bf16 %v532
      %v597 = vunpack.c.l.bf16 %v533
      %v598 = vunpack.c.l.bf16 %v534
      %v599 = vunpack.c.l.bf16 %v535
      %v600 = vunpack.c.l.bf16 %v536
      %v601 = vunpack.c.l.bf16 %v537
      %v602 = vunpack.c.l.bf16 %v538
      %v603 = vunpack.c.l.bf16 %v539
      %v604 = vunpack.c.l.bf16 %v540
      %v605 = vunpack.c.l.bf16 %v541
      %v606 = vunpack.c.l.bf16 %v542
      %v607 = vunpack.c.l.bf16 %v543
      %v608 = vunpack.c.l.bf16 %v544
      %v609 = vunpack.c.l.bf16 %v545
      %v610 = vunpack.c.l.bf16 %v546
      %v611 = vunpack.c.l.bf16 %v547
      %v612 = vunpack.c.l.bf16 %v548
      %v613 = vunpack.c.l.bf16 %v549
      %v614 = vunpack.c.l.bf16 %v550
      %v615 = vunpack.c.l.bf16 %v551
      %v616 = vunpack.c.l.bf16 %v552
      %v617 = vld [vmem:[%s469] sm:$0xf]
      %v618 = vld [vmem:[%s469 + $0x4] sm:$0xf]
      %v619 = vld [vmem:[%s469 + $0x8] sm:$0xf]
      %v620 = vld [vmem:[%s469 + $0xc] sm:$0xf]
      %v621 = vld [vmem:[%s469 + $0x10] sm:$0xf]
      %v622 = vld [vmem:[%s469 + $0x14] sm:$0xf]
      %v623 = vld [vmem:[%s469 + $0x18] sm:$0xf]
      %v624 = vld [vmem:[%s469 + $0x1c] sm:$0xf]
      %v625 = vld [vmem:[%s469 + $0x20] sm:$0xf]
      %v626 = vld [vmem:[%s469 + $0x24] sm:$0xf]
      %v627 = vld [vmem:[%s469 + $0x28] sm:$0xf]
      %v628 = vld [vmem:[%s469 + $0x2c] sm:$0xf]
      %v629 = vld [vmem:[%s469 + $0x30] sm:$0xf]
      %v630 = vld [vmem:[%s469 + $0x34] sm:$0xf]
      %v631 = vld [vmem:[%s469 + $0x38] sm:$0xf]
      %v632 = vld [vmem:[%s469 + $0x3c] sm:$0xf]
      %v633 = vld [vmem:[%s469 + $0x40] sm:$0xf]
      %v634 = vld [vmem:[%s469 + $0x44] sm:$0xf]
      %v635 = vld [vmem:[%s469 + $0x48] sm:$0xf]
      %v636 = vld [vmem:[%s469 + $0x4c] sm:$0xf]
      %v637 = vld [vmem:[%s469 + $0x50] sm:$0xf]
      %v638 = vld [vmem:[%s469 + $0x54] sm:$0xf]
      %v639 = vld [vmem:[%s469 + $0x58] sm:$0xf]
      %v640 = vld [vmem:[%s469 + $0x5c] sm:$0xf]
      %v641 = vld [vmem:[%s469 + $0x60] sm:$0xf]
      %v642 = vld [vmem:[%s469 + $0x64] sm:$0xf]
      %v643 = vld [vmem:[%s469 + $0x68] sm:$0xf]
      %v644 = vld [vmem:[%s469 + $0x6c] sm:$0xf]
      %v645 = vld [vmem:[%s469 + $0x70] sm:$0xf]
      %v646 = vld [vmem:[%s469 + $0x74] sm:$0xf]
      %v647 = vld [vmem:[%s469 + $0x78] sm:$0xf]
      %v648 = vld [vmem:[%s469 + $0x7c] sm:$0xf]
      %v649 = vld [vmem:[%s469 + $0x80] sm:$0xf]
      %v650 = vld [vmem:[%s469 + $0x84] sm:$0xf]
      %v651 = vld [vmem:[%s469 + $0x88] sm:$0xf]
      %v652 = vld [vmem:[%s469 + $0x8c] sm:$0xf]
      %v653 = vld [vmem:[%s469 + $0x90] sm:$0xf]
      %v654 = vld [vmem:[%s469 + $0x94] sm:$0xf]
      %v655 = vld [vmem:[%s469 + $0x98] sm:$0xf]
      %v656 = vld [vmem:[%s469 + $0x9c] sm:$0xf]
      %v657 = vld [vmem:[%s469 + $0xa0] sm:$0xf]
      %v658 = vld [vmem:[%s469 + $0xa4] sm:$0xf]
      %v659 = vld [vmem:[%s469 + $0xa8] sm:$0xf]
      %v660 = vld [vmem:[%s469 + $0xac] sm:$0xf]
      %v661 = vld [vmem:[%s469 + $0xb0] sm:$0xf]
      %v662 = vld [vmem:[%s469 + $0xb4] sm:$0xf]
      %v663 = vld [vmem:[%s469 + $0xb8] sm:$0xf]
      %v664 = vld [vmem:[%s469 + $0xbc] sm:$0xf]
      %v665 = vld [vmem:[%s469 + $0xc0] sm:$0xf]
      %v666 = vld [vmem:[%s469 + $0xc4] sm:$0xf]
      %v667 = vld [vmem:[%s469 + $0xc8] sm:$0xf]
      %v668 = vld [vmem:[%s469 + $0xcc] sm:$0xf]
      %v669 = vld [vmem:[%s469 + $0xd0] sm:$0xf]
      %v670 = vld [vmem:[%s469 + $0xd4] sm:$0xf]
      %v671 = vld [vmem:[%s469 + $0xd8] sm:$0xf]
      %v672 = vld [vmem:[%s469 + $0xdc] sm:$0xf]
      %v673 = vld [vmem:[%s469 + $0xe0] sm:$0xf]
      %v674 = vld [vmem:[%s469 + $0xe4] sm:$0xf]
      %v675 = vld [vmem:[%s469 + $0xe8] sm:$0xf]
      %v676 = vld [vmem:[%s469 + $0xec] sm:$0xf]
      %v677 = vld [vmem:[%s469 + $0xf0] sm:$0xf]
      %v678 = vld [vmem:[%s469 + $0xf4] sm:$0xf]
      %v679 = vld [vmem:[%s469 + $0xf8] sm:$0xf]
      %v680 = vld [vmem:[%s469 + $0xfc] sm:$0xf]
      %v681 = vld [vmem:[%s474] sm:$0xf]
      %v682 = vld [vmem:[%s474 + $0x4] sm:$0xf]
      %v683 = vld [vmem:[%s474 + $0x8] sm:$0xf]
      %v684 = vld [vmem:[%s474 + $0xc] sm:$0xf]
      %v685 = vld [vmem:[%s474 + $0x10] sm:$0xf]
      %v686 = vld [vmem:[%s474 + $0x14] sm:$0xf]
      %v687 = vld [vmem:[%s474 + $0x18] sm:$0xf]
      %v688 = vld [vmem:[%s474 + $0x1c] sm:$0xf]
      %v689 = vld [vmem:[%s474 + $0x20] sm:$0xf]
      %v690 = vld [vmem:[%s474 + $0x24] sm:$0xf]
      %v691 = vld [vmem:[%s474 + $0x28] sm:$0xf]
      %v692 = vld [vmem:[%s474 + $0x2c] sm:$0xf]
      %v693 = vld [vmem:[%s474 + $0x30] sm:$0xf]
      %v694 = vld [vmem:[%s474 + $0x34] sm:$0xf]
      %v695 = vld [vmem:[%s474 + $0x38] sm:$0xf]
      %v696 = vld [vmem:[%s474 + $0x3c] sm:$0xf]
      %v697 = vld [vmem:[%s474 + $0x40] sm:$0xf]
      %v698 = vld [vmem:[%s474 + $0x44] sm:$0xf]
      %v699 = vld [vmem:[%s474 + $0x48] sm:$0xf]
      %v700 = vld [vmem:[%s474 + $0x4c] sm:$0xf]
      %v701 = vld [vmem:[%s474 + $0x50] sm:$0xf]
      %v702 = vld [vmem:[%s474 + $0x54] sm:$0xf]
      %v703 = vld [vmem:[%s474 + $0x58] sm:$0xf]
      %v704 = vld [vmem:[%s474 + $0x5c] sm:$0xf]
      %v705 = vld [vmem:[%s474 + $0x60] sm:$0xf]
      %v706 = vld [vmem:[%s474 + $0x64] sm:$0xf]
      %v707 = vld [vmem:[%s474 + $0x68] sm:$0xf]
      %v708 = vld [vmem:[%s474 + $0x6c] sm:$0xf]
      %v709 = vld [vmem:[%s474 + $0x70] sm:$0xf]
      %v710 = vld [vmem:[%s474 + $0x74] sm:$0xf]
      %v711 = vld [vmem:[%s474 + $0x78] sm:$0xf]
      %v712 = vld [vmem:[%s474 + $0x7c] sm:$0xf]
      %v713 = vld [vmem:[%s474 + $0x80] sm:$0xf]
      %v714 = vld [vmem:[%s474 + $0x84] sm:$0xf]
      %v715 = vld [vmem:[%s474 + $0x88] sm:$0xf]
      %v716 = vld [vmem:[%s474 + $0x8c] sm:$0xf]
      %v717 = vld [vmem:[%s474 + $0x90] sm:$0xf]
      %v718 = vld [vmem:[%s474 + $0x94] sm:$0xf]
      %v719 = vld [vmem:[%s474 + $0x98] sm:$0xf]
      %v720 = vld [vmem:[%s474 + $0x9c] sm:$0xf]
      %v721 = vld [vmem:[%s474 + $0xa0] sm:$0xf]
      %v722 = vld [vmem:[%s474 + $0xa4] sm:$0xf]
      %v723 = vld [vmem:[%s474 + $0xa8] sm:$0xf]
      %v724 = vld [vmem:[%s474 + $0xac] sm:$0xf]
      %v725 = vld [vmem:[%s474 + $0xb0] sm:$0xf]
      %v726 = vld [vmem:[%s474 + $0xb4] sm:$0xf]
      %v727 = vld [vmem:[%s474 + $0xb8] sm:$0xf]
      %v728 = vld [vmem:[%s474 + $0xbc] sm:$0xf]
      %v729 = vld [vmem:[%s474 + $0xc0] sm:$0xf]
      %v730 = vld [vmem:[%s474 + $0xc4] sm:$0xf]
      %v731 = vld [vmem:[%s474 + $0xc8] sm:$0xf]
      %v732 = vld [vmem:[%s474 + $0xcc] sm:$0xf]
      %v733 = vld [vmem:[%s474 + $0xd0] sm:$0xf]
      %v734 = vld [vmem:[%s474 + $0xd4] sm:$0xf]
      %v735 = vld [vmem:[%s474 + $0xd8] sm:$0xf]
      %v736 = vld [vmem:[%s474 + $0xdc] sm:$0xf]
      %v737 = vld [vmem:[%s474 + $0xe0] sm:$0xf]
      %v738 = vld [vmem:[%s474 + $0xe4] sm:$0xf]
      %v739 = vld [vmem:[%s474 + $0xe8] sm:$0xf]
      %v740 = vld [vmem:[%s474 + $0xec] sm:$0xf]
      %v741 = vld [vmem:[%s474 + $0xf0] sm:$0xf]
      %v742 = vld [vmem:[%s474 + $0xf4] sm:$0xf]
      %v743 = vld [vmem:[%s474 + $0xf8] sm:$0xf]
      %v744 = vld [vmem:[%s474 + $0xfc] sm:$0xf]
      %v745 = vld [vmem:[%s3] sm:$0xf]
      %v746 = vld [vmem:[%s3 + $0x4] sm:$0xf]
      %v747 = vld [vmem:[%s3 + $0x8] sm:$0xf]
      %v748 = vld [vmem:[%s3 + $0xc] sm:$0xf]
      %v749 = vld [vmem:[%s3 + $0x10] sm:$0xf]
      %v750 = vld [vmem:[%s3 + $0x14] sm:$0xf]
      %v751 = vld [vmem:[%s3 + $0x18] sm:$0xf]
      %v752 = vld [vmem:[%s3 + $0x1c] sm:$0xf]
      %v753 = vld [vmem:[%s3 + $0x20] sm:$0xf]
      %v754 = vld [vmem:[%s3 + $0x24] sm:$0xf]
      %v755 = vld [vmem:[%s3 + $0x28] sm:$0xf]
      %v756 = vld [vmem:[%s3 + $0x2c] sm:$0xf]
      %v757 = vld [vmem:[%s3 + $0x30] sm:$0xf]
      %v758 = vld [vmem:[%s3 + $0x34] sm:$0xf]
      %v759 = vld [vmem:[%s3 + $0x38] sm:$0xf]
      %v760 = vld [vmem:[%s3 + $0x3c] sm:$0xf]
      %v761 = vld [vmem:[%s3 + $0x40] sm:$0xf]
      %v762 = vld [vmem:[%s3 + $0x44] sm:$0xf]
      %v763 = vld [vmem:[%s3 + $0x48] sm:$0xf]
      %v764 = vld [vmem:[%s3 + $0x4c] sm:$0xf]
      %v765 = vld [vmem:[%s3 + $0x50] sm:$0xf]
      %v766 = vld [vmem:[%s3 + $0x54] sm:$0xf]
      %v767 = vld [vmem:[%s3 + $0x58] sm:$0xf]
      %v768 = vld [vmem:[%s3 + $0x5c] sm:$0xf]
      %v769 = vld [vmem:[%s3 + $0x60] sm:$0xf]
      %v770 = vld [vmem:[%s3 + $0x64] sm:$0xf]
      %v771 = vld [vmem:[%s3 + $0x68] sm:$0xf]
      %v772 = vld [vmem:[%s3 + $0x6c] sm:$0xf]
      %v773 = vld [vmem:[%s3 + $0x70] sm:$0xf]
      %v774 = vld [vmem:[%s3 + $0x74] sm:$0xf]
      %v775 = vld [vmem:[%s3 + $0x78] sm:$0xf]
      %v776 = vld [vmem:[%s3 + $0x7c] sm:$0xf]
      %v777 = vld [vmem:[%s3 + $0x80] sm:$0xf]
      %v778 = vld [vmem:[%s3 + $0x84] sm:$0xf]
      %v779 = vld [vmem:[%s3 + $0x88] sm:$0xf]
      %v780 = vld [vmem:[%s3 + $0x8c] sm:$0xf]
      %v781 = vld [vmem:[%s3 + $0x90] sm:$0xf]
      %v782 = vld [vmem:[%s3 + $0x94] sm:$0xf]
      %v783 = vld [vmem:[%s3 + $0x98] sm:$0xf]
      %v784 = vld [vmem:[%s3 + $0x9c] sm:$0xf]
      %v785 = vld [vmem:[%s3 + $0xa0] sm:$0xf]
      %v786 = vld [vmem:[%s3 + $0xa4] sm:$0xf]
      %v787 = vld [vmem:[%s3 + $0xa8] sm:$0xf]
      %v788 = vld [vmem:[%s3 + $0xac] sm:$0xf]
      %v789 = vld [vmem:[%s3 + $0xb0] sm:$0xf]
      %v790 = vld [vmem:[%s3 + $0xb4] sm:$0xf]
      %v791 = vld [vmem:[%s3 + $0xb8] sm:$0xf]
      %v792 = vld [vmem:[%s3 + $0xbc] sm:$0xf]
      %v793 = vld [vmem:[%s3 + $0xc0] sm:$0xf]
      %v794 = vld [vmem:[%s3 + $0xc4] sm:$0xf]
      %v795 = vld [vmem:[%s3 + $0xc8] sm:$0xf]
      %v796 = vld [vmem:[%s3 + $0xcc] sm:$0xf]
      %v797 = vld [vmem:[%s3 + $0xd0] sm:$0xf]
      %v798 = vld [vmem:[%s3 + $0xd4] sm:$0xf]
      %v799 = vld [vmem:[%s3 + $0xd8] sm:$0xf]
      %v800 = vld [vmem:[%s3 + $0xdc] sm:$0xf]
      %v801 = vld [vmem:[%s3 + $0xe0] sm:$0xf]
      %v802 = vld [vmem:[%s3 + $0xe4] sm:$0xf]
      %v803 = vld [vmem:[%s3 + $0xe8] sm:$0xf]
      %v804 = vld [vmem:[%s3 + $0xec] sm:$0xf]
      %v805 = vld [vmem:[%s3 + $0xf0] sm:$0xf]
      %v806 = vld [vmem:[%s3 + $0xf4] sm:$0xf]
      %v807 = vld [vmem:[%s3 + $0xf8] sm:$0xf]
      %v808 = vld [vmem:[%s3 + $0xfc] sm:$0xf]
      %v809 = vld [vmem:[%s4] sm:$0x1]
      %v810 = vld [vmem:[%s4 + $0x1] sm:$0x1]
      %v811 = vld [vmem:[%s4 + $0x2] sm:$0x1]
      %v812 = vld [vmem:[%s4 + $0x3] sm:$0x1]
      %v817 = vlaneseq
      %v818 = vshrl.u32 %v817, 7
      %v819 = vsub.s32 0, %v818
      %v820 = vrot.slane %v809, %v819
      %v821 = vlaneseq
      %v822 = vshrl.u32 %v821, 7
      %v823 = vsub.s32 0, %v822
      %v824 = vrot.slane %v810, %v823
      %v825 = vlaneseq
      %v826 = vshrl.u32 %v825, 7
      %v827 = vsub.s32 0, %v826
      %v828 = vrot.slane %v811, %v827
      %v829 = vlaneseq
      %v830 = vshrl.u32 %v829, 7
      %v831 = vsub.s32 0, %v830
      %v832 = vrot.slane %v812, %v831
      %v837 = vadd.f32 %v553, %v820
      %v838 = vadd.f32 %v554, %v820
      %v839 = vadd.f32 %v555, %v820
      %v840 = vadd.f32 %v556, %v820
      %v841 = vadd.f32 %v557, %v820
      %v842 = vadd.f32 %v558, %v820
      %v843 = vadd.f32 %v559, %v820
      %v844 = vadd.f32 %v560, %v820
      %v845 = vadd.f32 %v561, %v820
      %v846 = vadd.f32 %v562, %v820
      %v847 = vadd.f32 %v563, %v820
      %v848 = vadd.f32 %v564, %v820
      %v849 = vadd.f32 %v565, %v820
      %v850 = vadd.f32 %v566, %v820
      %v851 = vadd.f32 %v567, %v820
      %v852 = vadd.f32 %v568, %v820
      %v853 = vadd.f32 %v569, %v824
      %v854 = vadd.f32 %v570, %v824
      %v855 = vadd.f32 %v571, %v824
      %v856 = vadd.f32 %v572, %v824
      %v857 = vadd.f32 %v573, %v824
      %v858 = vadd.f32 %v574, %v824
      %v859 = vadd.f32 %v575, %v824
      %v860 = vadd.f32 %v576, %v824
      %v861 = vadd.f32 %v577, %v824
      %v862 = vadd.f32 %v578, %v824
      %v863 = vadd.f32 %v579, %v824
      %v864 = vadd.f32 %v580, %v824
      %v865 = vadd.f32 %v581, %v824
      %v866 = vadd.f32 %v582, %v824
      %v867 = vadd.f32 %v583, %v824
      %v868 = vadd.f32 %v584, %v824
      %v869 = vadd.f32 %v585, %v828
      %v870 = vadd.f32 %v586, %v828
      %v871 = vadd.f32 %v587, %v828
      %v872 = vadd.f32 %v588, %v828
      %v873 = vadd.f32 %v589, %v828
      %v874 = vadd.f32 %v590, %v828
      %v875 = vadd.f32 %v591, %v828
      %v876 = vadd.f32 %v592, %v828
      %v877 = vadd.f32 %v593, %v828
      %v878 = vadd.f32 %v594, %v828
      %v879 = vadd.f32 %v595, %v828
      %v880 = vadd.f32 %v596, %v828
      %v881 = vadd.f32 %v597, %v828
      %v882 = vadd.f32 %v598, %v828
      %v883 = vadd.f32 %v599, %v828
      %v884 = vadd.f32 %v600, %v828
      %v885 = vadd.f32 %v601, %v832
      %v886 = vadd.f32 %v602, %v832
      %v887 = vadd.f32 %v603, %v832
      %v888 = vadd.f32 %v604, %v832
      %v889 = vadd.f32 %v605, %v832
      %v890 = vadd.f32 %v606, %v832
      %v891 = vadd.f32 %v607, %v832
      %v892 = vadd.f32 %v608, %v832
      %v893 = vadd.f32 %v609, %v832
      %v894 = vadd.f32 %v610, %v832
      %v895 = vadd.f32 %v611, %v832
      %v896 = vadd.f32 %v612, %v832
      %v897 = vadd.f32 %v613, %v832
      %v898 = vadd.f32 %v614, %v832
      %v899 = vadd.f32 %v615, %v832
      %v900 = vadd.f32 %v616, %v832
      %v901 = vmul.f32 %v837, 0.25
      %v902 = vmul.f32 %v838, 0.25
      %v903 = vmul.f32 %v839, 0.25
      %v904 = vmul.f32 %v840, 0.25
      %v905 = vmul.f32 %v841, 0.25
      %v906 = vmul.f32 %v842, 0.25
      %v907 = vmul.f32 %v843, 0.25
      %v908 = vmul.f32 %v844, 0.25
      %v909 = vmul.f32 %v845, 0.25
      %v910 = vmul.f32 %v846, 0.25
      %v911 = vmul.f32 %v847, 0.25
      %v912 = vmul.f32 %v848, 0.25
      %v913 = vmul.f32 %v849, 0.25
      %v914 = vmul.f32 %v850, 0.25
      %v915 = vmul.f32 %v851, 0.25
      %v916 = vmul.f32 %v852, 0.25
      %v917 = vmul.f32 %v853, 0.25
      %v918 = vmul.f32 %v854, 0.25
      %v919 = vmul.f32 %v855, 0.25
      %v920 = vmul.f32 %v856, 0.25
      %v921 = vmul.f32 %v857, 0.25
      %v922 = vmul.f32 %v858, 0.25
      %v923 = vmul.f32 %v859, 0.25
      %v924 = vmul.f32 %v860, 0.25
      %v925 = vmul.f32 %v861, 0.25
      %v926 = vmul.f32 %v862, 0.25
      %v927 = vmul.f32 %v863, 0.25
      %v928 = vmul.f32 %v864, 0.25
      %v929 = vmul.f32 %v865, 0.25
      %v930 = vmul.f32 %v866, 0.25
      %v931 = vmul.f32 %v867, 0.25
      %v932 = vmul.f32 %v868, 0.25
      %v933 = vmul.f32 %v869, 0.25
      %v934 = vmul.f32 %v870, 0.25
      %v935 = vmul.f32 %v871, 0.25
      %v936 = vmul.f32 %v872, 0.25
      %v937 = vmul.f32 %v873, 0.25
      %v938 = vmul.f32 %v874, 0.25
      %v939 = vmul.f32 %v875, 0.25
      %v940 = vmul.f32 %v876, 0.25
      %v941 = vmul.f32 %v877, 0.25
      %v942 = vmul.f32 %v878, 0.25
      %v943 = vmul.f32 %v879, 0.25
      %v944 = vmul.f32 %v880, 0.25
      %v945 = vmul.f32 %v881, 0.25
      %v946 = vmul.f32 %v882, 0.25
      %v947 = vmul.f32 %v883, 0.25
      %v948 = vmul.f32 %v884, 0.25
      %v949 = vmul.f32 %v885, 0.25
      %v950 = vmul.f32 %v886, 0.25
      %v951 = vmul.f32 %v887, 0.25
      %v952 = vmul.f32 %v888, 0.25
      %v953 = vmul.f32 %v889, 0.25
      %v954 = vmul.f32 %v890, 0.25
      %v955 = vmul.f32 %v891, 0.25
      %v956 = vmul.f32 %v892, 0.25
      %v957 = vmul.f32 %v893, 0.25
      %v958 = vmul.f32 %v894, 0.25
      %v959 = vmul.f32 %v895, 0.25
      %v960 = vmul.f32 %v896, 0.25
      %v961 = vmul.f32 %v897, 0.25
      %v962 = vmul.f32 %v898, 0.25
      %v963 = vmul.f32 %v899, 0.25
      %v964 = vmul.f32 %v900, 0.25
      %v965 = vpack.c.bf16 %v902, %v901
      %v966 = vpack.c.bf16 %v904, %v903
      %v967 = vpack.c.bf16 %v906, %v905
      %v968 = vpack.c.bf16 %v908, %v907
      %v969 = vpack.c.bf16 %v910, %v909
      %v970 = vpack.c.bf16 %v912, %v911
      %v971 = vpack.c.bf16 %v914, %v913
      %v972 = vpack.c.bf16 %v916, %v915
      %v973 = vpack.c.bf16 %v918, %v917
      %v974 = vpack.c.bf16 %v920, %v919
      %v975 = vpack.c.bf16 %v922, %v921
      %v976 = vpack.c.bf16 %v924, %v923
      %v977 = vpack.c.bf16 %v926, %v925
      %v978 = vpack.c.bf16 %v928, %v927
      %v979 = vpack.c.bf16 %v930, %v929
      %v980 = vpack.c.bf16 %v932, %v931
      %v981 = vpack.c.bf16 %v934, %v933
      %v982 = vpack.c.bf16 %v936, %v935
      %v983 = vpack.c.bf16 %v938, %v937
      %v984 = vpack.c.bf16 %v940, %v939
      %v985 = vpack.c.bf16 %v942, %v941
      %v986 = vpack.c.bf16 %v944, %v943
      %v987 = vpack.c.bf16 %v946, %v945
      %v988 = vpack.c.bf16 %v948, %v947
      %v989 = vpack.c.bf16 %v950, %v949
      %v990 = vpack.c.bf16 %v952, %v951
      %v991 = vpack.c.bf16 %v954, %v953
      %v992 = vpack.c.bf16 %v956, %v955
      %v993 = vpack.c.bf16 %v958, %v957
      %v994 = vpack.c.bf16 %v960, %v959
      %v995 = vpack.c.bf16 %v962, %v961
      %v996 = vpack.c.bf16 %v964, %v963
      %v997 = vld [vmem:[%s5] sm:$0x1]
      %v998 = vld [vmem:[%s5 + $0x1] sm:$0x1]
      %v999 = vld [vmem:[%s5 + $0x2] sm:$0x1]
      %v1000 = vld [vmem:[%s5 + $0x3] sm:$0x1]
      %v1005 = vlaneseq
      %v1006 = vshrl.u32 %v1005, 7
      %v1007 = vsub.s32 0, %v1006
      %v1008 = vrot.slane %v997, %v1007
      %v1009 = vlaneseq
      %v1010 = vshrl.u32 %v1009, 7
      %v1011 = vsub.s32 0, %v1010
      %v1012 = vrot.slane %v998, %v1011
      %v1013 = vlaneseq
      %v1014 = vshrl.u32 %v1013, 7
      %v1015 = vsub.s32 0, %v1014
      %v1016 = vrot.slane %v999, %v1015
      %v1017 = vlaneseq
      %v1018 = vshrl.u32 %v1017, 7
      %v1019 = vsub.s32 0, %v1018
      %v1020 = vrot.slane %v1000, %v1019
      %v1025 = vadd.f32 %v553, %v1008
      %v1026 = vadd.f32 %v554, %v1008
      %v1027 = vadd.f32 %v555, %v1008
      %v1028 = vadd.f32 %v556, %v1008
      %v1029 = vadd.f32 %v557, %v1008
      %v1030 = vadd.f32 %v558, %v1008
      %v1031 = vadd.f32 %v559, %v1008
      %v1032 = vadd.f32 %v560, %v1008
      %v1033 = vadd.f32 %v561, %v1008
      %v1034 = vadd.f32 %v562, %v1008
      %v1035 = vadd.f32 %v563, %v1008
      %v1036 = vadd.f32 %v564, %v1008
      %v1037 = vadd.f32 %v565, %v1008
      %v1038 = vadd.f32 %v566, %v1008
      %v1039 = vadd.f32 %v567, %v1008
      %v1040 = vadd.f32 %v568, %v1008
      %v1041 = vadd.f32 %v569, %v1012
      %v1042 = vadd.f32 %v570, %v1012
      %v1043 = vadd.f32 %v571, %v1012
      %v1044 = vadd.f32 %v572, %v1012
      %v1045 = vadd.f32 %v573, %v1012
      %v1046 = vadd.f32 %v574, %v1012
      %v1047 = vadd.f32 %v575, %v1012
      %v1048 = vadd.f32 %v576, %v1012
      %v1049 = vadd.f32 %v577, %v1012
      %v1050 = vadd.f32 %v578, %v1012
      %v1051 = vadd.f32 %v579, %v1012
      %v1052 = vadd.f32 %v580, %v1012
      %v1053 = vadd.f32 %v581, %v1012
      %v1054 = vadd.f32 %v582, %v1012
      %v1055 = vadd.f32 %v583, %v1012
      %v1056 = vadd.f32 %v584, %v1012
      %v1057 = vadd.f32 %v585, %v1016
      %v1058 = vadd.f32 %v586, %v1016
      %v1059 = vadd.f32 %v587, %v1016
      %v1060 = vadd.f32 %v588, %v1016
      %v1061 = vadd.f32 %v589, %v1016
      %v1062 = vadd.f32 %v590, %v1016
      %v1063 = vadd.f32 %v591, %v1016
      %v1064 = vadd.f32 %v592, %v1016
      %v1065 = vadd.f32 %v593, %v1016
      %v1066 = vadd.f32 %v594, %v1016
      %v1067 = vadd.f32 %v595, %v1016
      %v1068 = vadd.f32 %v596, %v1016
      %v1069 = vadd.f32 %v597, %v1016
      %v1070 = vadd.f32 %v598, %v1016
      %v1071 = vadd.f32 %v599, %v1016
      %v1072 = vadd.f32 %v600, %v1016
      %v1073 = vadd.f32 %v601, %v1020
      %v1074 = vadd.f32 %v602, %v1020
      %v1075 = vadd.f32 %v603, %v1020
      %v1076 = vadd.f32 %v604, %v1020
      %v1077 = vadd.f32 %v605, %v1020
      %v1078 = vadd.f32 %v606, %v1020
      %v1079 = vadd.f32 %v607, %v1020
      %v1080 = vadd.f32 %v608, %v1020
      %v1081 = vadd.f32 %v609, %v1020
      %v1082 = vadd.f32 %v610, %v1020
      %v1083 = vadd.f32 %v611, %v1020
      %v1084 = vadd.f32 %v612, %v1020
      %v1085 = vadd.f32 %v613, %v1020
      %v1086 = vadd.f32 %v614, %v1020
      %v1087 = vadd.f32 %v615, %v1020
      %v1088 = vadd.f32 %v616, %v1020
      %v1089 = vmul.f32 %v1025, 0.25
      %v1090 = vmul.f32 %v1026, 0.25
      %v1091 = vmul.f32 %v1027, 0.25
      %v1092 = vmul.f32 %v1028, 0.25
      %v1093 = vmul.f32 %v1029, 0.25
      %v1094 = vmul.f32 %v1030, 0.25
      %v1095 = vmul.f32 %v1031, 0.25
      %v1096 = vmul.f32 %v1032, 0.25
      %v1097 = vmul.f32 %v1033, 0.25
      %v1098 = vmul.f32 %v1034, 0.25
      %v1099 = vmul.f32 %v1035, 0.25
      %v1100 = vmul.f32 %v1036, 0.25
      %v1101 = vmul.f32 %v1037, 0.25
      %v1102 = vmul.f32 %v1038, 0.25
      %v1103 = vmul.f32 %v1039, 0.25
      %v1104 = vmul.f32 %v1040, 0.25
      %v1105 = vmul.f32 %v1041, 0.25
      %v1106 = vmul.f32 %v1042, 0.25
      %v1107 = vmul.f32 %v1043, 0.25
      %v1108 = vmul.f32 %v1044, 0.25
      %v1109 = vmul.f32 %v1045, 0.25
      %v1110 = vmul.f32 %v1046, 0.25
      %v1111 = vmul.f32 %v1047, 0.25
      %v1112 = vmul.f32 %v1048, 0.25
      %v1113 = vmul.f32 %v1049, 0.25
      %v1114 = vmul.f32 %v1050, 0.25
      %v1115 = vmul.f32 %v1051, 0.25
      %v1116 = vmul.f32 %v1052, 0.25
      %v1117 = vmul.f32 %v1053, 0.25
      %v1118 = vmul.f32 %v1054, 0.25
      %v1119 = vmul.f32 %v1055, 0.25
      %v1120 = vmul.f32 %v1056, 0.25
      %v1121 = vmul.f32 %v1057, 0.25
      %v1122 = vmul.f32 %v1058, 0.25
      %v1123 = vmul.f32 %v1059, 0.25
      %v1124 = vmul.f32 %v1060, 0.25
      %v1125 = vmul.f32 %v1061, 0.25
      %v1126 = vmul.f32 %v1062, 0.25
      %v1127 = vmul.f32 %v1063, 0.25
      %v1128 = vmul.f32 %v1064, 0.25
      %v1129 = vmul.f32 %v1065, 0.25
      %v1130 = vmul.f32 %v1066, 0.25
      %v1131 = vmul.f32 %v1067, 0.25
      %v1132 = vmul.f32 %v1068, 0.25
      %v1133 = vmul.f32 %v1069, 0.25
      %v1134 = vmul.f32 %v1070, 0.25
      %v1135 = vmul.f32 %v1071, 0.25
      %v1136 = vmul.f32 %v1072, 0.25
      %v1137 = vmul.f32 %v1073, 0.25
      %v1138 = vmul.f32 %v1074, 0.25
      %v1139 = vmul.f32 %v1075, 0.25
      %v1140 = vmul.f32 %v1076, 0.25
      %v1141 = vmul.f32 %v1077, 0.25
      %v1142 = vmul.f32 %v1078, 0.25
      %v1143 = vmul.f32 %v1079, 0.25
      %v1144 = vmul.f32 %v1080, 0.25
      %v1145 = vmul.f32 %v1081, 0.25
      %v1146 = vmul.f32 %v1082, 0.25
      %v1147 = vmul.f32 %v1083, 0.25
      %v1148 = vmul.f32 %v1084, 0.25
      %v1149 = vmul.f32 %v1085, 0.25
      %v1150 = vmul.f32 %v1086, 0.25
      %v1151 = vmul.f32 %v1087, 0.25
      %v1152 = vmul.f32 %v1088, 0.25
      %v1153 = vpack.c.bf16 %v1090, %v1089
      %v1154 = vpack.c.bf16 %v1092, %v1091
      %v1155 = vpack.c.bf16 %v1094, %v1093
      %v1156 = vpack.c.bf16 %v1096, %v1095
      %v1157 = vpack.c.bf16 %v1098, %v1097
      %v1158 = vpack.c.bf16 %v1100, %v1099
      %v1159 = vpack.c.bf16 %v1102, %v1101
      %v1160 = vpack.c.bf16 %v1104, %v1103
      %v1161 = vpack.c.bf16 %v1106, %v1105
      %v1162 = vpack.c.bf16 %v1108, %v1107
      %v1163 = vpack.c.bf16 %v1110, %v1109
      %v1164 = vpack.c.bf16 %v1112, %v1111
      %v1165 = vpack.c.bf16 %v1114, %v1113
      %v1166 = vpack.c.bf16 %v1116, %v1115
      %v1167 = vpack.c.bf16 %v1118, %v1117
      %v1168 = vpack.c.bf16 %v1120, %v1119
      %v1169 = vpack.c.bf16 %v1122, %v1121
      %v1170 = vpack.c.bf16 %v1124, %v1123
      %v1171 = vpack.c.bf16 %v1126, %v1125
      %v1172 = vpack.c.bf16 %v1128, %v1127
      %v1173 = vpack.c.bf16 %v1130, %v1129
      %v1174 = vpack.c.bf16 %v1132, %v1131
      %v1175 = vpack.c.bf16 %v1134, %v1133
      %v1176 = vpack.c.bf16 %v1136, %v1135
      %v1177 = vpack.c.bf16 %v1138, %v1137
      %v1178 = vpack.c.bf16 %v1140, %v1139
      %v1179 = vpack.c.bf16 %v1142, %v1141
      %v1180 = vpack.c.bf16 %v1144, %v1143
      %v1181 = vpack.c.bf16 %v1146, %v1145
      %v1182 = vpack.c.bf16 %v1148, %v1147
      %v1183 = vpack.c.bf16 %v1150, %v1149
      %v1184 = vpack.c.bf16 %v1152, %v1151
      %v1201 = vunpack.c.l.b16 %v745
      %v1202 = vunpack.c.l.b16 %v746
      %v1203 = vunpack.c.l.b16 %v747
      %v1204 = vunpack.c.l.b16 %v748
      %v1205 = vunpack.c.l.b16 %v749
      %v1206 = vunpack.c.l.b16 %v750
      %v1207 = vunpack.c.l.b16 %v751
      %v1208 = vunpack.c.l.b16 %v752
      %v1209 = vunpack.c.l.b16 %v753
      %v1210 = vunpack.c.l.b16 %v754
      %v1211 = vunpack.c.l.b16 %v755
      %v1212 = vunpack.c.l.b16 %v756
      %v1213 = vunpack.c.l.b16 %v757
      %v1214 = vunpack.c.l.b16 %v758
      %v1215 = vunpack.c.l.b16 %v759
      %v1216 = vunpack.c.l.b16 %v760
      %v1217 = vpack.c.b16 %v1202, %v1201
      %v1218 = vpack.c.b16 %v1204, %v1203
      %v1219 = vpack.c.b16 %v1206, %v1205
      %v1220 = vpack.c.b16 %v1208, %v1207
      %v1221 = vpack.c.b16 %v1210, %v1209
      %v1222 = vpack.c.b16 %v1212, %v1211
      %v1223 = vpack.c.b16 %v1214, %v1213
      %v1224 = vpack.c.b16 %v1216, %v1215
      %vm1225 = vcmask 130048
      %v1227 = vsel %vm1225, %v1153, 0
      %v1230 = vsel %vm1225, %v1154, 0
      %v1233 = vsel %vm1225, %v1155, 0
      %v1236 = vsel %vm1225, %v1156, 0
      %v1239 = vsel %vm1225, %v1157, 0
      %v1242 = vsel %vm1225, %v1158, 0
      %v1245 = vsel %vm1225, %v1159, 0
      %v1248 = vsel %vm1225, %v1160, 0
      %v1251 = vsel %vm1225, %v1217, 0
      %v1254 = vsel %vm1225, %v1218, 0
      %v1257 = vsel %vm1225, %v1219, 0
      %v1260 = vsel %vm1225, %v1220, 0
      %v1263 = vsel %vm1225, %v1221, 0
      %v1266 = vsel %vm1225, %v1222, 0
      %v1269 = vsel %vm1225, %v1223, 0
      %v1272 = vsel %vm1225, %v1224, 0
      %1274 = vmatprep.subr.bf16.mxu0 0
      %1275 = vmatpush1.bf16.xpose.msra.mxu0 %v1272
      %1276 = vmatprep.subr.bf16.mxu0 0
      %1277 = vmatpush1.bf16.xpose.msra.mxu0 %v1269
      %1278 = vmatprep.subr.bf16.mxu0 0
      %1279 = vmatpush1.bf16.xpose.msra.mxu0 %v1266
      %1280 = vmatprep.subr.bf16.mxu0 0
      %1281 = vmatpush1.bf16.xpose.msra.mxu0 %v1263
      %1282 = vmatprep.subr.bf16.mxu0 0
      %1283 = vmatpush1.bf16.xpose.msra.mxu0 %v1260
      %1284 = vmatprep.subr.bf16.mxu0 0
      %1285 = vmatpush1.bf16.xpose.msra.mxu0 %v1257
      %1286 = vmatprep.subr.bf16.mxu0 0
      %1287 = vmatpush1.bf16.xpose.msra.mxu0 %v1254
      %1288 = vmatprep.subr.bf16.mxu0 0
      %1289 = vmatpush1.bf16.xpose.msra.mxu0 %v1251
      %1290 = vmatprep.subr.bf16.mxu0 0
      %1291 = vmatpush2.bf16.xpose.msra.mxu0 0
      %1292 = vmatprep.subr.bf16.mxu0 0
      %1293 = vmatpush2.bf16.xpose.msra.mxu0 0
      %1294 = vmatprep.subr.bf16.mxu0 0
      %1295 = vmatpush2.bf16.xpose.msra.mxu0 0
      %1296 = vmatprep.subr.bf16.mxu0 0
      %1297 = vmatpush2.bf16.xpose.msra.mxu0 0
      %1298 = vmatprep.subr.bf16.mxu0 0
      %1299 = vmatpush2.bf16.xpose.msra.mxu0 0
      %1300 = vmatprep.subr.bf16.mxu0 0
      %1301 = vmatpush2.bf16.xpose.msra.mxu0 0
      %1302 = vmatprep.subr.bf16.mxu0 0
      %1303 = vmatpush2.bf16.xpose.msra.mxu0 0
      %1304 = vmatprep.subr.bf16.mxu0 0
      %1305 = vmatpush2.bf16.xpose.msra.mxu0 0
      %1306 = vmatprep.mubr.bf16.mxu0 0
      %1307 = vmatmul.mubr.bf16.gmra.mxu0 %v1227
      %v1308 = vpop.f32.mrf.mxu0
      %v1309 = vadd.f32 0.0, %v1308
      %v1310 = vpop.f32.mrf.mxu0
      %v1311 = vpop.f32.mrf.mxu0
      %v1312 = vadd.f32 0.0, %v1311
      %v1313 = vpop.f32.mrf.mxu0
      %1314 = vmatprep.mubr.bf16.mxu0 0
      %1315 = vmatmul.mubr.bf16.gmra.mxu0 %v1230
      %v1316 = vpop.f32.mrf.mxu0
      %v1317 = vadd.f32 0.0, %v1316
      %v1318 = vpop.f32.mrf.mxu0
      %v1319 = vpop.f32.mrf.mxu0
      %v1320 = vadd.f32 0.0, %v1319
      %v1321 = vpop.f32.mrf.mxu0
      %1322 = vmatprep.mubr.bf16.mxu0 0
      %1323 = vmatmul.mubr.bf16.gmra.mxu0 %v1233
      %v1324 = vpop.f32.mrf.mxu0
      %v1325 = vadd.f32 0.0, %v1324
      %v1326 = vpop.f32.mrf.mxu0
      %v1327 = vpop.f32.mrf.mxu0
      %v1328 = vadd.f32 0.0, %v1327
      %v1329 = vpop.f32.mrf.mxu0
      %1330 = vmatprep.mubr.bf16.mxu0 0
      %1331 = vmatmul.mubr.bf16.gmra.mxu0 %v1236
      %v1332 = vpop.f32.mrf.mxu0
      %v1333 = vadd.f32 0.0, %v1332
      %v1334 = vpop.f32.mrf.mxu0
      %v1335 = vpop.f32.mrf.mxu0
      %v1336 = vadd.f32 0.0, %v1335
      %v1337 = vpop.f32.mrf.mxu0
      %1338 = vmatprep.mubr.bf16.mxu0 0
      %1339 = vmatmul.mubr.bf16.gmra.mxu0 %v1239
      %v1340 = vpop.f32.mrf.mxu0
      %v1341 = vadd.f32 0.0, %v1340
      %v1342 = vpop.f32.mrf.mxu0
      %v1343 = vpop.f32.mrf.mxu0
      %v1344 = vadd.f32 0.0, %v1343
      %v1345 = vpop.f32.mrf.mxu0
      %1346 = vmatprep.mubr.bf16.mxu0 0
      %1347 = vmatmul.mubr.bf16.gmra.mxu0 %v1242
      %v1348 = vpop.f32.mrf.mxu0
      %v1349 = vadd.f32 0.0, %v1348
      %v1350 = vpop.f32.mrf.mxu0
      %v1351 = vpop.f32.mrf.mxu0
      %v1352 = vadd.f32 0.0, %v1351
      %v1353 = vpop.f32.mrf.mxu0
      %1354 = vmatprep.mubr.bf16.mxu0 0
      %1355 = vmatmul.mubr.bf16.gmra.mxu0 %v1245
      %v1356 = vpop.f32.mrf.mxu0
      %v1357 = vadd.f32 0.0, %v1356
      %v1358 = vpop.f32.mrf.mxu0
      %v1359 = vpop.f32.mrf.mxu0
      %v1360 = vadd.f32 0.0, %v1359
      %v1361 = vpop.f32.mrf.mxu0
      %1362 = vmatprep.mubr.bf16.mxu0 0
      %1363 = vmatmul.mubr.bf16.gmra.mxu0 %v1248
      %v1364 = vpop.f32.mrf.mxu0
      %v1365 = vadd.f32 0.0, %v1364
      %v1366 = vpop.f32.mrf.mxu0
      %v1367 = vpop.f32.mrf.mxu0
      %v1368 = vadd.f32 0.0, %v1367
      %v1369 = vpop.f32.mrf.mxu0
      %1370 = vdwg.mxu0
      %v1387 = vunpack.c.l.b16 %v761
      %v1388 = vunpack.c.l.b16 %v762
      %v1389 = vunpack.c.l.b16 %v763
      %v1390 = vunpack.c.l.b16 %v764
      %v1391 = vunpack.c.l.b16 %v765
      %v1392 = vunpack.c.l.b16 %v766
      %v1393 = vunpack.c.l.b16 %v767
      %v1394 = vunpack.c.l.b16 %v768
      %v1395 = vunpack.c.l.b16 %v769
      %v1396 = vunpack.c.l.b16 %v770
      %v1397 = vunpack.c.l.b16 %v771
      %v1398 = vunpack.c.l.b16 %v772
      %v1399 = vunpack.c.l.b16 %v773
      %v1400 = vunpack.c.l.b16 %v774
      %v1401 = vunpack.c.l.b16 %v775
      %v1402 = vunpack.c.l.b16 %v776
      %v1403 = vpack.c.b16 %v1388, %v1387
      %v1404 = vpack.c.b16 %v1390, %v1389
      %v1405 = vpack.c.b16 %v1392, %v1391
      %v1406 = vpack.c.b16 %v1394, %v1393
      %v1407 = vpack.c.b16 %v1396, %v1395
      %v1408 = vpack.c.b16 %v1398, %v1397
      %v1409 = vpack.c.b16 %v1400, %v1399
      %v1410 = vpack.c.b16 %v1402, %v1401
      %v1412 = vsel %vm1225, %v1161, 0
      %v1415 = vsel %vm1225, %v1162, 0
      %v1418 = vsel %vm1225, %v1163, 0
      %v1421 = vsel %vm1225, %v1164, 0
      %v1424 = vsel %vm1225, %v1165, 0
      %v1427 = vsel %vm1225, %v1166, 0
      %v1430 = vsel %vm1225, %v1167, 0
      %v1433 = vsel %vm1225, %v1168, 0
      %v1436 = vsel %vm1225, %v1403, 0
      %v1439 = vsel %vm1225, %v1404, 0
      %v1442 = vsel %vm1225, %v1405, 0
      %v1445 = vsel %vm1225, %v1406, 0
      %v1448 = vsel %vm1225, %v1407, 0
      %v1451 = vsel %vm1225, %v1408, 0
      %v1454 = vsel %vm1225, %v1409, 0
      %v1457 = vsel %vm1225, %v1410, 0
      %1459 = vmatprep.subr.bf16.mxu0 0
      %1460 = vmatpush1.bf16.xpose.msra.mxu0 %v1457
      %1461 = vmatprep.subr.bf16.mxu0 0
      %1462 = vmatpush1.bf16.xpose.msra.mxu0 %v1454
      %1463 = vmatprep.subr.bf16.mxu0 0
      %1464 = vmatpush1.bf16.xpose.msra.mxu0 %v1451
      %1465 = vmatprep.subr.bf16.mxu0 0
      %1466 = vmatpush1.bf16.xpose.msra.mxu0 %v1448
      %1467 = vmatprep.subr.bf16.mxu0 0
      %1468 = vmatpush1.bf16.xpose.msra.mxu0 %v1445
      %1469 = vmatprep.subr.bf16.mxu0 0
      %1470 = vmatpush1.bf16.xpose.msra.mxu0 %v1442
      %1471 = vmatprep.subr.bf16.mxu0 0
      %1472 = vmatpush1.bf16.xpose.msra.mxu0 %v1439
      %1473 = vmatprep.subr.bf16.mxu0 0
      %1474 = vmatpush1.bf16.xpose.msra.mxu0 %v1436
      %1475 = vmatprep.subr.bf16.mxu0 0
      %1476 = vmatpush2.bf16.xpose.msra.mxu0 0
      %1477 = vmatprep.subr.bf16.mxu0 0
      %1478 = vmatpush2.bf16.xpose.msra.mxu0 0
      %1479 = vmatprep.subr.bf16.mxu0 0
      %1480 = vmatpush2.bf16.xpose.msra.mxu0 0
      %1481 = vmatprep.subr.bf16.mxu0 0
      %1482 = vmatpush2.bf16.xpose.msra.mxu0 0
      %1483 = vmatprep.subr.bf16.mxu0 0
      %1484 = vmatpush2.bf16.xpose.msra.mxu0 0
      %1485 = vmatprep.subr.bf16.mxu0 0
      %1486 = vmatpush2.bf16.xpose.msra.mxu0 0
      %1487 = vmatprep.subr.bf16.mxu0 0
      %1488 = vmatpush2.bf16.xpose.msra.mxu0 0
      %1489 = vmatprep.subr.bf16.mxu0 0
      %1490 = vmatpush2.bf16.xpose.msra.mxu0 0
      %1491 = vmatprep.mubr.bf16.mxu0 0
      %1492 = vmatmul.mubr.bf16.gmra.mxu0 %v1412
      %v1493 = vpop.f32.mrf.mxu0
      %v1494 = vadd.f32 0.0, %v1493
      %v1495 = vpop.f32.mrf.mxu0
      %v1496 = vpop.f32.mrf.mxu0
      %v1497 = vadd.f32 0.0, %v1496
      %v1498 = vpop.f32.mrf.mxu0
      %1499 = vmatprep.mubr.bf16.mxu0 0
      %1500 = vmatmul.mubr.bf16.gmra.mxu0 %v1415
      %v1501 = vpop.f32.mrf.mxu0
      %v1502 = vadd.f32 0.0, %v1501
      %v1503 = vpop.f32.mrf.mxu0
      %v1504 = vpop.f32.mrf.mxu0
      %v1505 = vadd.f32 0.0, %v1504
      %v1506 = vpop.f32.mrf.mxu0
      %1507 = vmatprep.mubr.bf16.mxu0 0
      %1508 = vmatmul.mubr.bf16.gmra.mxu0 %v1418
      %v1509 = vpop.f32.mrf.mxu0
      %v1510 = vadd.f32 0.0, %v1509
      %v1511 = vpop.f32.mrf.mxu0
      %v1512 = vpop.f32.mrf.mxu0
      %v1513 = vadd.f32 0.0, %v1512
      %v1514 = vpop.f32.mrf.mxu0
      %1515 = vmatprep.mubr.bf16.mxu0 0
      %1516 = vmatmul.mubr.bf16.gmra.mxu0 %v1421
      %v1517 = vpop.f32.mrf.mxu0
      %v1518 = vadd.f32 0.0, %v1517
      %v1519 = vpop.f32.mrf.mxu0
      %v1520 = vpop.f32.mrf.mxu0
      %v1521 = vadd.f32 0.0, %v1520
      %v1522 = vpop.f32.mrf.mxu0
      %1523 = vmatprep.mubr.bf16.mxu0 0
      %1524 = vmatmul.mubr.bf16.gmra.mxu0 %v1424
      %v1525 = vpop.f32.mrf.mxu0
      %v1526 = vadd.f32 0.0, %v1525
      %v1527 = vpop.f32.mrf.mxu0
      %v1528 = vpop.f32.mrf.mxu0
      %v1529 = vadd.f32 0.0, %v1528
      %v1530 = vpop.f32.mrf.mxu0
      %1531 = vmatprep.mubr.bf16.mxu0 0
      %1532 = vmatmul.mubr.bf16.gmra.mxu0 %v1427
      %v1533 = vpop.f32.mrf.mxu0
      %v1534 = vadd.f32 0.0, %v1533
      %v1535 = vpop.f32.mrf.mxu0
      %v1536 = vpop.f32.mrf.mxu0
      %v1537 = vadd.f32 0.0, %v1536
      %v1538 = vpop.f32.mrf.mxu0
      %1539 = vmatprep.mubr.bf16.mxu0 0
      %1540 = vmatmul.mubr.bf16.gmra.mxu0 %v1430
      %v1541 = vpop.f32.mrf.mxu0
      %v1542 = vadd.f32 0.0, %v1541
      %v1543 = vpop.f32.mrf.mxu0
      %v1544 = vpop.f32.mrf.mxu0
      %v1545 = vadd.f32 0.0, %v1544
      %v1546 = vpop.f32.mrf.mxu0
      %1547 = vmatprep.mubr.bf16.mxu0 0
      %1548 = vmatmul.mubr.bf16.gmra.mxu0 %v1433
      %v1549 = vpop.f32.mrf.mxu0
      %v1550 = vadd.f32 0.0, %v1549
      %v1551 = vpop.f32.mrf.mxu0
      %v1552 = vpop.f32.mrf.mxu0
      %v1553 = vadd.f32 0.0, %v1552
      %v1554 = vpop.f32.mrf.mxu0
      %1555 = vdwg.mxu0
      %v1572 = vunpack.c.l.b16 %v777
      %v1573 = vunpack.c.l.b16 %v778
      %v1574 = vunpack.c.l.b16 %v779
      %v1575 = vunpack.c.l.b16 %v780
      %v1576 = vunpack.c.l.b16 %v781
      %v1577 = vunpack.c.l.b16 %v782
      %v1578 = vunpack.c.l.b16 %v783
      %v1579 = vunpack.c.l.b16 %v784
      %v1580 = vunpack.c.l.b16 %v785
      %v1581 = vunpack.c.l.b16 %v786
      %v1582 = vunpack.c.l.b16 %v787
      %v1583 = vunpack.c.l.b16 %v788
      %v1584 = vunpack.c.l.b16 %v789
      %v1585 = vunpack.c.l.b16 %v790
      %v1586 = vunpack.c.l.b16 %v791
      %v1587 = vunpack.c.l.b16 %v792
      %v1588 = vpack.c.b16 %v1573, %v1572
      %v1589 = vpack.c.b16 %v1575, %v1574
      %v1590 = vpack.c.b16 %v1577, %v1576
      %v1591 = vpack.c.b16 %v1579, %v1578
      %v1592 = vpack.c.b16 %v1581, %v1580
      %v1593 = vpack.c.b16 %v1583, %v1582
      %v1594 = vpack.c.b16 %v1585, %v1584
      %v1595 = vpack.c.b16 %v1587, %v1586
      %v1597 = vsel %vm1225, %v1169, 0
      %v1600 = vsel %vm1225, %v1170, 0
      %v1603 = vsel %vm1225, %v1171, 0
      %v1606 = vsel %vm1225, %v1172, 0
      %v1609 = vsel %vm1225, %v1173, 0
      %v1612 = vsel %vm1225, %v1174, 0
      %v1615 = vsel %vm1225, %v1175, 0
      %v1618 = vsel %vm1225, %v1176, 0
      %v1621 = vsel %vm1225, %v1588, 0
      %v1624 = vsel %vm1225, %v1589, 0
      %v1627 = vsel %vm1225, %v1590, 0
      %v1630 = vsel %vm1225, %v1591, 0
      %v1633 = vsel %vm1225, %v1592, 0
      %v1636 = vsel %vm1225, %v1593, 0
      %v1639 = vsel %vm1225, %v1594, 0
      %v1642 = vsel %vm1225, %v1595, 0
      %1644 = vmatprep.subr.bf16.mxu0 0
      %1645 = vmatpush1.bf16.xpose.msra.mxu0 %v1642
      %1646 = vmatprep.subr.bf16.mxu0 0
      %1647 = vmatpush1.bf16.xpose.msra.mxu0 %v1639
      %1648 = vmatprep.subr.bf16.mxu0 0
      %1649 = vmatpush1.bf16.xpose.msra.mxu0 %v1636
      %1650 = vmatprep.subr.bf16.mxu0 0
      %1651 = vmatpush1.bf16.xpose.msra.mxu0 %v1633
      %1652 = vmatprep.subr.bf16.mxu0 0
      %1653 = vmatpush1.bf16.xpose.msra.mxu0 %v1630
      %1654 = vmatprep.subr.bf16.mxu0 0
      %1655 = vmatpush1.bf16.xpose.msra.mxu0 %v1627
      %1656 = vmatprep.subr.bf16.mxu0 0
      %1657 = vmatpush1.bf16.xpose.msra.mxu0 %v1624
      %1658 = vmatprep.subr.bf16.mxu0 0
      %1659 = vmatpush1.bf16.xpose.msra.mxu0 %v1621
      %1660 = vmatprep.subr.bf16.mxu0 0
      %1661 = vmatpush2.bf16.xpose.msra.mxu0 0
      %1662 = vmatprep.subr.bf16.mxu0 0
      %1663 = vmatpush2.bf16.xpose.msra.mxu0 0
      %1664 = vmatprep.subr.bf16.mxu0 0
      %1665 = vmatpush2.bf16.xpose.msra.mxu0 0
      %1666 = vmatprep.subr.bf16.mxu0 0
      %1667 = vmatpush2.bf16.xpose.msra.mxu0 0
      %1668 = vmatprep.subr.bf16.mxu0 0
      %1669 = vmatpush2.bf16.xpose.msra.mxu0 0
      %1670 = vmatprep.subr.bf16.mxu0 0
      %1671 = vmatpush2.bf16.xpose.msra.mxu0 0
      %1672 = vmatprep.subr.bf16.mxu0 0
      %1673 = vmatpush2.bf16.xpose.msra.mxu0 0
      %1674 = vmatprep.subr.bf16.mxu0 0
      %1675 = vmatpush2.bf16.xpose.msra.mxu0 0
      %1676 = vmatprep.mubr.bf16.mxu0 0
      %1677 = vmatmul.mubr.bf16.gmra.mxu0 %v1597
      %v1678 = vpop.f32.mrf.mxu0
      %v1679 = vadd.f32 0.0, %v1678
      %v1680 = vpop.f32.mrf.mxu0
      %v1681 = vpop.f32.mrf.mxu0
      %v1682 = vadd.f32 0.0, %v1681
      %v1683 = vpop.f32.mrf.mxu0
      %1684 = vmatprep.mubr.bf16.mxu0 0
      %1685 = vmatmul.mubr.bf16.gmra.mxu0 %v1600
      %v1686 = vpop.f32.mrf.mxu0
      %v1687 = vadd.f32 0.0, %v1686
      %v1688 = vpop.f32.mrf.mxu0
      %v1689 = vpop.f32.mrf.mxu0
      %v1690 = vadd.f32 0.0, %v1689
      %v1691 = vpop.f32.mrf.mxu0
      %1692 = vmatprep.mubr.bf16.mxu0 0
      %1693 = vmatmul.mubr.bf16.gmra.mxu0 %v1603
      %v1694 = vpop.f32.mrf.mxu0
      %v1695 = vadd.f32 0.0, %v1694
      %v1696 = vpop.f32.mrf.mxu0
      %v1697 = vpop.f32.mrf.mxu0
      %v1698 = vadd.f32 0.0, %v1697
      %v1699 = vpop.f32.mrf.mxu0
      %1700 = vmatprep.mubr.bf16.mxu0 0
      %1701 = vmatmul.mubr.bf16.gmra.mxu0 %v1606
      %v1702 = vpop.f32.mrf.mxu0
      %v1703 = vadd.f32 0.0, %v1702
      %v1704 = vpop.f32.mrf.mxu0
      %v1705 = vpop.f32.mrf.mxu0
      %v1706 = vadd.f32 0.0, %v1705
      %v1707 = vpop.f32.mrf.mxu0
      %1708 = vmatprep.mubr.bf16.mxu0 0
      %1709 = vmatmul.mubr.bf16.gmra.mxu0 %v1609
      %v1710 = vpop.f32.mrf.mxu0
      %v1711 = vadd.f32 0.0, %v1710
      %v1712 = vpop.f32.mrf.mxu0
      %v1713 = vpop.f32.mrf.mxu0
      %v1714 = vadd.f32 0.0, %v1713
      %v1715 = vpop.f32.mrf.mxu0
      %1716 = vmatprep.mubr.bf16.mxu0 0
      %1717 = vmatmul.mubr.bf16.gmra.mxu0 %v1612
      %v1718 = vpop.f32.mrf.mxu0
      %v1719 = vadd.f32 0.0, %v1718
      %v1720 = vpop.f32.mrf.mxu0
      %v1721 = vpop.f32.mrf.mxu0
      %v1722 = vadd.f32 0.0, %v1721
      %v1723 = vpop.f32.mrf.mxu0
      %1724 = vmatprep.mubr.bf16.mxu0 0
      %1725 = vmatmul.mubr.bf16.gmra.mxu0 %v1615
      %v1726 = vpop.f32.mrf.mxu0
      %v1727 = vadd.f32 0.0, %v1726
      %v1728 = vpop.f32.mrf.mxu0
      %v1729 = vpop.f32.mrf.mxu0
      %v1730 = vadd.f32 0.0, %v1729
      %v1731 = vpop.f32.mrf.mxu0
      %1732 = vmatprep.mubr.bf16.mxu0 0
      %1733 = vmatmul.mubr.bf16.gmra.mxu0 %v1618
      %v1734 = vpop.f32.mrf.mxu0
      %v1735 = vadd.f32 0.0, %v1734
      %v1736 = vpop.f32.mrf.mxu0
      %v1737 = vpop.f32.mrf.mxu0
      %v1738 = vadd.f32 0.0, %v1737
      %v1739 = vpop.f32.mrf.mxu0
      %1740 = vdwg.mxu0
      %v1757 = vunpack.c.l.b16 %v793
      %v1758 = vunpack.c.l.b16 %v794
      %v1759 = vunpack.c.l.b16 %v795
      %v1760 = vunpack.c.l.b16 %v796
      %v1761 = vunpack.c.l.b16 %v797
      %v1762 = vunpack.c.l.b16 %v798
      %v1763 = vunpack.c.l.b16 %v799
      %v1764 = vunpack.c.l.b16 %v800
      %v1765 = vunpack.c.l.b16 %v801
      %v1766 = vunpack.c.l.b16 %v802
      %v1767 = vunpack.c.l.b16 %v803
      %v1768 = vunpack.c.l.b16 %v804
      %v1769 = vunpack.c.l.b16 %v805
      %v1770 = vunpack.c.l.b16 %v806
      %v1771 = vunpack.c.l.b16 %v807
      %v1772 = vunpack.c.l.b16 %v808
      %v1773 = vpack.c.b16 %v1758, %v1757
      %v1774 = vpack.c.b16 %v1760, %v1759
      %v1775 = vpack.c.b16 %v1762, %v1761
      %v1776 = vpack.c.b16 %v1764, %v1763
      %v1777 = vpack.c.b16 %v1766, %v1765
      %v1778 = vpack.c.b16 %v1768, %v1767
      %v1779 = vpack.c.b16 %v1770, %v1769
      %v1780 = vpack.c.b16 %v1772, %v1771
      %v1782 = vsel %vm1225, %v1177, 0
      %v1785 = vsel %vm1225, %v1178, 0
      %v1788 = vsel %vm1225, %v1179, 0
      %v1791 = vsel %vm1225, %v1180, 0
      %v1794 = vsel %vm1225, %v1181, 0
      %v1797 = vsel %vm1225, %v1182, 0
      %v1800 = vsel %vm1225, %v1183, 0
      %v1803 = vsel %vm1225, %v1184, 0
      %v1806 = vsel %vm1225, %v1773, 0
      %v1809 = vsel %vm1225, %v1774, 0
      %v1812 = vsel %vm1225, %v1775, 0
      %v1815 = vsel %vm1225, %v1776, 0
      %v1818 = vsel %vm1225, %v1777, 0
      %v1821 = vsel %vm1225, %v1778, 0
      %v1824 = vsel %vm1225, %v1779, 0
      %v1827 = vsel %vm1225, %v1780, 0
      %1829 = vmatprep.subr.bf16.mxu0 0
      %1830 = vmatpush1.bf16.xpose.msra.mxu0 %v1827
      %1831 = vmatprep.subr.bf16.mxu0 0
      %1832 = vmatpush1.bf16.xpose.msra.mxu0 %v1824
      %1833 = vmatprep.subr.bf16.mxu0 0
      %1834 = vmatpush1.bf16.xpose.msra.mxu0 %v1821
      %1835 = vmatprep.subr.bf16.mxu0 0
      %1836 = vmatpush1.bf16.xpose.msra.mxu0 %v1818
      %1837 = vmatprep.subr.bf16.mxu0 0
      %1838 = vmatpush1.bf16.xpose.msra.mxu0 %v1815
      %1839 = vmatprep.subr.bf16.mxu0 0
      %1840 = vmatpush1.bf16.xpose.msra.mxu0 %v1812
      %1841 = vmatprep.subr.bf16.mxu0 0
      %1842 = vmatpush1.bf16.xpose.msra.mxu0 %v1809
      %1843 = vmatprep.subr.bf16.mxu0 0
      %1844 = vmatpush1.bf16.xpose.msra.mxu0 %v1806
      %1845 = vmatprep.subr.bf16.mxu0 0
      %1846 = vmatpush2.bf16.xpose.msra.mxu0 0
      %1847 = vmatprep.subr.bf16.mxu0 0
      %1848 = vmatpush2.bf16.xpose.msra.mxu0 0
      %1849 = vmatprep.subr.bf16.mxu0 0
      %1850 = vmatpush2.bf16.xpose.msra.mxu0 0
      %1851 = vmatprep.subr.bf16.mxu0 0
      %1852 = vmatpush2.bf16.xpose.msra.mxu0 0
      %1853 = vmatprep.subr.bf16.mxu0 0
      %1854 = vmatpush2.bf16.xpose.msra.mxu0 0
      %1855 = vmatprep.subr.bf16.mxu0 0
      %1856 = vmatpush2.bf16.xpose.msra.mxu0 0
      %1857 = vmatprep.subr.bf16.mxu0 0
      %1858 = vmatpush2.bf16.xpose.msra.mxu0 0
      %1859 = vmatprep.subr.bf16.mxu0 0
      %1860 = vmatpush2.bf16.xpose.msra.mxu0 0
      %1861 = vmatprep.mubr.bf16.mxu0 0
      %1862 = vmatmul.mubr.bf16.gmra.mxu0 %v1782
      %v1863 = vpop.f32.mrf.mxu0
      %v1864 = vadd.f32 0.0, %v1863
      %v1865 = vpop.f32.mrf.mxu0
      %v1866 = vpop.f32.mrf.mxu0
      %v1867 = vadd.f32 0.0, %v1866
      %v1868 = vpop.f32.mrf.mxu0
      %1869 = vmatprep.mubr.bf16.mxu0 0
      %1870 = vmatmul.mubr.bf16.gmra.mxu0 %v1785
      %v1871 = vpop.f32.mrf.mxu0
      %v1872 = vadd.f32 0.0, %v1871
      %v1873 = vpop.f32.mrf.mxu0
      %v1874 = vpop.f32.mrf.mxu0
      %v1875 = vadd.f32 0.0, %v1874
      %v1876 = vpop.f32.mrf.mxu0
      %1877 = vmatprep.mubr.bf16.mxu0 0
      %1878 = vmatmul.mubr.bf16.gmra.mxu0 %v1788
      %v1879 = vpop.f32.mrf.mxu0
      %v1880 = vadd.f32 0.0, %v1879
      %v1881 = vpop.f32.mrf.mxu0
      %v1882 = vpop.f32.mrf.mxu0
      %v1883 = vadd.f32 0.0, %v1882
      %v1884 = vpop.f32.mrf.mxu0
      %1885 = vmatprep.mubr.bf16.mxu0 0
      %1886 = vmatmul.mubr.bf16.gmra.mxu0 %v1791
      %v1887 = vpop.f32.mrf.mxu0
      %v1888 = vadd.f32 0.0, %v1887
      %v1889 = vpop.f32.mrf.mxu0
      %v1890 = vpop.f32.mrf.mxu0
      %v1891 = vadd.f32 0.0, %v1890
      %v1892 = vpop.f32.mrf.mxu0
      %1893 = vmatprep.mubr.bf16.mxu0 0
      %1894 = vmatmul.mubr.bf16.gmra.mxu0 %v1794
      %v1895 = vpop.f32.mrf.mxu0
      %v1896 = vadd.f32 0.0, %v1895
      %v1897 = vpop.f32.mrf.mxu0
      %v1898 = vpop.f32.mrf.mxu0
      %v1899 = vadd.f32 0.0, %v1898
      %v1900 = vpop.f32.mrf.mxu0
      %1901 = vmatprep.mubr.bf16.mxu0 0
      %1902 = vmatmul.mubr.bf16.gmra.mxu0 %v1797
      %v1903 = vpop.f32.mrf.mxu0
      %v1904 = vadd.f32 0.0, %v1903
      %v1905 = vpop.f32.mrf.mxu0
      %v1906 = vpop.f32.mrf.mxu0
      %v1907 = vadd.f32 0.0, %v1906
      %v1908 = vpop.f32.mrf.mxu0
      %1909 = vmatprep.mubr.bf16.mxu0 0
      %1910 = vmatmul.mubr.bf16.gmra.mxu0 %v1800
      %v1911 = vpop.f32.mrf.mxu0
      %v1912 = vadd.f32 0.0, %v1911
      %v1913 = vpop.f32.mrf.mxu0
      %v1914 = vpop.f32.mrf.mxu0
      %v1915 = vadd.f32 0.0, %v1914
      %v1916 = vpop.f32.mrf.mxu0
      %1917 = vmatprep.mubr.bf16.mxu0 0
      %1918 = vmatmul.mubr.bf16.gmra.mxu0 %v1803
      %v1919 = vpop.f32.mrf.mxu0
      %v1920 = vadd.f32 0.0, %v1919
      %v1921 = vpop.f32.mrf.mxu0
      %v1922 = vpop.f32.mrf.mxu0
      %v1923 = vadd.f32 0.0, %v1922
      %v1924 = vpop.f32.mrf.mxu0
      %1925 = vdwg.mxu0
      %s1927 = sor.u32 256, 1
      %1928 = vrot.lane.b32.xlu0 %v1309, %s1927
      %v1929 = vpop.permute.xlu0 %1928
      %s1931 = sor.u32 256, 9
      %1932 = vrot.lane.b32.xlu0 %v1312, %s1931
      %v1933 = vpop.permute.xlu0 %1932
      %s1935 = sor.u32 256, 17
      %1936 = vrot.lane.b32.xlu0 %v1317, %s1935
      %v1937 = vpop.permute.xlu0 %1936
      %s1939 = sor.u32 256, 25
      %1940 = vrot.lane.b32.xlu0 %v1320, %s1939
      %v1941 = vpop.permute.xlu0 %1940
      %s1943 = sor.u32 256, 33
      %1944 = vrot.lane.b32.xlu0 %v1325, %s1943
      %v1945 = vpop.permute.xlu0 %1944
      %s1947 = sor.u32 256, 41
      %1948 = vrot.lane.b32.xlu0 %v1328, %s1947
      %v1949 = vpop.permute.xlu0 %1948
      %s1951 = sor.u32 256, 49
      %1952 = vrot.lane.b32.xlu0 %v1333, %s1951
      %v1953 = vpop.permute.xlu0 %1952
      %s1955 = sor.u32 256, 57
      %1956 = vrot.lane.b32.xlu0 %v1336, %s1955
      %v1957 = vpop.permute.xlu0 %1956
      %s1959 = sor.u32 256, 65
      %1960 = vrot.lane.b32.xlu0 %v1341, %s1959
      %v1961 = vpop.permute.xlu0 %1960
      %s1963 = sor.u32 256, 73
      %1964 = vrot.lane.b32.xlu0 %v1344, %s1963
      %v1965 = vpop.permute.xlu0 %1964
      %s1967 = sor.u32 256, 81
      %1968 = vrot.lane.b32.xlu0 %v1349, %s1967
      %v1969 = vpop.permute.xlu0 %1968
      %s1971 = sor.u32 256, 89
      %1972 = vrot.lane.b32.xlu0 %v1352, %s1971
      %v1973 = vpop.permute.xlu0 %1972
      %s1975 = sor.u32 256, 97
      %1976 = vrot.lane.b32.xlu0 %v1357, %s1975
      %v1977 = vpop.permute.xlu0 %1976
      %s1979 = sor.u32 256, 105
      %1980 = vrot.lane.b32.xlu0 %v1360, %s1979
      %v1981 = vpop.permute.xlu0 %1980
      %s1983 = sor.u32 256, 113
      %1984 = vrot.lane.b32.xlu0 %v1365, %s1983
      %v1985 = vpop.permute.xlu0 %1984
      %s1987 = sor.u32 256, 121
      %1988 = vrot.lane.b32.xlu0 %v1368, %s1987
      %v1989 = vpop.permute.xlu0 %1988
      %s1991 = sor.u32 256, 1
      %1992 = vrot.lane.b32.xlu0 %v1494, %s1991
      %v1993 = vpop.permute.xlu0 %1992
      %s1995 = sor.u32 256, 9
      %1996 = vrot.lane.b32.xlu0 %v1497, %s1995
      %v1997 = vpop.permute.xlu0 %1996
      %s1999 = sor.u32 256, 17
      %2000 = vrot.lane.b32.xlu0 %v1502, %s1999
      %v2001 = vpop.permute.xlu0 %2000
      %s2003 = sor.u32 256, 25
      %2004 = vrot.lane.b32.xlu0 %v1505, %s2003
      %v2005 = vpop.permute.xlu0 %2004
      %s2007 = sor.u32 256, 33
      %2008 = vrot.lane.b32.xlu0 %v1510, %s2007
      %v2009 = vpop.permute.xlu0 %2008
      %s2011 = sor.u32 256, 41
      %2012 = vrot.lane.b32.xlu0 %v1513, %s2011
      %v2013 = vpop.permute.xlu0 %2012
      %s2015 = sor.u32 256, 49
      %2016 = vrot.lane.b32.xlu0 %v1518, %s2015
      %v2017 = vpop.permute.xlu0 %2016
      %s2019 = sor.u32 256, 57
      %2020 = vrot.lane.b32.xlu0 %v1521, %s2019
      %v2021 = vpop.permute.xlu0 %2020
      %s2023 = sor.u32 256, 65
      %2024 = vrot.lane.b32.xlu0 %v1526, %s2023
      %v2025 = vpop.permute.xlu0 %2024
      %s2027 = sor.u32 256, 73
      %2028 = vrot.lane.b32.xlu0 %v1529, %s2027
      %v2029 = vpop.permute.xlu0 %2028
      %s2031 = sor.u32 256, 81
      %2032 = vrot.lane.b32.xlu0 %v1534, %s2031
      %v2033 = vpop.permute.xlu0 %2032
      %s2035 = sor.u32 256, 89
      %2036 = vrot.lane.b32.xlu0 %v1537, %s2035
      %v2037 = vpop.permute.xlu0 %2036
      %s2039 = sor.u32 256, 97
      %2040 = vrot.lane.b32.xlu0 %v1542, %s2039
      %v2041 = vpop.permute.xlu0 %2040
      %s2043 = sor.u32 256, 105
      %2044 = vrot.lane.b32.xlu0 %v1545, %s2043
      %v2045 = vpop.permute.xlu0 %2044
      %s2047 = sor.u32 256, 113
      %2048 = vrot.lane.b32.xlu0 %v1550, %s2047
      %v2049 = vpop.permute.xlu0 %2048
      %s2051 = sor.u32 256, 121
      %2052 = vrot.lane.b32.xlu0 %v1553, %s2051
      %v2053 = vpop.permute.xlu0 %2052
      %s2055 = sor.u32 256, 1
      %2056 = vrot.lane.b32.xlu0 %v1679, %s2055
      %v2057 = vpop.permute.xlu0 %2056
      %s2059 = sor.u32 256, 9
      %2060 = vrot.lane.b32.xlu0 %v1682, %s2059
      %v2061 = vpop.permute.xlu0 %2060
      %s2063 = sor.u32 256, 17
      %2064 = vrot.lane.b32.xlu0 %v1687, %s2063
      %v2065 = vpop.permute.xlu0 %2064
      %s2067 = sor.u32 256, 25
      %2068 = vrot.lane.b32.xlu0 %v1690, %s2067
      %v2069 = vpop.permute.xlu0 %2068
      %s2071 = sor.u32 256, 33
      %2072 = vrot.lane.b32.xlu0 %v1695, %s2071
      %v2073 = vpop.permute.xlu0 %2072
      %s2075 = sor.u32 256, 41
      %2076 = vrot.lane.b32.xlu0 %v1698, %s2075
      %v2077 = vpop.permute.xlu0 %2076
      %s2079 = sor.u32 256, 49
      %2080 = vrot.lane.b32.xlu0 %v1703, %s2079
      %v2081 = vpop.permute.xlu0 %2080
      %s2083 = sor.u32 256, 57
      %2084 = vrot.lane.b32.xlu0 %v1706, %s2083
      %v2085 = vpop.permute.xlu0 %2084
      %s2087 = sor.u32 256, 65
      %2088 = vrot.lane.b32.xlu0 %v1711, %s2087
      %v2089 = vpop.permute.xlu0 %2088
      %s2091 = sor.u32 256, 73
      %2092 = vrot.lane.b32.xlu0 %v1714, %s2091
      %v2093 = vpop.permute.xlu0 %2092
      %s2095 = sor.u32 256, 81
      %2096 = vrot.lane.b32.xlu0 %v1719, %s2095
      %v2097 = vpop.permute.xlu0 %2096
      %s2099 = sor.u32 256, 89
      %2100 = vrot.lane.b32.xlu0 %v1722, %s2099
      %v2101 = vpop.permute.xlu0 %2100
      %s2103 = sor.u32 256, 97
      %2104 = vrot.lane.b32.xlu0 %v1727, %s2103
      %v2105 = vpop.permute.xlu0 %2104
      %s2107 = sor.u32 256, 105
      %2108 = vrot.lane.b32.xlu0 %v1730, %s2107
      %v2109 = vpop.permute.xlu0 %2108
      %s2111 = sor.u32 256, 113
      %2112 = vrot.lane.b32.xlu0 %v1735, %s2111
      %v2113 = vpop.permute.xlu0 %2112
      %s2115 = sor.u32 256, 121
      %2116 = vrot.lane.b32.xlu0 %v1738, %s2115
      %v2117 = vpop.permute.xlu0 %2116
      %s2119 = sor.u32 256, 1
      %2120 = vrot.lane.b32.xlu0 %v1864, %s2119
      %v2121 = vpop.permute.xlu0 %2120
      %s2123 = sor.u32 256, 9
      %2124 = vrot.lane.b32.xlu0 %v1867, %s2123
      %v2125 = vpop.permute.xlu0 %2124
      %s2127 = sor.u32 256, 17
      %2128 = vrot.lane.b32.xlu0 %v1872, %s2127
      %v2129 = vpop.permute.xlu0 %2128
      %s2131 = sor.u32 256, 25
      %2132 = vrot.lane.b32.xlu0 %v1875, %s2131
      %v2133 = vpop.permute.xlu0 %2132
      %s2135 = sor.u32 256, 33
      %2136 = vrot.lane.b32.xlu0 %v1880, %s2135
      %v2137 = vpop.permute.xlu0 %2136
      %s2139 = sor.u32 256, 41
      %2140 = vrot.lane.b32.xlu0 %v1883, %s2139
      %v2141 = vpop.permute.xlu0 %2140
      %s2143 = sor.u32 256, 49
      %2144 = vrot.lane.b32.xlu0 %v1888, %s2143
      %v2145 = vpop.permute.xlu0 %2144
      %s2147 = sor.u32 256, 57
      %2148 = vrot.lane.b32.xlu0 %v1891, %s2147
      %v2149 = vpop.permute.xlu0 %2148
      %s2151 = sor.u32 256, 65
      %2152 = vrot.lane.b32.xlu0 %v1896, %s2151
      %v2153 = vpop.permute.xlu0 %2152
      %s2155 = sor.u32 256, 73
      %2156 = vrot.lane.b32.xlu0 %v1899, %s2155
      %v2157 = vpop.permute.xlu0 %2156
      %s2159 = sor.u32 256, 81
      %2160 = vrot.lane.b32.xlu0 %v1904, %s2159
      %v2161 = vpop.permute.xlu0 %2160
      %s2163 = sor.u32 256, 89
      %2164 = vrot.lane.b32.xlu0 %v1907, %s2163
      %v2165 = vpop.permute.xlu0 %2164
      %s2167 = sor.u32 256, 97
      %2168 = vrot.lane.b32.xlu0 %v1912, %s2167
      %v2169 = vpop.permute.xlu0 %2168
      %s2171 = sor.u32 256, 105
      %2172 = vrot.lane.b32.xlu0 %v1915, %s2171
      %v2173 = vpop.permute.xlu0 %2172
      %s2175 = sor.u32 256, 113
      %2176 = vrot.lane.b32.xlu0 %v1920, %s2175
      %v2177 = vpop.permute.xlu0 %2176
      %s2179 = sor.u32 256, 121
      %2180 = vrot.lane.b32.xlu0 %v1923, %s2179
      %v2181 = vpop.permute.xlu0 %2180
      %v2182 = vlaneseq
      %v2183 = vshrl.u32 %v2182, 7
      %v2184 = vadd.s32 %v2183, 8
      %v2185 = vadd.s32 %v2183, 16
      %v2186 = vadd.s32 %v2183, 24
      %v2187 = vadd.s32 %v2183, 32
      %v2188 = vadd.s32 %v2183, 40
      %v2189 = vadd.s32 %v2183, 48
      %v2190 = vadd.s32 %v2183, 56
      %v2191 = vadd.s32 %v2183, 64
      %v2192 = vadd.s32 %v2183, 72
      %v2193 = vadd.s32 %v2183, 80
      %v2194 = vadd.s32 %v2183, 88
      %v2195 = vadd.s32 %v2183, 96
      %v2196 = vadd.s32 %v2183, 104
      %v2197 = vadd.s32 %v2183, 112
      %v2198 = vadd.s32 %v2183, 120
      %v2199 = vlaneseq
      %v2200 = vand.u32 %v2199, 127
      %vm2201 = vcmp.le.s32.totalorder %v2200, %v2183
      %vm2202 = vcmp.le.s32.totalorder %v2200, %v2184
      %vm2203 = vcmp.le.s32.totalorder %v2200, %v2185
      %vm2204 = vcmp.le.s32.totalorder %v2200, %v2186
      %vm2205 = vcmp.le.s32.totalorder %v2200, %v2187
      %vm2206 = vcmp.le.s32.totalorder %v2200, %v2188
      %vm2207 = vcmp.le.s32.totalorder %v2200, %v2189
      %vm2208 = vcmp.le.s32.totalorder %v2200, %v2190
      %vm2209 = vcmp.le.s32.totalorder %v2200, %v2191
      %vm2210 = vcmp.le.s32.totalorder %v2200, %v2192
      %vm2211 = vcmp.le.s32.totalorder %v2200, %v2193
      %vm2212 = vcmp.le.s32.totalorder %v2200, %v2194
      %vm2213 = vcmp.le.s32.totalorder %v2200, %v2195
      %vm2214 = vcmp.le.s32.totalorder %v2200, %v2196
      %vm2215 = vcmp.le.s32.totalorder %v2200, %v2197
      %vm2216 = vcmp.le.s32.totalorder %v2200, %v2198
      %v2217 = vsel %vm2201, 1, 0
      %v2218 = vsel %vm2202, 1, 0
      %v2219 = vsel %vm2203, 1, 0
      %v2220 = vsel %vm2204, 1, 0
      %v2221 = vsel %vm2205, 1, 0
      %v2222 = vsel %vm2206, 1, 0
      %v2223 = vsel %vm2207, 1, 0
      %v2224 = vsel %vm2208, 1, 0
      %v2225 = vsel %vm2209, 1, 0
      %v2226 = vsel %vm2210, 1, 0
      %v2227 = vsel %vm2211, 1, 0
      %v2228 = vsel %vm2212, 1, 0
      %v2229 = vsel %vm2213, 1, 0
      %v2230 = vsel %vm2214, 1, 0
      %v2231 = vsel %vm2215, 1, 0
      %v2232 = vsel %vm2216, 1, 0
      %vm2233 = vcmp.eq.s32.totalorder %v2217, 1
      %vm2234 = vcmp.eq.s32.totalorder %v2218, 1
      %vm2235 = vcmp.eq.s32.totalorder %v2219, 1
      %vm2236 = vcmp.eq.s32.totalorder %v2220, 1
      %vm2237 = vcmp.eq.s32.totalorder %v2221, 1
      %vm2238 = vcmp.eq.s32.totalorder %v2222, 1
      %vm2239 = vcmp.eq.s32.totalorder %v2223, 1
      %vm2240 = vcmp.eq.s32.totalorder %v2224, 1
      %vm2241 = vcmp.eq.s32.totalorder %v2225, 1
      %vm2242 = vcmp.eq.s32.totalorder %v2226, 1
      %vm2243 = vcmp.eq.s32.totalorder %v2227, 1
      %vm2244 = vcmp.eq.s32.totalorder %v2228, 1
      %vm2245 = vcmp.eq.s32.totalorder %v2229, 1
      %vm2246 = vcmp.eq.s32.totalorder %v2230, 1
      %vm2247 = vcmp.eq.s32.totalorder %v2231, 1
      %vm2248 = vcmp.eq.s32.totalorder %v2232, 1
      %v2249 = vsel %vm2233, %v1929, 0.0
      %v2250 = vsel %vm2234, %v1933, 0.0
      %v2251 = vsel %vm2235, %v1937, 0.0
      %v2252 = vsel %vm2236, %v1941, 0.0
      %v2253 = vsel %vm2237, %v1945, 0.0
      %v2254 = vsel %vm2238, %v1949, 0.0
      %v2255 = vsel %vm2239, %v1953, 0.0
      %v2256 = vsel %vm2240, %v1957, 0.0
      %v2257 = vsel %vm2241, %v1961, 0.0
      %v2258 = vsel %vm2242, %v1965, 0.0
      %v2259 = vsel %vm2243, %v1969, 0.0
      %v2260 = vsel %vm2244, %v1973, 0.0
      %v2261 = vsel %vm2245, %v1977, 0.0
      %v2262 = vsel %vm2246, %v1981, 0.0
      %v2263 = vsel %vm2247, %v1985, 0.0
      %v2264 = vsel %vm2248, %v1989, 0.0
      %v2265 = vsel %vm2233, %v1993, 0.0
      %v2266 = vsel %vm2234, %v1997, 0.0
      %v2267 = vsel %vm2235, %v2001, 0.0
      %v2268 = vsel %vm2236, %v2005, 0.0
      %v2269 = vsel %vm2237, %v2009, 0.0
      %v2270 = vsel %vm2238, %v2013, 0.0
      %v2271 = vsel %vm2239, %v2017, 0.0
      %v2272 = vsel %vm2240, %v2021, 0.0
      %v2273 = vsel %vm2241, %v2025, 0.0
      %v2274 = vsel %vm2242, %v2029, 0.0
      %v2275 = vsel %vm2243, %v2033, 0.0
      %v2276 = vsel %vm2244, %v2037, 0.0
      %v2277 = vsel %vm2245, %v2041, 0.0
      %v2278 = vsel %vm2246, %v2045, 0.0
      %v2279 = vsel %vm2247, %v2049, 0.0
      %v2280 = vsel %vm2248, %v2053, 0.0
      %v2281 = vsel %vm2233, %v2057, 0.0
      %v2282 = vsel %vm2234, %v2061, 0.0
      %v2283 = vsel %vm2235, %v2065, 0.0
      %v2284 = vsel %vm2236, %v2069, 0.0
      %v2285 = vsel %vm2237, %v2073, 0.0
      %v2286 = vsel %vm2238, %v2077, 0.0
      %v2287 = vsel %vm2239, %v2081, 0.0
      %v2288 = vsel %vm2240, %v2085, 0.0
      %v2289 = vsel %vm2241, %v2089, 0.0
      %v2290 = vsel %vm2242, %v2093, 0.0
      %v2291 = vsel %vm2243, %v2097, 0.0
      %v2292 = vsel %vm2244, %v2101, 0.0
      %v2293 = vsel %vm2245, %v2105, 0.0
      %v2294 = vsel %vm2246, %v2109, 0.0
      %v2295 = vsel %vm2247, %v2113, 0.0
      %v2296 = vsel %vm2248, %v2117, 0.0
      %v2297 = vsel %vm2233, %v2121, 0.0
      %v2298 = vsel %vm2234, %v2125, 0.0
      %v2299 = vsel %vm2235, %v2129, 0.0
      %v2300 = vsel %vm2236, %v2133, 0.0
      %v2301 = vsel %vm2237, %v2137, 0.0
      %v2302 = vsel %vm2238, %v2141, 0.0
      %v2303 = vsel %vm2239, %v2145, 0.0
      %v2304 = vsel %vm2240, %v2149, 0.0
      %v2305 = vsel %vm2241, %v2153, 0.0
      %v2306 = vsel %vm2242, %v2157, 0.0
      %v2307 = vsel %vm2243, %v2161, 0.0
      %v2308 = vsel %vm2244, %v2165, 0.0
      %v2309 = vsel %vm2245, %v2169, 0.0
      %v2310 = vsel %vm2246, %v2173, 0.0
      %v2311 = vsel %vm2247, %v2177, 0.0
      %v2312 = vsel %vm2248, %v2181, 0.0
      %v2329 = vunpack.c.l.b16 %v617
      %v2330 = vunpack.c.l.b16 %v618
      %v2331 = vunpack.c.l.b16 %v619
      %v2332 = vunpack.c.l.b16 %v620
      %v2333 = vunpack.c.l.b16 %v621
      %v2334 = vunpack.c.l.b16 %v622
      %v2335 = vunpack.c.l.b16 %v623
      %v2336 = vunpack.c.l.b16 %v624
      %v2337 = vunpack.c.l.b16 %v625
      %v2338 = vunpack.c.l.b16 %v626
      %v2339 = vunpack.c.l.b16 %v627
      %v2340 = vunpack.c.l.b16 %v628
      %v2341 = vunpack.c.l.b16 %v629
      %v2342 = vunpack.c.l.b16 %v630
      %v2343 = vunpack.c.l.b16 %v631
      %v2344 = vunpack.c.l.b16 %v632
      %v2345 = vpack.c.b16 %v2330, %v2329
      %v2346 = vpack.c.b16 %v2332, %v2331
      %v2347 = vpack.c.b16 %v2334, %v2333
      %v2348 = vpack.c.b16 %v2336, %v2335
      %v2349 = vpack.c.b16 %v2338, %v2337
      %v2350 = vpack.c.b16 %v2340, %v2339
      %v2351 = vpack.c.b16 %v2342, %v2341
      %v2352 = vpack.c.b16 %v2344, %v2343
      %v2354 = vsel %vm1225, %v965, 0
      %v2357 = vsel %vm1225, %v966, 0
      %v2360 = vsel %vm1225, %v967, 0
      %v2363 = vsel %vm1225, %v968, 0
      %v2366 = vsel %vm1225, %v969, 0
      %v2369 = vsel %vm1225, %v970, 0
      %v2372 = vsel %vm1225, %v971, 0
      %v2375 = vsel %vm1225, %v972, 0
      %v2378 = vsel %vm1225, %v2345, 0
      %v2381 = vsel %vm1225, %v2346, 0
      %v2384 = vsel %vm1225, %v2347, 0
      %v2387 = vsel %vm1225, %v2348, 0
      %v2390 = vsel %vm1225, %v2349, 0
      %v2393 = vsel %vm1225, %v2350, 0
      %v2396 = vsel %vm1225, %v2351, 0
      %v2399 = vsel %vm1225, %v2352, 0
      %2401 = vmatprep.subr.bf16.mxu0 0
      %2402 = vmatpush1.bf16.xpose.msra.mxu0 %v2399
      %2403 = vmatprep.subr.bf16.mxu0 0
      %2404 = vmatpush1.bf16.xpose.msra.mxu0 %v2396
      %2405 = vmatprep.subr.bf16.mxu0 0
      %2406 = vmatpush1.bf16.xpose.msra.mxu0 %v2393
      %2407 = vmatprep.subr.bf16.mxu0 0
      %2408 = vmatpush1.bf16.xpose.msra.mxu0 %v2390
      %2409 = vmatprep.subr.bf16.mxu0 0
      %2410 = vmatpush1.bf16.xpose.msra.mxu0 %v2387
      %2411 = vmatprep.subr.bf16.mxu0 0
      %2412 = vmatpush1.bf16.xpose.msra.mxu0 %v2384
      %2413 = vmatprep.subr.bf16.mxu0 0
      %2414 = vmatpush1.bf16.xpose.msra.mxu0 %v2381
      %2415 = vmatprep.subr.bf16.mxu0 0
      %2416 = vmatpush1.bf16.xpose.msra.mxu0 %v2378
      %2417 = vmatprep.subr.bf16.mxu0 0
      %2418 = vmatpush2.bf16.xpose.msra.mxu0 0
      %2419 = vmatprep.subr.bf16.mxu0 0
      %2420 = vmatpush2.bf16.xpose.msra.mxu0 0
      %2421 = vmatprep.subr.bf16.mxu0 0
      %2422 = vmatpush2.bf16.xpose.msra.mxu0 0
      %2423 = vmatprep.subr.bf16.mxu0 0
      %2424 = vmatpush2.bf16.xpose.msra.mxu0 0
      %2425 = vmatprep.subr.bf16.mxu0 0
      %2426 = vmatpush2.bf16.xpose.msra.mxu0 0
      %2427 = vmatprep.subr.bf16.mxu0 0
      %2428 = vmatpush2.bf16.xpose.msra.mxu0 0
      %2429 = vmatprep.subr.bf16.mxu0 0
      %2430 = vmatpush2.bf16.xpose.msra.mxu0 0
      %2431 = vmatprep.subr.bf16.mxu0 0
      %2432 = vmatpush2.bf16.xpose.msra.mxu0 0
      %2433 = vmatprep.mubr.bf16.mxu0 0
      %2434 = vmatmul.mubr.bf16.gmra.mxu0 %v2354
      %v2435 = vpop.f32.mrf.mxu0
      %v2436 = vadd.f32 %v2249, %v2435
      %v2437 = vpop.f32.mrf.mxu0
      %v2438 = vpop.f32.mrf.mxu0
      %v2439 = vadd.f32 %v2250, %v2438
      %v2440 = vpop.f32.mrf.mxu0
      %2441 = vmatprep.mubr.bf16.mxu0 0
      %2442 = vmatmul.mubr.bf16.gmra.mxu0 %v2357
      %v2443 = vpop.f32.mrf.mxu0
      %v2444 = vadd.f32 %v2251, %v2443
      %v2445 = vpop.f32.mrf.mxu0
      %v2446 = vpop.f32.mrf.mxu0
      %v2447 = vadd.f32 %v2252, %v2446
      %v2448 = vpop.f32.mrf.mxu0
      %2449 = vmatprep.mubr.bf16.mxu0 0
      %2450 = vmatmul.mubr.bf16.gmra.mxu0 %v2360
      %v2451 = vpop.f32.mrf.mxu0
      %v2452 = vadd.f32 %v2253, %v2451
      %v2453 = vpop.f32.mrf.mxu0
      %v2454 = vpop.f32.mrf.mxu0
      %v2455 = vadd.f32 %v2254, %v2454
      %v2456 = vpop.f32.mrf.mxu0
      %2457 = vmatprep.mubr.bf16.mxu0 0
      %2458 = vmatmul.mubr.bf16.gmra.mxu0 %v2363
      %v2459 = vpop.f32.mrf.mxu0
      %v2460 = vadd.f32 %v2255, %v2459
      %v2461 = vpop.f32.mrf.mxu0
      %v2462 = vpop.f32.mrf.mxu0
      %v2463 = vadd.f32 %v2256, %v2462
      %v2464 = vpop.f32.mrf.mxu0
      %2465 = vmatprep.mubr.bf16.mxu0 0
      %2466 = vmatmul.mubr.bf16.gmra.mxu0 %v2366
      %v2467 = vpop.f32.mrf.mxu0
      %v2468 = vadd.f32 %v2257, %v2467
      %v2469 = vpop.f32.mrf.mxu0
      %v2470 = vpop.f32.mrf.mxu0
      %v2471 = vadd.f32 %v2258, %v2470
      %v2472 = vpop.f32.mrf.mxu0
      %2473 = vmatprep.mubr.bf16.mxu0 0
      %2474 = vmatmul.mubr.bf16.gmra.mxu0 %v2369
      %v2475 = vpop.f32.mrf.mxu0
      %v2476 = vadd.f32 %v2259, %v2475
      %v2477 = vpop.f32.mrf.mxu0
      %v2478 = vpop.f32.mrf.mxu0
      %v2479 = vadd.f32 %v2260, %v2478
      %v2480 = vpop.f32.mrf.mxu0
      %2481 = vmatprep.mubr.bf16.mxu0 0
      %2482 = vmatmul.mubr.bf16.gmra.mxu0 %v2372
      %v2483 = vpop.f32.mrf.mxu0
      %v2484 = vadd.f32 %v2261, %v2483
      %v2485 = vpop.f32.mrf.mxu0
      %v2486 = vpop.f32.mrf.mxu0
      %v2487 = vadd.f32 %v2262, %v2486
      %v2488 = vpop.f32.mrf.mxu0
      %2489 = vmatprep.mubr.bf16.mxu0 0
      %2490 = vmatmul.mubr.bf16.gmra.mxu0 %v2375
      %v2491 = vpop.f32.mrf.mxu0
      %v2492 = vadd.f32 %v2263, %v2491
      %v2493 = vpop.f32.mrf.mxu0
      %v2494 = vpop.f32.mrf.mxu0
      %v2495 = vadd.f32 %v2264, %v2494
      %v2496 = vpop.f32.mrf.mxu0
      %2497 = vdwg.mxu0
      %v2514 = vunpack.c.l.b16 %v633
      %v2515 = vunpack.c.l.b16 %v634
      %v2516 = vunpack.c.l.b16 %v635
      %v2517 = vunpack.c.l.b16 %v636
      %v2518 = vunpack.c.l.b16 %v637
      %v2519 = vunpack.c.l.b16 %v638
      %v2520 = vunpack.c.l.b16 %v639
      %v2521 = vunpack.c.l.b16 %v640
      %v2522 = vunpack.c.l.b16 %v641
      %v2523 = vunpack.c.l.b16 %v642
      %v2524 = vunpack.c.l.b16 %v643
      %v2525 = vunpack.c.l.b16 %v644
      %v2526 = vunpack.c.l.b16 %v645
      %v2527 = vunpack.c.l.b16 %v646
      %v2528 = vunpack.c.l.b16 %v647
      %v2529 = vunpack.c.l.b16 %v648
      %v2530 = vpack.c.b16 %v2515, %v2514
      %v2531 = vpack.c.b16 %v2517, %v2516
      %v2532 = vpack.c.b16 %v2519, %v2518
      %v2533 = vpack.c.b16 %v2521, %v2520
      %v2534 = vpack.c.b16 %v2523, %v2522
      %v2535 = vpack.c.b16 %v2525, %v2524
      %v2536 = vpack.c.b16 %v2527, %v2526
      %v2537 = vpack.c.b16 %v2529, %v2528
      %v2539 = vsel %vm1225, %v973, 0
      %v2542 = vsel %vm1225, %v974, 0
      %v2545 = vsel %vm1225, %v975, 0
      %v2548 = vsel %vm1225, %v976, 0
      %v2551 = vsel %vm1225, %v977, 0
      %v2554 = vsel %vm1225, %v978, 0
      %v2557 = vsel %vm1225, %v979, 0
      %v2560 = vsel %vm1225, %v980, 0
      %v2563 = vsel %vm1225, %v2530, 0
      %v2566 = vsel %vm1225, %v2531, 0
      %v2569 = vsel %vm1225, %v2532, 0
      %v2572 = vsel %vm1225, %v2533, 0
      %v2575 = vsel %vm1225, %v2534, 0
      %v2578 = vsel %vm1225, %v2535, 0
      %v2581 = vsel %vm1225, %v2536, 0
      %v2584 = vsel %vm1225, %v2537, 0
      %2586 = vmatprep.subr.bf16.mxu0 0
      %2587 = vmatpush1.bf16.xpose.msra.mxu0 %v2584
      %2588 = vmatprep.subr.bf16.mxu0 0
      %2589 = vmatpush1.bf16.xpose.msra.mxu0 %v2581
      %2590 = vmatprep.subr.bf16.mxu0 0
      %2591 = vmatpush1.bf16.xpose.msra.mxu0 %v2578
      %2592 = vmatprep.subr.bf16.mxu0 0
      %2593 = vmatpush1.bf16.xpose.msra.mxu0 %v2575
      %2594 = vmatprep.subr.bf16.mxu0 0
      %2595 = vmatpush1.bf16.xpose.msra.mxu0 %v2572
      %2596 = vmatprep.subr.bf16.mxu0 0
      %2597 = vmatpush1.bf16.xpose.msra.mxu0 %v2569
      %2598 = vmatprep.subr.bf16.mxu0 0
      %2599 = vmatpush1.bf16.xpose.msra.mxu0 %v2566
      %2600 = vmatprep.subr.bf16.mxu0 0
      %2601 = vmatpush1.bf16.xpose.msra.mxu0 %v2563
      %2602 = vmatprep.subr.bf16.mxu0 0
      %2603 = vmatpush2.bf16.xpose.msra.mxu0 0
      %2604 = vmatprep.subr.bf16.mxu0 0
      %2605 = vmatpush2.bf16.xpose.msra.mxu0 0
      %2606 = vmatprep.subr.bf16.mxu0 0
      %2607 = vmatpush2.bf16.xpose.msra.mxu0 0
      %2608 = vmatprep.subr.bf16.mxu0 0
      %2609 = vmatpush2.bf16.xpose.msra.mxu0 0
      %2610 = vmatprep.subr.bf16.mxu0 0
      %2611 = vmatpush2.bf16.xpose.msra.mxu0 0
      %2612 = vmatprep.subr.bf16.mxu0 0
      %2613 = vmatpush2.bf16.xpose.msra.mxu0 0
      %2614 = vmatprep.subr.bf16.mxu0 0
      %2615 = vmatpush2.bf16.xpose.msra.mxu0 0
      %2616 = vmatprep.subr.bf16.mxu0 0
      %2617 = vmatpush2.bf16.xpose.msra.mxu0 0
      %2618 = vmatprep.mubr.bf16.mxu0 0
      %2619 = vmatmul.mubr.bf16.gmra.mxu0 %v2539
      %v2620 = vpop.f32.mrf.mxu0
      %v2621 = vadd.f32 %v2265, %v2620
      %v2622 = vpop.f32.mrf.mxu0
      %v2623 = vpop.f32.mrf.mxu0
      %v2624 = vadd.f32 %v2266, %v2623
      %v2625 = vpop.f32.mrf.mxu0
      %2626 = vmatprep.mubr.bf16.mxu0 0
      %2627 = vmatmul.mubr.bf16.gmra.mxu0 %v2542
      %v2628 = vpop.f32.mrf.mxu0
      %v2629 = vadd.f32 %v2267, %v2628
      %v2630 = vpop.f32.mrf.mxu0
      %v2631 = vpop.f32.mrf.mxu0
      %v2632 = vadd.f32 %v2268, %v2631
      %v2633 = vpop.f32.mrf.mxu0
      %2634 = vmatprep.mubr.bf16.mxu0 0
      %2635 = vmatmul.mubr.bf16.gmra.mxu0 %v2545
      %v2636 = vpop.f32.mrf.mxu0
      %v2637 = vadd.f32 %v2269, %v2636
      %v2638 = vpop.f32.mrf.mxu0
      %v2639 = vpop.f32.mrf.mxu0
      %v2640 = vadd.f32 %v2270, %v2639
      %v2641 = vpop.f32.mrf.mxu0
      %2642 = vmatprep.mubr.bf16.mxu0 0
      %2643 = vmatmul.mubr.bf16.gmra.mxu0 %v2548
      %v2644 = vpop.f32.mrf.mxu0
      %v2645 = vadd.f32 %v2271, %v2644
      %v2646 = vpop.f32.mrf.mxu0
      %v2647 = vpop.f32.mrf.mxu0
      %v2648 = vadd.f32 %v2272, %v2647
      %v2649 = vpop.f32.mrf.mxu0
      %2650 = vmatprep.mubr.bf16.mxu0 0
      %2651 = vmatmul.mubr.bf16.gmra.mxu0 %v2551
      %v2652 = vpop.f32.mrf.mxu0
      %v2653 = vadd.f32 %v2273, %v2652
      %v2654 = vpop.f32.mrf.mxu0
      %v2655 = vpop.f32.mrf.mxu0
      %v2656 = vadd.f32 %v2274, %v2655
      %v2657 = vpop.f32.mrf.mxu0
      %2658 = vmatprep.mubr.bf16.mxu0 0
      %2659 = vmatmul.mubr.bf16.gmra.mxu0 %v2554
      %v2660 = vpop.f32.mrf.mxu0
      %v2661 = vadd.f32 %v2275, %v2660
      %v2662 = vpop.f32.mrf.mxu0
      %v2663 = vpop.f32.mrf.mxu0
      %v2664 = vadd.f32 %v2276, %v2663
      %v2665 = vpop.f32.mrf.mxu0
      %2666 = vmatprep.mubr.bf16.mxu0 0
      %2667 = vmatmul.mubr.bf16.gmra.mxu0 %v2557
      %v2668 = vpop.f32.mrf.mxu0
      %v2669 = vadd.f32 %v2277, %v2668
      %v2670 = vpop.f32.mrf.mxu0
      %v2671 = vpop.f32.mrf.mxu0
      %v2672 = vadd.f32 %v2278, %v2671
      %v2673 = vpop.f32.mrf.mxu0
      %2674 = vmatprep.mubr.bf16.mxu0 0
      %2675 = vmatmul.mubr.bf16.gmra.mxu0 %v2560
      %v2676 = vpop.f32.mrf.mxu0
      %v2677 = vadd.f32 %v2279, %v2676
      %v2678 = vpop.f32.mrf.mxu0
      %v2679 = vpop.f32.mrf.mxu0
      %v2680 = vadd.f32 %v2280, %v2679
      %v2681 = vpop.f32.mrf.mxu0
      %2682 = vdwg.mxu0
      %v2699 = vunpack.c.l.b16 %v649
      %v2700 = vunpack.c.l.b16 %v650
      %v2701 = vunpack.c.l.b16 %v651
      %v2702 = vunpack.c.l.b16 %v652
      %v2703 = vunpack.c.l.b16 %v653
      %v2704 = vunpack.c.l.b16 %v654
      %v2705 = vunpack.c.l.b16 %v655
      %v2706 = vunpack.c.l.b16 %v656
      %v2707 = vunpack.c.l.b16 %v657
      %v2708 = vunpack.c.l.b16 %v658
      %v2709 = vunpack.c.l.b16 %v659
      %v2710 = vunpack.c.l.b16 %v660
      %v2711 = vunpack.c.l.b16 %v661
      %v2712 = vunpack.c.l.b16 %v662
      %v2713 = vunpack.c.l.b16 %v663
      %v2714 = vunpack.c.l.b16 %v664
      %v2715 = vpack.c.b16 %v2700, %v2699
      %v2716 = vpack.c.b16 %v2702, %v2701
      %v2717 = vpack.c.b16 %v2704, %v2703
      %v2718 = vpack.c.b16 %v2706, %v2705
      %v2719 = vpack.c.b16 %v2708, %v2707
      %v2720 = vpack.c.b16 %v2710, %v2709
      %v2721 = vpack.c.b16 %v2712, %v2711
      %v2722 = vpack.c.b16 %v2714, %v2713
      %v2724 = vsel %vm1225, %v981, 0
      %v2727 = vsel %vm1225, %v982, 0
      %v2730 = vsel %vm1225, %v983, 0
      %v2733 = vsel %vm1225, %v984, 0
      %v2736 = vsel %vm1225, %v985, 0
      %v2739 = vsel %vm1225, %v986, 0
      %v2742 = vsel %vm1225, %v987, 0
      %v2745 = vsel %vm1225, %v988, 0
      %v2748 = vsel %vm1225, %v2715, 0
      %v2751 = vsel %vm1225, %v2716, 0
      %v2754 = vsel %vm1225, %v2717, 0
      %v2757 = vsel %vm1225, %v2718, 0
      %v2760 = vsel %vm1225, %v2719, 0
      %v2763 = vsel %vm1225, %v2720, 0
      %v2766 = vsel %vm1225, %v2721, 0
      %v2769 = vsel %vm1225, %v2722, 0
      %2771 = vmatprep.subr.bf16.mxu0 0
      %2772 = vmatpush1.bf16.xpose.msra.mxu0 %v2769
      %2773 = vmatprep.subr.bf16.mxu0 0
      %2774 = vmatpush1.bf16.xpose.msra.mxu0 %v2766
      %2775 = vmatprep.subr.bf16.mxu0 0
      %2776 = vmatpush1.bf16.xpose.msra.mxu0 %v2763
      %2777 = vmatprep.subr.bf16.mxu0 0
      %2778 = vmatpush1.bf16.xpose.msra.mxu0 %v2760
      %2779 = vmatprep.subr.bf16.mxu0 0
      %2780 = vmatpush1.bf16.xpose.msra.mxu0 %v2757
      %2781 = vmatprep.subr.bf16.mxu0 0
      %2782 = vmatpush1.bf16.xpose.msra.mxu0 %v2754
      %2783 = vmatprep.subr.bf16.mxu0 0
      %2784 = vmatpush1.bf16.xpose.msra.mxu0 %v2751
      %2785 = vmatprep.subr.bf16.mxu0 0
      %2786 = vmatpush1.bf16.xpose.msra.mxu0 %v2748
      %2787 = vmatprep.subr.bf16.mxu0 0
      %2788 = vmatpush2.bf16.xpose.msra.mxu0 0
      %2789 = vmatprep.subr.bf16.mxu0 0
      %2790 = vmatpush2.bf16.xpose.msra.mxu0 0
      %2791 = vmatprep.subr.bf16.mxu0 0
      %2792 = vmatpush2.bf16.xpose.msra.mxu0 0
      %2793 = vmatprep.subr.bf16.mxu0 0
      %2794 = vmatpush2.bf16.xpose.msra.mxu0 0
      %2795 = vmatprep.subr.bf16.mxu0 0
      %2796 = vmatpush2.bf16.xpose.msra.mxu0 0
      %2797 = vmatprep.subr.bf16.mxu0 0
      %2798 = vmatpush2.bf16.xpose.msra.mxu0 0
      %2799 = vmatprep.subr.bf16.mxu0 0
      %2800 = vmatpush2.bf16.xpose.msra.mxu0 0
      %2801 = vmatprep.subr.bf16.mxu0 0
      %2802 = vmatpush2.bf16.xpose.msra.mxu0 0
      %2803 = vmatprep.mubr.bf16.mxu0 0
      %2804 = vmatmul.mubr.bf16.gmra.mxu0 %v2724
      %v2805 = vpop.f32.mrf.mxu0
      %v2806 = vadd.f32 %v2281, %v2805
      %v2807 = vpop.f32.mrf.mxu0
      %v2808 = vpop.f32.mrf.mxu0
      %v2809 = vadd.f32 %v2282, %v2808
      %v2810 = vpop.f32.mrf.mxu0
      %2811 = vmatprep.mubr.bf16.mxu0 0
      %2812 = vmatmul.mubr.bf16.gmra.mxu0 %v2727
      %v2813 = vpop.f32.mrf.mxu0
      %v2814 = vadd.f32 %v2283, %v2813
      %v2815 = vpop.f32.mrf.mxu0
      %v2816 = vpop.f32.mrf.mxu0
      %v2817 = vadd.f32 %v2284, %v2816
      %v2818 = vpop.f32.mrf.mxu0
      %2819 = vmatprep.mubr.bf16.mxu0 0
      %2820 = vmatmul.mubr.bf16.gmra.mxu0 %v2730
      %v2821 = vpop.f32.mrf.mxu0
      %v2822 = vadd.f32 %v2285, %v2821
      %v2823 = vpop.f32.mrf.mxu0
      %v2824 = vpop.f32.mrf.mxu0
      %v2825 = vadd.f32 %v2286, %v2824
      %v2826 = vpop.f32.mrf.mxu0
      %2827 = vmatprep.mubr.bf16.mxu0 0
      %2828 = vmatmul.mubr.bf16.gmra.mxu0 %v2733
      %v2829 = vpop.f32.mrf.mxu0
      %v2830 = vadd.f32 %v2287, %v2829
      %v2831 = vpop.f32.mrf.mxu0
      %v2832 = vpop.f32.mrf.mxu0
      %v2833 = vadd.f32 %v2288, %v2832
      %v2834 = vpop.f32.mrf.mxu0
      %2835 = vmatprep.mubr.bf16.mxu0 0
      %2836 = vmatmul.mubr.bf16.gmra.mxu0 %v2736
      %v2837 = vpop.f32.mrf.mxu0
      %v2838 = vadd.f32 %v2289, %v2837
      %v2839 = vpop.f32.mrf.mxu0
      %v2840 = vpop.f32.mrf.mxu0
      %v2841 = vadd.f32 %v2290, %v2840
      %v2842 = vpop.f32.mrf.mxu0
      %2843 = vmatprep.mubr.bf16.mxu0 0
      %2844 = vmatmul.mubr.bf16.gmra.mxu0 %v2739
      %v2845 = vpop.f32.mrf.mxu0
      %v2846 = vadd.f32 %v2291, %v2845
      %v2847 = vpop.f32.mrf.mxu0
      %v2848 = vpop.f32.mrf.mxu0
      %v2849 = vadd.f32 %v2292, %v2848
      %v2850 = vpop.f32.mrf.mxu0
      %2851 = vmatprep.mubr.bf16.mxu0 0
      %2852 = vmatmul.mubr.bf16.gmra.mxu0 %v2742
      %v2853 = vpop.f32.mrf.mxu0
      %v2854 = vadd.f32 %v2293, %v2853
      %v2855 = vpop.f32.mrf.mxu0
      %v2856 = vpop.f32.mrf.mxu0
      %v2857 = vadd.f32 %v2294, %v2856
      %v2858 = vpop.f32.mrf.mxu0
      %2859 = vmatprep.mubr.bf16.mxu0 0
      %2860 = vmatmul.mubr.bf16.gmra.mxu0 %v2745
      %v2861 = vpop.f32.mrf.mxu0
      %v2862 = vadd.f32 %v2295, %v2861
      %v2863 = vpop.f32.mrf.mxu0
      %v2864 = vpop.f32.mrf.mxu0
      %v2865 = vadd.f32 %v2296, %v2864
      %v2866 = vpop.f32.mrf.mxu0
      %2867 = vdwg.mxu0
      %v2884 = vunpack.c.l.b16 %v665
      %v2885 = vunpack.c.l.b16 %v666
      %v2886 = vunpack.c.l.b16 %v667
      %v2887 = vunpack.c.l.b16 %v668
      %v2888 = vunpack.c.l.b16 %v669
      %v2889 = vunpack.c.l.b16 %v670
      %v2890 = vunpack.c.l.b16 %v671
      %v2891 = vunpack.c.l.b16 %v672
      %v2892 = vunpack.c.l.b16 %v673
      %v2893 = vunpack.c.l.b16 %v674
      %v2894 = vunpack.c.l.b16 %v675
      %v2895 = vunpack.c.l.b16 %v676
      %v2896 = vunpack.c.l.b16 %v677
      %v2897 = vunpack.c.l.b16 %v678
      %v2898 = vunpack.c.l.b16 %v679
      %v2899 = vunpack.c.l.b16 %v680
      %v2900 = vpack.c.b16 %v2885, %v2884
      %v2901 = vpack.c.b16 %v2887, %v2886
      %v2902 = vpack.c.b16 %v2889, %v2888
      %v2903 = vpack.c.b16 %v2891, %v2890
      %v2904 = vpack.c.b16 %v2893, %v2892
      %v2905 = vpack.c.b16 %v2895, %v2894
      %v2906 = vpack.c.b16 %v2897, %v2896
      %v2907 = vpack.c.b16 %v2899, %v2898
      %v2909 = vsel %vm1225, %v989, 0
      %v2912 = vsel %vm1225, %v990, 0
      %v2915 = vsel %vm1225, %v991, 0
      %v2918 = vsel %vm1225, %v992, 0
      %v2921 = vsel %vm1225, %v993, 0
      %v2924 = vsel %vm1225, %v994, 0
      %v2927 = vsel %vm1225, %v995, 0
      %v2930 = vsel %vm1225, %v996, 0
      %v2933 = vsel %vm1225, %v2900, 0
      %v2936 = vsel %vm1225, %v2901, 0
      %v2939 = vsel %vm1225, %v2902, 0
      %v2942 = vsel %vm1225, %v2903, 0
      %v2945 = vsel %vm1225, %v2904, 0
      %v2948 = vsel %vm1225, %v2905, 0
      %v2951 = vsel %vm1225, %v2906, 0
      %v2954 = vsel %vm1225, %v2907, 0
      %2956 = vmatprep.subr.bf16.mxu0 0
      %2957 = vmatpush1.bf16.xpose.msra.mxu0 %v2954
      %2958 = vmatprep.subr.bf16.mxu0 0
      %2959 = vmatpush1.bf16.xpose.msra.mxu0 %v2951
      %2960 = vmatprep.subr.bf16.mxu0 0
      %2961 = vmatpush1.bf16.xpose.msra.mxu0 %v2948
      %2962 = vmatprep.subr.bf16.mxu0 0
      %2963 = vmatpush1.bf16.xpose.msra.mxu0 %v2945
      %2964 = vmatprep.subr.bf16.mxu0 0
      %2965 = vmatpush1.bf16.xpose.msra.mxu0 %v2942
      %2966 = vmatprep.subr.bf16.mxu0 0
      %2967 = vmatpush1.bf16.xpose.msra.mxu0 %v2939
      %2968 = vmatprep.subr.bf16.mxu0 0
      %2969 = vmatpush1.bf16.xpose.msra.mxu0 %v2936
      %2970 = vmatprep.subr.bf16.mxu0 0
      %2971 = vmatpush1.bf16.xpose.msra.mxu0 %v2933
      %2972 = vmatprep.subr.bf16.mxu0 0
      %2973 = vmatpush2.bf16.xpose.msra.mxu0 0
      %2974 = vmatprep.subr.bf16.mxu0 0
      %2975 = vmatpush2.bf16.xpose.msra.mxu0 0
      %2976 = vmatprep.subr.bf16.mxu0 0
      %2977 = vmatpush2.bf16.xpose.msra.mxu0 0
      %2978 = vmatprep.subr.bf16.mxu0 0
      %2979 = vmatpush2.bf16.xpose.msra.mxu0 0
      %2980 = vmatprep.subr.bf16.mxu0 0
      %2981 = vmatpush2.bf16.xpose.msra.mxu0 0
      %2982 = vmatprep.subr.bf16.mxu0 0
      %2983 = vmatpush2.bf16.xpose.msra.mxu0 0
      %2984 = vmatprep.subr.bf16.mxu0 0
      %2985 = vmatpush2.bf16.xpose.msra.mxu0 0
      %2986 = vmatprep.subr.bf16.mxu0 0
      %2987 = vmatpush2.bf16.xpose.msra.mxu0 0
      %2988 = vmatprep.mubr.bf16.mxu0 0
      %2989 = vmatmul.mubr.bf16.gmra.mxu0 %v2909
      %v2990 = vpop.f32.mrf.mxu0
      %v2991 = vadd.f32 %v2297, %v2990
      %v2992 = vpop.f32.mrf.mxu0
      %v2993 = vpop.f32.mrf.mxu0
      %v2994 = vadd.f32 %v2298, %v2993
      %v2995 = vpop.f32.mrf.mxu0
      %2996 = vmatprep.mubr.bf16.mxu0 0
      %2997 = vmatmul.mubr.bf16.gmra.mxu0 %v2912
      %v2998 = vpop.f32.mrf.mxu0
      %v2999 = vadd.f32 %v2299, %v2998
      %v3000 = vpop.f32.mrf.mxu0
      %v3001 = vpop.f32.mrf.mxu0
      %v3002 = vadd.f32 %v2300, %v3001
      %v3003 = vpop.f32.mrf.mxu0
      %3004 = vmatprep.mubr.bf16.mxu0 0
      %3005 = vmatmul.mubr.bf16.gmra.mxu0 %v2915
      %v3006 = vpop.f32.mrf.mxu0
      %v3007 = vadd.f32 %v2301, %v3006
      %v3008 = vpop.f32.mrf.mxu0
      %v3009 = vpop.f32.mrf.mxu0
      %v3010 = vadd.f32 %v2302, %v3009
      %v3011 = vpop.f32.mrf.mxu0
      %3012 = vmatprep.mubr.bf16.mxu0 0
      %3013 = vmatmul.mubr.bf16.gmra.mxu0 %v2918
      %v3014 = vpop.f32.mrf.mxu0
      %v3015 = vadd.f32 %v2303, %v3014
      %v3016 = vpop.f32.mrf.mxu0
      %v3017 = vpop.f32.mrf.mxu0
      %v3018 = vadd.f32 %v2304, %v3017
      %v3019 = vpop.f32.mrf.mxu0
      %3020 = vmatprep.mubr.bf16.mxu0 0
      %3021 = vmatmul.mubr.bf16.gmra.mxu0 %v2921
      %v3022 = vpop.f32.mrf.mxu0
      %v3023 = vadd.f32 %v2305, %v3022
      %v3024 = vpop.f32.mrf.mxu0
      %v3025 = vpop.f32.mrf.mxu0
      %v3026 = vadd.f32 %v2306, %v3025
      %v3027 = vpop.f32.mrf.mxu0
      %3028 = vmatprep.mubr.bf16.mxu0 0
      %3029 = vmatmul.mubr.bf16.gmra.mxu0 %v2924
      %v3030 = vpop.f32.mrf.mxu0
      %v3031 = vadd.f32 %v2307, %v3030
      %v3032 = vpop.f32.mrf.mxu0
      %v3033 = vpop.f32.mrf.mxu0
      %v3034 = vadd.f32 %v2308, %v3033
      %v3035 = vpop.f32.mrf.mxu0
      %3036 = vmatprep.mubr.bf16.mxu0 0
      %3037 = vmatmul.mubr.bf16.gmra.mxu0 %v2927
      %v3038 = vpop.f32.mrf.mxu0
      %v3039 = vadd.f32 %v2309, %v3038
      %v3040 = vpop.f32.mrf.mxu0
      %v3041 = vpop.f32.mrf.mxu0
      %v3042 = vadd.f32 %v2310, %v3041
      %v3043 = vpop.f32.mrf.mxu0
      %3044 = vmatprep.mubr.bf16.mxu0 0
      %3045 = vmatmul.mubr.bf16.gmra.mxu0 %v2930
      %v3046 = vpop.f32.mrf.mxu0
      %v3047 = vadd.f32 %v2311, %v3046
      %v3048 = vpop.f32.mrf.mxu0
      %v3049 = vpop.f32.mrf.mxu0
      %v3050 = vadd.f32 %v2312, %v3049
      %v3051 = vpop.f32.mrf.mxu0
      %3052 = vdwg.mxu0
      %v3053 = vld [vmem:[%s477] sm:$0x1]
      %v3055 = vlaneseq
      %v3056 = vshrl.u32 %v3055, 7
      %v3057 = vsub.s32 0, %v3056
      %v3058 = vrot.slane %v3053, %v3057
      %v3060 = vadd.f32 %v2436, %v3058
      %v3061 = vadd.f32 %v2439, %v3058
      %v3062 = vadd.f32 %v2444, %v3058
      %v3063 = vadd.f32 %v2447, %v3058
      %v3064 = vadd.f32 %v2452, %v3058
      %v3065 = vadd.f32 %v2455, %v3058
      %v3066 = vadd.f32 %v2460, %v3058
      %v3067 = vadd.f32 %v2463, %v3058
      %v3068 = vadd.f32 %v2468, %v3058
      %v3069 = vadd.f32 %v2471, %v3058
      %v3070 = vadd.f32 %v2476, %v3058
      %v3071 = vadd.f32 %v2479, %v3058
      %v3072 = vadd.f32 %v2484, %v3058
      %v3073 = vadd.f32 %v2487, %v3058
      %v3074 = vadd.f32 %v2492, %v3058
      %v3075 = vadd.f32 %v2495, %v3058
      %v3076 = vadd.f32 %v2621, %v3058
      %v3077 = vadd.f32 %v2624, %v3058
      %v3078 = vadd.f32 %v2629, %v3058
      %v3079 = vadd.f32 %v2632, %v3058
      %v3080 = vadd.f32 %v2637, %v3058
      %v3081 = vadd.f32 %v2640, %v3058
      %v3082 = vadd.f32 %v2645, %v3058
      %v3083 = vadd.f32 %v2648, %v3058
      %v3084 = vadd.f32 %v2653, %v3058
      %v3085 = vadd.f32 %v2656, %v3058
      %v3086 = vadd.f32 %v2661, %v3058
      %v3087 = vadd.f32 %v2664, %v3058
      %v3088 = vadd.f32 %v2669, %v3058
      %v3089 = vadd.f32 %v2672, %v3058
      %v3090 = vadd.f32 %v2677, %v3058
      %v3091 = vadd.f32 %v2680, %v3058
      %v3092 = vadd.f32 %v2806, %v3058
      %v3093 = vadd.f32 %v2809, %v3058
      %v3094 = vadd.f32 %v2814, %v3058
      %v3095 = vadd.f32 %v2817, %v3058
      %v3096 = vadd.f32 %v2822, %v3058
      %v3097 = vadd.f32 %v2825, %v3058
      %v3098 = vadd.f32 %v2830, %v3058
      %v3099 = vadd.f32 %v2833, %v3058
      %v3100 = vadd.f32 %v2838, %v3058
      %v3101 = vadd.f32 %v2841, %v3058
      %v3102 = vadd.f32 %v2846, %v3058
      %v3103 = vadd.f32 %v2849, %v3058
      %v3104 = vadd.f32 %v2854, %v3058
      %v3105 = vadd.f32 %v2857, %v3058
      %v3106 = vadd.f32 %v2862, %v3058
      %v3107 = vadd.f32 %v2865, %v3058
      %v3108 = vadd.f32 %v2991, %v3058
      %v3109 = vadd.f32 %v2994, %v3058
      %v3110 = vadd.f32 %v2999, %v3058
      %v3111 = vadd.f32 %v3002, %v3058
      %v3112 = vadd.f32 %v3007, %v3058
      %v3113 = vadd.f32 %v3010, %v3058
      %v3114 = vadd.f32 %v3015, %v3058
      %v3115 = vadd.f32 %v3018, %v3058
      %v3116 = vadd.f32 %v3023, %v3058
      %v3117 = vadd.f32 %v3026, %v3058
      %v3118 = vadd.f32 %v3031, %v3058
      %v3119 = vadd.f32 %v3034, %v3058
      %v3120 = vadd.f32 %v3039, %v3058
      %v3121 = vadd.f32 %v3042, %v3058
      %v3122 = vadd.f32 %v3047, %v3058
      %v3123 = vadd.f32 %v3050, %v3058
      %3124 = vmax.xlane.f32.xlu0 %v3060
      %v3125 = vpop.xlane.xlu0 %3124
      %3126 = vmax.xlane.f32.xlu0 %v3061
      %v3127 = vpop.xlane.xlu0 %3126
      %3128 = vmax.xlane.f32.xlu0 %v3062
      %v3129 = vpop.xlane.xlu0 %3128
      %3130 = vmax.xlane.f32.xlu0 %v3063
      %v3131 = vpop.xlane.xlu0 %3130
      %3132 = vmax.xlane.f32.xlu0 %v3064
      %v3133 = vpop.xlane.xlu0 %3132
      %3134 = vmax.xlane.f32.xlu0 %v3065
      %v3135 = vpop.xlane.xlu0 %3134
      %3136 = vmax.xlane.f32.xlu0 %v3066
      %v3137 = vpop.xlane.xlu0 %3136
      %3138 = vmax.xlane.f32.xlu0 %v3067
      %v3139 = vpop.xlane.xlu0 %3138
      %3140 = vmax.xlane.f32.xlu0 %v3068
      %v3141 = vpop.xlane.xlu0 %3140
      %3142 = vmax.xlane.f32.xlu0 %v3069
      %v3143 = vpop.xlane.xlu0 %3142
      %3144 = vmax.xlane.f32.xlu0 %v3070
      %v3145 = vpop.xlane.xlu0 %3144
      %3146 = vmax.xlane.f32.xlu0 %v3071
      %v3147 = vpop.xlane.xlu0 %3146
      %3148 = vmax.xlane.f32.xlu0 %v3072
      %v3149 = vpop.xlane.xlu0 %3148
      %3150 = vmax.xlane.f32.xlu0 %v3073
      %v3151 = vpop.xlane.xlu0 %3150
      %3152 = vmax.xlane.f32.xlu0 %v3074
      %v3153 = vpop.xlane.xlu0 %3152
      %3154 = vmax.xlane.f32.xlu0 %v3075
      %v3155 = vpop.xlane.xlu0 %3154
      %3156 = vmax.xlane.f32.xlu0 %v3076
      %v3157 = vpop.xlane.xlu0 %3156
      %3158 = vmax.xlane.f32.xlu0 %v3077
      %v3159 = vpop.xlane.xlu0 %3158
      %3160 = vmax.xlane.f32.xlu0 %v3078
      %v3161 = vpop.xlane.xlu0 %3160
      %3162 = vmax.xlane.f32.xlu0 %v3079
      %v3163 = vpop.xlane.xlu0 %3162
      %3164 = vmax.xlane.f32.xlu0 %v3080
      %v3165 = vpop.xlane.xlu0 %3164
      %3166 = vmax.xlane.f32.xlu0 %v3081
      %v3167 = vpop.xlane.xlu0 %3166
      %3168 = vmax.xlane.f32.xlu0 %v3082
      %v3169 = vpop.xlane.xlu0 %3168
      %3170 = vmax.xlane.f32.xlu0 %v3083
      %v3171 = vpop.xlane.xlu0 %3170
      %3172 = vmax.xlane.f32.xlu0 %v3084
      %v3173 = vpop.xlane.xlu0 %3172
      %3174 = vmax.xlane.f32.xlu0 %v3085
      %v3175 = vpop.xlane.xlu0 %3174
      %3176 = vmax.xlane.f32.xlu0 %v3086
      %v3177 = vpop.xlane.xlu0 %3176
      %3178 = vmax.xlane.f32.xlu0 %v3087
      %v3179 = vpop.xlane.xlu0 %3178
      %3180 = vmax.xlane.f32.xlu0 %v3088
      %v3181 = vpop.xlane.xlu0 %3180
      %3182 = vmax.xlane.f32.xlu0 %v3089
      %v3183 = vpop.xlane.xlu0 %3182
      %3184 = vmax.xlane.f32.xlu0 %v3090
      %v3185 = vpop.xlane.xlu0 %3184
      %3186 = vmax.xlane.f32.xlu0 %v3091
      %v3187 = vpop.xlane.xlu0 %3186
      %3188 = vmax.xlane.f32.xlu0 %v3092
      %v3189 = vpop.xlane.xlu0 %3188
      %3190 = vmax.xlane.f32.xlu0 %v3093
      %v3191 = vpop.xlane.xlu0 %3190
      %3192 = vmax.xlane.f32.xlu0 %v3094
      %v3193 = vpop.xlane.xlu0 %3192
      %3194 = vmax.xlane.f32.xlu0 %v3095
      %v3195 = vpop.xlane.xlu0 %3194
      %3196 = vmax.xlane.f32.xlu0 %v3096
      %v3197 = vpop.xlane.xlu0 %3196
      %3198 = vmax.xlane.f32.xlu0 %v3097
      %v3199 = vpop.xlane.xlu0 %3198
      %3200 = vmax.xlane.f32.xlu0 %v3098
      %v3201 = vpop.xlane.xlu0 %3200
      %3202 = vmax.xlane.f32.xlu0 %v3099
      %v3203 = vpop.xlane.xlu0 %3202
      %3204 = vmax.xlane.f32.xlu0 %v3100
      %v3205 = vpop.xlane.xlu0 %3204
      %3206 = vmax.xlane.f32.xlu0 %v3101
      %v3207 = vpop.xlane.xlu0 %3206
      %3208 = vmax.xlane.f32.xlu0 %v3102
      %v3209 = vpop.xlane.xlu0 %3208
      %3210 = vmax.xlane.f32.xlu0 %v3103
      %v3211 = vpop.xlane.xlu0 %3210
      %3212 = vmax.xlane.f32.xlu0 %v3104
      %v3213 = vpop.xlane.xlu0 %3212
      %3214 = vmax.xlane.f32.xlu0 %v3105
      %v3215 = vpop.xlane.xlu0 %3214
      %3216 = vmax.xlane.f32.xlu0 %v3106
      %v3217 = vpop.xlane.xlu0 %3216
      %3218 = vmax.xlane.f32.xlu0 %v3107
      %v3219 = vpop.xlane.xlu0 %3218
      %3220 = vmax.xlane.f32.xlu0 %v3108
      %v3221 = vpop.xlane.xlu0 %3220
      %3222 = vmax.xlane.f32.xlu0 %v3109
      %v3223 = vpop.xlane.xlu0 %3222
      %3224 = vmax.xlane.f32.xlu0 %v3110
      %v3225 = vpop.xlane.xlu0 %3224
      %3226 = vmax.xlane.f32.xlu0 %v3111
      %v3227 = vpop.xlane.xlu0 %3226
      %3228 = vmax.xlane.f32.xlu0 %v3112
      %v3229 = vpop.xlane.xlu0 %3228
      %3230 = vmax.xlane.f32.xlu0 %v3113
      %v3231 = vpop.xlane.xlu0 %3230
      %3232 = vmax.xlane.f32.xlu0 %v3114
      %v3233 = vpop.xlane.xlu0 %3232
      %3234 = vmax.xlane.f32.xlu0 %v3115
      %v3235 = vpop.xlane.xlu0 %3234
      %3236 = vmax.xlane.f32.xlu0 %v3116
      %v3237 = vpop.xlane.xlu0 %3236
      %3238 = vmax.xlane.f32.xlu0 %v3117
      %v3239 = vpop.xlane.xlu0 %3238
      %3240 = vmax.xlane.f32.xlu0 %v3118
      %v3241 = vpop.xlane.xlu0 %3240
      %3242 = vmax.xlane.f32.xlu0 %v3119
      %v3243 = vpop.xlane.xlu0 %3242
      %3244 = vmax.xlane.f32.xlu0 %v3120
      %v3245 = vpop.xlane.xlu0 %3244
      %3246 = vmax.xlane.f32.xlu0 %v3121
      %v3247 = vpop.xlane.xlu0 %3246
      %3248 = vmax.xlane.f32.xlu0 %v3122
      %v3249 = vpop.xlane.xlu0 %3248
      %3250 = vmax.xlane.f32.xlu0 %v3123
      %v3251 = vpop.xlane.xlu0 %3250
      %v3252 = vsub.f32 %v3060, %v3125
      %v3253 = vsub.f32 %v3061, %v3127
      %v3254 = vsub.f32 %v3062, %v3129
      %v3255 = vsub.f32 %v3063, %v3131
      %v3256 = vsub.f32 %v3064, %v3133
      %v3257 = vsub.f32 %v3065, %v3135
      %v3258 = vsub.f32 %v3066, %v3137
      %v3259 = vsub.f32 %v3067, %v3139
      %v3260 = vsub.f32 %v3068, %v3141
      %v3261 = vsub.f32 %v3069, %v3143
      %v3262 = vsub.f32 %v3070, %v3145
      %v3263 = vsub.f32 %v3071, %v3147
      %v3264 = vsub.f32 %v3072, %v3149
      %v3265 = vsub.f32 %v3073, %v3151
      %v3266 = vsub.f32 %v3074, %v3153
      %v3267 = vsub.f32 %v3075, %v3155
      %v3268 = vsub.f32 %v3076, %v3157
      %v3269 = vsub.f32 %v3077, %v3159
      %v3270 = vsub.f32 %v3078, %v3161
      %v3271 = vsub.f32 %v3079, %v3163
      %v3272 = vsub.f32 %v3080, %v3165
      %v3273 = vsub.f32 %v3081, %v3167
      %v3274 = vsub.f32 %v3082, %v3169
      %v3275 = vsub.f32 %v3083, %v3171
      %v3276 = vsub.f32 %v3084, %v3173
      %v3277 = vsub.f32 %v3085, %v3175
      %v3278 = vsub.f32 %v3086, %v3177
      %v3279 = vsub.f32 %v3087, %v3179
      %v3280 = vsub.f32 %v3088, %v3181
      %v3281 = vsub.f32 %v3089, %v3183
      %v3282 = vsub.f32 %v3090, %v3185
      %v3283 = vsub.f32 %v3091, %v3187
      %v3284 = vsub.f32 %v3092, %v3189
      %v3285 = vsub.f32 %v3093, %v3191
      %v3286 = vsub.f32 %v3094, %v3193
      %v3287 = vsub.f32 %v3095, %v3195
      %v3288 = vsub.f32 %v3096, %v3197
      %v3289 = vsub.f32 %v3097, %v3199
      %v3290 = vsub.f32 %v3098, %v3201
      %v3291 = vsub.f32 %v3099, %v3203
      %v3292 = vsub.f32 %v3100, %v3205
      %v3293 = vsub.f32 %v3101, %v3207
      %v3294 = vsub.f32 %v3102, %v3209
      %v3295 = vsub.f32 %v3103, %v3211
      %v3296 = vsub.f32 %v3104, %v3213
      %v3297 = vsub.f32 %v3105, %v3215
      %v3298 = vsub.f32 %v3106, %v3217
      %v3299 = vsub.f32 %v3107, %v3219
      %v3300 = vsub.f32 %v3108, %v3221
      %v3301 = vsub.f32 %v3109, %v3223
      %v3302 = vsub.f32 %v3110, %v3225
      %v3303 = vsub.f32 %v3111, %v3227
      %v3304 = vsub.f32 %v3112, %v3229
      %v3305 = vsub.f32 %v3113, %v3231
      %v3306 = vsub.f32 %v3114, %v3233
      %v3307 = vsub.f32 %v3115, %v3235
      %v3308 = vsub.f32 %v3116, %v3237
      %v3309 = vsub.f32 %v3117, %v3239
      %v3310 = vsub.f32 %v3118, %v3241
      %v3311 = vsub.f32 %v3119, %v3243
      %v3312 = vsub.f32 %v3120, %v3245
      %v3313 = vsub.f32 %v3121, %v3247
      %v3314 = vsub.f32 %v3122, %v3249
      %v3315 = vsub.f32 %v3123, %v3251
      %v3316 = vmul.f32 %v3252, 1.442695
      %v3317 = vpow.pop %v3316
      %v3318 = vmul.f32 %v3253, 1.442695
      %v3319 = vpow.pop %v3318
      %v3320 = vmul.f32 %v3254, 1.442695
      %v3321 = vpow.pop %v3320
      %v3322 = vmul.f32 %v3255, 1.442695
      %v3323 = vpow.pop %v3322
      %v3324 = vmul.f32 %v3256, 1.442695
      %v3325 = vpow.pop %v3324
      %v3326 = vmul.f32 %v3257, 1.442695
      %v3327 = vpow.pop %v3326
      %v3328 = vmul.f32 %v3258, 1.442695
      %v3329 = vpow.pop %v3328
      %v3330 = vmul.f32 %v3259, 1.442695
      %v3331 = vpow.pop %v3330
      %v3332 = vmul.f32 %v3260, 1.442695
      %v3333 = vpow.pop %v3332
      %v3334 = vmul.f32 %v3261, 1.442695
      %v3335 = vpow.pop %v3334
      %v3336 = vmul.f32 %v3262, 1.442695
      %v3337 = vpow.pop %v3336
      %v3338 = vmul.f32 %v3263, 1.442695
      %v3339 = vpow.pop %v3338
      %v3340 = vmul.f32 %v3264, 1.442695
      %v3341 = vpow.pop %v3340
      %v3342 = vmul.f32 %v3265, 1.442695
      %v3343 = vpow.pop %v3342
      %v3344 = vmul.f32 %v3266, 1.442695
      %v3345 = vpow.pop %v3344
      %v3346 = vmul.f32 %v3267, 1.442695
      %v3347 = vpow.pop %v3346
      %v3348 = vmul.f32 %v3268, 1.442695
      %v3349 = vpow.pop %v3348
      %v3350 = vmul.f32 %v3269, 1.442695
      %v3351 = vpow.pop %v3350
      %v3352 = vmul.f32 %v3270, 1.442695
      %v3353 = vpow.pop %v3352
      %v3354 = vmul.f32 %v3271, 1.442695
      %v3355 = vpow.pop %v3354
      %v3356 = vmul.f32 %v3272, 1.442695
      %v3357 = vpow.pop %v3356
      %v3358 = vmul.f32 %v3273, 1.442695
      %v3359 = vpow.pop %v3358
      %v3360 = vmul.f32 %v3274, 1.442695
      %v3361 = vpow.pop %v3360
      %v3362 = vmul.f32 %v3275, 1.442695
      %v3363 = vpow.pop %v3362
      %v3364 = vmul.f32 %v3276, 1.442695
      %v3365 = vpow.pop %v3364
      %v3366 = vmul.f32 %v3277, 1.442695
      %v3367 = vpow.pop %v3366
      %v3368 = vmul.f32 %v3278, 1.442695
      %v3369 = vpow.pop %v3368
      %v3370 = vmul.f32 %v3279, 1.442695
      %v3371 = vpow.pop %v3370
      %v3372 = vmul.f32 %v3280, 1.442695
      %v3373 = vpow.pop %v3372
      %v3374 = vmul.f32 %v3281, 1.442695
      %v3375 = vpow.pop %v3374
      %v3376 = vmul.f32 %v3282, 1.442695
      %v3377 = vpow.pop %v3376
      %v3378 = vmul.f32 %v3283, 1.442695
      %v3379 = vpow.pop %v3378
      %v3380 = vmul.f32 %v3284, 1.442695
      %v3381 = vpow.pop %v3380
      %v3382 = vmul.f32 %v3285, 1.442695
      %v3383 = vpow.pop %v3382
      %v3384 = vmul.f32 %v3286, 1.442695
      %v3385 = vpow.pop %v3384
      %v3386 = vmul.f32 %v3287, 1.442695
      %v3387 = vpow.pop %v3386
      %v3388 = vmul.f32 %v3288, 1.442695
      %v3389 = vpow.pop %v3388
      %v3390 = vmul.f32 %v3289, 1.442695
      %v3391 = vpow.pop %v3390
      %v3392 = vmul.f32 %v3290, 1.442695
      %v3393 = vpow.pop %v3392
      %v3394 = vmul.f32 %v3291, 1.442695
      %v3395 = vpow.pop %v3394
      %v3396 = vmul.f32 %v3292, 1.442695
      %v3397 = vpow.pop %v3396
      %v3398 = vmul.f32 %v3293, 1.442695
      %v3399 = vpow.pop %v3398
      %v3400 = vmul.f32 %v3294, 1.442695
      %v3401 = vpow.pop %v3400
      %v3402 = vmul.f32 %v3295, 1.442695
      %v3403 = vpow.pop %v3402
      %v3404 = vmul.f32 %v3296, 1.442695
      %v3405 = vpow.pop %v3404
      %v3406 = vmul.f32 %v3297, 1.442695
      %v3407 = vpow.pop %v3406
      %v3408 = vmul.f32 %v3298, 1.442695
      %v3409 = vpow.pop %v3408
      %v3410 = vmul.f32 %v3299, 1.442695
      %v3411 = vpow.pop %v3410
      %v3412 = vmul.f32 %v3300, 1.442695
      %v3413 = vpow.pop %v3412
      %v3414 = vmul.f32 %v3301, 1.442695
      %v3415 = vpow.pop %v3414
      %v3416 = vmul.f32 %v3302, 1.442695
      %v3417 = vpow.pop %v3416
      %v3418 = vmul.f32 %v3303, 1.442695
      %v3419 = vpow.pop %v3418
      %v3420 = vmul.f32 %v3304, 1.442695
      %v3421 = vpow.pop %v3420
      %v3422 = vmul.f32 %v3305, 1.442695
      %v3423 = vpow.pop %v3422
      %v3424 = vmul.f32 %v3306, 1.442695
      %v3425 = vpow.pop %v3424
      %v3426 = vmul.f32 %v3307, 1.442695
      %v3427 = vpow.pop %v3426
      %v3428 = vmul.f32 %v3308, 1.442695
      %v3429 = vpow.pop %v3428
      %v3430 = vmul.f32 %v3309, 1.442695
      %v3431 = vpow.pop %v3430
      %v3432 = vmul.f32 %v3310, 1.442695
      %v3433 = vpow.pop %v3432
      %v3434 = vmul.f32 %v3311, 1.442695
      %v3435 = vpow.pop %v3434
      %v3436 = vmul.f32 %v3312, 1.442695
      %v3437 = vpow.pop %v3436
      %v3438 = vmul.f32 %v3313, 1.442695
      %v3439 = vpow.pop %v3438
      %v3440 = vmul.f32 %v3314, 1.442695
      %v3441 = vpow.pop %v3440
      %v3442 = vmul.f32 %v3315, 1.442695
      %v3443 = vpow.pop %v3442
      %3444 = vadd.xlane.f32.xlu0 %v3317
      %v3445 = vpop.xlane.xlu0 %3444
      %3446 = vadd.xlane.f32.xlu0 %v3319
      %v3447 = vpop.xlane.xlu0 %3446
      %3448 = vadd.xlane.f32.xlu0 %v3321
      %v3449 = vpop.xlane.xlu0 %3448
      %3450 = vadd.xlane.f32.xlu0 %v3323
      %v3451 = vpop.xlane.xlu0 %3450
      %3452 = vadd.xlane.f32.xlu0 %v3325
      %v3453 = vpop.xlane.xlu0 %3452
      %3454 = vadd.xlane.f32.xlu0 %v3327
      %v3455 = vpop.xlane.xlu0 %3454
      %3456 = vadd.xlane.f32.xlu0 %v3329
      %v3457 = vpop.xlane.xlu0 %3456
      %3458 = vadd.xlane.f32.xlu0 %v3331
      %v3459 = vpop.xlane.xlu0 %3458
      %3460 = vadd.xlane.f32.xlu0 %v3333
      %v3461 = vpop.xlane.xlu0 %3460
      %3462 = vadd.xlane.f32.xlu0 %v3335
      %v3463 = vpop.xlane.xlu0 %3462
      %3464 = vadd.xlane.f32.xlu0 %v3337
      %v3465 = vpop.xlane.xlu0 %3464
      %3466 = vadd.xlane.f32.xlu0 %v3339
      %v3467 = vpop.xlane.xlu0 %3466
      %3468 = vadd.xlane.f32.xlu0 %v3341
      %v3469 = vpop.xlane.xlu0 %3468
      %3470 = vadd.xlane.f32.xlu0 %v3343
      %v3471 = vpop.xlane.xlu0 %3470
      %3472 = vadd.xlane.f32.xlu0 %v3345
      %v3473 = vpop.xlane.xlu0 %3472
      %3474 = vadd.xlane.f32.xlu0 %v3347
      %v3475 = vpop.xlane.xlu0 %3474
      %3476 = vadd.xlane.f32.xlu0 %v3349
      %v3477 = vpop.xlane.xlu0 %3476
      %3478 = vadd.xlane.f32.xlu0 %v3351
      %v3479 = vpop.xlane.xlu0 %3478
      %3480 = vadd.xlane.f32.xlu0 %v3353
      %v3481 = vpop.xlane.xlu0 %3480
      %3482 = vadd.xlane.f32.xlu0 %v3355
      %v3483 = vpop.xlane.xlu0 %3482
      %3484 = vadd.xlane.f32.xlu0 %v3357
      %v3485 = vpop.xlane.xlu0 %3484
      %3486 = vadd.xlane.f32.xlu0 %v3359
      %v3487 = vpop.xlane.xlu0 %3486
      %3488 = vadd.xlane.f32.xlu0 %v3361
      %v3489 = vpop.xlane.xlu0 %3488
      %3490 = vadd.xlane.f32.xlu0 %v3363
      %v3491 = vpop.xlane.xlu0 %3490
      %3492 = vadd.xlane.f32.xlu0 %v3365
      %v3493 = vpop.xlane.xlu0 %3492
      %3494 = vadd.xlane.f32.xlu0 %v3367
      %v3495 = vpop.xlane.xlu0 %3494
      %3496 = vadd.xlane.f32.xlu0 %v3369
      %v3497 = vpop.xlane.xlu0 %3496
      %3498 = vadd.xlane.f32.xlu0 %v3371
      %v3499 = vpop.xlane.xlu0 %3498
      %3500 = vadd.xlane.f32.xlu0 %v3373
      %v3501 = vpop.xlane.xlu0 %3500
      %3502 = vadd.xlane.f32.xlu0 %v3375
      %v3503 = vpop.xlane.xlu0 %3502
      %3504 = vadd.xlane.f32.xlu0 %v3377
      %v3505 = vpop.xlane.xlu0 %3504
      %3506 = vadd.xlane.f32.xlu0 %v3379
      %v3507 = vpop.xlane.xlu0 %3506
      %3508 = vadd.xlane.f32.xlu0 %v3381
      %v3509 = vpop.xlane.xlu0 %3508
      %3510 = vadd.xlane.f32.xlu0 %v3383
      %v3511 = vpop.xlane.xlu0 %3510
      %3512 = vadd.xlane.f32.xlu0 %v3385
      %v3513 = vpop.xlane.xlu0 %3512
      %3514 = vadd.xlane.f32.xlu0 %v3387
      %v3515 = vpop.xlane.xlu0 %3514
      %3516 = vadd.xlane.f32.xlu0 %v3389
      %v3517 = vpop.xlane.xlu0 %3516
      %3518 = vadd.xlane.f32.xlu0 %v3391
      %v3519 = vpop.xlane.xlu0 %3518
      %3520 = vadd.xlane.f32.xlu0 %v3393
      %v3521 = vpop.xlane.xlu0 %3520
      %3522 = vadd.xlane.f32.xlu0 %v3395
      %v3523 = vpop.xlane.xlu0 %3522
      %3524 = vadd.xlane.f32.xlu0 %v3397
      %v3525 = vpop.xlane.xlu0 %3524
      %3526 = vadd.xlane.f32.xlu0 %v3399
      %v3527 = vpop.xlane.xlu0 %3526
      %3528 = vadd.xlane.f32.xlu0 %v3401
      %v3529 = vpop.xlane.xlu0 %3528
      %3530 = vadd.xlane.f32.xlu0 %v3403
      %v3531 = vpop.xlane.xlu0 %3530
      %3532 = vadd.xlane.f32.xlu0 %v3405
      %v3533 = vpop.xlane.xlu0 %3532
      %3534 = vadd.xlane.f32.xlu0 %v3407
      %v3535 = vpop.xlane.xlu0 %3534
      %3536 = vadd.xlane.f32.xlu0 %v3409
      %v3537 = vpop.xlane.xlu0 %3536
      %3538 = vadd.xlane.f32.xlu0 %v3411
      %v3539 = vpop.xlane.xlu0 %3538
      %3540 = vadd.xlane.f32.xlu0 %v3413
      %v3541 = vpop.xlane.xlu0 %3540
      %3542 = vadd.xlane.f32.xlu0 %v3415
      %v3543 = vpop.xlane.xlu0 %3542
      %3544 = vadd.xlane.f32.xlu0 %v3417
      %v3545 = vpop.xlane.xlu0 %3544
      %3546 = vadd.xlane.f32.xlu0 %v3419
      %v3547 = vpop.xlane.xlu0 %3546
      %3548 = vadd.xlane.f32.xlu0 %v3421
      %v3549 = vpop.xlane.xlu0 %3548
      %3550 = vadd.xlane.f32.xlu0 %v3423
      %v3551 = vpop.xlane.xlu0 %3550
      %3552 = vadd.xlane.f32.xlu0 %v3425
      %v3553 = vpop.xlane.xlu0 %3552
      %3554 = vadd.xlane.f32.xlu0 %v3427
      %v3555 = vpop.xlane.xlu0 %3554
      %3556 = vadd.xlane.f32.xlu0 %v3429
      %v3557 = vpop.xlane.xlu0 %3556
      %3558 = vadd.xlane.f32.xlu0 %v3431
      %v3559 = vpop.xlane.xlu0 %3558
      %3560 = vadd.xlane.f32.xlu0 %v3433
      %v3561 = vpop.xlane.xlu0 %3560
      %3562 = vadd.xlane.f32.xlu0 %v3435
      %v3563 = vpop.xlane.xlu0 %3562
      %3564 = vadd.xlane.f32.xlu0 %v3437
      %v3565 = vpop.xlane.xlu0 %3564
      %3566 = vadd.xlane.f32.xlu0 %v3439
      %v3567 = vpop.xlane.xlu0 %3566
      %3568 = vadd.xlane.f32.xlu0 %v3441
      %v3569 = vpop.xlane.xlu0 %3568
      %3570 = vadd.xlane.f32.xlu0 %v3443
      %v3571 = vpop.xlane.xlu0 %3570
      %v3572 = vrcp.pop %v3445
      %v3573 = vrcp.pop %v3447
      %v3574 = vrcp.pop %v3449
      %v3575 = vrcp.pop %v3451
      %v3576 = vrcp.pop %v3453
      %v3577 = vrcp.pop %v3455
      %v3578 = vrcp.pop %v3457
      %v3579 = vrcp.pop %v3459
      %v3580 = vrcp.pop %v3461
      %v3581 = vrcp.pop %v3463
      %v3582 = vrcp.pop %v3465
      %v3583 = vrcp.pop %v3467
      %v3584 = vrcp.pop %v3469
      %v3585 = vrcp.pop %v3471
      %v3586 = vrcp.pop %v3473
      %v3587 = vrcp.pop %v3475
      %v3588 = vrcp.pop %v3477
      %v3589 = vrcp.pop %v3479
      %v3590 = vrcp.pop %v3481
      %v3591 = vrcp.pop %v3483
      %v3592 = vrcp.pop %v3485
      %v3593 = vrcp.pop %v3487
      %v3594 = vrcp.pop %v3489
      %v3595 = vrcp.pop %v3491
      %v3596 = vrcp.pop %v3493
      %v3597 = vrcp.pop %v3495
      %v3598 = vrcp.pop %v3497
      %v3599 = vrcp.pop %v3499
      %v3600 = vrcp.pop %v3501
      %v3601 = vrcp.pop %v3503
      %v3602 = vrcp.pop %v3505
      %v3603 = vrcp.pop %v3507
      %v3604 = vrcp.pop %v3509
      %v3605 = vrcp.pop %v3511
      %v3606 = vrcp.pop %v3513
      %v3607 = vrcp.pop %v3515
      %v3608 = vrcp.pop %v3517
      %v3609 = vrcp.pop %v3519
      %v3610 = vrcp.pop %v3521
      %v3611 = vrcp.pop %v3523
      %v3612 = vrcp.pop %v3525
      %v3613 = vrcp.pop %v3527
      %v3614 = vrcp.pop %v3529
      %v3615 = vrcp.pop %v3531
      %v3616 = vrcp.pop %v3533
      %v3617 = vrcp.pop %v3535
      %v3618 = vrcp.pop %v3537
      %v3619 = vrcp.pop %v3539
      %v3620 = vrcp.pop %v3541
      %v3621 = vrcp.pop %v3543
      %v3622 = vrcp.pop %v3545
      %v3623 = vrcp.pop %v3547
      %v3624 = vrcp.pop %v3549
      %v3625 = vrcp.pop %v3551
      %v3626 = vrcp.pop %v3553
      %v3627 = vrcp.pop %v3555
      %v3628 = vrcp.pop %v3557
      %v3629 = vrcp.pop %v3559
      %v3630 = vrcp.pop %v3561
      %v3631 = vrcp.pop %v3563
      %v3632 = vrcp.pop %v3565
      %v3633 = vrcp.pop %v3567
      %v3634 = vrcp.pop %v3569
      %v3635 = vrcp.pop %v3571
      %v3636 = vmul.f32 %v3317, %v3572
      %v3637 = vmul.f32 %v3319, %v3573
      %v3638 = vmul.f32 %v3321, %v3574
      %v3639 = vmul.f32 %v3323, %v3575
      %v3640 = vmul.f32 %v3325, %v3576
      %v3641 = vmul.f32 %v3327, %v3577
      %v3642 = vmul.f32 %v3329, %v3578
      %v3643 = vmul.f32 %v3331, %v3579
      %v3644 = vmul.f32 %v3333, %v3580
      %v3645 = vmul.f32 %v3335, %v3581
      %v3646 = vmul.f32 %v3337, %v3582
      %v3647 = vmul.f32 %v3339, %v3583
      %v3648 = vmul.f32 %v3341, %v3584
      %v3649 = vmul.f32 %v3343, %v3585
      %v3650 = vmul.f32 %v3345, %v3586
      %v3651 = vmul.f32 %v3347, %v3587
      %v3652 = vmul.f32 %v3349, %v3588
      %v3653 = vmul.f32 %v3351, %v3589
      %v3654 = vmul.f32 %v3353, %v3590
      %v3655 = vmul.f32 %v3355, %v3591
      %v3656 = vmul.f32 %v3357, %v3592
      %v3657 = vmul.f32 %v3359, %v3593
      %v3658 = vmul.f32 %v3361, %v3594
      %v3659 = vmul.f32 %v3363, %v3595
      %v3660 = vmul.f32 %v3365, %v3596
      %v3661 = vmul.f32 %v3367, %v3597
      %v3662 = vmul.f32 %v3369, %v3598
      %v3663 = vmul.f32 %v3371, %v3599
      %v3664 = vmul.f32 %v3373, %v3600
      %v3665 = vmul.f32 %v3375, %v3601
      %v3666 = vmul.f32 %v3377, %v3602
      %v3667 = vmul.f32 %v3379, %v3603
      %v3668 = vmul.f32 %v3381, %v3604
      %v3669 = vmul.f32 %v3383, %v3605
      %v3670 = vmul.f32 %v3385, %v3606
      %v3671 = vmul.f32 %v3387, %v3607
      %v3672 = vmul.f32 %v3389, %v3608
      %v3673 = vmul.f32 %v3391, %v3609
      %v3674 = vmul.f32 %v3393, %v3610
      %v3675 = vmul.f32 %v3395, %v3611
      %v3676 = vmul.f32 %v3397, %v3612
      %v3677 = vmul.f32 %v3399, %v3613
      %v3678 = vmul.f32 %v3401, %v3614
      %v3679 = vmul.f32 %v3403, %v3615
      %v3680 = vmul.f32 %v3405, %v3616
      %v3681 = vmul.f32 %v3407, %v3617
      %v3682 = vmul.f32 %v3409, %v3618
      %v3683 = vmul.f32 %v3411, %v3619
      %v3684 = vmul.f32 %v3413, %v3620
      %v3685 = vmul.f32 %v3415, %v3621
      %v3686 = vmul.f32 %v3417, %v3622
      %v3687 = vmul.f32 %v3419, %v3623
      %v3688 = vmul.f32 %v3421, %v3624
      %v3689 = vmul.f32 %v3423, %v3625
      %v3690 = vmul.f32 %v3425, %v3626
      %v3691 = vmul.f32 %v3427, %v3627
      %v3692 = vmul.f32 %v3429, %v3628
      %v3693 = vmul.f32 %v3431, %v3629
      %v3694 = vmul.f32 %v3433, %v3630
      %v3695 = vmul.f32 %v3435, %v3631
      %v3696 = vmul.f32 %v3437, %v3632
      %v3697 = vmul.f32 %v3439, %v3633
      %v3698 = vmul.f32 %v3441, %v3634
      %v3699 = vmul.f32 %v3443, %v3635
      %v3700 = vpack.c.bf16 %v3637, %v3636
      %v3701 = vpack.c.bf16 %v3639, %v3638
      %v3702 = vpack.c.bf16 %v3641, %v3640
      %v3703 = vpack.c.bf16 %v3643, %v3642
      %v3704 = vpack.c.bf16 %v3645, %v3644
      %v3705 = vpack.c.bf16 %v3647, %v3646
      %v3706 = vpack.c.bf16 %v3649, %v3648
      %v3707 = vpack.c.bf16 %v3651, %v3650
      %v3708 = vpack.c.bf16 %v3653, %v3652
      %v3709 = vpack.c.bf16 %v3655, %v3654
      %v3710 = vpack.c.bf16 %v3657, %v3656
      %v3711 = vpack.c.bf16 %v3659, %v3658
      %v3712 = vpack.c.bf16 %v3661, %v3660
      %v3713 = vpack.c.bf16 %v3663, %v3662
      %v3714 = vpack.c.bf16 %v3665, %v3664
      %v3715 = vpack.c.bf16 %v3667, %v3666
      %v3716 = vpack.c.bf16 %v3669, %v3668
      %v3717 = vpack.c.bf16 %v3671, %v3670
      %v3718 = vpack.c.bf16 %v3673, %v3672
      %v3719 = vpack.c.bf16 %v3675, %v3674
      %v3720 = vpack.c.bf16 %v3677, %v3676
      %v3721 = vpack.c.bf16 %v3679, %v3678
      %v3722 = vpack.c.bf16 %v3681, %v3680
      %v3723 = vpack.c.bf16 %v3683, %v3682
      %v3724 = vpack.c.bf16 %v3685, %v3684
      %v3725 = vpack.c.bf16 %v3687, %v3686
      %v3726 = vpack.c.bf16 %v3689, %v3688
      %v3727 = vpack.c.bf16 %v3691, %v3690
      %v3728 = vpack.c.bf16 %v3693, %v3692
      %v3729 = vpack.c.bf16 %v3695, %v3694
      %v3730 = vpack.c.bf16 %v3697, %v3696
      %v3731 = vpack.c.bf16 %v3699, %v3698
      %v3748 = vunpack.c.l.b16 %v681
      %v3749 = vunpack.c.l.b16 %v682
      %v3750 = vunpack.c.l.b16 %v683
      %v3751 = vunpack.c.l.b16 %v684
      %v3752 = vunpack.c.l.b16 %v685
      %v3753 = vunpack.c.l.b16 %v686
      %v3754 = vunpack.c.l.b16 %v687
      %v3755 = vunpack.c.l.b16 %v688
      %v3756 = vunpack.c.l.b16 %v689
      %v3757 = vunpack.c.l.b16 %v690
      %v3758 = vunpack.c.l.b16 %v691
      %v3759 = vunpack.c.l.b16 %v692
      %v3760 = vunpack.c.l.b16 %v693
      %v3761 = vunpack.c.l.b16 %v694
      %v3762 = vunpack.c.l.b16 %v695
      %v3763 = vunpack.c.l.b16 %v696
      %v3764 = vpack.c.b16 %v3749, %v3748
      %v3765 = vpack.c.b16 %v3751, %v3750
      %v3766 = vpack.c.b16 %v3753, %v3752
      %v3767 = vpack.c.b16 %v3755, %v3754
      %v3768 = vpack.c.b16 %v3757, %v3756
      %v3769 = vpack.c.b16 %v3759, %v3758
      %v3770 = vpack.c.b16 %v3761, %v3760
      %v3771 = vpack.c.b16 %v3763, %v3762
      %3780 = vmatprep.subr.bf16.mxu0 0
      %3781 = vmatpush1.bf16.msra.mxu0 %v3771
      %3782 = vmatprep.subr.bf16.mxu0 0
      %3783 = vmatpush1.bf16.msra.mxu0 %v3770
      %3784 = vmatprep.subr.bf16.mxu0 0
      %3785 = vmatpush1.bf16.msra.mxu0 %v3769
      %3786 = vmatprep.subr.bf16.mxu0 0
      %3787 = vmatpush1.bf16.msra.mxu0 %v3768
      %3788 = vmatprep.subr.bf16.mxu0 0
      %3789 = vmatpush1.bf16.msra.mxu0 %v3767
      %3790 = vmatprep.subr.bf16.mxu0 0
      %3791 = vmatpush1.bf16.msra.mxu0 %v3766
      %3792 = vmatprep.subr.bf16.mxu0 0
      %3793 = vmatpush1.bf16.msra.mxu0 %v3765
      %3794 = vmatprep.subr.bf16.mxu0 0
      %3795 = vmatpush1.bf16.msra.mxu0 %v3764
      %3796 = vmatprep.subr.bf16.mxu0 0
      %3797 = vmatpush2.bf16.msra.mxu0 0
      %3798 = vmatprep.subr.bf16.mxu0 0
      %3799 = vmatpush2.bf16.msra.mxu0 0
      %3800 = vmatprep.subr.bf16.mxu0 0
      %3801 = vmatpush2.bf16.msra.mxu0 0
      %3802 = vmatprep.subr.bf16.mxu0 0
      %3803 = vmatpush2.bf16.msra.mxu0 0
      %3804 = vmatprep.subr.bf16.mxu0 0
      %3805 = vmatpush2.bf16.msra.mxu0 0
      %3806 = vmatprep.subr.bf16.mxu0 0
      %3807 = vmatpush2.bf16.msra.mxu0 0
      %3808 = vmatprep.subr.bf16.mxu0 0
      %3809 = vmatpush2.bf16.msra.mxu0 0
      %3810 = vmatprep.subr.bf16.mxu0 0
      %3811 = vmatpush2.bf16.msra.mxu0 0
      %3812 = vmatprep.mubr.bf16.mxu0 0
      %3813 = vmatmul.mubr.bf16.gmra.mxu0 %v3700
      %v3814 = vpop.f32.mrf.mxu0
      %v3815 = vadd.f32 0.0, %v3814
      %v3816 = vpop.f32.mrf.mxu0
      %v3817 = vpop.f32.mrf.mxu0
      %v3818 = vadd.f32 0.0, %v3817
      %v3819 = vpop.f32.mrf.mxu0
      %3820 = vmatprep.mubr.bf16.mxu0 0
      %3821 = vmatmul.mubr.bf16.gmra.mxu0 %v3701
      %v3822 = vpop.f32.mrf.mxu0
      %v3823 = vadd.f32 0.0, %v3822
      %v3824 = vpop.f32.mrf.mxu0
      %v3825 = vpop.f32.mrf.mxu0
      %v3826 = vadd.f32 0.0, %v3825
      %v3827 = vpop.f32.mrf.mxu0
      %3828 = vmatprep.mubr.bf16.mxu0 0
      %3829 = vmatmul.mubr.bf16.gmra.mxu0 %v3702
      %v3830 = vpop.f32.mrf.mxu0
      %v3831 = vadd.f32 0.0, %v3830
      %v3832 = vpop.f32.mrf.mxu0
      %v3833 = vpop.f32.mrf.mxu0
      %v3834 = vadd.f32 0.0, %v3833
      %v3835 = vpop.f32.mrf.mxu0
      %3836 = vmatprep.mubr.bf16.mxu0 0
      %3837 = vmatmul.mubr.bf16.gmra.mxu0 %v3703
      %v3838 = vpop.f32.mrf.mxu0
      %v3839 = vadd.f32 0.0, %v3838
      %v3840 = vpop.f32.mrf.mxu0
      %v3841 = vpop.f32.mrf.mxu0
      %v3842 = vadd.f32 0.0, %v3841
      %v3843 = vpop.f32.mrf.mxu0
      %3844 = vmatprep.mubr.bf16.mxu0 0
      %3845 = vmatmul.mubr.bf16.gmra.mxu0 %v3704
      %v3846 = vpop.f32.mrf.mxu0
      %v3847 = vadd.f32 0.0, %v3846
      %v3848 = vpop.f32.mrf.mxu0
      %v3849 = vpop.f32.mrf.mxu0
      %v3850 = vadd.f32 0.0, %v3849
      %v3851 = vpop.f32.mrf.mxu0
      %3852 = vmatprep.mubr.bf16.mxu0 0
      %3853 = vmatmul.mubr.bf16.gmra.mxu0 %v3705
      %v3854 = vpop.f32.mrf.mxu0
      %v3855 = vadd.f32 0.0, %v3854
      %v3856 = vpop.f32.mrf.mxu0
      %v3857 = vpop.f32.mrf.mxu0
      %v3858 = vadd.f32 0.0, %v3857
      %v3859 = vpop.f32.mrf.mxu0
      %3860 = vmatprep.mubr.bf16.mxu0 0
      %3861 = vmatmul.mubr.bf16.gmra.mxu0 %v3706
      %v3862 = vpop.f32.mrf.mxu0
      %v3863 = vadd.f32 0.0, %v3862
      %v3864 = vpop.f32.mrf.mxu0
      %v3865 = vpop.f32.mrf.mxu0
      %v3866 = vadd.f32 0.0, %v3865
      %v3867 = vpop.f32.mrf.mxu0
      %3868 = vmatprep.mubr.bf16.mxu0 0
      %3869 = vmatmul.mubr.bf16.gmra.mxu0 %v3707
      %v3870 = vpop.f32.mrf.mxu0
      %v3871 = vadd.f32 0.0, %v3870
      %v3872 = vpop.f32.mrf.mxu0
      %v3873 = vpop.f32.mrf.mxu0
      %v3874 = vadd.f32 0.0, %v3873
      %v3875 = vpop.f32.mrf.mxu0
      %3876 = vdwg.mxu0
      %v3893 = vunpack.c.l.b16 %v697
      %v3894 = vunpack.c.l.b16 %v698
      %v3895 = vunpack.c.l.b16 %v699
      %v3896 = vunpack.c.l.b16 %v700
      %v3897 = vunpack.c.l.b16 %v701
      %v3898 = vunpack.c.l.b16 %v702
      %v3899 = vunpack.c.l.b16 %v703
      %v3900 = vunpack.c.l.b16 %v704
      %v3901 = vunpack.c.l.b16 %v705
      %v3902 = vunpack.c.l.b16 %v706
      %v3903 = vunpack.c.l.b16 %v707
      %v3904 = vunpack.c.l.b16 %v708
      %v3905 = vunpack.c.l.b16 %v709
      %v3906 = vunpack.c.l.b16 %v710
      %v3907 = vunpack.c.l.b16 %v711
      %v3908 = vunpack.c.l.b16 %v712
      %v3909 = vpack.c.b16 %v3894, %v3893
      %v3910 = vpack.c.b16 %v3896, %v3895
      %v3911 = vpack.c.b16 %v3898, %v3897
      %v3912 = vpack.c.b16 %v3900, %v3899
      %v3913 = vpack.c.b16 %v3902, %v3901
      %v3914 = vpack.c.b16 %v3904, %v3903
      %v3915 = vpack.c.b16 %v3906, %v3905
      %v3916 = vpack.c.b16 %v3908, %v3907
      %3925 = vmatprep.subr.bf16.mxu0 0
      %3926 = vmatpush1.bf16.msra.mxu0 %v3916
      %3927 = vmatprep.subr.bf16.mxu0 0
      %3928 = vmatpush1.bf16.msra.mxu0 %v3915
      %3929 = vmatprep.subr.bf16.mxu0 0
      %3930 = vmatpush1.bf16.msra.mxu0 %v3914
      %3931 = vmatprep.subr.bf16.mxu0 0
      %3932 = vmatpush1.bf16.msra.mxu0 %v3913
      %3933 = vmatprep.subr.bf16.mxu0 0
      %3934 = vmatpush1.bf16.msra.mxu0 %v3912
      %3935 = vmatprep.subr.bf16.mxu0 0
      %3936 = vmatpush1.bf16.msra.mxu0 %v3911
      %3937 = vmatprep.subr.bf16.mxu0 0
      %3938 = vmatpush1.bf16.msra.mxu0 %v3910
      %3939 = vmatprep.subr.bf16.mxu0 0
      %3940 = vmatpush1.bf16.msra.mxu0 %v3909
      %3941 = vmatprep.subr.bf16.mxu0 0
      %3942 = vmatpush2.bf16.msra.mxu0 0
      %3943 = vmatprep.subr.bf16.mxu0 0
      %3944 = vmatpush2.bf16.msra.mxu0 0
      %3945 = vmatprep.subr.bf16.mxu0 0
      %3946 = vmatpush2.bf16.msra.mxu0 0
      %3947 = vmatprep.subr.bf16.mxu0 0
      %3948 = vmatpush2.bf16.msra.mxu0 0
      %3949 = vmatprep.subr.bf16.mxu0 0
      %3950 = vmatpush2.bf16.msra.mxu0 0
      %3951 = vmatprep.subr.bf16.mxu0 0
      %3952 = vmatpush2.bf16.msra.mxu0 0
      %3953 = vmatprep.subr.bf16.mxu0 0
      %3954 = vmatpush2.bf16.msra.mxu0 0
      %3955 = vmatprep.subr.bf16.mxu0 0
      %3956 = vmatpush2.bf16.msra.mxu0 0
      %3957 = vmatprep.mubr.bf16.mxu0 0
      %3958 = vmatmul.mubr.bf16.gmra.mxu0 %v3708
      %v3959 = vpop.f32.mrf.mxu0
      %v3960 = vadd.f32 0.0, %v3959
      %v3961 = vpop.f32.mrf.mxu0
      %v3962 = vpop.f32.mrf.mxu0
      %v3963 = vadd.f32 0.0, %v3962
      %v3964 = vpop.f32.mrf.mxu0
      %3965 = vmatprep.mubr.bf16.mxu0 0
      %3966 = vmatmul.mubr.bf16.gmra.mxu0 %v3709
      %v3967 = vpop.f32.mrf.mxu0
      %v3968 = vadd.f32 0.0, %v3967
      %v3969 = vpop.f32.mrf.mxu0
      %v3970 = vpop.f32.mrf.mxu0
      %v3971 = vadd.f32 0.0, %v3970
      %v3972 = vpop.f32.mrf.mxu0
      %3973 = vmatprep.mubr.bf16.mxu0 0
      %3974 = vmatmul.mubr.bf16.gmra.mxu0 %v3710
      %v3975 = vpop.f32.mrf.mxu0
      %v3976 = vadd.f32 0.0, %v3975
      %v3977 = vpop.f32.mrf.mxu0
      %v3978 = vpop.f32.mrf.mxu0
      %v3979 = vadd.f32 0.0, %v3978
      %v3980 = vpop.f32.mrf.mxu0
      %3981 = vmatprep.mubr.bf16.mxu0 0
      %3982 = vmatmul.mubr.bf16.gmra.mxu0 %v3711
      %v3983 = vpop.f32.mrf.mxu0
      %v3984 = vadd.f32 0.0, %v3983
      %v3985 = vpop.f32.mrf.mxu0
      %v3986 = vpop.f32.mrf.mxu0
      %v3987 = vadd.f32 0.0, %v3986
      %v3988 = vpop.f32.mrf.mxu0
      %3989 = vmatprep.mubr.bf16.mxu0 0
      %3990 = vmatmul.mubr.bf16.gmra.mxu0 %v3712
      %v3991 = vpop.f32.mrf.mxu0
      %v3992 = vadd.f32 0.0, %v3991
      %v3993 = vpop.f32.mrf.mxu0
      %v3994 = vpop.f32.mrf.mxu0
      %v3995 = vadd.f32 0.0, %v3994
      %v3996 = vpop.f32.mrf.mxu0
      %3997 = vmatprep.mubr.bf16.mxu0 0
      %3998 = vmatmul.mubr.bf16.gmra.mxu0 %v3713
      %v3999 = vpop.f32.mrf.mxu0
      %v4000 = vadd.f32 0.0, %v3999
      %v4001 = vpop.f32.mrf.mxu0
      %v4002 = vpop.f32.mrf.mxu0
      %v4003 = vadd.f32 0.0, %v4002
      %v4004 = vpop.f32.mrf.mxu0
      %4005 = vmatprep.mubr.bf16.mxu0 0
      %4006 = vmatmul.mubr.bf16.gmra.mxu0 %v3714
      %v4007 = vpop.f32.mrf.mxu0
      %v4008 = vadd.f32 0.0, %v4007
      %v4009 = vpop.f32.mrf.mxu0
      %v4010 = vpop.f32.mrf.mxu0
      %v4011 = vadd.f32 0.0, %v4010
      %v4012 = vpop.f32.mrf.mxu0
      %4013 = vmatprep.mubr.bf16.mxu0 0
      %4014 = vmatmul.mubr.bf16.gmra.mxu0 %v3715
      %v4015 = vpop.f32.mrf.mxu0
      %v4016 = vadd.f32 0.0, %v4015
      %v4017 = vpop.f32.mrf.mxu0
      %v4018 = vpop.f32.mrf.mxu0
      %v4019 = vadd.f32 0.0, %v4018
      %v4020 = vpop.f32.mrf.mxu0
      %4021 = vdwg.mxu0
      %v4038 = vunpack.c.l.b16 %v713
      %v4039 = vunpack.c.l.b16 %v714
      %v4040 = vunpack.c.l.b16 %v715
      %v4041 = vunpack.c.l.b16 %v716
      %v4042 = vunpack.c.l.b16 %v717
      %v4043 = vunpack.c.l.b16 %v718
      %v4044 = vunpack.c.l.b16 %v719
      %v4045 = vunpack.c.l.b16 %v720
      %v4046 = vunpack.c.l.b16 %v721
      %v4047 = vunpack.c.l.b16 %v722
      %v4048 = vunpack.c.l.b16 %v723
      %v4049 = vunpack.c.l.b16 %v724
      %v4050 = vunpack.c.l.b16 %v725
      %v4051 = vunpack.c.l.b16 %v726
      %v4052 = vunpack.c.l.b16 %v727
      %v4053 = vunpack.c.l.b16 %v728
      %v4054 = vpack.c.b16 %v4039, %v4038
      %v4055 = vpack.c.b16 %v4041, %v4040
      %v4056 = vpack.c.b16 %v4043, %v4042
      %v4057 = vpack.c.b16 %v4045, %v4044
      %v4058 = vpack.c.b16 %v4047, %v4046
      %v4059 = vpack.c.b16 %v4049, %v4048
      %v4060 = vpack.c.b16 %v4051, %v4050
      %v4061 = vpack.c.b16 %v4053, %v4052
      %4070 = vmatprep.subr.bf16.mxu0 0
      %4071 = vmatpush1.bf16.msra.mxu0 %v4061
      %4072 = vmatprep.subr.bf16.mxu0 0
      %4073 = vmatpush1.bf16.msra.mxu0 %v4060
      %4074 = vmatprep.subr.bf16.mxu0 0
      %4075 = vmatpush1.bf16.msra.mxu0 %v4059
      %4076 = vmatprep.subr.bf16.mxu0 0
      %4077 = vmatpush1.bf16.msra.mxu0 %v4058
      %4078 = vmatprep.subr.bf16.mxu0 0
      %4079 = vmatpush1.bf16.msra.mxu0 %v4057
      %4080 = vmatprep.subr.bf16.mxu0 0
      %4081 = vmatpush1.bf16.msra.mxu0 %v4056
      %4082 = vmatprep.subr.bf16.mxu0 0
      %4083 = vmatpush1.bf16.msra.mxu0 %v4055
      %4084 = vmatprep.subr.bf16.mxu0 0
      %4085 = vmatpush1.bf16.msra.mxu0 %v4054
      %4086 = vmatprep.subr.bf16.mxu0 0
      %4087 = vmatpush2.bf16.msra.mxu0 0
      %4088 = vmatprep.subr.bf16.mxu0 0
      %4089 = vmatpush2.bf16.msra.mxu0 0
      %4090 = vmatprep.subr.bf16.mxu0 0
      %4091 = vmatpush2.bf16.msra.mxu0 0
      %4092 = vmatprep.subr.bf16.mxu0 0
      %4093 = vmatpush2.bf16.msra.mxu0 0
      %4094 = vmatprep.subr.bf16.mxu0 0
      %4095 = vmatpush2.bf16.msra.mxu0 0
      %4096 = vmatprep.subr.bf16.mxu0 0
      %4097 = vmatpush2.bf16.msra.mxu0 0
      %4098 = vmatprep.subr.bf16.mxu0 0
      %4099 = vmatpush2.bf16.msra.mxu0 0
      %4100 = vmatprep.subr.bf16.mxu0 0
      %4101 = vmatpush2.bf16.msra.mxu0 0
      %4102 = vmatprep.mubr.bf16.mxu0 0
      %4103 = vmatmul.mubr.bf16.gmra.mxu0 %v3716
      %v4104 = vpop.f32.mrf.mxu0
      %v4105 = vadd.f32 0.0, %v4104
      %v4106 = vpop.f32.mrf.mxu0
      %v4107 = vpop.f32.mrf.mxu0
      %v4108 = vadd.f32 0.0, %v4107
      %v4109 = vpop.f32.mrf.mxu0
      %4110 = vmatprep.mubr.bf16.mxu0 0
      %4111 = vmatmul.mubr.bf16.gmra.mxu0 %v3717
      %v4112 = vpop.f32.mrf.mxu0
      %v4113 = vadd.f32 0.0, %v4112
      %v4114 = vpop.f32.mrf.mxu0
      %v4115 = vpop.f32.mrf.mxu0
      %v4116 = vadd.f32 0.0, %v4115
      %v4117 = vpop.f32.mrf.mxu0
      %4118 = vmatprep.mubr.bf16.mxu0 0
      %4119 = vmatmul.mubr.bf16.gmra.mxu0 %v3718
      %v4120 = vpop.f32.mrf.mxu0
      %v4121 = vadd.f32 0.0, %v4120
      %v4122 = vpop.f32.mrf.mxu0
      %v4123 = vpop.f32.mrf.mxu0
      %v4124 = vadd.f32 0.0, %v4123
      %v4125 = vpop.f32.mrf.mxu0
      %4126 = vmatprep.mubr.bf16.mxu0 0
      %4127 = vmatmul.mubr.bf16.gmra.mxu0 %v3719
      %v4128 = vpop.f32.mrf.mxu0
      %v4129 = vadd.f32 0.0, %v4128
      %v4130 = vpop.f32.mrf.mxu0
      %v4131 = vpop.f32.mrf.mxu0
      %v4132 = vadd.f32 0.0, %v4131
      %v4133 = vpop.f32.mrf.mxu0
      %4134 = vmatprep.mubr.bf16.mxu0 0
      %4135 = vmatmul.mubr.bf16.gmra.mxu0 %v3720
      %v4136 = vpop.f32.mrf.mxu0
      %v4137 = vadd.f32 0.0, %v4136
      %v4138 = vpop.f32.mrf.mxu0
      %v4139 = vpop.f32.mrf.mxu0
      %v4140 = vadd.f32 0.0, %v4139
      %v4141 = vpop.f32.mrf.mxu0
      %4142 = vmatprep.mubr.bf16.mxu0 0
      %4143 = vmatmul.mubr.bf16.gmra.mxu0 %v3721
      %v4144 = vpop.f32.mrf.mxu0
      %v4145 = vadd.f32 0.0, %v4144
      %v4146 = vpop.f32.mrf.mxu0
      %v4147 = vpop.f32.mrf.mxu0
      %v4148 = vadd.f32 0.0, %v4147
      %v4149 = vpop.f32.mrf.mxu0
      %4150 = vmatprep.mubr.bf16.mxu0 0
      %4151 = vmatmul.mubr.bf16.gmra.mxu0 %v3722
      %v4152 = vpop.f32.mrf.mxu0
      %v4153 = vadd.f32 0.0, %v4152
      %v4154 = vpop.f32.mrf.mxu0
      %v4155 = vpop.f32.mrf.mxu0
      %v4156 = vadd.f32 0.0, %v4155
      %v4157 = vpop.f32.mrf.mxu0
      %4158 = vmatprep.mubr.bf16.mxu0 0
      %4159 = vmatmul.mubr.bf16.gmra.mxu0 %v3723
      %v4160 = vpop.f32.mrf.mxu0
      %v4161 = vadd.f32 0.0, %v4160
      %v4162 = vpop.f32.mrf.mxu0
      %v4163 = vpop.f32.mrf.mxu0
      %v4164 = vadd.f32 0.0, %v4163
      %v4165 = vpop.f32.mrf.mxu0
      %4166 = vdwg.mxu0
      %v4183 = vunpack.c.l.b16 %v729
      %v4184 = vunpack.c.l.b16 %v730
      %v4185 = vunpack.c.l.b16 %v731
      %v4186 = vunpack.c.l.b16 %v732
      %v4187 = vunpack.c.l.b16 %v733
      %v4188 = vunpack.c.l.b16 %v734
      %v4189 = vunpack.c.l.b16 %v735
      %v4190 = vunpack.c.l.b16 %v736
      %v4191 = vunpack.c.l.b16 %v737
      %v4192 = vunpack.c.l.b16 %v738
      %v4193 = vunpack.c.l.b16 %v739
      %v4194 = vunpack.c.l.b16 %v740
      %v4195 = vunpack.c.l.b16 %v741
      %v4196 = vunpack.c.l.b16 %v742
      %v4197 = vunpack.c.l.b16 %v743
      %v4198 = vunpack.c.l.b16 %v744
      %v4199 = vpack.c.b16 %v4184, %v4183
      %v4200 = vpack.c.b16 %v4186, %v4185
      %v4201 = vpack.c.b16 %v4188, %v4187
      %v4202 = vpack.c.b16 %v4190, %v4189
      %v4203 = vpack.c.b16 %v4192, %v4191
      %v4204 = vpack.c.b16 %v4194, %v4193
      %v4205 = vpack.c.b16 %v4196, %v4195
      %v4206 = vpack.c.b16 %v4198, %v4197
      %4215 = vmatprep.subr.bf16.mxu0 0
      %4216 = vmatpush1.bf16.msra.mxu0 %v4206
      %4217 = vmatprep.subr.bf16.mxu0 0
      %4218 = vmatpush1.bf16.msra.mxu0 %v4205
      %4219 = vmatprep.subr.bf16.mxu0 0
      %4220 = vmatpush1.bf16.msra.mxu0 %v4204
      %4221 = vmatprep.subr.bf16.mxu0 0
      %4222 = vmatpush1.bf16.msra.mxu0 %v4203
      %4223 = vmatprep.subr.bf16.mxu0 0
      %4224 = vmatpush1.bf16.msra.mxu0 %v4202
      %4225 = vmatprep.subr.bf16.mxu0 0
      %4226 = vmatpush1.bf16.msra.mxu0 %v4201
      %4227 = vmatprep.subr.bf16.mxu0 0
      %4228 = vmatpush1.bf16.msra.mxu0 %v4200
      %4229 = vmatprep.subr.bf16.mxu0 0
      %4230 = vmatpush1.bf16.msra.mxu0 %v4199
      %4231 = vmatprep.subr.bf16.mxu0 0
      %4232 = vmatpush2.bf16.msra.mxu0 0
      %4233 = vmatprep.subr.bf16.mxu0 0
      %4234 = vmatpush2.bf16.msra.mxu0 0
      %4235 = vmatprep.subr.bf16.mxu0 0
      %4236 = vmatpush2.bf16.msra.mxu0 0
      %4237 = vmatprep.subr.bf16.mxu0 0
      %4238 = vmatpush2.bf16.msra.mxu0 0
      %4239 = vmatprep.subr.bf16.mxu0 0
      %4240 = vmatpush2.bf16.msra.mxu0 0
      %4241 = vmatprep.subr.bf16.mxu0 0
      %4242 = vmatpush2.bf16.msra.mxu0 0
      %4243 = vmatprep.subr.bf16.mxu0 0
      %4244 = vmatpush2.bf16.msra.mxu0 0
      %4245 = vmatprep.subr.bf16.mxu0 0
      %4246 = vmatpush2.bf16.msra.mxu0 0
      %4247 = vmatprep.mubr.bf16.mxu0 0
      %4248 = vmatmul.mubr.bf16.gmra.mxu0 %v3724
      %v4249 = vpop.f32.mrf.mxu0
      %v4250 = vadd.f32 0.0, %v4249
      %v4251 = vpop.f32.mrf.mxu0
      %v4252 = vpop.f32.mrf.mxu0
      %v4253 = vadd.f32 0.0, %v4252
      %v4254 = vpop.f32.mrf.mxu0
      %4255 = vmatprep.mubr.bf16.mxu0 0
      %4256 = vmatmul.mubr.bf16.gmra.mxu0 %v3725
      %v4257 = vpop.f32.mrf.mxu0
      %v4258 = vadd.f32 0.0, %v4257
      %v4259 = vpop.f32.mrf.mxu0
      %v4260 = vpop.f32.mrf.mxu0
      %v4261 = vadd.f32 0.0, %v4260
      %v4262 = vpop.f32.mrf.mxu0
      %4263 = vmatprep.mubr.bf16.mxu0 0
      %4264 = vmatmul.mubr.bf16.gmra.mxu0 %v3726
      %v4265 = vpop.f32.mrf.mxu0
      %v4266 = vadd.f32 0.0, %v4265
      %v4267 = vpop.f32.mrf.mxu0
      %v4268 = vpop.f32.mrf.mxu0
      %v4269 = vadd.f32 0.0, %v4268
      %v4270 = vpop.f32.mrf.mxu0
      %4271 = vmatprep.mubr.bf16.mxu0 0
      %4272 = vmatmul.mubr.bf16.gmra.mxu0 %v3727
      %v4273 = vpop.f32.mrf.mxu0
      %v4274 = vadd.f32 0.0, %v4273
      %v4275 = vpop.f32.mrf.mxu0
      %v4276 = vpop.f32.mrf.mxu0
      %v4277 = vadd.f32 0.0, %v4276
      %v4278 = vpop.f32.mrf.mxu0
      %4279 = vmatprep.mubr.bf16.mxu0 0
      %4280 = vmatmul.mubr.bf16.gmra.mxu0 %v3728
      %v4281 = vpop.f32.mrf.mxu0
      %v4282 = vadd.f32 0.0, %v4281
      %v4283 = vpop.f32.mrf.mxu0
      %v4284 = vpop.f32.mrf.mxu0
      %v4285 = vadd.f32 0.0, %v4284
      %v4286 = vpop.f32.mrf.mxu0
      %4287 = vmatprep.mubr.bf16.mxu0 0
      %4288 = vmatmul.mubr.bf16.gmra.mxu0 %v3729
      %v4289 = vpop.f32.mrf.mxu0
      %v4290 = vadd.f32 0.0, %v4289
      %v4291 = vpop.f32.mrf.mxu0
      %v4292 = vpop.f32.mrf.mxu0
      %v4293 = vadd.f32 0.0, %v4292
      %v4294 = vpop.f32.mrf.mxu0
      %4295 = vmatprep.mubr.bf16.mxu0 0
      %4296 = vmatmul.mubr.bf16.gmra.mxu0 %v3730
      %v4297 = vpop.f32.mrf.mxu0
      %v4298 = vadd.f32 0.0, %v4297
      %v4299 = vpop.f32.mrf.mxu0
      %v4300 = vpop.f32.mrf.mxu0
      %v4301 = vadd.f32 0.0, %v4300
      %v4302 = vpop.f32.mrf.mxu0
      %4303 = vmatprep.mubr.bf16.mxu0 0
      %4304 = vmatmul.mubr.bf16.gmra.mxu0 %v3731
      %v4305 = vpop.f32.mrf.mxu0
      %v4306 = vadd.f32 0.0, %v4305
      %v4307 = vpop.f32.mrf.mxu0
      %v4308 = vpop.f32.mrf.mxu0
      %v4309 = vadd.f32 0.0, %v4308
      %v4310 = vpop.f32.mrf.mxu0
      %4311 = vdwg.mxu0
      %v4312 = vpack.c.bf16 %v3818, %v3815
      %v4313 = vpack.c.bf16 %v3826, %v3823
      %v4314 = vpack.c.bf16 %v3834, %v3831
      %v4315 = vpack.c.bf16 %v3842, %v3839
      %v4316 = vpack.c.bf16 %v3850, %v3847
      %v4317 = vpack.c.bf16 %v3858, %v3855
      %v4318 = vpack.c.bf16 %v3866, %v3863
      %v4319 = vpack.c.bf16 %v3874, %v3871
      %v4320 = vpack.c.bf16 %v3963, %v3960
      %v4321 = vpack.c.bf16 %v3971, %v3968
      %v4322 = vpack.c.bf16 %v3979, %v3976
      %v4323 = vpack.c.bf16 %v3987, %v3984
      %v4324 = vpack.c.bf16 %v3995, %v3992
      %v4325 = vpack.c.bf16 %v4003, %v4000
      %v4326 = vpack.c.bf16 %v4011, %v4008
      %v4327 = vpack.c.bf16 %v4019, %v4016
      %v4328 = vpack.c.bf16 %v4108, %v4105
      %v4329 = vpack.c.bf16 %v4116, %v4113
      %v4330 = vpack.c.bf16 %v4124, %v4121
      %v4331 = vpack.c.bf16 %v4132, %v4129
      %v4332 = vpack.c.bf16 %v4140, %v4137
      %v4333 = vpack.c.bf16 %v4148, %v4145
      %v4334 = vpack.c.bf16 %v4156, %v4153
      %v4335 = vpack.c.bf16 %v4164, %v4161
      %v4336 = vpack.c.bf16 %v4253, %v4250
      %v4337 = vpack.c.bf16 %v4261, %v4258
      %v4338 = vpack.c.bf16 %v4269, %v4266
      %v4339 = vpack.c.bf16 %v4277, %v4274
      %v4340 = vpack.c.bf16 %v4285, %v4282
      %v4341 = vpack.c.bf16 %v4293, %v4290
      %v4342 = vpack.c.bf16 %v4301, %v4298
      %v4343 = vpack.c.bf16 %v4309, %v4306
      %v4344 = vld [vmem:[%s8] sm:$0xf]
      %v4345 = vld [vmem:[%s8 + $0x4] sm:$0xf]
      %s4346 = scalar_lea.vmem %s8, 8
      %v4347 = vld [vmem:[%s4346] sm:$0xf]
      %v4348 = vld [vmem:[%s4346 + $0x4] sm:$0xf]
      %v4351 = vunpack.c.l.b16 %v4347
      %v4352 = vunpack.c.l.b16 %v4348
      %v4353 = vpack.c.b16 %v4352, %v4351
      %v4356 = vsel %vm1225, %v4320, 0
      %v4359 = vsel %vm1225, %v4321, 0
      %v4362 = vsel %vm1225, %v4322, 0
      %v4365 = vsel %vm1225, %v4323, 0
      %v4368 = vsel %vm1225, %v4324, 0
      %v4371 = vsel %vm1225, %v4325, 0
      %v4374 = vsel %vm1225, %v4326, 0
      %v4377 = vsel %vm1225, %v4327, 0
      %4379 = vmatprep.subr.bf16.mxu0 0
      %4380 = vmatpush1.bf16.msra.mxu0 0
      %4381 = vmatprep.subr.bf16.mxu0 0
      %4382 = vmatpush1.bf16.msra.mxu0 0
      %4383 = vmatprep.subr.bf16.mxu0 0
      %4384 = vmatpush1.bf16.msra.mxu0 0
      %4385 = vmatprep.subr.bf16.mxu0 0
      %4386 = vmatpush1.bf16.msra.mxu0 0
      %4387 = vmatprep.subr.bf16.mxu0 0
      %4388 = vmatpush1.bf16.msra.mxu0 0
      %4389 = vmatprep.subr.bf16.mxu0 0
      %4390 = vmatpush1.bf16.msra.mxu0 0
      %4391 = vmatprep.subr.bf16.mxu0 0
      %4392 = vmatpush1.bf16.msra.mxu0 0
      %4393 = vmatprep.subr.bf16.mxu0 0
      %4394 = vmatpush1.bf16.msra.mxu0 %v4353
      %4395 = vmatprep.subr.bf16.mxu0 0
      %4396 = vmatpush2.bf16.msra.mxu0 0
      %4397 = vmatprep.subr.bf16.mxu0 0
      %4398 = vmatpush2.bf16.msra.mxu0 0
      %4399 = vmatprep.subr.bf16.mxu0 0
      %4400 = vmatpush2.bf16.msra.mxu0 0
      %4401 = vmatprep.subr.bf16.mxu0 0
      %4402 = vmatpush2.bf16.msra.mxu0 0
      %4403 = vmatprep.subr.bf16.mxu0 0
      %4404 = vmatpush2.bf16.msra.mxu0 0
      %4405 = vmatprep.subr.bf16.mxu0 0
      %4406 = vmatpush2.bf16.msra.mxu0 0
      %4407 = vmatprep.subr.bf16.mxu0 0
      %4408 = vmatpush2.bf16.msra.mxu0 0
      %4409 = vmatprep.subr.bf16.mxu0 0
      %4410 = vmatpush2.bf16.msra.mxu0 0
      %4411 = vmatprep.mubr.bf16.mxu0 0
      %4412 = vmatmul.mubr.bf16.gmra.mxu0 %v4356
      %v4413 = vpop.f32.mrf.mxu0
      %v4414 = vadd.f32 0.0, %v4413
      %v4415 = vpop.f32.mrf.mxu0
      %v4416 = vpop.f32.mrf.mxu0
      %v4417 = vadd.f32 0.0, %v4416
      %v4418 = vpop.f32.mrf.mxu0
      %4419 = vmatprep.mubr.bf16.mxu0 0
      %4420 = vmatmul.mubr.bf16.gmra.mxu0 %v4359
      %v4421 = vpop.f32.mrf.mxu0
      %v4422 = vadd.f32 0.0, %v4421
      %v4423 = vpop.f32.mrf.mxu0
      %v4424 = vpop.f32.mrf.mxu0
      %v4425 = vadd.f32 0.0, %v4424
      %v4426 = vpop.f32.mrf.mxu0
      %4427 = vmatprep.mubr.bf16.mxu0 0
      %4428 = vmatmul.mubr.bf16.gmra.mxu0 %v4362
      %v4429 = vpop.f32.mrf.mxu0
      %v4430 = vadd.f32 0.0, %v4429
      %v4431 = vpop.f32.mrf.mxu0
      %v4432 = vpop.f32.mrf.mxu0
      %v4433 = vadd.f32 0.0, %v4432
      %v4434 = vpop.f32.mrf.mxu0
      %4435 = vmatprep.mubr.bf16.mxu0 0
      %4436 = vmatmul.mubr.bf16.gmra.mxu0 %v4365
      %v4437 = vpop.f32.mrf.mxu0
      %v4438 = vadd.f32 0.0, %v4437
      %v4439 = vpop.f32.mrf.mxu0
      %v4440 = vpop.f32.mrf.mxu0
      %v4441 = vadd.f32 0.0, %v4440
      %v4442 = vpop.f32.mrf.mxu0
      %4443 = vmatprep.mubr.bf16.mxu0 0
      %4444 = vmatmul.mubr.bf16.gmra.mxu0 %v4368
      %v4445 = vpop.f32.mrf.mxu0
      %v4446 = vadd.f32 0.0, %v4445
      %v4447 = vpop.f32.mrf.mxu0
      %v4448 = vpop.f32.mrf.mxu0
      %v4449 = vadd.f32 0.0, %v4448
      %v4450 = vpop.f32.mrf.mxu0
      %4451 = vmatprep.mubr.bf16.mxu0 0
      %4452 = vmatmul.mubr.bf16.gmra.mxu0 %v4371
      %v4453 = vpop.f32.mrf.mxu0
      %v4454 = vadd.f32 0.0, %v4453
      %v4455 = vpop.f32.mrf.mxu0
      %v4456 = vpop.f32.mrf.mxu0
      %v4457 = vadd.f32 0.0, %v4456
      %v4458 = vpop.f32.mrf.mxu0
      %4459 = vmatprep.mubr.bf16.mxu0 0
      %4460 = vmatmul.mubr.bf16.gmra.mxu0 %v4374
      %v4461 = vpop.f32.mrf.mxu0
      %v4462 = vadd.f32 0.0, %v4461
      %v4463 = vpop.f32.mrf.mxu0
      %v4464 = vpop.f32.mrf.mxu0
      %v4465 = vadd.f32 0.0, %v4464
      %v4466 = vpop.f32.mrf.mxu0
      %4467 = vmatprep.mubr.bf16.mxu0 0
      %4468 = vmatmul.mubr.bf16.gmra.mxu0 %v4377
      %v4469 = vpop.f32.mrf.mxu0
      %v4470 = vadd.f32 0.0, %v4469
      %v4471 = vpop.f32.mrf.mxu0
      %v4472 = vpop.f32.mrf.mxu0
      %v4473 = vadd.f32 0.0, %v4472
      %v4474 = vpop.f32.mrf.mxu0
      %4475 = vdwg.mxu0
      %v4478 = vunpack.c.l.b16 %v4344
      %v4479 = vunpack.c.l.b16 %v4345
      %v4480 = vpack.c.b16 %v4479, %v4478
      %v4483 = vsel %vm1225, %v4312, 0
      %v4486 = vsel %vm1225, %v4313, 0
      %v4489 = vsel %vm1225, %v4314, 0
      %v4492 = vsel %vm1225, %v4315, 0
      %v4495 = vsel %vm1225, %v4316, 0
      %v4498 = vsel %vm1225, %v4317, 0
      %v4501 = vsel %vm1225, %v4318, 0
      %v4504 = vsel %vm1225, %v4319, 0
      %4506 = vmatprep.subr.bf16.mxu0 0
      %4507 = vmatpush1.bf16.msra.mxu0 0
      %4508 = vmatprep.subr.bf16.mxu0 0
      %4509 = vmatpush1.bf16.msra.mxu0 0
      %4510 = vmatprep.subr.bf16.mxu0 0
      %4511 = vmatpush1.bf16.msra.mxu0 0
      %4512 = vmatprep.subr.bf16.mxu0 0
      %4513 = vmatpush1.bf16.msra.mxu0 0
      %4514 = vmatprep.subr.bf16.mxu0 0
      %4515 = vmatpush1.bf16.msra.mxu0 0
      %4516 = vmatprep.subr.bf16.mxu0 0
      %4517 = vmatpush1.bf16.msra.mxu0 0
      %4518 = vmatprep.subr.bf16.mxu0 0
      %4519 = vmatpush1.bf16.msra.mxu0 0
      %4520 = vmatprep.subr.bf16.mxu0 0
      %4521 = vmatpush1.bf16.msra.mxu0 %v4480
      %4522 = vmatprep.subr.bf16.mxu0 0
      %4523 = vmatpush2.bf16.msra.mxu0 0
      %4524 = vmatprep.subr.bf16.mxu0 0
      %4525 = vmatpush2.bf16.msra.mxu0 0
      %4526 = vmatprep.subr.bf16.mxu0 0
      %4527 = vmatpush2.bf16.msra.mxu0 0
      %4528 = vmatprep.subr.bf16.mxu0 0
      %4529 = vmatpush2.bf16.msra.mxu0 0
      %4530 = vmatprep.subr.bf16.mxu0 0
      %4531 = vmatpush2.bf16.msra.mxu0 0
      %4532 = vmatprep.subr.bf16.mxu0 0
      %4533 = vmatpush2.bf16.msra.mxu0 0
      %4534 = vmatprep.subr.bf16.mxu0 0
      %4535 = vmatpush2.bf16.msra.mxu0 0
      %4536 = vmatprep.subr.bf16.mxu0 0
      %4537 = vmatpush2.bf16.msra.mxu0 0
      %4538 = vmatprep.mubr.bf16.mxu0 0
      %4539 = vmatmul.mubr.bf16.gmra.mxu0 %v4483
      %v4540 = vpop.f32.mrf.mxu0
      %v4541 = vadd.f32 %v4414, %v4540
      %v4542 = vpop.f32.mrf.mxu0
      %v4543 = vpop.f32.mrf.mxu0
      %v4544 = vadd.f32 %v4417, %v4543
      %v4545 = vpop.f32.mrf.mxu0
      %4546 = vmatprep.mubr.bf16.mxu0 0
      %4547 = vmatmul.mubr.bf16.gmra.mxu0 %v4486
      %v4548 = vpop.f32.mrf.mxu0
      %v4549 = vadd.f32 %v4422, %v4548
      %v4550 = vpop.f32.mrf.mxu0
      %v4551 = vpop.f32.mrf.mxu0
      %v4552 = vadd.f32 %v4425, %v4551
      %v4553 = vpop.f32.mrf.mxu0
      %4554 = vmatprep.mubr.bf16.mxu0 0
      %4555 = vmatmul.mubr.bf16.gmra.mxu0 %v4489
      %v4556 = vpop.f32.mrf.mxu0
      %v4557 = vadd.f32 %v4430, %v4556
      %v4558 = vpop.f32.mrf.mxu0
      %v4559 = vpop.f32.mrf.mxu0
      %v4560 = vadd.f32 %v4433, %v4559
      %v4561 = vpop.f32.mrf.mxu0
      %4562 = vmatprep.mubr.bf16.mxu0 0
      %4563 = vmatmul.mubr.bf16.gmra.mxu0 %v4492
      %v4564 = vpop.f32.mrf.mxu0
      %v4565 = vadd.f32 %v4438, %v4564
      %v4566 = vpop.f32.mrf.mxu0
      %v4567 = vpop.f32.mrf.mxu0
      %v4568 = vadd.f32 %v4441, %v4567
      %v4569 = vpop.f32.mrf.mxu0
      %4570 = vmatprep.mubr.bf16.mxu0 0
      %4571 = vmatmul.mubr.bf16.gmra.mxu0 %v4495
      %v4572 = vpop.f32.mrf.mxu0
      %v4573 = vadd.f32 %v4446, %v4572
      %v4574 = vpop.f32.mrf.mxu0
      %v4575 = vpop.f32.mrf.mxu0
      %v4576 = vadd.f32 %v4449, %v4575
      %v4577 = vpop.f32.mrf.mxu0
      %4578 = vmatprep.mubr.bf16.mxu0 0
      %4579 = vmatmul.mubr.bf16.gmra.mxu0 %v4498
      %v4580 = vpop.f32.mrf.mxu0
      %v4581 = vadd.f32 %v4454, %v4580
      %v4582 = vpop.f32.mrf.mxu0
      %v4583 = vpop.f32.mrf.mxu0
      %v4584 = vadd.f32 %v4457, %v4583
      %v4585 = vpop.f32.mrf.mxu0
      %4586 = vmatprep.mubr.bf16.mxu0 0
      %4587 = vmatmul.mubr.bf16.gmra.mxu0 %v4501
      %v4588 = vpop.f32.mrf.mxu0
      %v4589 = vadd.f32 %v4462, %v4588
      %v4590 = vpop.f32.mrf.mxu0
      %v4591 = vpop.f32.mrf.mxu0
      %v4592 = vadd.f32 %v4465, %v4591
      %v4593 = vpop.f32.mrf.mxu0
      %4594 = vmatprep.mubr.bf16.mxu0 0
      %4595 = vmatmul.mubr.bf16.gmra.mxu0 %v4504
      %v4596 = vpop.f32.mrf.mxu0
      %v4597 = vadd.f32 %v4470, %v4596
      %v4598 = vpop.f32.mrf.mxu0
      %v4599 = vpop.f32.mrf.mxu0
      %v4600 = vadd.f32 %v4473, %v4599
      %v4601 = vpop.f32.mrf.mxu0
      %4602 = vdwg.mxu0
      %s4603 = scalar_lea.vmem %s8, 16
      %v4604 = vld [vmem:[%s4603] sm:$0xf]
      %v4605 = vld [vmem:[%s4603 + $0x4] sm:$0xf]
      %v4608 = vunpack.c.l.b16 %v4604
      %v4609 = vunpack.c.l.b16 %v4605
      %v4610 = vpack.c.b16 %v4609, %v4608
      %v4613 = vsel %vm1225, %v4328, 0
      %v4616 = vsel %vm1225, %v4329, 0
      %v4619 = vsel %vm1225, %v4330, 0
      %v4622 = vsel %vm1225, %v4331, 0
      %v4625 = vsel %vm1225, %v4332, 0
      %v4628 = vsel %vm1225, %v4333, 0
      %v4631 = vsel %vm1225, %v4334, 0
      %v4634 = vsel %vm1225, %v4335, 0
      %4636 = vmatprep.subr.bf16.mxu0 0
      %4637 = vmatpush1.bf16.msra.mxu0 0
      %4638 = vmatprep.subr.bf16.mxu0 0
      %4639 = vmatpush1.bf16.msra.mxu0 0
      %4640 = vmatprep.subr.bf16.mxu0 0
      %4641 = vmatpush1.bf16.msra.mxu0 0
      %4642 = vmatprep.subr.bf16.mxu0 0
      %4643 = vmatpush1.bf16.msra.mxu0 0
      %4644 = vmatprep.subr.bf16.mxu0 0
      %4645 = vmatpush1.bf16.msra.mxu0 0
      %4646 = vmatprep.subr.bf16.mxu0 0
      %4647 = vmatpush1.bf16.msra.mxu0 0
      %4648 = vmatprep.subr.bf16.mxu0 0
      %4649 = vmatpush1.bf16.msra.mxu0 0
      %4650 = vmatprep.subr.bf16.mxu0 0
      %4651 = vmatpush1.bf16.msra.mxu0 %v4610
      %4652 = vmatprep.subr.bf16.mxu0 0
      %4653 = vmatpush2.bf16.msra.mxu0 0
      %4654 = vmatprep.subr.bf16.mxu0 0
      %4655 = vmatpush2.bf16.msra.mxu0 0
      %4656 = vmatprep.subr.bf16.mxu0 0
      %4657 = vmatpush2.bf16.msra.mxu0 0
      %4658 = vmatprep.subr.bf16.mxu0 0
      %4659 = vmatpush2.bf16.msra.mxu0 0
      %4660 = vmatprep.subr.bf16.mxu0 0
      %4661 = vmatpush2.bf16.msra.mxu0 0
      %4662 = vmatprep.subr.bf16.mxu0 0
      %4663 = vmatpush2.bf16.msra.mxu0 0
      %4664 = vmatprep.subr.bf16.mxu0 0
      %4665 = vmatpush2.bf16.msra.mxu0 0
      %4666 = vmatprep.subr.bf16.mxu0 0
      %4667 = vmatpush2.bf16.msra.mxu0 0
      %4668 = vmatprep.mubr.bf16.mxu0 0
      %4669 = vmatmul.mubr.bf16.gmra.mxu0 %v4613
      %v4670 = vpop.f32.mrf.mxu0
      %v4671 = vadd.f32 0.0, %v4670
      %v4672 = vpop.f32.mrf.mxu0
      %v4673 = vpop.f32.mrf.mxu0
      %v4674 = vadd.f32 0.0, %v4673
      %v4675 = vpop.f32.mrf.mxu0
      %4676 = vmatprep.mubr.bf16.mxu0 0
      %4677 = vmatmul.mubr.bf16.gmra.mxu0 %v4616
      %v4678 = vpop.f32.mrf.mxu0
      %v4679 = vadd.f32 0.0, %v4678
      %v4680 = vpop.f32.mrf.mxu0
      %v4681 = vpop.f32.mrf.mxu0
      %v4682 = vadd.f32 0.0, %v4681
      %v4683 = vpop.f32.mrf.mxu0
      %4684 = vmatprep.mubr.bf16.mxu0 0
      %4685 = vmatmul.mubr.bf16.gmra.mxu0 %v4619
      %v4686 = vpop.f32.mrf.mxu0
      %v4687 = vadd.f32 0.0, %v4686
      %v4688 = vpop.f32.mrf.mxu0
      %v4689 = vpop.f32.mrf.mxu0
      %v4690 = vadd.f32 0.0, %v4689
      %v4691 = vpop.f32.mrf.mxu0
      %4692 = vmatprep.mubr.bf16.mxu0 0
      %4693 = vmatmul.mubr.bf16.gmra.mxu0 %v4622
      %v4694 = vpop.f32.mrf.mxu0
      %v4695 = vadd.f32 0.0, %v4694
      %v4696 = vpop.f32.mrf.mxu0
      %v4697 = vpop.f32.mrf.mxu0
      %v4698 = vadd.f32 0.0, %v4697
      %v4699 = vpop.f32.mrf.mxu0
      %4700 = vmatprep.mubr.bf16.mxu0 0
      %4701 = vmatmul.mubr.bf16.gmra.mxu0 %v4625
      %v4702 = vpop.f32.mrf.mxu0
      %v4703 = vadd.f32 0.0, %v4702
      %v4704 = vpop.f32.mrf.mxu0
      %v4705 = vpop.f32.mrf.mxu0
      %v4706 = vadd.f32 0.0, %v4705
      %v4707 = vpop.f32.mrf.mxu0
      %4708 = vmatprep.mubr.bf16.mxu0 0
      %4709 = vmatmul.mubr.bf16.gmra.mxu0 %v4628
      %v4710 = vpop.f32.mrf.mxu0
      %v4711 = vadd.f32 0.0, %v4710
      %v4712 = vpop.f32.mrf.mxu0
      %v4713 = vpop.f32.mrf.mxu0
      %v4714 = vadd.f32 0.0, %v4713
      %v4715 = vpop.f32.mrf.mxu0
      %4716 = vmatprep.mubr.bf16.mxu0 0
      %4717 = vmatmul.mubr.bf16.gmra.mxu0 %v4631
      %v4718 = vpop.f32.mrf.mxu0
      %v4719 = vadd.f32 0.0, %v4718
      %v4720 = vpop.f32.mrf.mxu0
      %v4721 = vpop.f32.mrf.mxu0
      %v4722 = vadd.f32 0.0, %v4721
      %v4723 = vpop.f32.mrf.mxu0
      %4724 = vmatprep.mubr.bf16.mxu0 0
      %4725 = vmatmul.mubr.bf16.gmra.mxu0 %v4634
      %v4726 = vpop.f32.mrf.mxu0
      %v4727 = vadd.f32 0.0, %v4726
      %v4728 = vpop.f32.mrf.mxu0
      %v4729 = vpop.f32.mrf.mxu0
      %v4730 = vadd.f32 0.0, %v4729
      %v4731 = vpop.f32.mrf.mxu0
      %4732 = vdwg.mxu0
      %v4733 = vadd.f32 %v4541, %v4671
      %v4734 = vadd.f32 %v4544, %v4674
      %v4735 = vadd.f32 %v4549, %v4679
      %v4736 = vadd.f32 %v4552, %v4682
      %v4737 = vadd.f32 %v4557, %v4687
      %v4738 = vadd.f32 %v4560, %v4690
      %v4739 = vadd.f32 %v4565, %v4695
      %v4740 = vadd.f32 %v4568, %v4698
      %v4741 = vadd.f32 %v4573, %v4703
      %v4742 = vadd.f32 %v4576, %v4706
      %v4743 = vadd.f32 %v4581, %v4711
      %v4744 = vadd.f32 %v4584, %v4714
      %v4745 = vadd.f32 %v4589, %v4719
      %v4746 = vadd.f32 %v4592, %v4722
      %v4747 = vadd.f32 %v4597, %v4727
      %v4748 = vadd.f32 %v4600, %v4730
      %s4749 = scalar_lea.vmem %s8, 24
      %v4750 = vld [vmem:[%s4749] sm:$0xf]
      %v4751 = vld [vmem:[%s4749 + $0x4] sm:$0xf]
      %v4754 = vunpack.c.l.b16 %v4750
      %v4755 = vunpack.c.l.b16 %v4751
      %v4756 = vpack.c.b16 %v4755, %v4754
      %v4759 = vsel %vm1225, %v4336, 0
      %v4762 = vsel %vm1225, %v4337, 0
      %v4765 = vsel %vm1225, %v4338, 0
      %v4768 = vsel %vm1225, %v4339, 0
      %v4771 = vsel %vm1225, %v4340, 0
      %v4774 = vsel %vm1225, %v4341, 0
      %v4777 = vsel %vm1225, %v4342, 0
      %v4780 = vsel %vm1225, %v4343, 0
      %4782 = vmatprep.subr.bf16.mxu0 0
      %4783 = vmatpush1.bf16.msra.mxu0 0
      %4784 = vmatprep.subr.bf16.mxu0 0
      %4785 = vmatpush1.bf16.msra.mxu0 0
      %4786 = vmatprep.subr.bf16.mxu0 0
      %4787 = vmatpush1.bf16.msra.mxu0 0
      %4788 = vmatprep.subr.bf16.mxu0 0
      %4789 = vmatpush1.bf16.msra.mxu0 0
      %4790 = vmatprep.subr.bf16.mxu0 0
      %4791 = vmatpush1.bf16.msra.mxu0 0
      %4792 = vmatprep.subr.bf16.mxu0 0
      %4793 = vmatpush1.bf16.msra.mxu0 0
      %4794 = vmatprep.subr.bf16.mxu0 0
      %4795 = vmatpush1.bf16.msra.mxu0 0
      %4796 = vmatprep.subr.bf16.mxu0 0
      %4797 = vmatpush1.bf16.msra.mxu0 %v4756
      %4798 = vmatprep.subr.bf16.mxu0 0
      %4799 = vmatpush2.bf16.msra.mxu0 0
      %4800 = vmatprep.subr.bf16.mxu0 0
      %4801 = vmatpush2.bf16.msra.mxu0 0
      %4802 = vmatprep.subr.bf16.mxu0 0
      %4803 = vmatpush2.bf16.msra.mxu0 0
      %4804 = vmatprep.subr.bf16.mxu0 0
      %4805 = vmatpush2.bf16.msra.mxu0 0
      %4806 = vmatprep.subr.bf16.mxu0 0
      %4807 = vmatpush2.bf16.msra.mxu0 0
      %4808 = vmatprep.subr.bf16.mxu0 0
      %4809 = vmatpush2.bf16.msra.mxu0 0
      %4810 = vmatprep.subr.bf16.mxu0 0
      %4811 = vmatpush2.bf16.msra.mxu0 0
      %4812 = vmatprep.subr.bf16.mxu0 0
      %4813 = vmatpush2.bf16.msra.mxu0 0
      %4814 = vmatprep.mubr.bf16.mxu0 0
      %4815 = vmatmul.mubr.bf16.gmra.mxu0 %v4759
      %v4816 = vpop.f32.mrf.mxu0
      %v4817 = vadd.f32 0.0, %v4816
      %v4818 = vpop.f32.mrf.mxu0
      %v4819 = vpop.f32.mrf.mxu0
      %v4820 = vadd.f32 0.0, %v4819
      %v4821 = vpop.f32.mrf.mxu0
      %4822 = vmatprep.mubr.bf16.mxu0 0
      %4823 = vmatmul.mubr.bf16.gmra.mxu0 %v4762
      %v4824 = vpop.f32.mrf.mxu0
      %v4825 = vadd.f32 0.0, %v4824
      %v4826 = vpop.f32.mrf.mxu0
      %v4827 = vpop.f32.mrf.mxu0
      %v4828 = vadd.f32 0.0, %v4827
      %v4829 = vpop.f32.mrf.mxu0
      %4830 = vmatprep.mubr.bf16.mxu0 0
      %4831 = vmatmul.mubr.bf16.gmra.mxu0 %v4765
      %v4832 = vpop.f32.mrf.mxu0
      %v4833 = vadd.f32 0.0, %v4832
      %v4834 = vpop.f32.mrf.mxu0
      %v4835 = vpop.f32.mrf.mxu0
      %v4836 = vadd.f32 0.0, %v4835
      %v4837 = vpop.f32.mrf.mxu0
      %4838 = vmatprep.mubr.bf16.mxu0 0
      %4839 = vmatmul.mubr.bf16.gmra.mxu0 %v4768
      %v4840 = vpop.f32.mrf.mxu0
      %v4841 = vadd.f32 0.0, %v4840
      %v4842 = vpop.f32.mrf.mxu0
      %v4843 = vpop.f32.mrf.mxu0
      %v4844 = vadd.f32 0.0, %v4843
      %v4845 = vpop.f32.mrf.mxu0
      %4846 = vmatprep.mubr.bf16.mxu0 0
      %4847 = vmatmul.mubr.bf16.gmra.mxu0 %v4771
      %v4848 = vpop.f32.mrf.mxu0
      %v4849 = vadd.f32 0.0, %v4848
      %v4850 = vpop.f32.mrf.mxu0
      %v4851 = vpop.f32.mrf.mxu0
      %v4852 = vadd.f32 0.0, %v4851
      %v4853 = vpop.f32.mrf.mxu0
      %4854 = vmatprep.mubr.bf16.mxu0 0
      %4855 = vmatmul.mubr.bf16.gmra.mxu0 %v4774
      %v4856 = vpop.f32.mrf.mxu0
      %v4857 = vadd.f32 0.0, %v4856
      %v4858 = vpop.f32.mrf.mxu0
      %v4859 = vpop.f32.mrf.mxu0
      %v4860 = vadd.f32 0.0, %v4859
      %v4861 = vpop.f32.mrf.mxu0
      %4862 = vmatprep.mubr.bf16.mxu0 0
      %4863 = vmatmul.mubr.bf16.gmra.mxu0 %v4777
      %v4864 = vpop.f32.mrf.mxu0
      %v4865 = vadd.f32 0.0, %v4864
      %v4866 = vpop.f32.mrf.mxu0
      %v4867 = vpop.f32.mrf.mxu0
      %v4868 = vadd.f32 0.0, %v4867
      %v4869 = vpop.f32.mrf.mxu0
      %4870 = vmatprep.mubr.bf16.mxu0 0
      %4871 = vmatmul.mubr.bf16.gmra.mxu0 %v4780
      %v4872 = vpop.f32.mrf.mxu0
      %v4873 = vadd.f32 0.0, %v4872
      %v4874 = vpop.f32.mrf.mxu0
      %v4875 = vpop.f32.mrf.mxu0
      %v4876 = vadd.f32 0.0, %v4875
      %v4877 = vpop.f32.mrf.mxu0
      %4878 = vdwg.mxu0
      %v4879 = vadd.f32 %v4733, %v4817
      %v4880 = vadd.f32 %v4734, %v4820
      %v4881 = vadd.f32 %v4735, %v4825
      %v4882 = vadd.f32 %v4736, %v4828
      %v4883 = vadd.f32 %v4737, %v4833
      %v4884 = vadd.f32 %v4738, %v4836
      %v4885 = vadd.f32 %v4739, %v4841
      %v4886 = vadd.f32 %v4740, %v4844
      %v4887 = vadd.f32 %v4741, %v4849
      %v4888 = vadd.f32 %v4742, %v4852
      %v4889 = vadd.f32 %v4743, %v4857
      %v4890 = vadd.f32 %v4744, %v4860
      %v4891 = vadd.f32 %v4745, %v4865
      %v4892 = vadd.f32 %v4746, %v4868
      %v4893 = vadd.f32 %v4747, %v4873
      %v4894 = vadd.f32 %v4748, %v4876
      %v4895 = vld [vmem:[%s9] sm:$0x1]
      %v4897 = vlaneseq
      %v4898 = vshrl.u32 %v4897, 7
      %v4899 = vsub.s32 0, %v4898
      %v4900 = vrot.slane %v4895, %v4899
      %v4902 = vadd.f32 %v4879, %v4900
      %v4903 = vadd.f32 %v4880, %v4900
      %v4904 = vadd.f32 %v4881, %v4900
      %v4905 = vadd.f32 %v4882, %v4900
      %v4906 = vadd.f32 %v4883, %v4900
      %v4907 = vadd.f32 %v4884, %v4900
      %v4908 = vadd.f32 %v4885, %v4900
      %v4909 = vadd.f32 %v4886, %v4900
      %v4910 = vadd.f32 %v4887, %v4900
      %v4911 = vadd.f32 %v4888, %v4900
      %v4912 = vadd.f32 %v4889, %v4900
      %v4913 = vadd.f32 %v4890, %v4900
      %v4914 = vadd.f32 %v4891, %v4900
      %v4915 = vadd.f32 %v4892, %v4900
      %v4916 = vadd.f32 %v4893, %v4900
      %v4917 = vadd.f32 %v4894, %v4900
      %v4918 = vld [vmem:[%s482] sm:$0xff]
      %v4919 = vld [vmem:[%s482 + $0x8] sm:$0xff]
      %v4920 = vld [vmem:[%s482 + $0x10] sm:$0xff]
      %v4921 = vld [vmem:[%s482 + $0x18] sm:$0xff]
      %v4922 = vld [vmem:[%s482 + $0x20] sm:$0xff]
      %v4923 = vld [vmem:[%s482 + $0x28] sm:$0xff]
      %v4924 = vld [vmem:[%s482 + $0x30] sm:$0xff]
      %v4925 = vld [vmem:[%s482 + $0x38] sm:$0xff]
      %v4926 = vld [vmem:[%s482 + $0x40] sm:$0xff]
      %v4927 = vld [vmem:[%s482 + $0x48] sm:$0xff]
      %v4928 = vld [vmem:[%s482 + $0x50] sm:$0xff]
      %v4929 = vld [vmem:[%s482 + $0x58] sm:$0xff]
      %v4930 = vld [vmem:[%s482 + $0x60] sm:$0xff]
      %v4931 = vld [vmem:[%s482 + $0x68] sm:$0xff]
      %v4932 = vld [vmem:[%s482 + $0x70] sm:$0xff]
      %v4933 = vld [vmem:[%s482 + $0x78] sm:$0xff]
      %v4934 = vadd.f32 %v4902, %v4918
      %v4935 = vadd.f32 %v4903, %v4919
      %v4936 = vadd.f32 %v4904, %v4920
      %v4937 = vadd.f32 %v4905, %v4921
      %v4938 = vadd.f32 %v4906, %v4922
      %v4939 = vadd.f32 %v4907, %v4923
      %v4940 = vadd.f32 %v4908, %v4924
      %v4941 = vadd.f32 %v4909, %v4925
      %v4942 = vadd.f32 %v4910, %v4926
      %v4943 = vadd.f32 %v4911, %v4927
      %v4944 = vadd.f32 %v4912, %v4928
      %v4945 = vadd.f32 %v4913, %v4929
      %v4946 = vadd.f32 %v4914, %v4930
      %v4947 = vadd.f32 %v4915, %v4931
      %v4948 = vadd.f32 %v4916, %v4932
      %v4949 = vadd.f32 %v4917, %v4933
      %vm4950 = vcmask 523264
      %v4951 = vsel %vm4950, %v4934, 0.0
      %4952 = vadd.xlane.f32.xlu0 %v4951
      %v4953 = vpop.xlane.xlu0 %4952
      %v4954 = vsel %vm4950, %v4935, 0.0
      %4955 = vadd.xlane.f32.xlu0 %v4954
      %v4956 = vpop.xlane.xlu0 %4955
      %v4957 = vsel %vm4950, %v4936, 0.0
      %4958 = vadd.xlane.f32.xlu0 %v4957
      %v4959 = vpop.xlane.xlu0 %4958
      %v4960 = vsel %vm4950, %v4937, 0.0
      %4961 = vadd.xlane.f32.xlu0 %v4960
      %v4962 = vpop.xlane.xlu0 %4961
      %v4963 = vsel %vm4950, %v4938, 0.0
      %4964 = vadd.xlane.f32.xlu0 %v4963
      %v4965 = vpop.xlane.xlu0 %4964
      %v4966 = vsel %vm4950, %v4939, 0.0
      %4967 = vadd.xlane.f32.xlu0 %v4966
      %v4968 = vpop.xlane.xlu0 %4967
      %v4969 = vsel %vm4950, %v4940, 0.0
      %4970 = vadd.xlane.f32.xlu0 %v4969
      %v4971 = vpop.xlane.xlu0 %4970
      %v4972 = vsel %vm4950, %v4941, 0.0
      %4973 = vadd.xlane.f32.xlu0 %v4972
      %v4974 = vpop.xlane.xlu0 %4973
      %v4975 = vsel %vm4950, %v4942, 0.0
      %4976 = vadd.xlane.f32.xlu0 %v4975
      %v4977 = vpop.xlane.xlu0 %4976
      %v4978 = vsel %vm4950, %v4943, 0.0
      %4979 = vadd.xlane.f32.xlu0 %v4978
      %v4980 = vpop.xlane.xlu0 %4979
      %v4981 = vsel %vm4950, %v4944, 0.0
      %4982 = vadd.xlane.f32.xlu0 %v4981
      %v4983 = vpop.xlane.xlu0 %4982
      %v4984 = vsel %vm4950, %v4945, 0.0
      %4985 = vadd.xlane.f32.xlu0 %v4984
      %v4986 = vpop.xlane.xlu0 %4985
      %v4987 = vsel %vm4950, %v4946, 0.0
      %4988 = vadd.xlane.f32.xlu0 %v4987
      %v4989 = vpop.xlane.xlu0 %4988
      %v4990 = vsel %vm4950, %v4947, 0.0
      %4991 = vadd.xlane.f32.xlu0 %v4990
      %v4992 = vpop.xlane.xlu0 %4991
      %v4993 = vsel %vm4950, %v4948, 0.0
      %4994 = vadd.xlane.f32.xlu0 %v4993
      %v4995 = vpop.xlane.xlu0 %4994
      %v4996 = vsel %vm4950, %v4949, 0.0
      %4997 = vadd.xlane.f32.xlu0 %v4996
      %v4998 = vpop.xlane.xlu0 %4997
      %v4999 = vrcp.pop 64.0
      %v5000 = vmul.f32 %v4953, %v4999
      %v5001 = vmul.f32 %v4956, %v4999
      %v5002 = vmul.f32 %v4959, %v4999
      %v5003 = vmul.f32 %v4962, %v4999
      %v5004 = vmul.f32 %v4965, %v4999
      %v5005 = vmul.f32 %v4968, %v4999
      %v5006 = vmul.f32 %v4971, %v4999
      %v5007 = vmul.f32 %v4974, %v4999
      %v5008 = vmul.f32 %v4977, %v4999
      %v5009 = vmul.f32 %v4980, %v4999
      %v5010 = vmul.f32 %v4983, %v4999
      %v5011 = vmul.f32 %v4986, %v4999
      %v5012 = vmul.f32 %v4989, %v4999
      %v5013 = vmul.f32 %v4992, %v4999
      %v5014 = vmul.f32 %v4995, %v4999
      %v5015 = vmul.f32 %v4998, %v4999
      %v5016 = vsub.f32 %v4934, %v5000
      %v5017 = vsub.f32 %v4935, %v5001
      %v5018 = vsub.f32 %v4936, %v5002
      %v5019 = vsub.f32 %v4937, %v5003
      %v5020 = vsub.f32 %v4938, %v5004
      %v5021 = vsub.f32 %v4939, %v5005
      %v5022 = vsub.f32 %v4940, %v5006
      %v5023 = vsub.f32 %v4941, %v5007
      %v5024 = vsub.f32 %v4942, %v5008
      %v5025 = vsub.f32 %v4943, %v5009
      %v5026 = vsub.f32 %v4944, %v5010
      %v5027 = vsub.f32 %v4945, %v5011
      %v5028 = vsub.f32 %v4946, %v5012
      %v5029 = vsub.f32 %v4947, %v5013
      %v5030 = vsub.f32 %v4948, %v5014
      %v5031 = vsub.f32 %v4949, %v5015
      %v5032 = vmul.f32 %v5016, %v5016
      %v5033 = vmul.f32 %v5017, %v5017
      %v5034 = vmul.f32 %v5018, %v5018
      %v5035 = vmul.f32 %v5019, %v5019
      %v5036 = vmul.f32 %v5020, %v5020
      %v5037 = vmul.f32 %v5021, %v5021
      %v5038 = vmul.f32 %v5022, %v5022
      %v5039 = vmul.f32 %v5023, %v5023
      %v5040 = vmul.f32 %v5024, %v5024
      %v5041 = vmul.f32 %v5025, %v5025
      %v5042 = vmul.f32 %v5026, %v5026
      %v5043 = vmul.f32 %v5027, %v5027
      %v5044 = vmul.f32 %v5028, %v5028
      %v5045 = vmul.f32 %v5029, %v5029
      %v5046 = vmul.f32 %v5030, %v5030
      %v5047 = vmul.f32 %v5031, %v5031
      %v5048 = vsel %vm4950, %v5032, 0.0
      %5049 = vadd.xlane.f32.xlu0 %v5048
      %v5050 = vpop.xlane.xlu0 %5049
      %v5051 = vsel %vm4950, %v5033, 0.0
      %5052 = vadd.xlane.f32.xlu0 %v5051
      %v5053 = vpop.xlane.xlu0 %5052
      %v5054 = vsel %vm4950, %v5034, 0.0
      %5055 = vadd.xlane.f32.xlu0 %v5054
      %v5056 = vpop.xlane.xlu0 %5055
      %v5057 = vsel %vm4950, %v5035, 0.0
      %5058 = vadd.xlane.f32.xlu0 %v5057
      %v5059 = vpop.xlane.xlu0 %5058
      %v5060 = vsel %vm4950, %v5036, 0.0
      %5061 = vadd.xlane.f32.xlu0 %v5060
      %v5062 = vpop.xlane.xlu0 %5061
      %v5063 = vsel %vm4950, %v5037, 0.0
      %5064 = vadd.xlane.f32.xlu0 %v5063
      %v5065 = vpop.xlane.xlu0 %5064
      %v5066 = vsel %vm4950, %v5038, 0.0
      %5067 = vadd.xlane.f32.xlu0 %v5066
      %v5068 = vpop.xlane.xlu0 %5067
      %v5069 = vsel %vm4950, %v5039, 0.0
      %5070 = vadd.xlane.f32.xlu0 %v5069
      %v5071 = vpop.xlane.xlu0 %5070
      %v5072 = vsel %vm4950, %v5040, 0.0
      %5073 = vadd.xlane.f32.xlu0 %v5072
      %v5074 = vpop.xlane.xlu0 %5073
      %v5075 = vsel %vm4950, %v5041, 0.0
      %5076 = vadd.xlane.f32.xlu0 %v5075
      %v5077 = vpop.xlane.xlu0 %5076
      %v5078 = vsel %vm4950, %v5042, 0.0
      %5079 = vadd.xlane.f32.xlu0 %v5078
      %v5080 = vpop.xlane.xlu0 %5079
      %v5081 = vsel %vm4950, %v5043, 0.0
      %5082 = vadd.xlane.f32.xlu0 %v5081
      %v5083 = vpop.xlane.xlu0 %5082
      %v5084 = vsel %vm4950, %v5044, 0.0
      %5085 = vadd.xlane.f32.xlu0 %v5084
      %v5086 = vpop.xlane.xlu0 %5085
      %v5087 = vsel %vm4950, %v5045, 0.0
      %5088 = vadd.xlane.f32.xlu0 %v5087
      %v5089 = vpop.xlane.xlu0 %5088
      %v5090 = vsel %vm4950, %v5046, 0.0
      %5091 = vadd.xlane.f32.xlu0 %v5090
      %v5092 = vpop.xlane.xlu0 %5091
      %v5093 = vsel %vm4950, %v5047, 0.0
      %5094 = vadd.xlane.f32.xlu0 %v5093
      %v5095 = vpop.xlane.xlu0 %5094
      %v5096 = vmul.f32 %v5050, %v4999
      %v5097 = vmul.f32 %v5053, %v4999
      %v5098 = vmul.f32 %v5056, %v4999
      %v5099 = vmul.f32 %v5059, %v4999
      %v5100 = vmul.f32 %v5062, %v4999
      %v5101 = vmul.f32 %v5065, %v4999
      %v5102 = vmul.f32 %v5068, %v4999
      %v5103 = vmul.f32 %v5071, %v4999
      %v5104 = vmul.f32 %v5074, %v4999
      %v5105 = vmul.f32 %v5077, %v4999
      %v5106 = vmul.f32 %v5080, %v4999
      %v5107 = vmul.f32 %v5083, %v4999
      %v5108 = vmul.f32 %v5086, %v4999
      %v5109 = vmul.f32 %v5089, %v4999
      %v5110 = vmul.f32 %v5092, %v4999
      %v5111 = vmul.f32 %v5095, %v4999
      %v5112 = vadd.f32 %v5096, 1e-05
      %v5113 = vadd.f32 %v5097, 1e-05
      %v5114 = vadd.f32 %v5098, 1e-05
      %v5115 = vadd.f32 %v5099, 1e-05
      %v5116 = vadd.f32 %v5100, 1e-05
      %v5117 = vadd.f32 %v5101, 1e-05
      %v5118 = vadd.f32 %v5102, 1e-05
      %v5119 = vadd.f32 %v5103, 1e-05
      %v5120 = vadd.f32 %v5104, 1e-05
      %v5121 = vadd.f32 %v5105, 1e-05
      %v5122 = vadd.f32 %v5106, 1e-05
      %v5123 = vadd.f32 %v5107, 1e-05
      %v5124 = vadd.f32 %v5108, 1e-05
      %v5125 = vadd.f32 %v5109, 1e-05
      %v5126 = vadd.f32 %v5110, 1e-05
      %v5127 = vadd.f32 %v5111, 1e-05
      %v5128 = vrsqrt.pop %v5112
      %v5129 = vrsqrt.pop %v5113
      %v5130 = vrsqrt.pop %v5114
      %v5131 = vrsqrt.pop %v5115
      %v5132 = vrsqrt.pop %v5116
      %v5133 = vrsqrt.pop %v5117
      %v5134 = vrsqrt.pop %v5118
      %v5135 = vrsqrt.pop %v5119
      %v5136 = vrsqrt.pop %v5120
      %v5137 = vrsqrt.pop %v5121
      %v5138 = vrsqrt.pop %v5122
      %v5139 = vrsqrt.pop %v5123
      %v5140 = vrsqrt.pop %v5124
      %v5141 = vrsqrt.pop %v5125
      %v5142 = vrsqrt.pop %v5126
      %v5143 = vrsqrt.pop %v5127
      %v5144 = vmul.f32 %v5016, %v5128
      %v5145 = vmul.f32 %v5017, %v5129
      %v5146 = vmul.f32 %v5018, %v5130
      %v5147 = vmul.f32 %v5019, %v5131
      %v5148 = vmul.f32 %v5020, %v5132
      %v5149 = vmul.f32 %v5021, %v5133
      %v5150 = vmul.f32 %v5022, %v5134
      %v5151 = vmul.f32 %v5023, %v5135
      %v5152 = vmul.f32 %v5024, %v5136
      %v5153 = vmul.f32 %v5025, %v5137
      %v5154 = vmul.f32 %v5026, %v5138
      %v5155 = vmul.f32 %v5027, %v5139
      %v5156 = vmul.f32 %v5028, %v5140
      %v5157 = vmul.f32 %v5029, %v5141
      %v5158 = vmul.f32 %v5030, %v5142
      %v5159 = vmul.f32 %v5031, %v5143
      %v5160 = vld [vmem:[%s10] sm:$0x1]
      %v5162 = vlaneseq
      %v5163 = vshrl.u32 %v5162, 7
      %v5164 = vsub.s32 0, %v5163
      %v5165 = vrot.slane %v5160, %v5164
      %v5167 = vmul.f32 %v5144, %v5165
      %v5168 = vmul.f32 %v5145, %v5165
      %v5169 = vmul.f32 %v5146, %v5165
      %v5170 = vmul.f32 %v5147, %v5165
      %v5171 = vmul.f32 %v5148, %v5165
      %v5172 = vmul.f32 %v5149, %v5165
      %v5173 = vmul.f32 %v5150, %v5165
      %v5174 = vmul.f32 %v5151, %v5165
      %v5175 = vmul.f32 %v5152, %v5165
      %v5176 = vmul.f32 %v5153, %v5165
      %v5177 = vmul.f32 %v5154, %v5165
      %v5178 = vmul.f32 %v5155, %v5165
      %v5179 = vmul.f32 %v5156, %v5165
      %v5180 = vmul.f32 %v5157, %v5165
      %v5181 = vmul.f32 %v5158, %v5165
      %v5182 = vmul.f32 %v5159, %v5165
      %v5183 = vld [vmem:[%s11] sm:$0x1]
      %v5185 = vlaneseq
      %v5186 = vshrl.u32 %v5185, 7
      %v5187 = vsub.s32 0, %v5186
      %v5188 = vrot.slane %v5183, %v5187
      %v5190 = vadd.f32 %v5167, %v5188
      %v5191 = vadd.f32 %v5168, %v5188
      %v5192 = vadd.f32 %v5169, %v5188
      %v5193 = vadd.f32 %v5170, %v5188
      %v5194 = vadd.f32 %v5171, %v5188
      %v5195 = vadd.f32 %v5172, %v5188
      %v5196 = vadd.f32 %v5173, %v5188
      %v5197 = vadd.f32 %v5174, %v5188
      %v5198 = vadd.f32 %v5175, %v5188
      %v5199 = vadd.f32 %v5176, %v5188
      %v5200 = vadd.f32 %v5177, %v5188
      %v5201 = vadd.f32 %v5178, %v5188
      %v5202 = vadd.f32 %v5179, %v5188
      %v5203 = vadd.f32 %v5180, %v5188
      %v5204 = vadd.f32 %v5181, %v5188
      %v5205 = vadd.f32 %v5182, %v5188
      %5206 = vst.msk [vmem:[%s487] sm:$0xff] %vm4950, %v5190
      %5207 = vst.msk [vmem:[%s487 + $0x8] sm:$0xff] %vm4950, %v5191
      %5208 = vst.msk [vmem:[%s487 + $0x10] sm:$0xff] %vm4950, %v5192
      %5209 = vst.msk [vmem:[%s487 + $0x18] sm:$0xff] %vm4950, %v5193
      %5210 = vst.msk [vmem:[%s487 + $0x20] sm:$0xff] %vm4950, %v5194
      %5211 = vst.msk [vmem:[%s487 + $0x28] sm:$0xff] %vm4950, %v5195
      %5212 = vst.msk [vmem:[%s487 + $0x30] sm:$0xff] %vm4950, %v5196
      %5213 = vst.msk [vmem:[%s487 + $0x38] sm:$0xff] %vm4950, %v5197
      %5214 = vst.msk [vmem:[%s487 + $0x40] sm:$0xff] %vm4950, %v5198
      %5215 = vst.msk [vmem:[%s487 + $0x48] sm:$0xff] %vm4950, %v5199
      %5216 = vst.msk [vmem:[%s487 + $0x50] sm:$0xff] %vm4950, %v5200
      %5217 = vst.msk [vmem:[%s487 + $0x58] sm:$0xff] %vm4950, %v5201
      %5218 = vst.msk [vmem:[%s487 + $0x60] sm:$0xff] %vm4950, %v5202
      %5219 = vst.msk [vmem:[%s487 + $0x68] sm:$0xff] %vm4950, %v5203
      %5220 = vst.msk [vmem:[%s487 + $0x70] sm:$0xff] %vm4950, %v5204
      %5221 = vst.msk [vmem:[%s487 + $0x78] sm:$0xff] %vm4950, %v5205
      %p5222 = scmp.lt.s32.totalorder %s23, 1
      %s5223 = scalar_select %p5222, %s23, 1
      %s5224 = smul.addr %s5223, 16
      %s5225 = smul.addr %s5224, 8
      %s5226 = scalar_lea.vmem %s12, %s5225
      // Predicated region
      $region69: #{rel0_encoder_forward.11} parent=67 // pred_check
        %p5227 = pneg %p318
      $region70: #{rel0_encoder_forward.11} parent=67 // pred_check_branch
        %5229 = sbr.rel (%p5227) target = $region72
      $region71: #{rel0_encoder_forward.11} parent=67 // pred_region
        _
      $region72: #{rel0_encoder_forward.11} parent=67 // pred_fallthru
        _
    $region68: #{rel0_encoder_forward.11} parent=5 // pred_fallthru
      _
    %p5230 = scmp.le.s32.totalorder 2, %s18
    // Predicated region
    $region73: #{rel0_encoder_forward.11} parent=5 // pred_check
      %p5231 = pneg %p5230
    $region74: #{rel0_encoder_forward.11} parent=5 // pred_check_branch
      %5233 = sbr.rel (%p5231) target = $region76
    $region75: #{rel0_encoder_forward.11} parent=5 // pred_region
      %s5234 = ssub.s32 %s18, 2
      // Predicated region
      $region77: #{rel0_encoder_forward.11} parent=75 // pred_check
        %p5235 = pneg %p324
      $region78: #{rel0_encoder_forward.11} parent=75 // pred_check_branch
        %5237 = sbr.rel (%p5235) target = $region80
      $region79: #{rel0_encoder_forward.11} parent=75 // pred_region
        %p5238 = scmp.lt.s32.totalorder %s24, 1
        %s5239 = scalar_select %p5238, %s24, 1
        %s5240 = smul.addr %s5239, 16
        %s5241 = smul.addr %s5240, 8
        %s5242 = scalar_lea.vmem %s12, %s5241
      $region80: #{rel0_encoder_forward.11} parent=75 // pred_fallthru
        _
    $region76: #{rel0_encoder_forward.11} parent=5 // pred_fallthru
      _
  $region6: #{rel0_encoder_forward.11} parent=0 // loop_footer
    %s22 = sadd.s32 1, %s18
  $region7: #{rel0_encoder_forward.11} parent=0 // loop_footer_branch
    %17 = sbr.rel target = $region3
  $region8: #{rel0_encoder_forward.11} parent=0 // loop_exit
    _

</llo_original>
